<compile_context>
chip_gen: v7x
topology: tpu7x:2x2x1
jax: 0.10.0
libtpu: 0.0.40
codegen_flags: <defaults>
</compile_context>

<pallas_src>
import functools

import jax
import jax.numpy as jnp
from jax.experimental import pallas as pl
from jax.experimental.pallas import tpu as pltpu

_EPS_BN = 1e-5


def _round_up(x, n):
    return ((x + n - 1) // n) * n


# ----------------------- tiled fused matmul (conv core) ---------------------

def _mm_fused_kernel(*refs, act, has_residual):
    if has_residual:
        a_ref, b_ref, s_ref, t_ref, r_ref, o_ref, acc_ref = refs
    else:
        a_ref, b_ref, s_ref, t_ref, o_ref, acc_ref = refs
        r_ref = None

    @pl.when(pl.program_id(2) == 0)
    def _():
        acc_ref[...] = jnp.zeros_like(acc_ref)

    acc_ref[...] += jnp.dot(a_ref[...], b_ref[...],
                            preferred_element_type=jnp.float32)

    @pl.when(pl.program_id(2) == pl.num_programs(2) - 1)
    def _():
        y = acc_ref[...] * s_ref[...] + t_ref[...]
        if has_residual:
            y = y + r_ref[...]
        if act == "relu":
            y = jnp.maximum(y, 0.0)
        elif act == "sigmoid":
            y = jax.nn.sigmoid(y)
        o_ref[...] = y


def mm_scale_shift_act(a, b, scale, shift, act="none", residual=None,
                       tm=256, tn=256, tk=256):
    """act((a @ b) * scale + shift [+ residual]); scale/shift per column.

    bf16 MXU operands, f32 accumulation/epilogue, lane-dense (>=128) N tiles.
    """
    m, k = a.shape
    k2, n = b.shape
    assert k == k2
    tm = min(tm, _round_up(m, 8))
    tn = min(tn, _round_up(n, 128))
    tk = min(tk, _round_up(k, 128))
    mp, np_, kp = _round_up(m, tm), _round_up(n, tn), _round_up(k, tk)

    a_p = jnp.pad(a.astype(jnp.float32),
                  ((0, mp - m), (0, kp - k))).astype(jnp.bfloat16)
    b_p = jnp.pad(b.astype(jnp.float32),
                  ((0, kp - k), (0, np_ - n))).astype(jnp.bfloat16)
    s_p = jnp.pad(scale.reshape(1, n).astype(jnp.float32),
                  ((0, 0), (0, np_ - n)))
    t_p = jnp.pad(shift.reshape(1, n).astype(jnp.float32),
                  ((0, 0), (0, np_ - n)))

    has_residual = residual is not None
    in_specs = [
        pl.BlockSpec((tm, tk), lambda i, j, kk: (i, kk)),
        pl.BlockSpec((tk, tn), lambda i, j, kk: (kk, j)),
        pl.BlockSpec((1, tn), lambda i, j, kk: (0, j)),
        pl.BlockSpec((1, tn), lambda i, j, kk: (0, j)),
    ]
    operands = [a_p, b_p, s_p, t_p]
    bytes_accessed = a_p.size * 2 + b_p.size * 2 + mp * np_ * 4 + 2 * np_ * 4
    if has_residual:
        r_p = jnp.pad(residual.astype(jnp.float32),
                      ((0, mp - m), (0, np_ - n)))
        in_specs.append(pl.BlockSpec((tm, tn), lambda i, j, kk: (i, j)))
        operands.append(r_p)
        bytes_accessed += mp * np_ * 4

    out = pl.pallas_call(
        functools.partial(_mm_fused_kernel, act=act,
                          has_residual=has_residual),
        grid=(mp // tm, np_ // tn, kp // tk),
        in_specs=in_specs,
        out_specs=pl.BlockSpec((tm, tn), lambda i, j, kk: (i, j)),
        out_shape=jax.ShapeDtypeStruct((mp, np_), jnp.float32),
        scratch_shapes=[pltpu.VMEM((tm, tn), jnp.float32)],
        compiler_params=pltpu.CompilerParams(
            dimension_semantics=("parallel", "parallel", "arbitrary"),
            vmem_limit_bytes=32 * 1024 * 1024),
        cost_estimate=pl.CostEstimate(
            flops=2 * mp * np_ * kp,
            transcendentals=mp * np_ if act == "sigmoid" else 0,
            bytes_accessed=int(bytes_accessed)),
    )(*operands)
    return out[:m, :n]


# ----------------------------- small fused kernels --------------------------

def _instance_norm_kernel(x_ref, o_ref):
    x = x_ref[...]
    mean = jnp.mean(x, axis=1, keepdims=True)
    var = jnp.mean(jnp.square(x - mean), axis=1, keepdims=True)
    o_ref[...] = (x - mean) * jax.lax.rsqrt(var + 1e-5)


def instance_norm_rows(x):
    # Tiny op at these shapes; single full-block call.
    return pl.pallas_call(
        _instance_norm_kernel,
        out_shape=jax.ShapeDtypeStruct(x.shape, jnp.float32))(x)


def _dtcf_kernel(x_ref, w1_ref, b1_ref, w2_ref, b2_ref, o_ref):
    x = x_ref[0]                                            # (H*W, C)
    pooled = jnp.mean(x, axis=0, keepdims=True)             # (1, C)
    h1 = jnp.dot(pooled, w1_ref[...], preferred_element_type=jnp.float32)
    h1 = jnp.maximum(h1 + b1_ref[...], 0.0)                 # (1, hid)
    g = jax.nn.sigmoid(
        jnp.dot(h1, w2_ref[...], preferred_element_type=jnp.float32)
        + b2_ref[...])                                      # (1, C)
    o_ref[...] = (x * g)[None, :, :]


def dtcf_forward(x, p):
    """SE-style channel attention, fully fused, one grid step per batch row."""
    b, h, w, c = x.shape
    hw = h * w
    hid = p["w1"].shape[0]
    xr = x.reshape(b, hw, c)
    out = pl.pallas_call(
        _dtcf_kernel,
        grid=(b,),
        in_specs=[
            pl.BlockSpec((1, hw, c), lambda i: (i, 0, 0)),
            pl.BlockSpec((c, hid), lambda i: (0, 0)),
            pl.BlockSpec((1, hid), lambda i: (0, 0)),
            pl.BlockSpec((hid, c), lambda i: (0, 0)),
            pl.BlockSpec((1, c), lambda i: (0, 0)),
        ],
        out_specs=pl.BlockSpec((1, hw, c), lambda i: (i, 0, 0)),
        out_shape=jax.ShapeDtypeStruct((b, hw, c), jnp.float32),
        compiler_params=pltpu.CompilerParams(
            dimension_semantics=("parallel",)),
    )(xr, p["w1"].T, p["b1"].reshape(1, hid), p["w2"].T, p["b2"].reshape(1, c))
    return out.reshape(b, h, w, c)


def _softmax_asp_kernel(lg_ref, x_ref, mu_ref, sg_ref):
    lg = lg_ref[0]                                          # (T, D)
    x = x_ref[0]                                            # (T, D)
    m = jnp.max(lg, axis=0, keepdims=True)
    e = jnp.exp(lg - m)
    w = e / jnp.sum(e, axis=0, keepdims=True)               # softmax over time
    mu = jnp.sum(x * w, axis=0, keepdims=True)              # (1, D)
    ex2 = jnp.sum(x * x * w, axis=0, keepdims=True)         # (1, D)
    sg = jnp.sqrt(jnp.maximum(ex2 - mu * mu, 1e-5))
    mu_ref[...] = mu[None, :, :]
    sg_ref[...] = sg[None, :, :]


def softmax_asp(logits, x_td):
    """Fused Softmax(dim=time) + attentive-statistics pooling."""
    b, t, d = logits.shape
    mu, sg = pl.pallas_call(
        _softmax_asp_kernel,
        grid=(b,),
        in_specs=[pl.BlockSpec((1, t, d), lambda i: (i, 0, 0)),
                  pl.BlockSpec((1, t, d), lambda i: (i, 0, 0))],
        out_specs=(pl.BlockSpec((1, 1, d), lambda i: (i, 0, 0)),
                   pl.BlockSpec((1, 1, d), lambda i: (i, 0, 0))),
        out_shape=(jax.ShapeDtypeStruct((b, 1, d), jnp.float32),
                   jax.ShapeDtypeStruct((b, 1, d), jnp.float32)),
        compiler_params=pltpu.CompilerParams(
            dimension_semantics=("parallel",)),
    )(logits, x_td)
    return mu.reshape(b, d), sg.reshape(b, d)


# ----------------------------- model building blocks ------------------------

def _bn_scale_shift(c):
    # TODO(synk): eval-mode BatchNorm with default running stats; thread real
    # (gamma, beta, mean, var) through here to match a trained checkpoint.
    scale = jnp.full((c,), 1.0 / (1.0 + _EPS_BN) ** 0.5, jnp.float32)
    shift = jnp.zeros((c,), jnp.float32)
    return scale, shift


def conv2d_bn_act(x, w, stride=1, act="none", residual=None):
    """NHWC conv (k in {1,3}, pad=(k-1)//2, bias=False) + folded BN + act.

    `residual` (same NHWC shape as the output), if given, is added before the
    activation inside the matmul epilogue (fused residual add + ReLU).
    """
    b, h, wd, cin = x.shape
    cout, _, k, _ = w.shape
    pad = (k - 1) // 2
    ho = (h + 2 * pad - k) // stride + 1
    wo = (wd + 2 * pad - k) // stride + 1
    xp = jnp.pad(x, ((0, 0), (pad, pad), (pad, pad), (0, 0)))
    # TODO(synk): im2col is still materialized by XLA (NHWC pad/slice/concat,
    # no transposes); in-kernel tap gathering would further cut HBM traffic.
    taps = []
    for i in range(k):
        for j in range(k):
            taps.append(xp[:, i:i + stride * (ho - 1) + 1:stride,
                            j:j + stride * (wo - 1) + 1:stride, :])
    col = jnp.concatenate(taps, axis=-1).reshape(b * ho * wo, k * k * cin)
    wm = w.transpose(2, 3, 1, 0).reshape(k * k * cin, cout)   # (kh,kw,cin)->K
    scale, shift = _bn_scale_shift(cout)
    res2d = residual.reshape(b * ho * wo, cout) if residual is not None else None
    y = mm_scale_shift_act(col, wm, scale, shift, act=act, residual=res2d)
    return y.reshape(b, ho, wo, cout)


def resblock_forward(x, blk):
    stride = blk["stride"]
    out1 = conv2d_bn_act(x, blk["conv1"], stride=stride, act="relu")
    if "short" in blk:
        sc = conv2d_bn_act(x, blk["short"], stride=stride, act="none")
    else:
        sc = x
    # conv2 + BN + residual add + ReLU fused in a single matmul epilogue.
    return conv2d_bn_act(out1, blk["conv2"], stride=1, act="relu", residual=sc)


# ----------------------------- parameter init -------------------------------

def init_params(key, num_blocks, num_filters, emb_dim, n_mels):
    keys = iter(jax.random.split(key, 128))

    def nk():
        return next(keys)

    def conv_w(cout, cin, k):
        std = (2.0 / (cout * k * k)) ** 0.5     # kaiming_normal fan_out / relu
        return (std * jax.random.normal(nk(), (cout, cin, k, k))).astype(jnp.float32)

    def lin(cout, cin):
        std = (1.0 / cin) ** 0.5
        w = (std * jax.random.normal(nk(), (cout, cin))).astype(jnp.float32)
        b = (std * jax.random.normal(nk(), (cout,))).astype(jnp.float32)
        return w, b

    def make_layer(nb, cin, cout, stride):
        blocks = []
        blk = {"conv1": conv_w(cout, cin, 3), "conv2": conv_w(cout, cout, 3),
               "stride": stride}
        if stride != 1 or cin != cout:
            blk["short"] = conv_w(cout, cin, 1)
        blocks.append(blk)
        for _ in range(1, nb):
            blocks.append({"conv1": conv_w(cout, cout, 3),
                           "conv2": conv_w(cout, cout, 3), "stride": 1})
        return blocks

    def make_dtcf(c, reduction=8):
        hid = max(c // reduction, 1)
        w1, b1 = lin(hid, c)
        w2, b2 = lin(c, hid)
        return {"w1": w1, "b1": b1, "w2": w2, "b2": b2}

    p = {"conv1_w": conv_w(num_filters[0], 1, 3)}
    p["layer1"] = make_layer(num_blocks[0], num_filters[0], num_filters[1], 1)
    p["layer2"] = make_layer(num_blocks[1], num_filters[1], num_filters[2], 2)
    p["layer3"] = make_layer(num_blocks[2], num_filters[2], num_filters[3], 2)
    p["layer4"] = make_layer(num_blocks[3], num_filters[3], num_filters[4], 2)
    p["dtcf1"] = make_dtcf(num_filters[1])
    p["dtcf2"] = make_dtcf(num_filters[2])
    p["dtcf3"] = make_dtcf(num_filters[3])
    p["dtcf4"] = make_dtcf(num_filters[4])

    out_l = n_mels // 8
    d = num_filters[-1] * out_l
    p["att_w1"], p["att_b1"] = lin(128, d)
    p["att_w2"], p["att_b2"] = lin(d, 128)
    p["fc_w"], p["fc_b"] = lin(emb_dim, d * 2)
    return p


# ----------------------------- forward pass ---------------------------------

def resnet_dtcf_forward(params, x):
    # x: (B, 1, n_mels, T)  (NCHW, like the PyTorch module)
    b, _, m, t = x.shape

    # InstanceNorm1d(n_mels): normalize each (batch, mel) row over time.
    xin = instance_norm_rows(x.reshape(b * m, t)).reshape(b, m, t, 1)  # NHWC

    h = conv2d_bn_act(xin, params["conv1_w"], stride=1, act="relu")
    for layer_name, dtcf_name in (("layer1", "dtcf1"), ("layer2", "dtcf2"),
                                  ("layer3", "dtcf3"), ("layer4", "dtcf4")):
        for blk in params[layer_name]:
            h = resblock_forward(h, blk)
        h = dtcf_forward(h, params[dtcf_name])

    bb, hf, tt, c = h.shape
    d = c * hf
    # PyTorch reshape(B, C*Hf, T') on NCHW -> feature index = c*Hf + hf.
    x_td = h.transpose(0, 2, 3, 1).reshape(bb, tt, d)          # (B, T', D)

    # attention: Conv1d(D,128,1) -> ReLU -> BN1d(128) -> Conv1d(128,D,1)
    a2 = x_td.reshape(bb * tt, d)
    h1 = mm_scale_shift_act(a2, params["att_w1"].T,
                            jnp.ones((128,), jnp.float32), params["att_b1"],
                            act="relu")
    s_bn, t_bn = _bn_scale_shift(128)          # fold eval-mode BN into conv2
    w2_eff = params["att_w2"] * s_bn[None, :]
    b2_eff = params["att_w2"] @ t_bn + params["att_b2"]
    h2 = mm_scale_shift_act(h1, w2_eff.T, jnp.ones((d,), jnp.float32), b2_eff)
    logits = h2.reshape(bb, tt, d)

    # fused Softmax(dim=time) + attentive statistics pooling
    mu, sg = softmax_asp(logits, x_td)
    cat = jnp.concatenate([mu, sg], axis=1)                    # (B, 2D)

    emb = mm_scale_shift_act(
        cat, params["fc_w"].T,
        jnp.ones((params["fc_w"].shape[0],), jnp.float32), params["fc_b"])
    return emb


# ----------------------------- main ------------------------------------------

if __name__ == "__main__":
    # Small configuration consistent with the module's constructor:
    num_blocks = [1, 1, 1, 1]
    num_filters = [8, 8, 16, 32, 64]
    emb_dim = 32
    n_mels = 16            # must be divisible by 8 (three stride-2 layers)
    batch, time = 2, 16

    key = jax.random.PRNGKey(0)
    pkey, xkey = jax.random.split(key)
    params = init_params(pkey, num_blocks, num_filters, emb_dim, n_mels)
    x = jax.random.normal(xkey, (batch, 1, n_mels, time), jnp.float32)

    fwd = jax.jit(lambda inp: resnet_dtcf_forward(params, inp))
    out = fwd(x)
    out = jax.block_until_ready(out)

    assert out.shape == (batch, emb_dim), out.shape
    assert bool(jnp.all(jnp.isfinite(out)))
    print("KERNEL_OK")
</pallas_src>

<mosaic_0001>
module attributes {stable_mosaic.version = 11 : i64} {
  func.func @_instance_norm_kernel(%arg0: memref<32x16xf32, #tpu.memory_space<vmem>>, %arg1: memref<32x16xf32, #tpu.memory_space<vmem>>) attributes {dimension_semantics = [], scalar_prefetch = 0 : i64, scratch_operands = 0 : i64, tpu.core_type = #tpu.core_type<tc>} {
    %c0 = arith.constant 0 : index
    %c0_0 = arith.constant 0 : index
    %0 = vector.load %arg0[%c0, %c0_0] : memref<32x16xf32, #tpu.memory_space<vmem>>, vector<32x16xf32>
    %cst = arith.constant dense<0.000000e+00> : vector<32xf32>
    %1 = vector.multi_reduction <add>, %0, %cst [1] : vector<32x16xf32> to vector<32xf32>
    %2 = vector.shape_cast %1 : vector<32xf32> to vector<32x1xf32>
    %cst_1 = arith.constant 1.600000e+01 : f32
    %3 = vector.broadcast %cst_1 : f32 to vector<32x1xf32>
    %4 = arith.divf %2, %3 : vector<32x1xf32>
    %5 = vector.broadcast %4 : vector<32x1xf32> to vector<32x16xf32>
    %6 = arith.subf %0, %5 : vector<32x16xf32>
    %7 = arith.mulf %6, %6 : vector<32x16xf32>
    %cst_2 = arith.constant dense<0.000000e+00> : vector<32xf32>
    %8 = vector.multi_reduction <add>, %7, %cst_2 [1] : vector<32x16xf32> to vector<32xf32>
    %9 = vector.shape_cast %8 : vector<32xf32> to vector<32x1xf32>
    %cst_3 = arith.constant 1.600000e+01 : f32
    %10 = vector.broadcast %cst_3 : f32 to vector<32x1xf32>
    %11 = arith.divf %9, %10 : vector<32x1xf32>
    %12 = vector.broadcast %4 : vector<32x1xf32> to vector<32x16xf32>
    %13 = arith.subf %0, %12 : vector<32x16xf32>
    %cst_4 = arith.constant 9.99999974E-6 : f32
    %14 = vector.broadcast %cst_4 : f32 to vector<32x1xf32>
    %15 = arith.addf %11, %14 : vector<32x1xf32>
    %16 = math.rsqrt %15 : vector<32x1xf32>
    %17 = vector.broadcast %16 : vector<32x1xf32> to vector<32x16xf32>
    %18 = arith.mulf %13, %17 : vector<32x16xf32>
    %c0_5 = arith.constant 0 : index
    %c0_6 = arith.constant 0 : index
    %19 = vector.load %arg1[%c0_5, %c0_6] : memref<32x16xf32, #tpu.memory_space<vmem>>, vector<32x16xf32>
    tpu.vector_store %arg1[%c0_5, %c0_6], %18 {strides = array<i32>} : memref<32x16xf32, #tpu.memory_space<vmem>>, vector<32x16xf32>,
    return
  }
}

module attributes {stable_mosaic.version = 11 : i64} {
  func.func @_mm_fused_kernel(%arg0: i32, %arg1: i32, %arg2: i32, %arg3: memref<256x128xbf16, #tpu.memory_space<vmem>>, %arg4: memref<128x128xbf16, #tpu.memory_space<vmem>>, %arg5: memref<1x128xf32, #tpu.memory_space<vmem>>, %arg6: memref<1x128xf32, #tpu.memory_space<vmem>>, %arg7: memref<256x128xf32, #tpu.memory_space<vmem>>, %arg8: memref<256x128xf32, #tpu.memory_space<vmem>>) attributes {dimension_semantics = [#tpu.dimension_semantics<parallel>, #tpu.dimension_semantics<parallel>, #tpu.dimension_semantics<arbitrary>], iteration_bounds = array<i64: 2, 1, 1>, scalar_prefetch = 0 : i64, scratch_operands = 1 : i64, tpu.core_type = #tpu.core_type<tc>, window_params = [{transform_indices = @transform_0, window_bounds = array<i64: 256, 128>}, {transform_indices = @transform_1, window_bounds = array<i64: 128, 128>}, {transform_indices = @transform_2, window_bounds = array<i64: 1, 128>}, {transform_indices = @transform_3, window_bounds = array<i64: 1, 128>}, {transform_indices = @transform_4, window_bounds = array<i64: 256, 128>}]} {
    %c0_i32 = arith.constant 0 : i32
    %0 = arith.cmpi eq, %arg2, %c0_i32 : i32
    %1 = arith.extui %0 : i1 to i32
    %c0_i32_0 = arith.constant 0 : i32
    %2 = arith.cmpi ne, %1, %c0_i32_0 : i32
    scf.if %2 {
      %cst_10 = arith.constant 0.000000e+00 : f32
      %12 = vector.broadcast %cst_10 : f32 to vector<256x128xf32>
      %c0_11 = arith.constant 0 : index
      %c0_12 = arith.constant 0 : index
      %13 = vector.load %arg8[%c0_11, %c0_12] : memref<256x128xf32, #tpu.memory_space<vmem>>, vector<256x128xf32>
      tpu.vector_store %arg8[%c0_11, %c0_12], %12 {strides = array<i32>} : memref<256x128xf32, #tpu.memory_space<vmem>>, vector<256x128xf32>,
    } else {
    }
    %c0 = arith.constant 0 : index
    %c0_1 = arith.constant 0 : index
    %3 = vector.load %arg8[%c0, %c0_1] : memref<256x128xf32, #tpu.memory_space<vmem>>, vector<256x128xf32>
    %c0_2 = arith.constant 0 : index
    %c0_3 = arith.constant 0 : index
    %4 = vector.load %arg3[%c0_2, %c0_3] : memref<256x128xbf16, #tpu.memory_space<vmem>>, vector<256x128xbf16>
    %c0_4 = arith.constant 0 : index
    %c0_5 = arith.constant 0 : index
    %5 = vector.load %arg4[%c0_4, %c0_5] : memref<128x128xbf16, #tpu.memory_space<vmem>>, vector<128x128xbf16>
    %cst = arith.constant dense<0.000000e+00> : vector<256x128xf32>
    %6 = tpu.matmul %4, %5, %cst {dimension_numbers = #tpu.dot_dimension_numbers<[1], [0], [0], [1], [0, 0, 1, 1], [], []>} : vector<256x128xbf16>, vector<128x128xbf16>, vector<256x128xf32> -> vector<256x128xf32>
    %7 = arith.addf %3, %6 : vector<256x128xf32>
    %c0_6 = arith.constant 0 : index
    %c0_7 = arith.constant 0 : index
    %8 = vector.load %arg8[%c0_6, %c0_7] : memref<256x128xf32, #tpu.memory_space<vmem>>, vector<256x128xf32>
    tpu.vector_store %arg8[%c0_6, %c0_7], %7 {strides = array<i32>} : memref<256x128xf32, #tpu.memory_space<vmem>>, vector<256x128xf32>,
    %c0_i32_8 = arith.constant 0 : i32
    %9 = arith.cmpi eq, %arg2, %c0_i32_8 : i32
    %10 = arith.extui %9 : i1 to i32
    %c0_i32_9 = arith.constant 0 : i32
    %11 = arith.cmpi ne, %10, %c0_i32_9 : i32
    scf.if %11 {
      %c0_10 = arith.constant 0 : index
      %c0_11 = arith.constant 0 : index
      %12 = vector.load %arg8[%c0_10, %c0_11] : memref<256x128xf32, #tpu.memory_space<vmem>>, vector<256x128xf32>
      %c0_12 = arith.constant 0 : index
      %c0_13 = arith.constant 0 : index
      %13 = vector.load %arg5[%c0_12, %c0_13] : memref<1x128xf32, #tpu.memory_space<vmem>>, vector<1x128xf32>
      %14 = vector.broadcast %13 : vector<1x128xf32> to vector<256x128xf32>
      %15 = arith.mulf %12, %14 : vector<256x128xf32>
      %c0_14 = arith.constant 0 : index
      %c0_15 = arith.constant 0 : index
      %16 = vector.load %arg6[%c0_14, %c0_15] : memref<1x128xf32, #tpu.memory_space<vmem>>, vector<1x128xf32>
      %17 = vector.broadcast %16 : vector<1x128xf32> to vector<256x128xf32>
      %18 = arith.addf %15, %17 : vector<256x128xf32>
      %cst_16 = arith.constant 0.000000e+00 : f32
      %19 = vector.broadcast %cst_16 : f32 to vector<256x128xf32>
      %20 = arith.maximumf %18, %19 : vector<256x128xf32>
      %c0_17 = arith.constant 0 : index
      %c0_18 = arith.constant 0 : index
      %21 = vector.load %arg7[%c0_17, %c0_18] : memref<256x128xf32, #tpu.memory_space<vmem>>, vector<256x128xf32>
      tpu.vector_store %arg7[%c0_17, %c0_18], %20 {strides = array<i32>} : memref<256x128xf32, #tpu.memory_space<vmem>>, vector<256x128xf32>,
    } else {
    }
    return
  }
  func.func @transform_0(%arg0: i32, %arg1: i32, %arg2: i32) -> (i32, i32) {
    %c0_i32 = arith.constant 0 : i32
    return %arg0, %arg2 : i32, i32
  }
  func.func @transform_1(%arg0: i32, %arg1: i32, %arg2: i32) -> (i32, i32) {
    %c0_i32 = arith.constant 0 : i32
    return %arg2, %arg1 : i32, i32
  }
  func.func @transform_2(%arg0: i32, %arg1: i32, %arg2: i32) -> (i32, i32) {
    %c0_i32 = arith.constant 0 : i32
    %c0_i32_0 = arith.constant 0 : i32
    return %c0_i32, %arg1 : i32, i32
  }
  func.func @transform_3(%arg0: i32, %arg1: i32, %arg2: i32) -> (i32, i32) {
    %c0_i32 = arith.constant 0 : i32
    %c0_i32_0 = arith.constant 0 : i32
    return %c0_i32, %arg1 : i32, i32
  }
  func.func @transform_4(%arg0: i32, %arg1: i32, %arg2: i32) -> (i32, i32) {
    %c0_i32 = arith.constant 0 : i32
    return %arg0, %arg1 : i32, i32
  }
}

module attributes {stable_mosaic.version = 11 : i64} {
  func.func @_mm_fused_kernel(%arg0: i32, %arg1: i32, %arg2: i32, %arg3: memref<256x128xbf16, #tpu.memory_space<vmem>>, %arg4: memref<128x128xbf16, #tpu.memory_space<vmem>>, %arg5: memref<1x128xf32, #tpu.memory_space<vmem>>, %arg6: memref<1x128xf32, #tpu.memory_space<vmem>>, %arg7: memref<256x128xf32, #tpu.memory_space<vmem>>, %arg8: memref<256x128xf32, #tpu.memory_space<vmem>>, %arg9: memref<256x128xf32, #tpu.memory_space<vmem>>) attributes {dimension_semantics = [#tpu.dimension_semantics<parallel>, #tpu.dimension_semantics<parallel>, #tpu.dimension_semantics<arbitrary>], iteration_bounds = array<i64: 2, 1, 1>, scalar_prefetch = 0 : i64, scratch_operands = 1 : i64, tpu.core_type = #tpu.core_type<tc>, window_params = [{transform_indices = @transform_0, window_bounds = array<i64: 256, 128>}, {transform_indices = @transform_1, window_bounds = array<i64: 128, 128>}, {transform_indices = @transform_2, window_bounds = array<i64: 1, 128>}, {transform_indices = @transform_3, window_bounds = array<i64: 1, 128>}, {transform_indices = @transform_4, window_bounds = array<i64: 256, 128>}, {transform_indices = @transform_5, window_bounds = array<i64: 256, 128>}]} {
    %c0_i32 = arith.constant 0 : i32
    %0 = arith.cmpi eq, %arg2, %c0_i32 : i32
    %1 = arith.extui %0 : i1 to i32
    %c0_i32_0 = arith.constant 0 : i32
    %2 = arith.cmpi ne, %1, %c0_i32_0 : i32
    scf.if %2 {
      %cst_10 = arith.constant 0.000000e+00 : f32
      %12 = vector.broadcast %cst_10 : f32 to vector<256x128xf32>
      %c0_11 = arith.constant 0 : index
      %c0_12 = arith.constant 0 : index
      %13 = vector.load %arg9[%c0_11, %c0_12] : memref<256x128xf32, #tpu.memory_space<vmem>>, vector<256x128xf32>
      tpu.vector_store %arg9[%c0_11, %c0_12], %12 {strides = array<i32>} : memref<256x128xf32, #tpu.memory_space<vmem>>, vector<256x128xf32>,
    } else {
    }
    %c0 = arith.constant 0 : index
    %c0_1 = arith.constant 0 : index
    %3 = vector.load %arg9[%c0, %c0_1] : memref<256x128xf32, #tpu.memory_space<vmem>>, vector<256x128xf32>
    %c0_2 = arith.constant 0 : index
    %c0_3 = arith.constant 0 : index
    %4 = vector.load %arg3[%c0_2, %c0_3] : memref<256x128xbf16, #tpu.memory_space<vmem>>, vector<256x128xbf16>
    %c0_4 = arith.constant 0 : index
    %c0_5 = arith.constant 0 : index
    %5 = vector.load %arg4[%c0_4, %c0_5] : memref<128x128xbf16, #tpu.memory_space<vmem>>, vector<128x128xbf16>
    %cst = arith.constant dense<0.000000e+00> : vector<256x128xf32>
    %6 = tpu.matmul %4, %5, %cst {dimension_numbers = #tpu.dot_dimension_numbers<[1], [0], [0], [1], [0, 0, 1, 1], [], []>} : vector<256x128xbf16>, vector<128x128xbf16>, vector<256x128xf32> -> vector<256x128xf32>
    %7 = arith.addf %3, %6 : vector<256x128xf32>
    %c0_6 = arith.constant 0 : index
    %c0_7 = arith.constant 0 : index
    %8 = vector.load %arg9[%c0_6, %c0_7] : memref<256x128xf32, #tpu.memory_space<vmem>>, vector<256x128xf32>
    tpu.vector_store %arg9[%c0_6, %c0_7], %7 {strides = array<i32>} : memref<256x128xf32, #tpu.memory_space<vmem>>, vector<256x128xf32>,
    %c0_i32_8 = arith.constant 0 : i32
    %9 = arith.cmpi eq, %arg2, %c0_i32_8 : i32
    %10 = arith.extui %9 : i1 to i32
    %c0_i32_9 = arith.constant 0 : i32
    %11 = arith.cmpi ne, %10, %c0_i32_9 : i32
    scf.if %11 {
      %c0_10 = arith.constant 0 : index
      %c0_11 = arith.constant 0 : index
      %12 = vector.load %arg9[%c0_10, %c0_11] : memref<256x128xf32, #tpu.memory_space<vmem>>, vector<256x128xf32>
      %c0_12 = arith.constant 0 : index
      %c0_13 = arith.constant 0 : index
      %13 = vector.load %arg5[%c0_12, %c0_13] : memref<1x128xf32, #tpu.memory_space<vmem>>, vector<1x128xf32>
      %14 = vector.broadcast %13 : vector<1x128xf32> to vector<256x128xf32>
      %15 = arith.mulf %12, %14 : vector<256x128xf32>
      %c0_14 = arith.constant 0 : index
      %c0_15 = arith.constant 0 : index
      %16 = vector.load %arg6[%c0_14, %c0_15] : memref<1x128xf32, #tpu.memory_space<vmem>>, vector<1x128xf32>
      %17 = vector.broadcast %16 : vector<1x128xf32> to vector<256x128xf32>
      %18 = arith.addf %15, %17 : vector<256x128xf32>
      %c0_16 = arith.constant 0 : index
      %c0_17 = arith.constant 0 : index
      %19 = vector.load %arg7[%c0_16, %c0_17] : memref<256x128xf32, #tpu.memory_space<vmem>>, vector<256x128xf32>
      %20 = arith.addf %18, %19 : vector<256x128xf32>
      %cst_18 = arith.constant 0.000000e+00 : f32
      %21 = vector.broadcast %cst_18 : f32 to vector<256x128xf32>
      %22 = arith.maximumf %20, %21 : vector<256x128xf32>
      %c0_19 = arith.constant 0 : index
      %c0_20 = arith.constant 0 : index
      %23 = vector.load %arg8[%c0_19, %c0_20] : memref<256x128xf32, #tpu.memory_space<vmem>>, vector<256x128xf32>
      tpu.vector_store %arg8[%c0_19, %c0_20], %22 {strides = array<i32>} : memref<256x128xf32, #tpu.memory_space<vmem>>, vector<256x128xf32>,
    } else {
    }
    return
  }
  func.func @transform_0(%arg0: i32, %arg1: i32, %arg2: i32) -> (i32, i32) {
    %c0_i32 = arith.constant 0 : i32
    return %arg0, %arg2 : i32, i32
  }
  func.func @transform_1(%arg0: i32, %arg1: i32, %arg2: i32) -> (i32, i32) {
    %c0_i32 = arith.constant 0 : i32
    return %arg2, %arg1 : i32, i32
  }
  func.func @transform_2(%arg0: i32, %arg1: i32, %arg2: i32) -> (i32, i32) {
    %c0_i32 = arith.constant 0 : i32
    %c0_i32_0 = arith.constant 0 : i32
    return %c0_i32, %arg1 : i32, i32
  }
  func.func @transform_3(%arg0: i32, %arg1: i32, %arg2: i32) -> (i32, i32) {
    %c0_i32 = arith.constant 0 : i32
    %c0_i32_0 = arith.constant 0 : i32
    return %c0_i32, %arg1 : i32, i32
  }
  func.func @transform_4(%arg0: i32, %arg1: i32, %arg2: i32) -> (i32, i32) {
    %c0_i32 = arith.constant 0 : i32
    return %arg0, %arg1 : i32, i32
  }
  func.func @transform_5(%arg0: i32, %arg1: i32, %arg2: i32) -> (i32, i32) {
    %c0_i32 = arith.constant 0 : i32
    return %arg0, %arg1 : i32, i32
  }
}

module attributes {stable_mosaic.version = 11 : i64} {
  func.func @_dtcf_kernel(%arg0: i32, %arg1: memref<1x256x8xf32, #tpu.memory_space<vmem>>, %arg2: memref<8x1xf32, #tpu.memory_space<vmem>>, %arg3: memref<1x1xf32, #tpu.memory_space<vmem>>, %arg4: memref<1x8xf32, #tpu.memory_space<vmem>>, %arg5: memref<1x8xf32, #tpu.memory_space<vmem>>, %arg6: memref<1x256x8xf32, #tpu.memory_space<vmem>>) attributes {dimension_semantics = [#tpu.dimension_semantics<parallel>], iteration_bounds = array<i64: 2>, scalar_prefetch = 0 : i64, scratch_operands = 0 : i64, tpu.core_type = #tpu.core_type<tc>, window_params = [{transform_indices = @transform_0, window_bounds = array<i64: 1, 256, 8>}, {pipeline_mode = #tpu.pipeline_mode<synchronous>, transform_indices = @transform_1, window_bounds = array<i64: 8, 1>}, {pipeline_mode = #tpu.pipeline_mode<synchronous>, transform_indices = @transform_2, window_bounds = array<i64: 1, 1>}, {pipeline_mode = #tpu.pipeline_mode<synchronous>, transform_indices = @transform_3, window_bounds = array<i64: 1, 8>}, {pipeline_mode = #tpu.pipeline_mode<synchronous>, transform_indices = @transform_4, window_bounds = array<i64: 1, 8>}, {transform_indices = @transform_5, window_bounds = array<i64: 1, 256, 8>}]} {
    %c0 = arith.constant 0 : index
    %c0_0 = arith.constant 0 : index
    %c0_1 = arith.constant 0 : index
    %0 = vector.load %arg1[%c0, %c0_0, %c0_1] : memref<1x256x8xf32, #tpu.memory_space<vmem>>, vector<1x256x8xf32>
    %1 = vector.shape_cast %0 : vector<1x256x8xf32> to vector<256x8xf32>
    %cst = arith.constant dense<0.000000e+00> : vector<8xf32>
    %2 = vector.multi_reduction <add>, %1, %cst [0] : vector<256x8xf32> to vector<8xf32>
    %3 = vector.shape_cast %2 : vector<8xf32> to vector<1x8xf32>
    %cst_2 = arith.constant 2.560000e+02 : f32
    %4 = vector.broadcast %cst_2 : f32 to vector<1x8xf32>
    %5 = arith.divf %3, %4 : vector<1x8xf32>
    %c0_3 = arith.constant 0 : index
    %c0_4 = arith.constant 0 : index
    %6 = vector.load %arg2[%c0_3, %c0_4] : memref<8x1xf32, #tpu.memory_space<vmem>>, vector<8x1xf32>
    %cst_5 = arith.constant dense<0.000000e+00> : vector<1x1xf32>
    %7 = tpu.matmul %5, %6, %cst_5 {dimension_numbers = #tpu.dot_dimension_numbers<[1], [0], [0], [1], [0, 0, 1, 1], [], []>} : vector<1x8xf32>, vector<8x1xf32>, vector<1x1xf32> -> vector<1x1xf32>
    %c0_6 = arith.constant 0 : index
    %c0_7 = arith.constant 0 : index
    %8 = vector.load %arg3[%c0_6, %c0_7] : memref<1x1xf32, #tpu.memory_space<vmem>>, vector<1x1xf32>
    %9 = arith.addf %7, %8 : vector<1x1xf32>
    %cst_8 = arith.constant 0.000000e+00 : f32
    %10 = vector.broadcast %cst_8 : f32 to vector<1x1xf32>
    %11 = arith.maximumf %9, %10 : vector<1x1xf32>
    %c0_9 = arith.constant 0 : index
    %c0_10 = arith.constant 0 : index
    %12 = vector.load %arg4[%c0_9, %c0_10] : memref<1x8xf32, #tpu.memory_space<vmem>>, vector<1x8xf32>
    %cst_11 = arith.constant dense<0.000000e+00> : vector<1x8xf32>
    %13 = tpu.matmul %11, %12, %cst_11 {dimension_numbers = #tpu.dot_dimension_numbers<[1], [0], [0], [1], [0, 0, 1, 1], [], []>} : vector<1x1xf32>, vector<1x8xf32>, vector<1x8xf32> -> vector<1x8xf32>
    %c0_12 = arith.constant 0 : index
    %c0_13 = arith.constant 0 : index
    %14 = vector.load %arg5[%c0_12, %c0_13] : memref<1x8xf32, #tpu.memory_space<vmem>>, vector<1x8xf32>
    %15 = arith.addf %13, %14 : vector<1x8xf32>
    %16 = arith.negf %15 : vector<1x8xf32>
    %17 = math.exp %16 : vector<1x8xf32>
    %cst_14 = arith.constant 1.000000e+00 : f32
    %18 = vector.broadcast %cst_14 : f32 to vector<1x8xf32>
    %19 = arith.addf %18, %17 : vector<1x8xf32>
    %20 = arith.divf %18, %19 : vector<1x8xf32>
    %21 = vector.broadcast %20 : vector<1x8xf32> to vector<256x8xf32>
    %22 = arith.mulf %1, %21 : vector<256x8xf32>
    %23 = vector.shape_cast %22 : vector<256x8xf32> to vector<1x256x8xf32>
    %c0_15 = arith.constant 0 : index
    %c0_16 = arith.constant 0 : index
    %c0_17 = arith.constant 0 : index
    %24 = vector.load %arg6[%c0_15, %c0_16, %c0_17] : memref<1x256x8xf32, #tpu.memory_space<vmem>>, vector<1x256x8xf32>
    tpu.vector_store %arg6[%c0_15, %c0_16, %c0_17], %23 {strides = array<i32>} : memref<1x256x8xf32, #tpu.memory_space<vmem>>, vector<1x256x8xf32>,
    return
  }
  func.func @transform_0(%arg0: i32) -> (i32, i32, i32) {
    %c0_i32 = arith.constant 0 : i32
    %c0_i32_0 = arith.constant 0 : i32
    %c0_i32_1 = arith.constant 0 : i32
    return %arg0, %c0_i32, %c0_i32_0 : i32, i32, i32
  }
  func.func @transform_1(%arg0: i32) -> (i32, i32) {
    %c0_i32 = arith.constant 0 : i32
    %c0_i32_0 = arith.constant 0 : i32
    %c0_i32_1 = arith.constant 0 : i32
    return %c0_i32, %c0_i32_0 : i32, i32
  }
  func.func @transform_2(%arg0: i32) -> (i32, i32) {
    %c0_i32 = arith.constant 0 : i32
    %c0_i32_0 = arith.constant 0 : i32
    %c0_i32_1 = arith.constant 0 : i32
    return %c0_i32, %c0_i32_0 : i32, i32
  }
  func.func @transform_3(%arg0: i32) -> (i32, i32) {
    %c0_i32 = arith.constant 0 : i32
    %c0_i32_0 = arith.constant 0 : i32
    %c0_i32_1 = arith.constant 0 : i32
    return %c0_i32, %c0_i32_0 : i32, i32
  }
  func.func @transform_4(%arg0: i32) -> (i32, i32) {
    %c0_i32 = arith.constant 0 : i32
    %c0_i32_0 = arith.constant 0 : i32
    %c0_i32_1 = arith.constant 0 : i32
    return %c0_i32, %c0_i32_0 : i32, i32
  }
  func.func @transform_5(%arg0: i32) -> (i32, i32, i32) {
    %c0_i32 = arith.constant 0 : i32
    %c0_i32_0 = arith.constant 0 : i32
    %c0_i32_1 = arith.constant 0 : i32
    return %arg0, %c0_i32, %c0_i32_0 : i32, i32, i32
  }
}

module attributes {stable_mosaic.version = 11 : i64} {
  func.func @_mm_fused_kernel(%arg0: i32, %arg1: i32, %arg2: i32, %arg3: memref<128x128xbf16, #tpu.memory_space<vmem>>, %arg4: memref<128x128xbf16, #tpu.memory_space<vmem>>, %arg5: memref<1x128xf32, #tpu.memory_space<vmem>>, %arg6: memref<1x128xf32, #tpu.memory_space<vmem>>, %arg7: memref<128x128xf32, #tpu.memory_space<vmem>>, %arg8: memref<128x128xf32, #tpu.memory_space<vmem>>) attributes {dimension_semantics = [#tpu.dimension_semantics<parallel>, #tpu.dimension_semantics<parallel>, #tpu.dimension_semantics<arbitrary>], iteration_bounds = array<i64: 1, 1, 1>, scalar_prefetch = 0 : i64, scratch_operands = 1 : i64, tpu.core_type = #tpu.core_type<tc>, window_params = [{transform_indices = @transform_0, window_bounds = array<i64: 128, 128>}, {transform_indices = @transform_1, window_bounds = array<i64: 128, 128>}, {transform_indices = @transform_2, window_bounds = array<i64: 1, 128>}, {transform_indices = @transform_3, window_bounds = array<i64: 1, 128>}, {transform_indices = @transform_4, window_bounds = array<i64: 128, 128>}]} {
    %c0_i32 = arith.constant 0 : i32
    %0 = arith.cmpi eq, %arg2, %c0_i32 : i32
    %1 = arith.extui %0 : i1 to i32
    %c0_i32_0 = arith.constant 0 : i32
    %2 = arith.cmpi ne, %1, %c0_i32_0 : i32
    scf.if %2 {
      %cst_10 = arith.constant 0.000000e+00 : f32
      %12 = vector.broadcast %cst_10 : f32 to vector<128x128xf32>
      %c0_11 = arith.constant 0 : index
      %c0_12 = arith.constant 0 : index
      %13 = vector.load %arg8[%c0_11, %c0_12] : memref<128x128xf32, #tpu.memory_space<vmem>>, vector<128x128xf32>
      tpu.vector_store %arg8[%c0_11, %c0_12], %12 {strides = array<i32>} : memref<128x128xf32, #tpu.memory_space<vmem>>, vector<128x128xf32>,
    } else {
    }
    %c0 = arith.constant 0 : index
    %c0_1 = arith.constant 0 : index
    %3 = vector.load %arg8[%c0, %c0_1] : memref<128x128xf32, #tpu.memory_space<vmem>>, vector<128x128xf32>
    %c0_2 = arith.constant 0 : index
    %c0_3 = arith.constant 0 : index
    %4 = vector.load %arg3[%c0_2, %c0_3] : memref<128x128xbf16, #tpu.memory_space<vmem>>, vector<128x128xbf16>
    %c0_4 = arith.constant 0 : index
    %c0_5 = arith.constant 0 : index
    %5 = vector.load %arg4[%c0_4, %c0_5] : memref<128x128xbf16, #tpu.memory_space<vmem>>, vector<128x128xbf16>
    %cst = arith.constant dense<0.000000e+00> : vector<128x128xf32>
    %6 = tpu.matmul %4, %5, %cst {dimension_numbers = #tpu.dot_dimension_numbers<[1], [0], [0], [1], [0, 0, 1, 1], [], []>} : vector<128x128xbf16>, vector<128x128xbf16>, vector<128x128xf32> -> vector<128x128xf32>
    %7 = arith.addf %3, %6 : vector<128x128xf32>
    %c0_6 = arith.constant 0 : index
    %c0_7 = arith.constant 0 : index
    %8 = vector.load %arg8[%c0_6, %c0_7] : memref<128x128xf32, #tpu.memory_space<vmem>>, vector<128x128xf32>
    tpu.vector_store %arg8[%c0_6, %c0_7], %7 {strides = array<i32>} : memref<128x128xf32, #tpu.memory_space<vmem>>, vector<128x128xf32>,
    %c0_i32_8 = arith.constant 0 : i32
    %9 = arith.cmpi eq, %arg2, %c0_i32_8 : i32
    %10 = arith.extui %9 : i1 to i32
    %c0_i32_9 = arith.constant 0 : i32
    %11 = arith.cmpi ne, %10, %c0_i32_9 : i32
    scf.if %11 {
      %c0_10 = arith.constant 0 : index
      %c0_11 = arith.constant 0 : index
      %12 = vector.load %arg8[%c0_10, %c0_11] : memref<128x128xf32, #tpu.memory_space<vmem>>, vector<128x128xf32>
      %c0_12 = arith.constant 0 : index
      %c0_13 = arith.constant 0 : index
      %13 = vector.load %arg5[%c0_12, %c0_13] : memref<1x128xf32, #tpu.memory_space<vmem>>, vector<1x128xf32>
      %14 = vector.broadcast %13 : vector<1x128xf32> to vector<128x128xf32>
      %15 = arith.mulf %12, %14 : vector<128x128xf32>
      %c0_14 = arith.constant 0 : index
      %c0_15 = arith.constant 0 : index
      %16 = vector.load %arg6[%c0_14, %c0_15] : memref<1x128xf32, #tpu.memory_space<vmem>>, vector<1x128xf32>
      %17 = vector.broadcast %16 : vector<1x128xf32> to vector<128x128xf32>
      %18 = arith.addf %15, %17 : vector<128x128xf32>
      %cst_16 = arith.constant 0.000000e+00 : f32
      %19 = vector.broadcast %cst_16 : f32 to vector<128x128xf32>
      %20 = arith.maximumf %18, %19 : vector<128x128xf32>
      %c0_17 = arith.constant 0 : index
      %c0_18 = arith.constant 0 : index
      %21 = vector.load %arg7[%c0_17, %c0_18] : memref<128x128xf32, #tpu.memory_space<vmem>>, vector<128x128xf32>
      tpu.vector_store %arg7[%c0_17, %c0_18], %20 {strides = array<i32>} : memref<128x128xf32, #tpu.memory_space<vmem>>, vector<128x128xf32>,
    } else {
    }
    return
  }
  func.func @transform_0(%arg0: i32, %arg1: i32, %arg2: i32) -> (i32, i32) {
    %c0_i32 = arith.constant 0 : i32
    return %arg0, %arg2 : i32, i32
  }
  func.func @transform_1(%arg0: i32, %arg1: i32, %arg2: i32) -> (i32, i32) {
    %c0_i32 = arith.constant 0 : i32
    return %arg2, %arg1 : i32, i32
  }
  func.func @transform_2(%arg0: i32, %arg1: i32, %arg2: i32) -> (i32, i32) {
    %c0_i32 = arith.constant 0 : i32
    %c0_i32_0 = arith.constant 0 : i32
    return %c0_i32, %arg1 : i32, i32
  }
  func.func @transform_3(%arg0: i32, %arg1: i32, %arg2: i32) -> (i32, i32) {
    %c0_i32 = arith.constant 0 : i32
    %c0_i32_0 = arith.constant 0 : i32
    return %c0_i32, %arg1 : i32, i32
  }
  func.func @transform_4(%arg0: i32, %arg1: i32, %arg2: i32) -> (i32, i32) {
    %c0_i32 = arith.constant 0 : i32
    return %arg0, %arg1 : i32, i32
  }
}

module attributes {stable_mosaic.version = 11 : i64} {
  func.func @_mm_fused_kernel(%arg0: i32, %arg1: i32, %arg2: i32, %arg3: memref<128x128xbf16, #tpu.memory_space<vmem>>, %arg4: memref<128x128xbf16, #tpu.memory_space<vmem>>, %arg5: memref<1x128xf32, #tpu.memory_space<vmem>>, %arg6: memref<1x128xf32, #tpu.memory_space<vmem>>, %arg7: memref<128x128xf32, #tpu.memory_space<vmem>>, %arg8: memref<128x128xf32, #tpu.memory_space<vmem>>) attributes {dimension_semantics = [#tpu.dimension_semantics<parallel>, #tpu.dimension_semantics<parallel>, #tpu.dimension_semantics<arbitrary>], iteration_bounds = array<i64: 1, 1, 1>, scalar_prefetch = 0 : i64, scratch_operands = 1 : i64, tpu.core_type = #tpu.core_type<tc>, window_params = [{transform_indices = @transform_0, window_bounds = array<i64: 128, 128>}, {transform_indices = @transform_1, window_bounds = array<i64: 128, 128>}, {transform_indices = @transform_2, window_bounds = array<i64: 1, 128>}, {transform_indices = @transform_3, window_bounds = array<i64: 1, 128>}, {transform_indices = @transform_4, window_bounds = array<i64: 128, 128>}]} {
    %c0_i32 = arith.constant 0 : i32
    %0 = arith.cmpi eq, %arg2, %c0_i32 : i32
    %1 = arith.extui %0 : i1 to i32
    %c0_i32_0 = arith.constant 0 : i32
    %2 = arith.cmpi ne, %1, %c0_i32_0 : i32
    scf.if %2 {
      %cst_10 = arith.constant 0.000000e+00 : f32
      %12 = vector.broadcast %cst_10 : f32 to vector<128x128xf32>
      %c0_11 = arith.constant 0 : index
      %c0_12 = arith.constant 0 : index
      %13 = vector.load %arg8[%c0_11, %c0_12] : memref<128x128xf32, #tpu.memory_space<vmem>>, vector<128x128xf32>
      tpu.vector_store %arg8[%c0_11, %c0_12], %12 {strides = array<i32>} : memref<128x128xf32, #tpu.memory_space<vmem>>, vector<128x128xf32>,
    } else {
    }
    %c0 = arith.constant 0 : index
    %c0_1 = arith.constant 0 : index
    %3 = vector.load %arg8[%c0, %c0_1] : memref<128x128xf32, #tpu.memory_space<vmem>>, vector<128x128xf32>
    %c0_2 = arith.constant 0 : index
    %c0_3 = arith.constant 0 : index
    %4 = vector.load %arg3[%c0_2, %c0_3] : memref<128x128xbf16, #tpu.memory_space<vmem>>, vector<128x128xbf16>
    %c0_4 = arith.constant 0 : index
    %c0_5 = arith.constant 0 : index
    %5 = vector.load %arg4[%c0_4, %c0_5] : memref<128x128xbf16, #tpu.memory_space<vmem>>, vector<128x128xbf16>
    %cst = arith.constant dense<0.000000e+00> : vector<128x128xf32>
    %6 = tpu.matmul %4, %5, %cst {dimension_numbers = #tpu.dot_dimension_numbers<[1], [0], [0], [1], [0, 0, 1, 1], [], []>} : vector<128x128xbf16>, vector<128x128xbf16>, vector<128x128xf32> -> vector<128x128xf32>
    %7 = arith.addf %3, %6 : vector<128x128xf32>
    %c0_6 = arith.constant 0 : index
    %c0_7 = arith.constant 0 : index
    %8 = vector.load %arg8[%c0_6, %c0_7] : memref<128x128xf32, #tpu.memory_space<vmem>>, vector<128x128xf32>
    tpu.vector_store %arg8[%c0_6, %c0_7], %7 {strides = array<i32>} : memref<128x128xf32, #tpu.memory_space<vmem>>, vector<128x128xf32>,
    %c0_i32_8 = arith.constant 0 : i32
    %9 = arith.cmpi eq, %arg2, %c0_i32_8 : i32
    %10 = arith.extui %9 : i1 to i32
    %c0_i32_9 = arith.constant 0 : i32
    %11 = arith.cmpi ne, %10, %c0_i32_9 : i32
    scf.if %11 {
      %c0_10 = arith.constant 0 : index
      %c0_11 = arith.constant 0 : index
      %12 = vector.load %arg8[%c0_10, %c0_11] : memref<128x128xf32, #tpu.memory_space<vmem>>, vector<128x128xf32>
      %c0_12 = arith.constant 0 : index
      %c0_13 = arith.constant 0 : index
      %13 = vector.load %arg5[%c0_12, %c0_13] : memref<1x128xf32, #tpu.memory_space<vmem>>, vector<1x128xf32>
      %14 = vector.broadcast %13 : vector<1x128xf32> to vector<128x128xf32>
      %15 = arith.mulf %12, %14 : vector<128x128xf32>
      %c0_14 = arith.constant 0 : index
      %c0_15 = arith.constant 0 : index
      %16 = vector.load %arg6[%c0_14, %c0_15] : memref<1x128xf32, #tpu.memory_space<vmem>>, vector<1x128xf32>
      %17 = vector.broadcast %16 : vector<1x128xf32> to vector<128x128xf32>
      %18 = arith.addf %15, %17 : vector<128x128xf32>
      %c0_16 = arith.constant 0 : index
      %c0_17 = arith.constant 0 : index
      %19 = vector.load %arg7[%c0_16, %c0_17] : memref<128x128xf32, #tpu.memory_space<vmem>>, vector<128x128xf32>
      tpu.vector_store %arg7[%c0_16, %c0_17], %18 {strides = array<i32>} : memref<128x128xf32, #tpu.memory_space<vmem>>, vector<128x128xf32>,
    } else {
    }
    return
  }
  func.func @transform_0(%arg0: i32, %arg1: i32, %arg2: i32) -> (i32, i32) {
    %c0_i32 = arith.constant 0 : i32
    return %arg0, %arg2 : i32, i32
  }
  func.func @transform_1(%arg0: i32, %arg1: i32, %arg2: i32) -> (i32, i32) {
    %c0_i32 = arith.constant 0 : i32
    return %arg2, %arg1 : i32, i32
  }
  func.func @transform_2(%arg0: i32, %arg1: i32, %arg2: i32) -> (i32, i32) {
    %c0_i32 = arith.constant 0 : i32
    %c0_i32_0 = arith.constant 0 : i32
    return %c0_i32, %arg1 : i32, i32
  }
  func.func @transform_3(%arg0: i32, %arg1: i32, %arg2: i32) -> (i32, i32) {
    %c0_i32 = arith.constant 0 : i32
    %c0_i32_0 = arith.constant 0 : i32
    return %c0_i32, %arg1 : i32, i32
  }
  func.func @transform_4(%arg0: i32, %arg1: i32, %arg2: i32) -> (i32, i32) {
    %c0_i32 = arith.constant 0 : i32
    return %arg0, %arg1 : i32, i32
  }
}

module attributes {stable_mosaic.version = 11 : i64} {
  func.func @_mm_fused_kernel(%arg0: i32, %arg1: i32, %arg2: i32, %arg3: memref<128x256xbf16, #tpu.memory_space<vmem>>, %arg4: memref<256x128xbf16, #tpu.memory_space<vmem>>, %arg5: memref<1x128xf32, #tpu.memory_space<vmem>>, %arg6: memref<1x128xf32, #tpu.memory_space<vmem>>, %arg7: memref<128x128xf32, #tpu.memory_space<vmem>>, %arg8: memref<128x128xf32, #tpu.memory_space<vmem>>, %arg9: memref<128x128xf32, #tpu.memory_space<vmem>>) attributes {dimension_semantics = [#tpu.dimension_semantics<parallel>, #tpu.dimension_semantics<parallel>, #tpu.dimension_semantics<arbitrary>], iteration_bounds = array<i64: 1, 1, 1>, scalar_prefetch = 0 : i64, scratch_operands = 1 : i64, tpu.core_type = #tpu.core_type<tc>, window_params = [{transform_indices = @transform_0, window_bounds = array<i64: 128, 256>}, {transform_indices = @transform_1, window_bounds = array<i64: 256, 128>}, {transform_indices = @transform_2, window_bounds = array<i64: 1, 128>}, {transform_indices = @transform_3, window_bounds = array<i64: 1, 128>}, {transform_indices = @transform_4, window_bounds = array<i64: 128, 128>}, {transform_indices = @transform_5, window_bounds = array<i64: 128, 128>}]} {
    %c0_i32 = arith.constant 0 : i32
    %0 = arith.cmpi eq, %arg2, %c0_i32 : i32
    %1 = arith.extui %0 : i1 to i32
    %c0_i32_0 = arith.constant 0 : i32
    %2 = arith.cmpi ne, %1, %c0_i32_0 : i32
    scf.if %2 {
      %cst_10 = arith.constant 0.000000e+00 : f32
      %12 = vector.broadcast %cst_10 : f32 to vector<128x128xf32>
      %c0_11 = arith.constant 0 : index
      %c0_12 = arith.constant 0 : index
      %13 = vector.load %arg9[%c0_11, %c0_12] : memref<128x128xf32, #tpu.memory_space<vmem>>, vector<128x128xf32>
      tpu.vector_store %arg9[%c0_11, %c0_12], %12 {strides = array<i32>} : memref<128x128xf32, #tpu.memory_space<vmem>>, vector<128x128xf32>,
    } else {
    }
    %c0 = arith.constant 0 : index
    %c0_1 = arith.constant 0 : index
    %3 = vector.load %arg9[%c0, %c0_1] : memref<128x128xf32, #tpu.memory_space<vmem>>, vector<128x128xf32>
    %c0_2 = arith.constant 0 : index
    %c0_3 = arith.constant 0 : index
    %4 = vector.load %arg3[%c0_2, %c0_3] : memref<128x256xbf16, #tpu.memory_space<vmem>>, vector<128x256xbf16>
    %c0_4 = arith.constant 0 : index
    %c0_5 = arith.constant 0 : index
    %5 = vector.load %arg4[%c0_4, %c0_5] : memref<256x128xbf16, #tpu.memory_space<vmem>>, vector<256x128xbf16>
    %cst = arith.constant dense<0.000000e+00> : vector<128x128xf32>
    %6 = tpu.matmul %4, %5, %cst {dimension_numbers = #tpu.dot_dimension_numbers<[1], [0], [0], [1], [0, 0, 1, 1], [], []>} : vector<128x256xbf16>, vector<256x128xbf16>, vector<128x128xf32> -> vector<128x128xf32>
    %7 = arith.addf %3, %6 : vector<128x128xf32>
    %c0_6 = arith.constant 0 : index
    %c0_7 = arith.constant 0 : index
    %8 = vector.load %arg9[%c0_6, %c0_7] : memref<128x128xf32, #tpu.memory_space<vmem>>, vector<128x128xf32>
    tpu.vector_store %arg9[%c0_6, %c0_7], %7 {strides = array<i32>} : memref<128x128xf32, #tpu.memory_space<vmem>>, vector<128x128xf32>,
    %c0_i32_8 = arith.constant 0 : i32
    %9 = arith.cmpi eq, %arg2, %c0_i32_8 : i32
    %10 = arith.extui %9 : i1 to i32
    %c0_i32_9 = arith.constant 0 : i32
    %11 = arith.cmpi ne, %10, %c0_i32_9 : i32
    scf.if %11 {
      %c0_10 = arith.constant 0 : index
      %c0_11 = arith.constant 0 : index
      %12 = vector.load %arg9[%c0_10, %c0_11] : memref<128x128xf32, #tpu.memory_space<vmem>>, vector<128x128xf32>
      %c0_12 = arith.constant 0 : index
      %c0_13 = arith.constant 0 : index
      %13 = vector.load %arg5[%c0_12, %c0_13] : memref<1x128xf32, #tpu.memory_space<vmem>>, vector<1x128xf32>
      %14 = vector.broadcast %13 : vector<1x128xf32> to vector<128x128xf32>
      %15 = arith.mulf %12, %14 : vector<128x128xf32>
      %c0_14 = arith.constant 0 : index
      %c0_15 = arith.constant 0 : index
      %16 = vector.load %arg6[%c0_14, %c0_15] : memref<1x128xf32, #tpu.memory_space<vmem>>, vector<1x128xf32>
      %17 = vector.broadcast %16 : vector<1x128xf32> to vector<128x128xf32>
      %18 = arith.addf %15, %17 : vector<128x128xf32>
      %c0_16 = arith.constant 0 : index
      %c0_17 = arith.constant 0 : index
      %19 = vector.load %arg7[%c0_16, %c0_17] : memref<128x128xf32, #tpu.memory_space<vmem>>, vector<128x128xf32>
      %20 = arith.addf %18, %19 : vector<128x128xf32>
      %cst_18 = arith.constant 0.000000e+00 : f32
      %21 = vector.broadcast %cst_18 : f32 to vector<128x128xf32>
      %22 = arith.maximumf %20, %21 : vector<128x128xf32>
      %c0_19 = arith.constant 0 : index
      %c0_20 = arith.constant 0 : index
      %23 = vector.load %arg8[%c0_19, %c0_20] : memref<128x128xf32, #tpu.memory_space<vmem>>, vector<128x128xf32>
      tpu.vector_store %arg8[%c0_19, %c0_20], %22 {strides = array<i32>} : memref<128x128xf32, #tpu.memory_space<vmem>>, vector<128x128xf32>,
    } else {
    }
    return
  }
  func.func @transform_0(%arg0: i32, %arg1: i32, %arg2: i32) -> (i32, i32) {
    %c0_i32 = arith.constant 0 : i32
    return %arg0, %arg2 : i32, i32
  }
  func.func @transform_1(%arg0: i32, %arg1: i32, %arg2: i32) -> (i32, i32) {
    %c0_i32 = arith.constant 0 : i32
    return %arg2, %arg1 : i32, i32
  }
  func.func @transform_2(%arg0: i32, %arg1: i32, %arg2: i32) -> (i32, i32) {
    %c0_i32 = arith.constant 0 : i32
    %c0_i32_0 = arith.constant 0 : i32
    return %c0_i32, %arg1 : i32, i32
  }
  func.func @transform_3(%arg0: i32, %arg1: i32, %arg2: i32) -> (i32, i32) {
    %c0_i32 = arith.constant 0 : i32
    %c0_i32_0 = arith.constant 0 : i32
    return %c0_i32, %arg1 : i32, i32
  }
  func.func @transform_4(%arg0: i32, %arg1: i32, %arg2: i32) -> (i32, i32) {
    %c0_i32 = arith.constant 0 : i32
    return %arg0, %arg1 : i32, i32
  }
  func.func @transform_5(%arg0: i32, %arg1: i32, %arg2: i32) -> (i32, i32) {
    %c0_i32 = arith.constant 0 : i32
    return %arg0, %arg1 : i32, i32
  }
}

module attributes {stable_mosaic.version = 11 : i64} {
  func.func @_dtcf_kernel(%arg0: i32, %arg1: memref<1x64x16xf32, #tpu.memory_space<vmem>>, %arg2: memref<16x2xf32, #tpu.memory_space<vmem>>, %arg3: memref<1x2xf32, #tpu.memory_space<vmem>>, %arg4: memref<2x16xf32, #tpu.memory_space<vmem>>, %arg5: memref<1x16xf32, #tpu.memory_space<vmem>>, %arg6: memref<1x64x16xf32, #tpu.memory_space<vmem>>) attributes {dimension_semantics = [#tpu.dimension_semantics<parallel>], iteration_bounds = array<i64: 2>, scalar_prefetch = 0 : i64, scratch_operands = 0 : i64, tpu.core_type = #tpu.core_type<tc>, window_params = [{transform_indices = @transform_0, window_bounds = array<i64: 1, 64, 16>}, {pipeline_mode = #tpu.pipeline_mode<synchronous>, transform_indices = @transform_1, window_bounds = array<i64: 16, 2>}, {pipeline_mode = #tpu.pipeline_mode<synchronous>, transform_indices = @transform_2, window_bounds = array<i64: 1, 2>}, {pipeline_mode = #tpu.pipeline_mode<synchronous>, transform_indices = @transform_3, window_bounds = array<i64: 2, 16>}, {pipeline_mode = #tpu.pipeline_mode<synchronous>, transform_indices = @transform_4, window_bounds = array<i64: 1, 16>}, {transform_indices = @transform_5, window_bounds = array<i64: 1, 64, 16>}]} {
    %c0 = arith.constant 0 : index
    %c0_0 = arith.constant 0 : index
    %c0_1 = arith.constant 0 : index
    %0 = vector.load %arg1[%c0, %c0_0, %c0_1] : memref<1x64x16xf32, #tpu.memory_space<vmem>>, vector<1x64x16xf32>
    %1 = vector.shape_cast %0 : vector<1x64x16xf32> to vector<64x16xf32>
    %cst = arith.constant dense<0.000000e+00> : vector<16xf32>
    %2 = vector.multi_reduction <add>, %1, %cst [0] : vector<64x16xf32> to vector<16xf32>
    %3 = vector.shape_cast %2 : vector<16xf32> to vector<1x16xf32>
    %cst_2 = arith.constant 6.400000e+01 : f32
    %4 = vector.broadcast %cst_2 : f32 to vector<1x16xf32>
    %5 = arith.divf %3, %4 : vector<1x16xf32>
    %c0_3 = arith.constant 0 : index
    %c0_4 = arith.constant 0 : index
    %6 = vector.load %arg2[%c0_3, %c0_4] : memref<16x2xf32, #tpu.memory_space<vmem>>, vector<16x2xf32>
    %cst_5 = arith.constant dense<0.000000e+00> : vector<1x2xf32>
    %7 = tpu.matmul %5, %6, %cst_5 {dimension_numbers = #tpu.dot_dimension_numbers<[1], [0], [0], [1], [0, 0, 1, 1], [], []>} : vector<1x16xf32>, vector<16x2xf32>, vector<1x2xf32> -> vector<1x2xf32>
    %c0_6 = arith.constant 0 : index
    %c0_7 = arith.constant 0 : index
    %8 = vector.load %arg3[%c0_6, %c0_7] : memref<1x2xf32, #tpu.memory_space<vmem>>, vector<1x2xf32>
    %9 = arith.addf %7, %8 : vector<1x2xf32>
    %cst_8 = arith.constant 0.000000e+00 : f32
    %10 = vector.broadcast %cst_8 : f32 to vector<1x2xf32>
    %11 = arith.maximumf %9, %10 : vector<1x2xf32>
    %c0_9 = arith.constant 0 : index
    %c0_10 = arith.constant 0 : index
    %12 = vector.load %arg4[%c0_9, %c0_10] : memref<2x16xf32, #tpu.memory_space<vmem>>, vector<2x16xf32>
    %cst_11 = arith.constant dense<0.000000e+00> : vector<1x16xf32>
    %13 = tpu.matmul %11, %12, %cst_11 {dimension_numbers = #tpu.dot_dimension_numbers<[1], [0], [0], [1], [0, 0, 1, 1], [], []>} : vector<1x2xf32>, vector<2x16xf32>, vector<1x16xf32> -> vector<1x16xf32>
    %c0_12 = arith.constant 0 : index
    %c0_13 = arith.constant 0 : index
    %14 = vector.load %arg5[%c0_12, %c0_13] : memref<1x16xf32, #tpu.memory_space<vmem>>, vector<1x16xf32>
    %15 = arith.addf %13, %14 : vector<1x16xf32>
    %16 = arith.negf %15 : vector<1x16xf32>
    %17 = math.exp %16 : vector<1x16xf32>
    %cst_14 = arith.constant 1.000000e+00 : f32
    %18 = vector.broadcast %cst_14 : f32 to vector<1x16xf32>
    %19 = arith.addf %18, %17 : vector<1x16xf32>
    %20 = arith.divf %18, %19 : vector<1x16xf32>
    %21 = vector.broadcast %20 : vector<1x16xf32> to vector<64x16xf32>
    %22 = arith.mulf %1, %21 : vector<64x16xf32>
    %23 = vector.shape_cast %22 : vector<64x16xf32> to vector<1x64x16xf32>
    %c0_15 = arith.constant 0 : index
    %c0_16 = arith.constant 0 : index
    %c0_17 = arith.constant 0 : index
    %24 = vector.load %arg6[%c0_15, %c0_16, %c0_17] : memref<1x64x16xf32, #tpu.memory_space<vmem>>, vector<1x64x16xf32>
    tpu.vector_store %arg6[%c0_15, %c0_16, %c0_17], %23 {strides = array<i32>} : memref<1x64x16xf32, #tpu.memory_space<vmem>>, vector<1x64x16xf32>,
    return
  }
  func.func @transform_0(%arg0: i32) -> (i32, i32, i32) {
    %c0_i32 = arith.constant 0 : i32
    %c0_i32_0 = arith.constant 0 : i32
    %c0_i32_1 = arith.constant 0 : i32
    return %arg0, %c0_i32, %c0_i32_0 : i32, i32, i32
  }
  func.func @transform_1(%arg0: i32) -> (i32, i32) {
    %c0_i32 = arith.constant 0 : i32
    %c0_i32_0 = arith.constant 0 : i32
    %c0_i32_1 = arith.constant 0 : i32
    return %c0_i32, %c0_i32_0 : i32, i32
  }
  func.func @transform_2(%arg0: i32) -> (i32, i32) {
    %c0_i32 = arith.constant 0 : i32
    %c0_i32_0 = arith.constant 0 : i32
    %c0_i32_1 = arith.constant 0 : i32
    return %c0_i32, %c0_i32_0 : i32, i32
  }
  func.func @transform_3(%arg0: i32) -> (i32, i32) {
    %c0_i32 = arith.constant 0 : i32
    %c0_i32_0 = arith.constant 0 : i32
    %c0_i32_1 = arith.constant 0 : i32
    return %c0_i32, %c0_i32_0 : i32, i32
  }
  func.func @transform_4(%arg0: i32) -> (i32, i32) {
    %c0_i32 = arith.constant 0 : i32
    %c0_i32_0 = arith.constant 0 : i32
    %c0_i32_1 = arith.constant 0 : i32
    return %c0_i32, %c0_i32_0 : i32, i32
  }
  func.func @transform_5(%arg0: i32) -> (i32, i32, i32) {
    %c0_i32 = arith.constant 0 : i32
    %c0_i32_0 = arith.constant 0 : i32
    %c0_i32_1 = arith.constant 0 : i32
    return %arg0, %c0_i32, %c0_i32_0 : i32, i32, i32
  }
}

module attributes {stable_mosaic.version = 11 : i64} {
  func.func @_mm_fused_kernel(%arg0: i32, %arg1: i32, %arg2: i32, %arg3: memref<32x256xbf16, #tpu.memory_space<vmem>>, %arg4: memref<256x128xbf16, #tpu.memory_space<vmem>>, %arg5: memref<1x128xf32, #tpu.memory_space<vmem>>, %arg6: memref<1x128xf32, #tpu.memory_space<vmem>>, %arg7: memref<32x128xf32, #tpu.memory_space<vmem>>, %arg8: memref<32x128xf32, #tpu.memory_space<vmem>>) attributes {dimension_semantics = [#tpu.dimension_semantics<parallel>, #tpu.dimension_semantics<parallel>, #tpu.dimension_semantics<arbitrary>], iteration_bounds = array<i64: 1, 1, 1>, scalar_prefetch = 0 : i64, scratch_operands = 1 : i64, tpu.core_type = #tpu.core_type<tc>, window_params = [{transform_indices = @transform_0, window_bounds = array<i64: 32, 256>}, {transform_indices = @transform_1, window_bounds = array<i64: 256, 128>}, {transform_indices = @transform_2, window_bounds = array<i64: 1, 128>}, {transform_indices = @transform_3, window_bounds = array<i64: 1, 128>}, {transform_indices = @transform_4, window_bounds = array<i64: 32, 128>}]} {
    %c0_i32 = arith.constant 0 : i32
    %0 = arith.cmpi eq, %arg2, %c0_i32 : i32
    %1 = arith.extui %0 : i1 to i32
    %c0_i32_0 = arith.constant 0 : i32
    %2 = arith.cmpi ne, %1, %c0_i32_0 : i32
    scf.if %2 {
      %cst_10 = arith.constant 0.000000e+00 : f32
      %12 = vector.broadcast %cst_10 : f32 to vector<32x128xf32>
      %c0_11 = arith.constant 0 : index
      %c0_12 = arith.constant 0 : index
      %13 = vector.load %arg8[%c0_11, %c0_12] : memref<32x128xf32, #tpu.memory_space<vmem>>, vector<32x128xf32>
      tpu.vector_store %arg8[%c0_11, %c0_12], %12 {strides = array<i32>} : memref<32x128xf32, #tpu.memory_space<vmem>>, vector<32x128xf32>,
    } else {
    }
    %c0 = arith.constant 0 : index
    %c0_1 = arith.constant 0 : index
    %3 = vector.load %arg8[%c0, %c0_1] : memref<32x128xf32, #tpu.memory_space<vmem>>, vector<32x128xf32>
    %c0_2 = arith.constant 0 : index
    %c0_3 = arith.constant 0 : index
    %4 = vector.load %arg3[%c0_2, %c0_3] : memref<32x256xbf16, #tpu.memory_space<vmem>>, vector<32x256xbf16>
    %c0_4 = arith.constant 0 : index
    %c0_5 = arith.constant 0 : index
    %5 = vector.load %arg4[%c0_4, %c0_5] : memref<256x128xbf16, #tpu.memory_space<vmem>>, vector<256x128xbf16>
    %cst = arith.constant dense<0.000000e+00> : vector<32x128xf32>
    %6 = tpu.matmul %4, %5, %cst {dimension_numbers = #tpu.dot_dimension_numbers<[1], [0], [0], [1], [0, 0, 1, 1], [], []>} : vector<32x256xbf16>, vector<256x128xbf16>, vector<32x128xf32> -> vector<32x128xf32>
    %7 = arith.addf %3, %6 : vector<32x128xf32>
    %c0_6 = arith.constant 0 : index
    %c0_7 = arith.constant 0 : index
    %8 = vector.load %arg8[%c0_6, %c0_7] : memref<32x128xf32, #tpu.memory_space<vmem>>, vector<32x128xf32>
    tpu.vector_store %arg8[%c0_6, %c0_7], %7 {strides = array<i32>} : memref<32x128xf32, #tpu.memory_space<vmem>>, vector<32x128xf32>,
    %c0_i32_8 = arith.constant 0 : i32
    %9 = arith.cmpi eq, %arg2, %c0_i32_8 : i32
    %10 = arith.extui %9 : i1 to i32
    %c0_i32_9 = arith.constant 0 : i32
    %11 = arith.cmpi ne, %10, %c0_i32_9 : i32
    scf.if %11 {
      %c0_10 = arith.constant 0 : index
      %c0_11 = arith.constant 0 : index
      %12 = vector.load %arg8[%c0_10, %c0_11] : memref<32x128xf32, #tpu.memory_space<vmem>>, vector<32x128xf32>
      %c0_12 = arith.constant 0 : index
      %c0_13 = arith.constant 0 : index
      %13 = vector.load %arg5[%c0_12, %c0_13] : memref<1x128xf32, #tpu.memory_space<vmem>>, vector<1x128xf32>
      %14 = vector.broadcast %13 : vector<1x128xf32> to vector<32x128xf32>
      %15 = arith.mulf %12, %14 : vector<32x128xf32>
      %c0_14 = arith.constant 0 : index
      %c0_15 = arith.constant 0 : index
      %16 = vector.load %arg6[%c0_14, %c0_15] : memref<1x128xf32, #tpu.memory_space<vmem>>, vector<1x128xf32>
      %17 = vector.broadcast %16 : vector<1x128xf32> to vector<32x128xf32>
      %18 = arith.addf %15, %17 : vector<32x128xf32>
      %cst_16 = arith.constant 0.000000e+00 : f32
      %19 = vector.broadcast %cst_16 : f32 to vector<32x128xf32>
      %20 = arith.maximumf %18, %19 : vector<32x128xf32>
      %c0_17 = arith.constant 0 : index
      %c0_18 = arith.constant 0 : index
      %21 = vector.load %arg7[%c0_17, %c0_18] : memref<32x128xf32, #tpu.memory_space<vmem>>, vector<32x128xf32>
      tpu.vector_store %arg7[%c0_17, %c0_18], %20 {strides = array<i32>} : memref<32x128xf32, #tpu.memory_space<vmem>>, vector<32x128xf32>,
    } else {
    }
    return
  }
  func.func @transform_0(%arg0: i32, %arg1: i32, %arg2: i32) -> (i32, i32) {
    %c0_i32 = arith.constant 0 : i32
    return %arg0, %arg2 : i32, i32
  }
  func.func @transform_1(%arg0: i32, %arg1: i32, %arg2: i32) -> (i32, i32) {
    %c0_i32 = arith.constant 0 : i32
    return %arg2, %arg1 : i32, i32
  }
  func.func @transform_2(%arg0: i32, %arg1: i32, %arg2: i32) -> (i32, i32) {
    %c0_i32 = arith.constant 0 : i32
    %c0_i32_0 = arith.constant 0 : i32
    return %c0_i32, %arg1 : i32, i32
  }
  func.func @transform_3(%arg0: i32, %arg1: i32, %arg2: i32) -> (i32, i32) {
    %c0_i32 = arith.constant 0 : i32
    %c0_i32_0 = arith.constant 0 : i32
    return %c0_i32, %arg1 : i32, i32
  }
  func.func @transform_4(%arg0: i32, %arg1: i32, %arg2: i32) -> (i32, i32) {
    %c0_i32 = arith.constant 0 : i32
    return %arg0, %arg1 : i32, i32
  }
}

module attributes {stable_mosaic.version = 11 : i64} {
  func.func @_mm_fused_kernel(%arg0: i32, %arg1: i32, %arg2: i32, %arg3: memref<32x128xbf16, #tpu.memory_space<vmem>>, %arg4: memref<128x128xbf16, #tpu.memory_space<vmem>>, %arg5: memref<1x128xf32, #tpu.memory_space<vmem>>, %arg6: memref<1x128xf32, #tpu.memory_space<vmem>>, %arg7: memref<32x128xf32, #tpu.memory_space<vmem>>, %arg8: memref<32x128xf32, #tpu.memory_space<vmem>>) attributes {dimension_semantics = [#tpu.dimension_semantics<parallel>, #tpu.dimension_semantics<parallel>, #tpu.dimension_semantics<arbitrary>], iteration_bounds = array<i64: 1, 1, 1>, scalar_prefetch = 0 : i64, scratch_operands = 1 : i64, tpu.core_type = #tpu.core_type<tc>, window_params = [{transform_indices = @transform_0, window_bounds = array<i64: 32, 128>}, {transform_indices = @transform_1, window_bounds = array<i64: 128, 128>}, {transform_indices = @transform_2, window_bounds = array<i64: 1, 128>}, {transform_indices = @transform_3, window_bounds = array<i64: 1, 128>}, {transform_indices = @transform_4, window_bounds = array<i64: 32, 128>}]} {
    %c0_i32 = arith.constant 0 : i32
    %0 = arith.cmpi eq, %arg2, %c0_i32 : i32
    %1 = arith.extui %0 : i1 to i32
    %c0_i32_0 = arith.constant 0 : i32
    %2 = arith.cmpi ne, %1, %c0_i32_0 : i32
    scf.if %2 {
      %cst_10 = arith.constant 0.000000e+00 : f32
      %12 = vector.broadcast %cst_10 : f32 to vector<32x128xf32>
      %c0_11 = arith.constant 0 : index
      %c0_12 = arith.constant 0 : index
      %13 = vector.load %arg8[%c0_11, %c0_12] : memref<32x128xf32, #tpu.memory_space<vmem>>, vector<32x128xf32>
      tpu.vector_store %arg8[%c0_11, %c0_12], %12 {strides = array<i32>} : memref<32x128xf32, #tpu.memory_space<vmem>>, vector<32x128xf32>,
    } else {
    }
    %c0 = arith.constant 0 : index
    %c0_1 = arith.constant 0 : index
    %3 = vector.load %arg8[%c0, %c0_1] : memref<32x128xf32, #tpu.memory_space<vmem>>, vector<32x128xf32>
    %c0_2 = arith.constant 0 : index
    %c0_3 = arith.constant 0 : index
    %4 = vector.load %arg3[%c0_2, %c0_3] : memref<32x128xbf16, #tpu.memory_space<vmem>>, vector<32x128xbf16>
    %c0_4 = arith.constant 0 : index
    %c0_5 = arith.constant 0 : index
    %5 = vector.load %arg4[%c0_4, %c0_5] : memref<128x128xbf16, #tpu.memory_space<vmem>>, vector<128x128xbf16>
    %cst = arith.constant dense<0.000000e+00> : vector<32x128xf32>
    %6 = tpu.matmul %4, %5, %cst {dimension_numbers = #tpu.dot_dimension_numbers<[1], [0], [0], [1], [0, 0, 1, 1], [], []>} : vector<32x128xbf16>, vector<128x128xbf16>, vector<32x128xf32> -> vector<32x128xf32>
    %7 = arith.addf %3, %6 : vector<32x128xf32>
    %c0_6 = arith.constant 0 : index
    %c0_7 = arith.constant 0 : index
    %8 = vector.load %arg8[%c0_6, %c0_7] : memref<32x128xf32, #tpu.memory_space<vmem>>, vector<32x128xf32>
    tpu.vector_store %arg8[%c0_6, %c0_7], %7 {strides = array<i32>} : memref<32x128xf32, #tpu.memory_space<vmem>>, vector<32x128xf32>,
    %c0_i32_8 = arith.constant 0 : i32
    %9 = arith.cmpi eq, %arg2, %c0_i32_8 : i32
    %10 = arith.extui %9 : i1 to i32
    %c0_i32_9 = arith.constant 0 : i32
    %11 = arith.cmpi ne, %10, %c0_i32_9 : i32
    scf.if %11 {
      %c0_10 = arith.constant 0 : index
      %c0_11 = arith.constant 0 : index
      %12 = vector.load %arg8[%c0_10, %c0_11] : memref<32x128xf32, #tpu.memory_space<vmem>>, vector<32x128xf32>
      %c0_12 = arith.constant 0 : index
      %c0_13 = arith.constant 0 : index
      %13 = vector.load %arg5[%c0_12, %c0_13] : memref<1x128xf32, #tpu.memory_space<vmem>>, vector<1x128xf32>
      %14 = vector.broadcast %13 : vector<1x128xf32> to vector<32x128xf32>
      %15 = arith.mulf %12, %14 : vector<32x128xf32>
      %c0_14 = arith.constant 0 : index
      %c0_15 = arith.constant 0 : index
      %16 = vector.load %arg6[%c0_14, %c0_15] : memref<1x128xf32, #tpu.memory_space<vmem>>, vector<1x128xf32>
      %17 = vector.broadcast %16 : vector<1x128xf32> to vector<32x128xf32>
      %18 = arith.addf %15, %17 : vector<32x128xf32>
      %c0_16 = arith.constant 0 : index
      %c0_17 = arith.constant 0 : index
      %19 = vector.load %arg7[%c0_16, %c0_17] : memref<32x128xf32, #tpu.memory_space<vmem>>, vector<32x128xf32>
      tpu.vector_store %arg7[%c0_16, %c0_17], %18 {strides = array<i32>} : memref<32x128xf32, #tpu.memory_space<vmem>>, vector<32x128xf32>,
    } else {
    }
    return
  }
  func.func @transform_0(%arg0: i32, %arg1: i32, %arg2: i32) -> (i32, i32) {
    %c0_i32 = arith.constant 0 : i32
    return %arg0, %arg2 : i32, i32
  }
  func.func @transform_1(%arg0: i32, %arg1: i32, %arg2: i32) -> (i32, i32) {
    %c0_i32 = arith.constant 0 : i32
    return %arg2, %arg1 : i32, i32
  }
  func.func @transform_2(%arg0: i32, %arg1: i32, %arg2: i32) -> (i32, i32) {
    %c0_i32 = arith.constant 0 : i32
    %c0_i32_0 = arith.constant 0 : i32
    return %c0_i32, %arg1 : i32, i32
  }
  func.func @transform_3(%arg0: i32, %arg1: i32, %arg2: i32) -> (i32, i32) {
    %c0_i32 = arith.constant 0 : i32
    %c0_i32_0 = arith.constant 0 : i32
    return %c0_i32, %arg1 : i32, i32
  }
  func.func @transform_4(%arg0: i32, %arg1: i32, %arg2: i32) -> (i32, i32) {
    %c0_i32 = arith.constant 0 : i32
    return %arg0, %arg1 : i32, i32
  }
}

module attributes {stable_mosaic.version = 11 : i64} {
  func.func @_dtcf_kernel(%arg0: i32, %arg1: memref<1x16x32xf32, #tpu.memory_space<vmem>>, %arg2: memref<32x4xf32, #tpu.memory_space<vmem>>, %arg3: memref<1x4xf32, #tpu.memory_space<vmem>>, %arg4: memref<4x32xf32, #tpu.memory_space<vmem>>, %arg5: memref<1x32xf32, #tpu.memory_space<vmem>>, %arg6: memref<1x16x32xf32, #tpu.memory_space<vmem>>) attributes {dimension_semantics = [#tpu.dimension_semantics<parallel>], iteration_bounds = array<i64: 2>, scalar_prefetch = 0 : i64, scratch_operands = 0 : i64, tpu.core_type = #tpu.core_type<tc>, window_params = [{transform_indices = @transform_0, window_bounds = array<i64: 1, 16, 32>}, {pipeline_mode = #tpu.pipeline_mode<synchronous>, transform_indices = @transform_1, window_bounds = array<i64: 32, 4>}, {pipeline_mode = #tpu.pipeline_mode<synchronous>, transform_indices = @transform_2, window_bounds = array<i64: 1, 4>}, {pipeline_mode = #tpu.pipeline_mode<synchronous>, transform_indices = @transform_3, window_bounds = array<i64: 4, 32>}, {pipeline_mode = #tpu.pipeline_mode<synchronous>, transform_indices = @transform_4, window_bounds = array<i64: 1, 32>}, {transform_indices = @transform_5, window_bounds = array<i64: 1, 16, 32>}]} {
    %c0 = arith.constant 0 : index
    %c0_0 = arith.constant 0 : index
    %c0_1 = arith.constant 0 : index
    %0 = vector.load %arg1[%c0, %c0_0, %c0_1] : memref<1x16x32xf32, #tpu.memory_space<vmem>>, vector<1x16x32xf32>
    %1 = vector.shape_cast %0 : vector<1x16x32xf32> to vector<16x32xf32>
    %cst = arith.constant dense<0.000000e+00> : vector<32xf32>
    %2 = vector.multi_reduction <add>, %1, %cst [0] : vector<16x32xf32> to vector<32xf32>
    %3 = vector.shape_cast %2 : vector<32xf32> to vector<1x32xf32>
    %cst_2 = arith.constant 1.600000e+01 : f32
    %4 = vector.broadcast %cst_2 : f32 to vector<1x32xf32>
    %5 = arith.divf %3, %4 : vector<1x32xf32>
    %c0_3 = arith.constant 0 : index
    %c0_4 = arith.constant 0 : index
    %6 = vector.load %arg2[%c0_3, %c0_4] : memref<32x4xf32, #tpu.memory_space<vmem>>, vector<32x4xf32>
    %cst_5 = arith.constant dense<0.000000e+00> : vector<1x4xf32>
    %7 = tpu.matmul %5, %6, %cst_5 {dimension_numbers = #tpu.dot_dimension_numbers<[1], [0], [0], [1], [0, 0, 1, 1], [], []>} : vector<1x32xf32>, vector<32x4xf32>, vector<1x4xf32> -> vector<1x4xf32>
    %c0_6 = arith.constant 0 : index
    %c0_7 = arith.constant 0 : index
    %8 = vector.load %arg3[%c0_6, %c0_7] : memref<1x4xf32, #tpu.memory_space<vmem>>, vector<1x4xf32>
    %9 = arith.addf %7, %8 : vector<1x4xf32>
    %cst_8 = arith.constant 0.000000e+00 : f32
    %10 = vector.broadcast %cst_8 : f32 to vector<1x4xf32>
    %11 = arith.maximumf %9, %10 : vector<1x4xf32>
    %c0_9 = arith.constant 0 : index
    %c0_10 = arith.constant 0 : index
    %12 = vector.load %arg4[%c0_9, %c0_10] : memref<4x32xf32, #tpu.memory_space<vmem>>, vector<4x32xf32>
    %cst_11 = arith.constant dense<0.000000e+00> : vector<1x32xf32>
    %13 = tpu.matmul %11, %12, %cst_11 {dimension_numbers = #tpu.dot_dimension_numbers<[1], [0], [0], [1], [0, 0, 1, 1], [], []>} : vector<1x4xf32>, vector<4x32xf32>, vector<1x32xf32> -> vector<1x32xf32>
    %c0_12 = arith.constant 0 : index
    %c0_13 = arith.constant 0 : index
    %14 = vector.load %arg5[%c0_12, %c0_13] : memref<1x32xf32, #tpu.memory_space<vmem>>, vector<1x32xf32>
    %15 = arith.addf %13, %14 : vector<1x32xf32>
    %16 = arith.negf %15 : vector<1x32xf32>
    %17 = math.exp %16 : vector<1x32xf32>
    %cst_14 = arith.constant 1.000000e+00 : f32
    %18 = vector.broadcast %cst_14 : f32 to vector<1x32xf32>
    %19 = arith.addf %18, %17 : vector<1x32xf32>
    %20 = arith.divf %18, %19 : vector<1x32xf32>
    %21 = vector.broadcast %20 : vector<1x32xf32> to vector<16x32xf32>
    %22 = arith.mulf %1, %21 : vector<16x32xf32>
    %23 = vector.shape_cast %22 : vector<16x32xf32> to vector<1x16x32xf32>
    %c0_15 = arith.constant 0 : index
    %c0_16 = arith.constant 0 : index
    %c0_17 = arith.constant 0 : index
    %24 = vector.load %arg6[%c0_15, %c0_16, %c0_17] : memref<1x16x32xf32, #tpu.memory_space<vmem>>, vector<1x16x32xf32>
    tpu.vector_store %arg6[%c0_15, %c0_16, %c0_17], %23 {strides = array<i32>} : memref<1x16x32xf32, #tpu.memory_space<vmem>>, vector<1x16x32xf32>,
    return
  }
  func.func @transform_0(%arg0: i32) -> (i32, i32, i32) {
    %c0_i32 = arith.constant 0 : i32
    %c0_i32_0 = arith.constant 0 : i32
    %c0_i32_1 = arith.constant 0 : i32
    return %arg0, %c0_i32, %c0_i32_0 : i32, i32, i32
  }
  func.func @transform_1(%arg0: i32) -> (i32, i32) {
    %c0_i32 = arith.constant 0 : i32
    %c0_i32_0 = arith.constant 0 : i32
    %c0_i32_1 = arith.constant 0 : i32
    return %c0_i32, %c0_i32_0 : i32, i32
  }
  func.func @transform_2(%arg0: i32) -> (i32, i32) {
    %c0_i32 = arith.constant 0 : i32
    %c0_i32_0 = arith.constant 0 : i32
    %c0_i32_1 = arith.constant 0 : i32
    return %c0_i32, %c0_i32_0 : i32, i32
  }
  func.func @transform_3(%arg0: i32) -> (i32, i32) {
    %c0_i32 = arith.constant 0 : i32
    %c0_i32_0 = arith.constant 0 : i32
    %c0_i32_1 = arith.constant 0 : i32
    return %c0_i32, %c0_i32_0 : i32, i32
  }
  func.func @transform_4(%arg0: i32) -> (i32, i32) {
    %c0_i32 = arith.constant 0 : i32
    %c0_i32_0 = arith.constant 0 : i32
    %c0_i32_1 = arith.constant 0 : i32
    return %c0_i32, %c0_i32_0 : i32, i32
  }
  func.func @transform_5(%arg0: i32) -> (i32, i32, i32) {
    %c0_i32 = arith.constant 0 : i32
    %c0_i32_0 = arith.constant 0 : i32
    %c0_i32_1 = arith.constant 0 : i32
    return %arg0, %c0_i32, %c0_i32_0 : i32, i32, i32
  }
}

module attributes {stable_mosaic.version = 11 : i64} {
  func.func @_mm_fused_kernel(%arg0: i32, %arg1: i32, %arg2: i32, %arg3: memref<32x256xbf16, #tpu.memory_space<vmem>>, %arg4: memref<256x128xbf16, #tpu.memory_space<vmem>>, %arg5: memref<1x128xf32, #tpu.memory_space<vmem>>, %arg6: memref<1x128xf32, #tpu.memory_space<vmem>>, %arg7: memref<32x128xf32, #tpu.memory_space<vmem>>, %arg8: memref<32x128xf32, #tpu.memory_space<vmem>>, %arg9: memref<32x128xf32, #tpu.memory_space<vmem>>) attributes {dimension_semantics = [#tpu.dimension_semantics<parallel>, #tpu.dimension_semantics<parallel>, #tpu.dimension_semantics<arbitrary>], iteration_bounds = array<i64: 1, 1, 2>, scalar_prefetch = 0 : i64, scratch_operands = 1 : i64, tpu.core_type = #tpu.core_type<tc>, window_params = [{transform_indices = @transform_0, window_bounds = array<i64: 32, 256>}, {transform_indices = @transform_1, window_bounds = array<i64: 256, 128>}, {transform_indices = @transform_2, window_bounds = array<i64: 1, 128>}, {transform_indices = @transform_3, window_bounds = array<i64: 1, 128>}, {transform_indices = @transform_4, window_bounds = array<i64: 32, 128>}, {transform_indices = @transform_5, window_bounds = array<i64: 32, 128>}]} {
    %c0_i32 = arith.constant 0 : i32
    %0 = arith.cmpi eq, %arg2, %c0_i32 : i32
    %1 = arith.extui %0 : i1 to i32
    %c0_i32_0 = arith.constant 0 : i32
    %2 = arith.cmpi ne, %1, %c0_i32_0 : i32
    scf.if %2 {
      %cst_9 = arith.constant 0.000000e+00 : f32
      %12 = vector.broadcast %cst_9 : f32 to vector<32x128xf32>
      %c0_10 = arith.constant 0 : index
      %c0_11 = arith.constant 0 : index
      %13 = vector.load %arg9[%c0_10, %c0_11] : memref<32x128xf32, #tpu.memory_space<vmem>>, vector<32x128xf32>
      tpu.vector_store %arg9[%c0_10, %c0_11], %12 {strides = array<i32>} : memref<32x128xf32, #tpu.memory_space<vmem>>, vector<32x128xf32>,
    } else {
    }
    %c0 = arith.constant 0 : index
    %c0_1 = arith.constant 0 : index
    %3 = vector.load %arg9[%c0, %c0_1] : memref<32x128xf32, #tpu.memory_space<vmem>>, vector<32x128xf32>
    %c0_2 = arith.constant 0 : index
    %c0_3 = arith.constant 0 : index
    %4 = vector.load %arg3[%c0_2, %c0_3] : memref<32x256xbf16, #tpu.memory_space<vmem>>, vector<32x256xbf16>
    %c0_4 = arith.constant 0 : index
    %c0_5 = arith.constant 0 : index
    %5 = vector.load %arg4[%c0_4, %c0_5] : memref<256x128xbf16, #tpu.memory_space<vmem>>, vector<256x128xbf16>
    %cst = arith.constant dense<0.000000e+00> : vector<32x128xf32>
    %6 = tpu.matmul %4, %5, %cst {dimension_numbers = #tpu.dot_dimension_numbers<[1], [0], [0], [1], [0, 0, 1, 1], [], []>} : vector<32x256xbf16>, vector<256x128xbf16>, vector<32x128xf32> -> vector<32x128xf32>
    %7 = arith.addf %3, %6 : vector<32x128xf32>
    %c0_6 = arith.constant 0 : index
    %c0_7 = arith.constant 0 : index
    %8 = vector.load %arg9[%c0_6, %c0_7] : memref<32x128xf32, #tpu.memory_space<vmem>>, vector<32x128xf32>
    tpu.vector_store %arg9[%c0_6, %c0_7], %7 {strides = array<i32>} : memref<32x128xf32, #tpu.memory_space<vmem>>, vector<32x128xf32>,
    %c1_i32 = arith.constant 1 : i32
    %9 = arith.cmpi eq, %arg2, %c1_i32 : i32
    %10 = arith.extui %9 : i1 to i32
    %c0_i32_8 = arith.constant 0 : i32
    %11 = arith.cmpi ne, %10, %c0_i32_8 : i32
    scf.if %11 {
      %c0_9 = arith.constant 0 : index
      %c0_10 = arith.constant 0 : index
      %12 = vector.load %arg9[%c0_9, %c0_10] : memref<32x128xf32, #tpu.memory_space<vmem>>, vector<32x128xf32>
      %c0_11 = arith.constant 0 : index
      %c0_12 = arith.constant 0 : index
      %13 = vector.load %arg5[%c0_11, %c0_12] : memref<1x128xf32, #tpu.memory_space<vmem>>, vector<1x128xf32>
      %14 = vector.broadcast %13 : vector<1x128xf32> to vector<32x128xf32>
      %15 = arith.mulf %12, %14 : vector<32x128xf32>
      %c0_13 = arith.constant 0 : index
      %c0_14 = arith.constant 0 : index
      %16 = vector.load %arg6[%c0_13, %c0_14] : memref<1x128xf32, #tpu.memory_space<vmem>>, vector<1x128xf32>
      %17 = vector.broadcast %16 : vector<1x128xf32> to vector<32x128xf32>
      %18 = arith.addf %15, %17 : vector<32x128xf32>
      %c0_15 = arith.constant 0 : index
      %c0_16 = arith.constant 0 : index
      %19 = vector.load %arg7[%c0_15, %c0_16] : memref<32x128xf32, #tpu.memory_space<vmem>>, vector<32x128xf32>
      %20 = arith.addf %18, %19 : vector<32x128xf32>
      %cst_17 = arith.constant 0.000000e+00 : f32
      %21 = vector.broadcast %cst_17 : f32 to vector<32x128xf32>
      %22 = arith.maximumf %20, %21 : vector<32x128xf32>
      %c0_18 = arith.constant 0 : index
      %c0_19 = arith.constant 0 : index
      %23 = vector.load %arg8[%c0_18, %c0_19] : memref<32x128xf32, #tpu.memory_space<vmem>>, vector<32x128xf32>
      tpu.vector_store %arg8[%c0_18, %c0_19], %22 {strides = array<i32>} : memref<32x128xf32, #tpu.memory_space<vmem>>, vector<32x128xf32>,
    } else {
    }
    return
  }
  func.func @transform_0(%arg0: i32, %arg1: i32, %arg2: i32) -> (i32, i32) {
    %c0_i32 = arith.constant 0 : i32
    return %arg0, %arg2 : i32, i32
  }
  func.func @transform_1(%arg0: i32, %arg1: i32, %arg2: i32) -> (i32, i32) {
    %c0_i32 = arith.constant 0 : i32
    return %arg2, %arg1 : i32, i32
  }
  func.func @transform_2(%arg0: i32, %arg1: i32, %arg2: i32) -> (i32, i32) {
    %c0_i32 = arith.constant 0 : i32
    %c0_i32_0 = arith.constant 0 : i32
    return %c0_i32, %arg1 : i32, i32
  }
  func.func @transform_3(%arg0: i32, %arg1: i32, %arg2: i32) -> (i32, i32) {
    %c0_i32 = arith.constant 0 : i32
    %c0_i32_0 = arith.constant 0 : i32
    return %c0_i32, %arg1 : i32, i32
  }
  func.func @transform_4(%arg0: i32, %arg1: i32, %arg2: i32) -> (i32, i32) {
    %c0_i32 = arith.constant 0 : i32
    return %arg0, %arg1 : i32, i32
  }
  func.func @transform_5(%arg0: i32, %arg1: i32, %arg2: i32) -> (i32, i32) {
    %c0_i32 = arith.constant 0 : i32
    return %arg0, %arg1 : i32, i32
  }
}

module attributes {stable_mosaic.version = 11 : i64} {
  func.func @_mm_fused_kernel(%arg0: i32, %arg1: i32, %arg2: i32, %arg3: memref<8x256xbf16, #tpu.memory_space<vmem>>, %arg4: memref<256x128xbf16, #tpu.memory_space<vmem>>, %arg5: memref<1x128xf32, #tpu.memory_space<vmem>>, %arg6: memref<1x128xf32, #tpu.memory_space<vmem>>, %arg7: memref<8x128xf32, #tpu.memory_space<vmem>>, %arg8: memref<8x128xf32, #tpu.memory_space<vmem>>) attributes {dimension_semantics = [#tpu.dimension_semantics<parallel>, #tpu.dimension_semantics<parallel>, #tpu.dimension_semantics<arbitrary>], iteration_bounds = array<i64: 1, 1, 2>, scalar_prefetch = 0 : i64, scratch_operands = 1 : i64, tpu.core_type = #tpu.core_type<tc>, window_params = [{transform_indices = @transform_0, window_bounds = array<i64: 8, 256>}, {transform_indices = @transform_1, window_bounds = array<i64: 256, 128>}, {transform_indices = @transform_2, window_bounds = array<i64: 1, 128>}, {transform_indices = @transform_3, window_bounds = array<i64: 1, 128>}, {transform_indices = @transform_4, window_bounds = array<i64: 8, 128>}]} {
    %c0_i32 = arith.constant 0 : i32
    %0 = arith.cmpi eq, %arg2, %c0_i32 : i32
    %1 = arith.extui %0 : i1 to i32
    %c0_i32_0 = arith.constant 0 : i32
    %2 = arith.cmpi ne, %1, %c0_i32_0 : i32
    scf.if %2 {
      %cst_9 = arith.constant 0.000000e+00 : f32
      %12 = vector.broadcast %cst_9 : f32 to vector<8x128xf32>
      %c0_10 = arith.constant 0 : index
      %c0_11 = arith.constant 0 : index
      %13 = vector.load %arg8[%c0_10, %c0_11] : memref<8x128xf32, #tpu.memory_space<vmem>>, vector<8x128xf32>
      tpu.vector_store %arg8[%c0_10, %c0_11], %12 {strides = array<i32>} : memref<8x128xf32, #tpu.memory_space<vmem>>, vector<8x128xf32>,
    } else {
    }
    %c0 = arith.constant 0 : index
    %c0_1 = arith.constant 0 : index
    %3 = vector.load %arg8[%c0, %c0_1] : memref<8x128xf32, #tpu.memory_space<vmem>>, vector<8x128xf32>
    %c0_2 = arith.constant 0 : index
    %c0_3 = arith.constant 0 : index
    %4 = vector.load %arg3[%c0_2, %c0_3] : memref<8x256xbf16, #tpu.memory_space<vmem>>, vector<8x256xbf16>
    %c0_4 = arith.constant 0 : index
    %c0_5 = arith.constant 0 : index
    %5 = vector.load %arg4[%c0_4, %c0_5] : memref<256x128xbf16, #tpu.memory_space<vmem>>, vector<256x128xbf16>
    %cst = arith.constant dense<0.000000e+00> : vector<8x128xf32>
    %6 = tpu.matmul %4, %5, %cst {dimension_numbers = #tpu.dot_dimension_numbers<[1], [0], [0], [1], [0, 0, 1, 1], [], []>} : vector<8x256xbf16>, vector<256x128xbf16>, vector<8x128xf32> -> vector<8x128xf32>
    %7 = arith.addf %3, %6 : vector<8x128xf32>
    %c0_6 = arith.constant 0 : index
    %c0_7 = arith.constant 0 : index
    %8 = vector.load %arg8[%c0_6, %c0_7] : memref<8x128xf32, #tpu.memory_space<vmem>>, vector<8x128xf32>
    tpu.vector_store %arg8[%c0_6, %c0_7], %7 {strides = array<i32>} : memref<8x128xf32, #tpu.memory_space<vmem>>, vector<8x128xf32>,
    %c1_i32 = arith.constant 1 : i32
    %9 = arith.cmpi eq, %arg2, %c1_i32 : i32
    %10 = arith.extui %9 : i1 to i32
    %c0_i32_8 = arith.constant 0 : i32
    %11 = arith.cmpi ne, %10, %c0_i32_8 : i32
    scf.if %11 {
      %c0_9 = arith.constant 0 : index
      %c0_10 = arith.constant 0 : index
      %12 = vector.load %arg8[%c0_9, %c0_10] : memref<8x128xf32, #tpu.memory_space<vmem>>, vector<8x128xf32>
      %c0_11 = arith.constant 0 : index
      %c0_12 = arith.constant 0 : index
      %13 = vector.load %arg5[%c0_11, %c0_12] : memref<1x128xf32, #tpu.memory_space<vmem>>, vector<1x128xf32>
      %14 = vector.broadcast %13 : vector<1x128xf32> to vector<8x128xf32>
      %15 = arith.mulf %12, %14 : vector<8x128xf32>
      %c0_13 = arith.constant 0 : index
      %c0_14 = arith.constant 0 : index
      %16 = vector.load %arg6[%c0_13, %c0_14] : memref<1x128xf32, #tpu.memory_space<vmem>>, vector<1x128xf32>
      %17 = vector.broadcast %16 : vector<1x128xf32> to vector<8x128xf32>
      %18 = arith.addf %15, %17 : vector<8x128xf32>
      %cst_15 = arith.constant 0.000000e+00 : f32
      %19 = vector.broadcast %cst_15 : f32 to vector<8x128xf32>
      %20 = arith.maximumf %18, %19 : vector<8x128xf32>
      %c0_16 = arith.constant 0 : index
      %c0_17 = arith.constant 0 : index
      %21 = vector.load %arg7[%c0_16, %c0_17] : memref<8x128xf32, #tpu.memory_space<vmem>>, vector<8x128xf32>
      tpu.vector_store %arg7[%c0_16, %c0_17], %20 {strides = array<i32>} : memref<8x128xf32, #tpu.memory_space<vmem>>, vector<8x128xf32>,
    } else {
    }
    return
  }
  func.func @transform_0(%arg0: i32, %arg1: i32, %arg2: i32) -> (i32, i32) {
    %c0_i32 = arith.constant 0 : i32
    return %arg0, %arg2 : i32, i32
  }
  func.func @transform_1(%arg0: i32, %arg1: i32, %arg2: i32) -> (i32, i32) {
    %c0_i32 = arith.constant 0 : i32
    return %arg2, %arg1 : i32, i32
  }
  func.func @transform_2(%arg0: i32, %arg1: i32, %arg2: i32) -> (i32, i32) {
    %c0_i32 = arith.constant 0 : i32
    %c0_i32_0 = arith.constant 0 : i32
    return %c0_i32, %arg1 : i32, i32
  }
  func.func @transform_3(%arg0: i32, %arg1: i32, %arg2: i32) -> (i32, i32) {
    %c0_i32 = arith.constant 0 : i32
    %c0_i32_0 = arith.constant 0 : i32
    return %c0_i32, %arg1 : i32, i32
  }
  func.func @transform_4(%arg0: i32, %arg1: i32, %arg2: i32) -> (i32, i32) {
    %c0_i32 = arith.constant 0 : i32
    return %arg0, %arg1 : i32, i32
  }
}

module attributes {stable_mosaic.version = 11 : i64} {
  func.func @_mm_fused_kernel(%arg0: i32, %arg1: i32, %arg2: i32, %arg3: memref<8x128xbf16, #tpu.memory_space<vmem>>, %arg4: memref<128x128xbf16, #tpu.memory_space<vmem>>, %arg5: memref<1x128xf32, #tpu.memory_space<vmem>>, %arg6: memref<1x128xf32, #tpu.memory_space<vmem>>, %arg7: memref<8x128xf32, #tpu.memory_space<vmem>>, %arg8: memref<8x128xf32, #tpu.memory_space<vmem>>) attributes {dimension_semantics = [#tpu.dimension_semantics<parallel>, #tpu.dimension_semantics<parallel>, #tpu.dimension_semantics<arbitrary>], iteration_bounds = array<i64: 1, 1, 1>, scalar_prefetch = 0 : i64, scratch_operands = 1 : i64, tpu.core_type = #tpu.core_type<tc>, window_params = [{transform_indices = @transform_0, window_bounds = array<i64: 8, 128>}, {transform_indices = @transform_1, window_bounds = array<i64: 128, 128>}, {transform_indices = @transform_2, window_bounds = array<i64: 1, 128>}, {transform_indices = @transform_3, window_bounds = array<i64: 1, 128>}, {transform_indices = @transform_4, window_bounds = array<i64: 8, 128>}]} {
    %c0_i32 = arith.constant 0 : i32
    %0 = arith.cmpi eq, %arg2, %c0_i32 : i32
    %1 = arith.extui %0 : i1 to i32
    %c0_i32_0 = arith.constant 0 : i32
    %2 = arith.cmpi ne, %1, %c0_i32_0 : i32
    scf.if %2 {
      %cst_10 = arith.constant 0.000000e+00 : f32
      %12 = vector.broadcast %cst_10 : f32 to vector<8x128xf32>
      %c0_11 = arith.constant 0 : index
      %c0_12 = arith.constant 0 : index
      %13 = vector.load %arg8[%c0_11, %c0_12] : memref<8x128xf32, #tpu.memory_space<vmem>>, vector<8x128xf32>
      tpu.vector_store %arg8[%c0_11, %c0_12], %12 {strides = array<i32>} : memref<8x128xf32, #tpu.memory_space<vmem>>, vector<8x128xf32>,
    } else {
    }
    %c0 = arith.constant 0 : index
    %c0_1 = arith.constant 0 : index
    %3 = vector.load %arg8[%c0, %c0_1] : memref<8x128xf32, #tpu.memory_space<vmem>>, vector<8x128xf32>
    %c0_2 = arith.constant 0 : index
    %c0_3 = arith.constant 0 : index
    %4 = vector.load %arg3[%c0_2, %c0_3] : memref<8x128xbf16, #tpu.memory_space<vmem>>, vector<8x128xbf16>
    %c0_4 = arith.constant 0 : index
    %c0_5 = arith.constant 0 : index
    %5 = vector.load %arg4[%c0_4, %c0_5] : memref<128x128xbf16, #tpu.memory_space<vmem>>, vector<128x128xbf16>
    %cst = arith.constant dense<0.000000e+00> : vector<8x128xf32>
    %6 = tpu.matmul %4, %5, %cst {dimension_numbers = #tpu.dot_dimension_numbers<[1], [0], [0], [1], [0, 0, 1, 1], [], []>} : vector<8x128xbf16>, vector<128x128xbf16>, vector<8x128xf32> -> vector<8x128xf32>
    %7 = arith.addf %3, %6 : vector<8x128xf32>
    %c0_6 = arith.constant 0 : index
    %c0_7 = arith.constant 0 : index
    %8 = vector.load %arg8[%c0_6, %c0_7] : memref<8x128xf32, #tpu.memory_space<vmem>>, vector<8x128xf32>
    tpu.vector_store %arg8[%c0_6, %c0_7], %7 {strides = array<i32>} : memref<8x128xf32, #tpu.memory_space<vmem>>, vector<8x128xf32>,
    %c0_i32_8 = arith.constant 0 : i32
    %9 = arith.cmpi eq, %arg2, %c0_i32_8 : i32
    %10 = arith.extui %9 : i1 to i32
    %c0_i32_9 = arith.constant 0 : i32
    %11 = arith.cmpi ne, %10, %c0_i32_9 : i32
    scf.if %11 {
      %c0_10 = arith.constant 0 : index
      %c0_11 = arith.constant 0 : index
      %12 = vector.load %arg8[%c0_10, %c0_11] : memref<8x128xf32, #tpu.memory_space<vmem>>, vector<8x128xf32>
      %c0_12 = arith.constant 0 : index
      %c0_13 = arith.constant 0 : index
      %13 = vector.load %arg5[%c0_12, %c0_13] : memref<1x128xf32, #tpu.memory_space<vmem>>, vector<1x128xf32>
      %14 = vector.broadcast %13 : vector<1x128xf32> to vector<8x128xf32>
      %15 = arith.mulf %12, %14 : vector<8x128xf32>
      %c0_14 = arith.constant 0 : index
      %c0_15 = arith.constant 0 : index
      %16 = vector.load %arg6[%c0_14, %c0_15] : memref<1x128xf32, #tpu.memory_space<vmem>>, vector<1x128xf32>
      %17 = vector.broadcast %16 : vector<1x128xf32> to vector<8x128xf32>
      %18 = arith.addf %15, %17 : vector<8x128xf32>
      %c0_16 = arith.constant 0 : index
      %c0_17 = arith.constant 0 : index
      %19 = vector.load %arg7[%c0_16, %c0_17] : memref<8x128xf32, #tpu.memory_space<vmem>>, vector<8x128xf32>
      tpu.vector_store %arg7[%c0_16, %c0_17], %18 {strides = array<i32>} : memref<8x128xf32, #tpu.memory_space<vmem>>, vector<8x128xf32>,
    } else {
    }
    return
  }
  func.func @transform_0(%arg0: i32, %arg1: i32, %arg2: i32) -> (i32, i32) {
    %c0_i32 = arith.constant 0 : i32
    return %arg0, %arg2 : i32, i32
  }
  func.func @transform_1(%arg0: i32, %arg1: i32, %arg2: i32) -> (i32, i32) {
    %c0_i32 = arith.constant 0 : i32
    return %arg2, %arg1 : i32, i32
  }
  func.func @transform_2(%arg0: i32, %arg1: i32, %arg2: i32) -> (i32, i32) {
    %c0_i32 = arith.constant 0 : i32
    %c0_i32_0 = arith.constant 0 : i32
    return %c0_i32, %arg1 : i32, i32
  }
  func.func @transform_3(%arg0: i32, %arg1: i32, %arg2: i32) -> (i32, i32) {
    %c0_i32 = arith.constant 0 : i32
    %c0_i32_0 = arith.constant 0 : i32
    return %c0_i32, %arg1 : i32, i32
  }
  func.func @transform_4(%arg0: i32, %arg1: i32, %arg2: i32) -> (i32, i32) {
    %c0_i32 = arith.constant 0 : i32
    return %arg0, %arg1 : i32, i32
  }
}

module attributes {stable_mosaic.version = 11 : i64} {
  func.func @_mm_fused_kernel(%arg0: i32, %arg1: i32, %arg2: i32, %arg3: memref<8x256xbf16, #tpu.memory_space<vmem>>, %arg4: memref<256x128xbf16, #tpu.memory_space<vmem>>, %arg5: memref<1x128xf32, #tpu.memory_space<vmem>>, %arg6: memref<1x128xf32, #tpu.memory_space<vmem>>, %arg7: memref<8x128xf32, #tpu.memory_space<vmem>>, %arg8: memref<8x128xf32, #tpu.memory_space<vmem>>, %arg9: memref<8x128xf32, #tpu.memory_space<vmem>>) attributes {dimension_semantics = [#tpu.dimension_semantics<parallel>, #tpu.dimension_semantics<parallel>, #tpu.dimension_semantics<arbitrary>], iteration_bounds = array<i64: 1, 1, 3>, scalar_prefetch = 0 : i64, scratch_operands = 1 : i64, tpu.core_type = #tpu.core_type<tc>, window_params = [{transform_indices = @transform_0, window_bounds = array<i64: 8, 256>}, {transform_indices = @transform_1, window_bounds = array<i64: 256, 128>}, {transform_indices = @transform_2, window_bounds = array<i64: 1, 128>}, {transform_indices = @transform_3, window_bounds = array<i64: 1, 128>}, {transform_indices = @transform_4, window_bounds = array<i64: 8, 128>}, {transform_indices = @transform_5, window_bounds = array<i64: 8, 128>}]} {
    %c0_i32 = arith.constant 0 : i32
    %0 = arith.cmpi eq, %arg2, %c0_i32 : i32
    %1 = arith.extui %0 : i1 to i32
    %c0_i32_0 = arith.constant 0 : i32
    %2 = arith.cmpi ne, %1, %c0_i32_0 : i32
    scf.if %2 {
      %cst_9 = arith.constant 0.000000e+00 : f32
      %12 = vector.broadcast %cst_9 : f32 to vector<8x128xf32>
      %c0_10 = arith.constant 0 : index
      %c0_11 = arith.constant 0 : index
      %13 = vector.load %arg9[%c0_10, %c0_11] : memref<8x128xf32, #tpu.memory_space<vmem>>, vector<8x128xf32>
      tpu.vector_store %arg9[%c0_10, %c0_11], %12 {strides = array<i32>} : memref<8x128xf32, #tpu.memory_space<vmem>>, vector<8x128xf32>,
    } else {
    }
    %c0 = arith.constant 0 : index
    %c0_1 = arith.constant 0 : index
    %3 = vector.load %arg9[%c0, %c0_1] : memref<8x128xf32, #tpu.memory_space<vmem>>, vector<8x128xf32>
    %c0_2 = arith.constant 0 : index
    %c0_3 = arith.constant 0 : index
    %4 = vector.load %arg3[%c0_2, %c0_3] : memref<8x256xbf16, #tpu.memory_space<vmem>>, vector<8x256xbf16>
    %c0_4 = arith.constant 0 : index
    %c0_5 = arith.constant 0 : index
    %5 = vector.load %arg4[%c0_4, %c0_5] : memref<256x128xbf16, #tpu.memory_space<vmem>>, vector<256x128xbf16>
    %cst = arith.constant dense<0.000000e+00> : vector<8x128xf32>
    %6 = tpu.matmul %4, %5, %cst {dimension_numbers = #tpu.dot_dimension_numbers<[1], [0], [0], [1], [0, 0, 1, 1], [], []>} : vector<8x256xbf16>, vector<256x128xbf16>, vector<8x128xf32> -> vector<8x128xf32>
    %7 = arith.addf %3, %6 : vector<8x128xf32>
    %c0_6 = arith.constant 0 : index
    %c0_7 = arith.constant 0 : index
    %8 = vector.load %arg9[%c0_6, %c0_7] : memref<8x128xf32, #tpu.memory_space<vmem>>, vector<8x128xf32>
    tpu.vector_store %arg9[%c0_6, %c0_7], %7 {strides = array<i32>} : memref<8x128xf32, #tpu.memory_space<vmem>>, vector<8x128xf32>,
    %c2_i32 = arith.constant 2 : i32
    %9 = arith.cmpi eq, %arg2, %c2_i32 : i32
    %10 = arith.extui %9 : i1 to i32
    %c0_i32_8 = arith.constant 0 : i32
    %11 = arith.cmpi ne, %10, %c0_i32_8 : i32
    scf.if %11 {
      %c0_9 = arith.constant 0 : index
      %c0_10 = arith.constant 0 : index
      %12 = vector.load %arg9[%c0_9, %c0_10] : memref<8x128xf32, #tpu.memory_space<vmem>>, vector<8x128xf32>
      %c0_11 = arith.constant 0 : index
      %c0_12 = arith.constant 0 : index
      %13 = vector.load %arg5[%c0_11, %c0_12] : memref<1x128xf32, #tpu.memory_space<vmem>>, vector<1x128xf32>
      %14 = vector.broadcast %13 : vector<1x128xf32> to vector<8x128xf32>
      %15 = arith.mulf %12, %14 : vector<8x128xf32>
      %c0_13 = arith.constant 0 : index
      %c0_14 = arith.constant 0 : index
      %16 = vector.load %arg6[%c0_13, %c0_14] : memref<1x128xf32, #tpu.memory_space<vmem>>, vector<1x128xf32>
      %17 = vector.broadcast %16 : vector<1x128xf32> to vector<8x128xf32>
      %18 = arith.addf %15, %17 : vector<8x128xf32>
      %c0_15 = arith.constant 0 : index
      %c0_16 = arith.constant 0 : index
      %19 = vector.load %arg7[%c0_15, %c0_16] : memref<8x128xf32, #tpu.memory_space<vmem>>, vector<8x128xf32>
      %20 = arith.addf %18, %19 : vector<8x128xf32>
      %cst_17 = arith.constant 0.000000e+00 : f32
      %21 = vector.broadcast %cst_17 : f32 to vector<8x128xf32>
      %22 = arith.maximumf %20, %21 : vector<8x128xf32>
      %c0_18 = arith.constant 0 : index
      %c0_19 = arith.constant 0 : index
      %23 = vector.load %arg8[%c0_18, %c0_19] : memref<8x128xf32, #tpu.memory_space<vmem>>, vector<8x128xf32>
      tpu.vector_store %arg8[%c0_18, %c0_19], %22 {strides = array<i32>} : memref<8x128xf32, #tpu.memory_space<vmem>>, vector<8x128xf32>,
    } else {
    }
    return
  }
  func.func @transform_0(%arg0: i32, %arg1: i32, %arg2: i32) -> (i32, i32) {
    %c0_i32 = arith.constant 0 : i32
    return %arg0, %arg2 : i32, i32
  }
  func.func @transform_1(%arg0: i32, %arg1: i32, %arg2: i32) -> (i32, i32) {
    %c0_i32 = arith.constant 0 : i32
    return %arg2, %arg1 : i32, i32
  }
  func.func @transform_2(%arg0: i32, %arg1: i32, %arg2: i32) -> (i32, i32) {
    %c0_i32 = arith.constant 0 : i32
    %c0_i32_0 = arith.constant 0 : i32
    return %c0_i32, %arg1 : i32, i32
  }
  func.func @transform_3(%arg0: i32, %arg1: i32, %arg2: i32) -> (i32, i32) {
    %c0_i32 = arith.constant 0 : i32
    %c0_i32_0 = arith.constant 0 : i32
    return %c0_i32, %arg1 : i32, i32
  }
  func.func @transform_4(%arg0: i32, %arg1: i32, %arg2: i32) -> (i32, i32) {
    %c0_i32 = arith.constant 0 : i32
    return %arg0, %arg1 : i32, i32
  }
  func.func @transform_5(%arg0: i32, %arg1: i32, %arg2: i32) -> (i32, i32) {
    %c0_i32 = arith.constant 0 : i32
    return %arg0, %arg1 : i32, i32
  }
}

module attributes {stable_mosaic.version = 11 : i64} {
  func.func @_dtcf_kernel(%arg0: i32, %arg1: memref<1x4x64xf32, #tpu.memory_space<vmem>>, %arg2: memref<64x8xf32, #tpu.memory_space<vmem>>, %arg3: memref<1x8xf32, #tpu.memory_space<vmem>>, %arg4: memref<8x64xf32, #tpu.memory_space<vmem>>, %arg5: memref<1x64xf32, #tpu.memory_space<vmem>>, %arg6: memref<1x4x64xf32, #tpu.memory_space<vmem>>) attributes {dimension_semantics = [#tpu.dimension_semantics<parallel>], iteration_bounds = array<i64: 2>, scalar_prefetch = 0 : i64, scratch_operands = 0 : i64, tpu.core_type = #tpu.core_type<tc>, window_params = [{transform_indices = @transform_0, window_bounds = array<i64: 1, 4, 64>}, {pipeline_mode = #tpu.pipeline_mode<synchronous>, transform_indices = @transform_1, window_bounds = array<i64: 64, 8>}, {pipeline_mode = #tpu.pipeline_mode<synchronous>, transform_indices = @transform_2, window_bounds = array<i64: 1, 8>}, {pipeline_mode = #tpu.pipeline_mode<synchronous>, transform_indices = @transform_3, window_bounds = array<i64: 8, 64>}, {pipeline_mode = #tpu.pipeline_mode<synchronous>, transform_indices = @transform_4, window_bounds = array<i64: 1, 64>}, {transform_indices = @transform_5, window_bounds = array<i64: 1, 4, 64>}]} {
    %c0 = arith.constant 0 : index
    %c0_0 = arith.constant 0 : index
    %c0_1 = arith.constant 0 : index
    %0 = vector.load %arg1[%c0, %c0_0, %c0_1] : memref<1x4x64xf32, #tpu.memory_space<vmem>>, vector<1x4x64xf32>
    %1 = vector.shape_cast %0 : vector<1x4x64xf32> to vector<4x64xf32>
    %cst = arith.constant dense<0.000000e+00> : vector<64xf32>
    %2 = vector.multi_reduction <add>, %1, %cst [0] : vector<4x64xf32> to vector<64xf32>
    %3 = vector.shape_cast %2 : vector<64xf32> to vector<1x64xf32>
    %cst_2 = arith.constant 4.000000e+00 : f32
    %4 = vector.broadcast %cst_2 : f32 to vector<1x64xf32>
    %5 = arith.divf %3, %4 : vector<1x64xf32>
    %c0_3 = arith.constant 0 : index
    %c0_4 = arith.constant 0 : index
    %6 = vector.load %arg2[%c0_3, %c0_4] : memref<64x8xf32, #tpu.memory_space<vmem>>, vector<64x8xf32>
    %cst_5 = arith.constant dense<0.000000e+00> : vector<1x8xf32>
    %7 = tpu.matmul %5, %6, %cst_5 {dimension_numbers = #tpu.dot_dimension_numbers<[1], [0], [0], [1], [0, 0, 1, 1], [], []>} : vector<1x64xf32>, vector<64x8xf32>, vector<1x8xf32> -> vector<1x8xf32>
    %c0_6 = arith.constant 0 : index
    %c0_7 = arith.constant 0 : index
    %8 = vector.load %arg3[%c0_6, %c0_7] : memref<1x8xf32, #tpu.memory_space<vmem>>, vector<1x8xf32>
    %9 = arith.addf %7, %8 : vector<1x8xf32>
    %cst_8 = arith.constant 0.000000e+00 : f32
    %10 = vector.broadcast %cst_8 : f32 to vector<1x8xf32>
    %11 = arith.maximumf %9, %10 : vector<1x8xf32>
    %c0_9 = arith.constant 0 : index
    %c0_10 = arith.constant 0 : index
    %12 = vector.load %arg4[%c0_9, %c0_10] : memref<8x64xf32, #tpu.memory_space<vmem>>, vector<8x64xf32>
    %cst_11 = arith.constant dense<0.000000e+00> : vector<1x64xf32>
    %13 = tpu.matmul %11, %12, %cst_11 {dimension_numbers = #tpu.dot_dimension_numbers<[1], [0], [0], [1], [0, 0, 1, 1], [], []>} : vector<1x8xf32>, vector<8x64xf32>, vector<1x64xf32> -> vector<1x64xf32>
    %c0_12 = arith.constant 0 : index
    %c0_13 = arith.constant 0 : index
    %14 = vector.load %arg5[%c0_12, %c0_13] : memref<1x64xf32, #tpu.memory_space<vmem>>, vector<1x64xf32>
    %15 = arith.addf %13, %14 : vector<1x64xf32>
    %16 = arith.negf %15 : vector<1x64xf32>
    %17 = math.exp %16 : vector<1x64xf32>
    %cst_14 = arith.constant 1.000000e+00 : f32
    %18 = vector.broadcast %cst_14 : f32 to vector<1x64xf32>
    %19 = arith.addf %18, %17 : vector<1x64xf32>
    %20 = arith.divf %18, %19 : vector<1x64xf32>
    %21 = vector.broadcast %20 : vector<1x64xf32> to vector<4x64xf32>
    %22 = arith.mulf %1, %21 : vector<4x64xf32>
    %23 = vector.shape_cast %22 : vector<4x64xf32> to vector<1x4x64xf32>
    %c0_15 = arith.constant 0 : index
    %c0_16 = arith.constant 0 : index
    %c0_17 = arith.constant 0 : index
    %24 = vector.load %arg6[%c0_15, %c0_16, %c0_17] : memref<1x4x64xf32, #tpu.memory_space<vmem>>, vector<1x4x64xf32>
    tpu.vector_store %arg6[%c0_15, %c0_16, %c0_17], %23 {strides = array<i32>} : memref<1x4x64xf32, #tpu.memory_space<vmem>>, vector<1x4x64xf32>,
    return
  }
  func.func @transform_0(%arg0: i32) -> (i32, i32, i32) {
    %c0_i32 = arith.constant 0 : i32
    %c0_i32_0 = arith.constant 0 : i32
    %c0_i32_1 = arith.constant 0 : i32
    return %arg0, %c0_i32, %c0_i32_0 : i32, i32, i32
  }
  func.func @transform_1(%arg0: i32) -> (i32, i32) {
    %c0_i32 = arith.constant 0 : i32
    %c0_i32_0 = arith.constant 0 : i32
    %c0_i32_1 = arith.constant 0 : i32
    return %c0_i32, %c0_i32_0 : i32, i32
  }
  func.func @transform_2(%arg0: i32) -> (i32, i32) {
    %c0_i32 = arith.constant 0 : i32
    %c0_i32_0 = arith.constant 0 : i32
    %c0_i32_1 = arith.constant 0 : i32
    return %c0_i32, %c0_i32_0 : i32, i32
  }
  func.func @transform_3(%arg0: i32) -> (i32, i32) {
    %c0_i32 = arith.constant 0 : i32
    %c0_i32_0 = arith.constant 0 : i32
    %c0_i32_1 = arith.constant 0 : i32
    return %c0_i32, %c0_i32_0 : i32, i32
  }
  func.func @transform_4(%arg0: i32) -> (i32, i32) {
    %c0_i32 = arith.constant 0 : i32
    %c0_i32_0 = arith.constant 0 : i32
    %c0_i32_1 = arith.constant 0 : i32
    return %c0_i32, %c0_i32_0 : i32, i32
  }
  func.func @transform_5(%arg0: i32) -> (i32, i32, i32) {
    %c0_i32 = arith.constant 0 : i32
    %c0_i32_0 = arith.constant 0 : i32
    %c0_i32_1 = arith.constant 0 : i32
    return %arg0, %c0_i32, %c0_i32_0 : i32, i32, i32
  }
}

module attributes {stable_mosaic.version = 11 : i64} {
  func.func @_mm_fused_kernel(%arg0: i32, %arg1: i32, %arg2: i32, %arg3: memref<8x128xbf16, #tpu.memory_space<vmem>>, %arg4: memref<128x128xbf16, #tpu.memory_space<vmem>>, %arg5: memref<1x128xf32, #tpu.memory_space<vmem>>, %arg6: memref<1x128xf32, #tpu.memory_space<vmem>>, %arg7: memref<8x128xf32, #tpu.memory_space<vmem>>, %arg8: memref<8x128xf32, #tpu.memory_space<vmem>>) attributes {dimension_semantics = [#tpu.dimension_semantics<parallel>, #tpu.dimension_semantics<parallel>, #tpu.dimension_semantics<arbitrary>], iteration_bounds = array<i64: 1, 1, 1>, scalar_prefetch = 0 : i64, scratch_operands = 1 : i64, tpu.core_type = #tpu.core_type<tc>, window_params = [{transform_indices = @transform_0, window_bounds = array<i64: 8, 128>}, {transform_indices = @transform_1, window_bounds = array<i64: 128, 128>}, {transform_indices = @transform_2, window_bounds = array<i64: 1, 128>}, {transform_indices = @transform_3, window_bounds = array<i64: 1, 128>}, {transform_indices = @transform_4, window_bounds = array<i64: 8, 128>}]} {
    %c0_i32 = arith.constant 0 : i32
    %0 = arith.cmpi eq, %arg2, %c0_i32 : i32
    %1 = arith.extui %0 : i1 to i32
    %c0_i32_0 = arith.constant 0 : i32
    %2 = arith.cmpi ne, %1, %c0_i32_0 : i32
    scf.if %2 {
      %cst_10 = arith.constant 0.000000e+00 : f32
      %12 = vector.broadcast %cst_10 : f32 to vector<8x128xf32>
      %c0_11 = arith.constant 0 : index
      %c0_12 = arith.constant 0 : index
      %13 = vector.load %arg8[%c0_11, %c0_12] : memref<8x128xf32, #tpu.memory_space<vmem>>, vector<8x128xf32>
      tpu.vector_store %arg8[%c0_11, %c0_12], %12 {strides = array<i32>} : memref<8x128xf32, #tpu.memory_space<vmem>>, vector<8x128xf32>,
    } else {
    }
    %c0 = arith.constant 0 : index
    %c0_1 = arith.constant 0 : index
    %3 = vector.load %arg8[%c0, %c0_1] : memref<8x128xf32, #tpu.memory_space<vmem>>, vector<8x128xf32>
    %c0_2 = arith.constant 0 : index
    %c0_3 = arith.constant 0 : index
    %4 = vector.load %arg3[%c0_2, %c0_3] : memref<8x128xbf16, #tpu.memory_space<vmem>>, vector<8x128xbf16>
    %c0_4 = arith.constant 0 : index
    %c0_5 = arith.constant 0 : index
    %5 = vector.load %arg4[%c0_4, %c0_5] : memref<128x128xbf16, #tpu.memory_space<vmem>>, vector<128x128xbf16>
    %cst = arith.constant dense<0.000000e+00> : vector<8x128xf32>
    %6 = tpu.matmul %4, %5, %cst {dimension_numbers = #tpu.dot_dimension_numbers<[1], [0], [0], [1], [0, 0, 1, 1], [], []>} : vector<8x128xbf16>, vector<128x128xbf16>, vector<8x128xf32> -> vector<8x128xf32>
    %7 = arith.addf %3, %6 : vector<8x128xf32>
    %c0_6 = arith.constant 0 : index
    %c0_7 = arith.constant 0 : index
    %8 = vector.load %arg8[%c0_6, %c0_7] : memref<8x128xf32, #tpu.memory_space<vmem>>, vector<8x128xf32>
    tpu.vector_store %arg8[%c0_6, %c0_7], %7 {strides = array<i32>} : memref<8x128xf32, #tpu.memory_space<vmem>>, vector<8x128xf32>,
    %c0_i32_8 = arith.constant 0 : i32
    %9 = arith.cmpi eq, %arg2, %c0_i32_8 : i32
    %10 = arith.extui %9 : i1 to i32
    %c0_i32_9 = arith.constant 0 : i32
    %11 = arith.cmpi ne, %10, %c0_i32_9 : i32
    scf.if %11 {
      %c0_10 = arith.constant 0 : index
      %c0_11 = arith.constant 0 : index
      %12 = vector.load %arg8[%c0_10, %c0_11] : memref<8x128xf32, #tpu.memory_space<vmem>>, vector<8x128xf32>
      %c0_12 = arith.constant 0 : index
      %c0_13 = arith.constant 0 : index
      %13 = vector.load %arg5[%c0_12, %c0_13] : memref<1x128xf32, #tpu.memory_space<vmem>>, vector<1x128xf32>
      %14 = vector.broadcast %13 : vector<1x128xf32> to vector<8x128xf32>
      %15 = arith.mulf %12, %14 : vector<8x128xf32>
      %c0_14 = arith.constant 0 : index
      %c0_15 = arith.constant 0 : index
      %16 = vector.load %arg6[%c0_14, %c0_15] : memref<1x128xf32, #tpu.memory_space<vmem>>, vector<1x128xf32>
      %17 = vector.broadcast %16 : vector<1x128xf32> to vector<8x128xf32>
      %18 = arith.addf %15, %17 : vector<8x128xf32>
      %cst_16 = arith.constant 0.000000e+00 : f32
      %19 = vector.broadcast %cst_16 : f32 to vector<8x128xf32>
      %20 = arith.maximumf %18, %19 : vector<8x128xf32>
      %c0_17 = arith.constant 0 : index
      %c0_18 = arith.constant 0 : index
      %21 = vector.load %arg7[%c0_17, %c0_18] : memref<8x128xf32, #tpu.memory_space<vmem>>, vector<8x128xf32>
      tpu.vector_store %arg7[%c0_17, %c0_18], %20 {strides = array<i32>} : memref<8x128xf32, #tpu.memory_space<vmem>>, vector<8x128xf32>,
    } else {
    }
    return
  }
  func.func @transform_0(%arg0: i32, %arg1: i32, %arg2: i32) -> (i32, i32) {
    %c0_i32 = arith.constant 0 : i32
    return %arg0, %arg2 : i32, i32
  }
  func.func @transform_1(%arg0: i32, %arg1: i32, %arg2: i32) -> (i32, i32) {
    %c0_i32 = arith.constant 0 : i32
    return %arg2, %arg1 : i32, i32
  }
  func.func @transform_2(%arg0: i32, %arg1: i32, %arg2: i32) -> (i32, i32) {
    %c0_i32 = arith.constant 0 : i32
    %c0_i32_0 = arith.constant 0 : i32
    return %c0_i32, %arg1 : i32, i32
  }
  func.func @transform_3(%arg0: i32, %arg1: i32, %arg2: i32) -> (i32, i32) {
    %c0_i32 = arith.constant 0 : i32
    %c0_i32_0 = arith.constant 0 : i32
    return %c0_i32, %arg1 : i32, i32
  }
  func.func @transform_4(%arg0: i32, %arg1: i32, %arg2: i32) -> (i32, i32) {
    %c0_i32 = arith.constant 0 : i32
    return %arg0, %arg1 : i32, i32
  }
}

module attributes {stable_mosaic.version = 11 : i64} {
  func.func @_softmax_asp_kernel(%arg0: i32, %arg1: memref<1x2x128xf32, #tpu.memory_space<vmem>>, %arg2: memref<1x2x128xf32, #tpu.memory_space<vmem>>, %arg3: memref<1x1x128xf32, #tpu.memory_space<vmem>>, %arg4: memref<1x1x128xf32, #tpu.memory_space<vmem>>) attributes {dimension_semantics = [#tpu.dimension_semantics<parallel>], iteration_bounds = array<i64: 2>, scalar_prefetch = 0 : i64, scratch_operands = 0 : i64, tpu.core_type = #tpu.core_type<tc>, window_params = [{transform_indices = @transform_0, window_bounds = array<i64: 1, 2, 128>}, {transform_indices = @transform_1, window_bounds = array<i64: 1, 2, 128>}, {transform_indices = @transform_2, window_bounds = array<i64: 1, 1, 128>}, {transform_indices = @transform_3, window_bounds = array<i64: 1, 1, 128>}]} {
    %c0 = arith.constant 0 : index
    %c0_0 = arith.constant 0 : index
    %c0_1 = arith.constant 0 : index
    %0 = vector.load %arg1[%c0, %c0_0, %c0_1] : memref<1x2x128xf32, #tpu.memory_space<vmem>>, vector<1x2x128xf32>
    %1 = vector.shape_cast %0 : vector<1x2x128xf32> to vector<2x128xf32>
    %c0_2 = arith.constant 0 : index
    %c0_3 = arith.constant 0 : index
    %c0_4 = arith.constant 0 : index
    %2 = vector.load %arg2[%c0_2, %c0_3, %c0_4] : memref<1x2x128xf32, #tpu.memory_space<vmem>>, vector<1x2x128xf32>
    %3 = vector.shape_cast %2 : vector<1x2x128xf32> to vector<2x128xf32>
    %cst = arith.constant dense<0xFF800000> : vector<128xf32>
    %4 = vector.multi_reduction <maximumf>, %1, %cst [0] : vector<2x128xf32> to vector<128xf32>
    %5 = vector.shape_cast %4 : vector<128xf32> to vector<1x128xf32>
    %6 = vector.broadcast %5 : vector<1x128xf32> to vector<2x128xf32>
    %7 = arith.subf %1, %6 : vector<2x128xf32>
    %8 = math.exp %7 : vector<2x128xf32>
    %cst_5 = arith.constant dense<0.000000e+00> : vector<128xf32>
    %9 = vector.multi_reduction <add>, %8, %cst_5 [0] : vector<2x128xf32> to vector<128xf32>
    %10 = vector.shape_cast %9 : vector<128xf32> to vector<1x128xf32>
    %11 = vector.broadcast %10 : vector<1x128xf32> to vector<2x128xf32>
    %12 = arith.divf %8, %11 : vector<2x128xf32>
    %13 = arith.mulf %3, %12 : vector<2x128xf32>
    %cst_6 = arith.constant dense<0.000000e+00> : vector<128xf32>
    %14 = vector.multi_reduction <add>, %13, %cst_6 [0] : vector<2x128xf32> to vector<128xf32>
    %15 = vector.shape_cast %14 : vector<128xf32> to vector<1x128xf32>
    %16 = arith.mulf %3, %3 : vector<2x128xf32>
    %17 = arith.mulf %16, %12 : vector<2x128xf32>
    %cst_7 = arith.constant dense<0.000000e+00> : vector<128xf32>
    %18 = vector.multi_reduction <add>, %17, %cst_7 [0] : vector<2x128xf32> to vector<128xf32>
    %19 = vector.shape_cast %18 : vector<128xf32> to vector<1x128xf32>
    %20 = arith.mulf %15, %15 : vector<1x128xf32>
    %21 = arith.subf %19, %20 : vector<1x128xf32>
    %cst_8 = arith.constant 9.99999974E-6 : f32
    %22 = vector.broadcast %cst_8 : f32 to vector<1x128xf32>
    %23 = arith.maximumf %21, %22 : vector<1x128xf32>
    %24 = math.sqrt %23 : vector<1x128xf32>
    %25 = vector.shape_cast %15 : vector<1x128xf32> to vector<1x1x128xf32>
    %c0_9 = arith.constant 0 : index
    %c0_10 = arith.constant 0 : index
    %c0_11 = arith.constant 0 : index
    %26 = vector.load %arg3[%c0_9, %c0_10, %c0_11] : memref<1x1x128xf32, #tpu.memory_space<vmem>>, vector<1x1x128xf32>
    tpu.vector_store %arg3[%c0_9, %c0_10, %c0_11], %25 {strides = array<i32>} : memref<1x1x128xf32, #tpu.memory_space<vmem>>, vector<1x1x128xf32>,
    %27 = vector.shape_cast %24 : vector<1x128xf32> to vector<1x1x128xf32>
    %c0_12 = arith.constant 0 : index
    %c0_13 = arith.constant 0 : index
    %c0_14 = arith.constant 0 : index
    %28 = vector.load %arg4[%c0_12, %c0_13, %c0_14] : memref<1x1x128xf32, #tpu.memory_space<vmem>>, vector<1x1x128xf32>
    tpu.vector_store %arg4[%c0_12, %c0_13, %c0_14], %27 {strides = array<i32>} : memref<1x1x128xf32, #tpu.memory_space<vmem>>, vector<1x1x128xf32>,
    return
  }
  func.func @transform_0(%arg0: i32) -> (i32, i32, i32) {
    %c0_i32 = arith.constant 0 : i32
    %c0_i32_0 = arith.constant 0 : i32
    %c0_i32_1 = arith.constant 0 : i32
    return %arg0, %c0_i32, %c0_i32_0 : i32, i32, i32
  }
  func.func @transform_1(%arg0: i32) -> (i32, i32, i32) {
    %c0_i32 = arith.constant 0 : i32
    %c0_i32_0 = arith.constant 0 : i32
    %c0_i32_1 = arith.constant 0 : i32
    return %arg0, %c0_i32, %c0_i32_0 : i32, i32, i32
  }
  func.func @transform_2(%arg0: i32) -> (i32, i32, i32) {
    %c0_i32 = arith.constant 0 : i32
    %c0_i32_0 = arith.constant 0 : i32
    %c0_i32_1 = arith.constant 0 : i32
    return %arg0, %c0_i32, %c0_i32_0 : i32, i32, i32
  }
  func.func @transform_3(%arg0: i32) -> (i32, i32, i32) {
    %c0_i32 = arith.constant 0 : i32
    %c0_i32_0 = arith.constant 0 : i32
    %c0_i32_1 = arith.constant 0 : i32
    return %arg0, %c0_i32, %c0_i32_0 : i32, i32, i32
  }
}

module attributes {stable_mosaic.version = 11 : i64} {
  func.func @_mm_fused_kernel(%arg0: i32, %arg1: i32, %arg2: i32, %arg3: memref<8x256xbf16, #tpu.memory_space<vmem>>, %arg4: memref<256x128xbf16, #tpu.memory_space<vmem>>, %arg5: memref<1x128xf32, #tpu.memory_space<vmem>>, %arg6: memref<1x128xf32, #tpu.memory_space<vmem>>, %arg7: memref<8x128xf32, #tpu.memory_space<vmem>>, %arg8: memref<8x128xf32, #tpu.memory_space<vmem>>) attributes {dimension_semantics = [#tpu.dimension_semantics<parallel>, #tpu.dimension_semantics<parallel>, #tpu.dimension_semantics<arbitrary>], iteration_bounds = array<i64: 1, 1, 1>, scalar_prefetch = 0 : i64, scratch_operands = 1 : i64, tpu.core_type = #tpu.core_type<tc>, window_params = [{transform_indices = @transform_0, window_bounds = array<i64: 8, 256>}, {transform_indices = @transform_1, window_bounds = array<i64: 256, 128>}, {transform_indices = @transform_2, window_bounds = array<i64: 1, 128>}, {transform_indices = @transform_3, window_bounds = array<i64: 1, 128>}, {transform_indices = @transform_4, window_bounds = array<i64: 8, 128>}]} {
    %c0_i32 = arith.constant 0 : i32
    %0 = arith.cmpi eq, %arg2, %c0_i32 : i32
    %1 = arith.extui %0 : i1 to i32
    %c0_i32_0 = arith.constant 0 : i32
    %2 = arith.cmpi ne, %1, %c0_i32_0 : i32
    scf.if %2 {
      %cst_10 = arith.constant 0.000000e+00 : f32
      %12 = vector.broadcast %cst_10 : f32 to vector<8x128xf32>
      %c0_11 = arith.constant 0 : index
      %c0_12 = arith.constant 0 : index
      %13 = vector.load %arg8[%c0_11, %c0_12] : memref<8x128xf32, #tpu.memory_space<vmem>>, vector<8x128xf32>
      tpu.vector_store %arg8[%c0_11, %c0_12], %12 {strides = array<i32>} : memref<8x128xf32, #tpu.memory_space<vmem>>, vector<8x128xf32>,
    } else {
    }
    %c0 = arith.constant 0 : index
    %c0_1 = arith.constant 0 : index
    %3 = vector.load %arg8[%c0, %c0_1] : memref<8x128xf32, #tpu.memory_space<vmem>>, vector<8x128xf32>
    %c0_2 = arith.constant 0 : index
    %c0_3 = arith.constant 0 : index
    %4 = vector.load %arg3[%c0_2, %c0_3] : memref<8x256xbf16, #tpu.memory_space<vmem>>, vector<8x256xbf16>
    %c0_4 = arith.constant 0 : index
    %c0_5 = arith.constant 0 : index
    %5 = vector.load %arg4[%c0_4, %c0_5] : memref<256x128xbf16, #tpu.memory_space<vmem>>, vector<256x128xbf16>
    %cst = arith.constant dense<0.000000e+00> : vector<8x128xf32>
    %6 = tpu.matmul %4, %5, %cst {dimension_numbers = #tpu.dot_dimension_numbers<[1], [0], [0], [1], [0, 0, 1, 1], [], []>} : vector<8x256xbf16>, vector<256x128xbf16>, vector<8x128xf32> -> vector<8x128xf32>
    %7 = arith.addf %3, %6 : vector<8x128xf32>
    %c0_6 = arith.constant 0 : index
    %c0_7 = arith.constant 0 : index
    %8 = vector.load %arg8[%c0_6, %c0_7] : memref<8x128xf32, #tpu.memory_space<vmem>>, vector<8x128xf32>
    tpu.vector_store %arg8[%c0_6, %c0_7], %7 {strides = array<i32>} : memref<8x128xf32, #tpu.memory_space<vmem>>, vector<8x128xf32>,
    %c0_i32_8 = arith.constant 0 : i32
    %9 = arith.cmpi eq, %arg2, %c0_i32_8 : i32
    %10 = arith.extui %9 : i1 to i32
    %c0_i32_9 = arith.constant 0 : i32
    %11 = arith.cmpi ne, %10, %c0_i32_9 : i32
    scf.if %11 {
      %c0_10 = arith.constant 0 : index
      %c0_11 = arith.constant 0 : index
      %12 = vector.load %arg8[%c0_10, %c0_11] : memref<8x128xf32, #tpu.memory_space<vmem>>, vector<8x128xf32>
      %c0_12 = arith.constant 0 : index
      %c0_13 = arith.constant 0 : index
      %13 = vector.load %arg5[%c0_12, %c0_13] : memref<1x128xf32, #tpu.memory_space<vmem>>, vector<1x128xf32>
      %14 = vector.broadcast %13 : vector<1x128xf32> to vector<8x128xf32>
      %15 = arith.mulf %12, %14 : vector<8x128xf32>
      %c0_14 = arith.constant 0 : index
      %c0_15 = arith.constant 0 : index
      %16 = vector.load %arg6[%c0_14, %c0_15] : memref<1x128xf32, #tpu.memory_space<vmem>>, vector<1x128xf32>
      %17 = vector.broadcast %16 : vector<1x128xf32> to vector<8x128xf32>
      %18 = arith.addf %15, %17 : vector<8x128xf32>
      %c0_16 = arith.constant 0 : index
      %c0_17 = arith.constant 0 : index
      %19 = vector.load %arg7[%c0_16, %c0_17] : memref<8x128xf32, #tpu.memory_space<vmem>>, vector<8x128xf32>
      tpu.vector_store %arg7[%c0_16, %c0_17], %18 {strides = array<i32>} : memref<8x128xf32, #tpu.memory_space<vmem>>, vector<8x128xf32>,
    } else {
    }
    return
  }
  func.func @transform_0(%arg0: i32, %arg1: i32, %arg2: i32) -> (i32, i32) {
    %c0_i32 = arith.constant 0 : i32
    return %arg0, %arg2 : i32, i32
  }
  func.func @transform_1(%arg0: i32, %arg1: i32, %arg2: i32) -> (i32, i32) {
    %c0_i32 = arith.constant 0 : i32
    return %arg2, %arg1 : i32, i32
  }
  func.func @transform_2(%arg0: i32, %arg1: i32, %arg2: i32) -> (i32, i32) {
    %c0_i32 = arith.constant 0 : i32
    %c0_i32_0 = arith.constant 0 : i32
    return %c0_i32, %arg1 : i32, i32
  }
  func.func @transform_3(%arg0: i32, %arg1: i32, %arg2: i32) -> (i32, i32) {
    %c0_i32 = arith.constant 0 : i32
    %c0_i32_0 = arith.constant 0 : i32
    return %c0_i32, %arg1 : i32, i32
  }
  func.func @transform_4(%arg0: i32, %arg1: i32, %arg2: i32) -> (i32, i32) {
    %c0_i32 = arith.constant 0 : i32
    return %arg0, %arg1 : i32, i32
  }
}

</mosaic_0001>

<llo_original>
// kernel: _lambda_.21
$region0: #{_lambda_.21}
  #allocation0 [shape = 'u32[]', space=smem, size = 0x4, offset = 0x4, fixed_abs, tag = 'smem constant byte address 0x4 - core index']
  #allocation1 [shape = 'u32[144,128]{1,0:T(1,128)}', space=vmem, size = 0x12000, scoped, tag = 'internal scratch']
  %s0 = inlined_call_operand.hbm [shape: f32[32,16], index: 0, kind: input, shape index: {}]
  %s1 = inlined_call_operand.vmem [shape: f32[32,16], index: 1, kind: output, shape index: {}]
  %s2 = sld [smem:[#allocation0]]
  $region18: #{_lambda_.21} parent=0
    _
  %s4 = ssub.s32 1, %s2
  %s5 = scalar_select 0, %s4, %s2
  $region1: #{_lambda_.21} parent=0
    #allocation2 [shape = 'u8[16384]{0}', space=vmem, size = 0x4000, scoped, tag = 'input window, operand 0, single buffered']
    #allocation3 [shape = 's32[1]{0}', space=sflag, size = 0x4, scoped, tag = 'scoped memory for _lambda_.21']
    %6 = vsyncpa [#allocation3], 0
    // Predicated region
    $region2: #{_lambda_.21} parent=1 // pred_check
      _
    $region3: #{_lambda_.21} parent=1 // pred_check_branch
      %8 = sbr.rel (0) target = $region5
    $region4: #{_lambda_.21} parent=1 // pred_region
      %s10 = ssub.s32 512, 512
      %11 = vsyncadd [#allocation3], %s10
      %s12 = sshll.u32 [#allocation2], 4
      %s13 = int_to_ptr.vmem [resolvable:$true] %s12
      %18 = dma.hbm_to_vmem [thread:$0]  %s0, 512, %s13, [#allocation3], 128, 128, 8
    $region5: #{_lambda_.21} parent=1 // pred_fallthru
      _
    // Predicated region
    $region6: #{_lambda_.21} parent=1 // pred_check
      _
    $region7: #{_lambda_.21} parent=1 // pred_check_branch
      %20 = sbr.rel (0) target = $region9
    $region8: #{_lambda_.21} parent=1 // pred_region
      %21 = dma.done [#allocation3], 512
    $region9: #{_lambda_.21} parent=1 // pred_fallthru
      _
    %v22 = vld [vmem:[#allocation2] sm:$0xff]
    %v23 = vld [vmem:[#allocation2 + $0x8] sm:$0xff]
    %v24 = vld [vmem:[#allocation2 + $0x10] sm:$0xff]
    %v25 = vld [vmem:[#allocation2 + $0x18] sm:$0xff]
    %vm26 = vcmask 130048
    %v27 = vsel %vm26, %v22, 0.0
    %28 = vadd.xlane.f32.xlu0 %v27
    %v29 = vpop.xlane.xlu0 %28
    %v30 = vsel %vm26, %v23, 0.0
    %31 = vadd.xlane.f32.xlu0 %v30
    %v32 = vpop.xlane.xlu0 %31
    %v33 = vsel %vm26, %v24, 0.0
    %34 = vadd.xlane.f32.xlu0 %v33
    %v35 = vpop.xlane.xlu0 %34
    %v36 = vsel %vm26, %v25, 0.0
    %37 = vadd.xlane.f32.xlu0 %v36
    %v38 = vpop.xlane.xlu0 %37
    %v39 = vrcp.pop 16.0
    %v40 = vmul.f32 %v29, %v39
    %v41 = vmul.f32 %v32, %v39
    %v42 = vmul.f32 %v35, %v39
    %v43 = vmul.f32 %v38, %v39
    %v44 = vsub.f32 %v22, %v40
    %v45 = vsub.f32 %v23, %v41
    %v46 = vsub.f32 %v24, %v42
    %v47 = vsub.f32 %v25, %v43
    %v48 = vmul.f32 %v44, %v44
    %v49 = vmul.f32 %v45, %v45
    %v50 = vmul.f32 %v46, %v46
    %v51 = vmul.f32 %v47, %v47
    %v52 = vsel %vm26, %v48, 0.0
    %53 = vadd.xlane.f32.xlu0 %v52
    %v54 = vpop.xlane.xlu0 %53
    %v55 = vsel %vm26, %v49, 0.0
    %56 = vadd.xlane.f32.xlu0 %v55
    %v57 = vpop.xlane.xlu0 %56
    %v58 = vsel %vm26, %v50, 0.0
    %59 = vadd.xlane.f32.xlu0 %v58
    %v60 = vpop.xlane.xlu0 %59
    %v61 = vsel %vm26, %v51, 0.0
    %62 = vadd.xlane.f32.xlu0 %v61
    %v63 = vpop.xlane.xlu0 %62
    %v64 = vmul.f32 %v54, %v39
    %v65 = vmul.f32 %v57, %v39
    %v66 = vmul.f32 %v60, %v39
    %v67 = vmul.f32 %v63, %v39
    %v68 = vadd.f32 %v64, 1e-05
    %v69 = vadd.f32 %v65, 1e-05
    %v70 = vadd.f32 %v66, 1e-05
    %v71 = vadd.f32 %v67, 1e-05
    %v72 = vrsqrt.pop %v68
    %v73 = vrsqrt.pop %v69
    %v74 = vrsqrt.pop %v70
    %v75 = vrsqrt.pop %v71
    %v76 = vmul.f32 %v44, %v72
    %v77 = vmul.f32 %v45, %v73
    %v78 = vmul.f32 %v46, %v74
    %v79 = vmul.f32 %v47, %v75
    %80 = vst.msk [vmem:[%s1] sm:$0xff] %vm26, %v76
    %81 = vst.msk [vmem:[%s1 + $0x8] sm:$0xff] %vm26, %v77
    %82 = vst.msk [vmem:[%s1 + $0x10] sm:$0xff] %vm26, %v78
    %83 = vst.msk [vmem:[%s1 + $0x18] sm:$0xff] %vm26, %v79
    // Predicated region
    $region10: #{_lambda_.21} parent=1 // pred_check
      _
    $region11: #{_lambda_.21} parent=1 // pred_check_branch
      %85 = sbr.rel (0) target = $region13
    $region12: #{_lambda_.21} parent=1 // pred_region
      _
    $region13: #{_lambda_.21} parent=1 // pred_fallthru
      _
    // Predicated region
    $region14: #{_lambda_.21} parent=1 // pred_check
      _
    $region15: #{_lambda_.21} parent=1 // pred_check_branch
      %87 = sbr.rel (0) target = $region17
    $region16: #{_lambda_.21} parent=1 // pred_region
      _
    $region17: #{_lambda_.21} parent=1 // pred_fallthru
      _
    %88 = vsyncpa [#allocation3], 1

// kernel: _lambda_.22
$region0: #{_lambda_.22}
  #allocation0 [shape = 'u32[]', space=smem, size = 0x4, offset = 0x4, fixed_abs, tag = 'smem constant byte address 0x4 - core index']
  #allocation1 [shape = 'u32[144,128]{1,0:T(1,128)}', space=vmem, size = 0x12000, scoped, tag = 'internal scratch']
  #allocation2 [shape = 'f32[256,128]{1,0:T(8,128)}', space=vmem, size = 0x20000, scoped, tag = 'scratch operand']
  %s0 = inlined_call_operand.vmem [shape: bf16[512,128], index: 0, kind: input, shape index: {}]
  %s1 = inlined_call_operand.vmem [shape: bf16[128,128], index: 1, kind: input, shape index: {}]
  %s2 = inlined_call_operand.vmem [shape: f32[1,128], index: 2, kind: input, shape index: {}]
  %s3 = inlined_call_operand.vmem [shape: f32[1,128], index: 3, kind: input, shape index: {}]
  %s4 = inlined_call_operand.vmem [shape: f32[512,128], index: 4, kind: output, shape index: {}]
  %s5 = sld [smem:[#allocation0]]
  $region57: #{_lambda_.22} parent=0
    _
  %s7 = ssub.s32 1, %s5
  %s8 = scalar_select 0, %s7, %s5
  loop: start=0, step=1, limit=4
  $region2: #{_lambda_.22} parent=0 // loop_pre_header
    _
  $region3: #{_lambda_.22} parent=0 // loop_header
    %s10 = sphi 0, %s14
    %p11 = scmp.ge.s32.totalorder %s10, 4
    %s17 = sphi 0, %s36
    %s18 = sphi 0, %s32
    %s19 = sphi 0, %s28
    %s20 = sphi 0, %s17
    %s21 = sphi 0, %s18
    %s22 = sphi 0, %s19
    %s23 = sphi 0, %s20
    %s24 = sphi 0, %s21
    %s25 = sphi 0, %s22
    %s41 = sphi 0, %s43
    %s44 = sphi 0, %s41
    %s45 = sphi 0, %s44
    %s61 = sphi 0, %s45
    %s69 = sphi 0, %s71
    %s72 = sphi 0, %s69
    %s73 = sphi 0, %s72
    %s89 = sphi 0, %s73
    %s95 = sphi 0, %s97
    %s98 = sphi 0, %s95
    %s99 = sphi 0, %s98
    %s115 = sphi 0, %s99
    %s121 = sphi 0, %s123
    %s124 = sphi 0, %s121
    %s125 = sphi 0, %s124
    %s141 = sphi 0, %s125
    %s149 = sphi 0, %s151
    %s152 = sphi 0, %s149
    %s153 = sphi 0, %s152
    %s169 = sphi 0, %s153
  $region4: #{_lambda_.22} parent=0 // loop_header_branch
    %13 = sbr.rel (%p11) target = $region8
  $region5: #{_lambda_.22} parent=0 // loop_body
    %s15 = ssub.s32 %s10, 1
    %s16 = ssub.s32 %s10, 2
    %s26 = sadd.s32 1, %s19
    %p27 = scmp.ge.s32.totalorder %s26, 1
    %s28 = scalar_select %p27, 0, %s26
    %s29 = sadd.s32 1, %s18
    %s30 = scalar_select %p27, %s29, %s18
    %p31 = scmp.ge.s32.totalorder %s30, 1
    %s32 = scalar_select %p31, 0, %s30
    %s33 = sadd.s32 1, %s17
    %s34 = scalar_select %p31, %s33, %s17
    %p35 = scmp.ge.s32.totalorder %s34, 2
    %s36 = scalar_select %p35, 0, %s34
    %s37 = ssub.s32 %s17, %s36
    %s38 = ssub.s32 %s19, %s28
    %s39 = sor.u32 %s37, %s38
    %p40 = scmp.eq.s32.totalorder %s39, 0
    %s42 = sadd.s32 %s41, 1
    %s43 = scalar_select %p40, %s41, %s42
    %p46 = pneg %p40
    %p47 = scmp.eq.s32.totalorder %s10, 1
    %p48 = por %p46, %p47
    %p49 = scmp.ne.s32.totalorder %s41, %s44
    %p50 = scmp.eq.s32.totalorder %s10, 0
    %p51 = por %p49, %p50
    %p52 = scmp.ne.s32.totalorder %s41, %s44
    %p53 = scmp.eq.s32.totalorder %s15, 1
    %p54 = por %p52, %p53
    %p55 = scmp.ne.s32.totalorder %s44, %s45
    %p56 = scmp.eq.s32.totalorder %s15, 0
    %p57 = por %p55, %p56
    %p58 = scmp.ne.s32.totalorder %s44, %s45
    %p59 = scmp.eq.s32.totalorder %s16, 1
    %p60 = por %p58, %p59
    %p62 = scmp.ne.s32.totalorder %s45, %s61
    %p63 = scmp.eq.s32.totalorder %s16, 0
    %p64 = por %p62, %p63
    %s65 = ssub.s32 %s19, %s28
    %s66 = ssub.s32 %s18, %s32
    %s67 = sor.u32 %s65, %s66
    %p68 = scmp.eq.s32.totalorder %s67, 0
    %s70 = sadd.s32 %s69, 1
    %s71 = scalar_select %p68, %s69, %s70
    %p74 = pneg %p68
    %p75 = scmp.eq.s32.totalorder %s10, 1
    %p76 = por %p74, %p75
    %p77 = scmp.ne.s32.totalorder %s69, %s72
    %p78 = scmp.eq.s32.totalorder %s10, 0
    %p79 = por %p77, %p78
    %p80 = scmp.ne.s32.totalorder %s69, %s72
    %p81 = scmp.eq.s32.totalorder %s15, 1
    %p82 = por %p80, %p81
    %p83 = scmp.ne.s32.totalorder %s72, %s73
    %p84 = scmp.eq.s32.totalorder %s15, 0
    %p85 = por %p83, %p84
    %p86 = scmp.ne.s32.totalorder %s72, %s73
    %p87 = scmp.eq.s32.totalorder %s16, 1
    %p88 = por %p86, %p87
    %p90 = scmp.ne.s32.totalorder %s73, %s89
    %p91 = scmp.eq.s32.totalorder %s16, 0
    %p92 = por %p90, %p91
    %s93 = ssub.s32 %s18, %s32
    %p94 = scmp.eq.s32.totalorder %s93, 0
    %s96 = sadd.s32 %s95, 1
    %s97 = scalar_select %p94, %s95, %s96
    %p100 = pneg %p94
    %p101 = scmp.eq.s32.totalorder %s10, 1
    %p102 = por %p100, %p101
    %p103 = scmp.ne.s32.totalorder %s95, %s98
    %p104 = scmp.eq.s32.totalorder %s10, 0
    %p105 = por %p103, %p104
    %p106 = scmp.ne.s32.totalorder %s95, %s98
    %p107 = scmp.eq.s32.totalorder %s15, 1
    %p108 = por %p106, %p107
    %p109 = scmp.ne.s32.totalorder %s98, %s99
    %p110 = scmp.eq.s32.totalorder %s15, 0
    %p111 = por %p109, %p110
    %p112 = scmp.ne.s32.totalorder %s98, %s99
    %p113 = scmp.eq.s32.totalorder %s16, 1
    %p114 = por %p112, %p113
    %p116 = scmp.ne.s32.totalorder %s99, %s115
    %p117 = scmp.eq.s32.totalorder %s16, 0
    %p118 = por %p116, %p117
    %s119 = ssub.s32 %s18, %s32
    %p120 = scmp.eq.s32.totalorder %s119, 0
    %s122 = sadd.s32 %s121, 1
    %s123 = scalar_select %p120, %s121, %s122
    %p126 = pneg %p120
    %p127 = scmp.eq.s32.totalorder %s10, 1
    %p128 = por %p126, %p127
    %p129 = scmp.ne.s32.totalorder %s121, %s124
    %p130 = scmp.eq.s32.totalorder %s10, 0
    %p131 = por %p129, %p130
    %p132 = scmp.ne.s32.totalorder %s121, %s124
    %p133 = scmp.eq.s32.totalorder %s15, 1
    %p134 = por %p132, %p133
    %p135 = scmp.ne.s32.totalorder %s124, %s125
    %p136 = scmp.eq.s32.totalorder %s15, 0
    %p137 = por %p135, %p136
    %p138 = scmp.ne.s32.totalorder %s124, %s125
    %p139 = scmp.eq.s32.totalorder %s16, 1
    %p140 = por %p138, %p139
    %p142 = scmp.ne.s32.totalorder %s125, %s141
    %p143 = scmp.eq.s32.totalorder %s16, 0
    %p144 = por %p142, %p143
    %s145 = ssub.s32 %s17, %s36
    %s146 = ssub.s32 %s18, %s32
    %s147 = sor.u32 %s145, %s146
    %p148 = scmp.eq.s32.totalorder %s147, 0
    %s150 = sadd.s32 %s149, 1
    %s151 = scalar_select %p148, %s149, %s150
    %p154 = pneg %p148
    %p155 = scmp.eq.s32.totalorder %s10, 1
    %p156 = por %p154, %p155
    %p157 = scmp.ne.s32.totalorder %s149, %s152
    %p158 = scmp.eq.s32.totalorder %s10, 0
    %p159 = por %p157, %p158
    %p160 = scmp.ne.s32.totalorder %s149, %s152
    %p161 = scmp.eq.s32.totalorder %s15, 1
    %p162 = por %p160, %p161
    %p163 = scmp.ne.s32.totalorder %s152, %s153
    %p164 = scmp.eq.s32.totalorder %s15, 0
    %p165 = por %p163, %p164
    %p166 = scmp.ne.s32.totalorder %s152, %s153
    %p167 = scmp.eq.s32.totalorder %s16, 1
    %p168 = por %p166, %p167
    %p170 = scmp.ne.s32.totalorder %s153, %s169
    %p171 = scmp.eq.s32.totalorder %s16, 0
    %p172 = por %p170, %p171
    %p173 = scmp.le.s32.totalorder 1, %s10
    %p174 = scmp.lt.s32.totalorder %s10, 3
    %p175 = pnand %p173, %p174
    %p176 = pneg %p175
    // Predicated region
    $region9: #{_lambda_.22} parent=5 // pred_check
      _
    $region10: #{_lambda_.22} parent=5 // pred_check_branch
      %178 = sbr.rel (%p175) target = $region12
    $region11: #{_lambda_.22} parent=5 // pred_region
      %s179 = ssub.s32 %s10, 1
      // Predicated region
      $region13: #{_lambda_.22} parent=11 // pred_check
        %p180 = pneg %p85
      $region14: #{_lambda_.22} parent=11 // pred_check_branch
        %182 = sbr.rel (%p180) target = $region16
      $region15: #{_lambda_.22} parent=11 // pred_region
        %s183 = smul.u32 16, %s22
        %p184 = scmp.lt.s32.totalorder %s183, 15
        %s185 = scalar_select %p184, %s183, 15
        %p186 = scmp.lt.s32.totalorder %s21, 0
        %s187 = scalar_select %p186, %s21, 0
        %s188 = sadd.s32 %s187, %s185
        %s189 = smul.addr %s188, 4
        %s190 = scalar_lea.vmem %s1, %s189
        %s191 = smul.u32 16, %s22
      $region16: #{_lambda_.22} parent=11 // pred_fallthru
        _
      // Predicated region
      $region17: #{_lambda_.22} parent=11 // pred_check
        %p192 = pneg %p111
      $region18: #{_lambda_.22} parent=11 // pred_check_branch
        %194 = sbr.rel (%p192) target = $region20
      $region19: #{_lambda_.22} parent=11 // pred_region
        %p195 = scmp.lt.s32.totalorder %s21, 0
        %s196 = scalar_select %p195, %s21, 0
        %s197 = scalar_lea.vmem %s2, %s196
      $region20: #{_lambda_.22} parent=11 // pred_fallthru
        _
      // Predicated region
      $region21: #{_lambda_.22} parent=11 // pred_check
        %p198 = pneg %p137
      $region22: #{_lambda_.22} parent=11 // pred_check_branch
        %200 = sbr.rel (%p198) target = $region24
      $region23: #{_lambda_.22} parent=11 // pred_region
        %p201 = scmp.lt.s32.totalorder %s21, 0
        %s202 = scalar_select %p201, %s21, 0
        %s203 = scalar_lea.vmem %s3, %s202
      $region24: #{_lambda_.22} parent=11 // pred_fallthru
        _
    $region12: #{_lambda_.22} parent=5 // pred_fallthru
      _
    %p204 = scmp.lt.s32.totalorder %s10, 2
    // Predicated region
    $region25: #{_lambda_.22} parent=5 // pred_check
      %p205 = pneg %p204
    $region26: #{_lambda_.22} parent=5 // pred_check_branch
      %207 = sbr.rel (%p205) target = $region28
    $region27: #{_lambda_.22} parent=5 // pred_region
      // Predicated region
      $region29: #{_lambda_.22} parent=27 // pred_check
        %p208 = pneg %p51
      $region30: #{_lambda_.22} parent=27 // pred_check_branch
        %210 = sbr.rel (%p208) target = $region32
      $region31: #{_lambda_.22} parent=27 // pred_region
        %s211 = smul.u32 32, %s17
        %p212 = scmp.lt.s32.totalorder %s211, 63
        %s213 = scalar_select %p212, %s211, 63
        %p214 = scmp.lt.s32.totalorder %s19, 0
        %s215 = scalar_select %p214, %s19, 0
        %s216 = sadd.s32 %s215, %s213
        %s217 = smul.addr %s216, 4
        %s218 = scalar_lea.vmem %s0, %s217
        %s219 = smul.u32 32, %s17
      $region32: #{_lambda_.22} parent=27 // pred_fallthru
        _
    $region28: #{_lambda_.22} parent=5 // pred_fallthru
      _
    %p220 = scmp.le.s32.totalorder 1, %s10
    %p221 = scmp.lt.s32.totalorder %s10, 3
    %p222 = pnand %p220, %p221
    %p223 = pneg %p222
    // Predicated region
    $region33: #{_lambda_.22} parent=5 // pred_check
      _
    $region34: #{_lambda_.22} parent=5 // pred_check_branch
      %225 = sbr.rel (%p222) target = $region36
    $region35: #{_lambda_.22} parent=5 // pred_region
      %s226 = ssub.s32 %s10, 1
      %s227 = smul.u32 32, %s20
      %p228 = scmp.lt.s32.totalorder %s227, 63
      %s229 = scalar_select %p228, %s227, 63
      %p230 = scmp.lt.s32.totalorder %s22, 0
      %s231 = scalar_select %p230, %s22, 0
      %s232 = sadd.s32 %s231, %s229
      %s233 = smul.addr %s232, 4
      %s234 = scalar_lea.vmem %s0, %s233
      %p235 = pneg %p57
      %p236 = pneg %p54
      %s237 = smul.u32 16, %s22
      %p238 = scmp.lt.s32.totalorder %s237, 15
      %s239 = scalar_select %p238, %s237, 15
      %p240 = scmp.lt.s32.totalorder %s21, 0
      %s241 = scalar_select %p240, %s21, 0
      %s242 = sadd.s32 %s241, %s239
      %s243 = smul.addr %s242, 4
      %s244 = scalar_lea.vmem %s1, %s243
      %p245 = pneg %p85
      %p246 = pneg %p82
      %p247 = scmp.lt.s32.totalorder %s21, 0
      %s248 = scalar_select %p247, %s21, 0
      %s249 = scalar_lea.vmem %s2, %s248
      %p250 = pneg %p111
      %p251 = pneg %p108
      %p252 = scmp.lt.s32.totalorder %s21, 0
      %s253 = scalar_select %p252, %s21, 0
      %s254 = scalar_lea.vmem %s3, %s253
      %p255 = pneg %p137
      %p256 = pneg %p134
      %p257 = pneg %p165
      %p258 = pneg %p162
      %s259 = smul.u32 32, %s20
      %p260 = scmp.lt.s32.totalorder %s259, 63
      %s261 = scalar_select %p260, %s259, 63
      %p262 = scmp.lt.s32.totalorder %s21, 0
      %s263 = scalar_select %p262, %s21, 0
      %s264 = sadd.s32 %s263, %s261
      %s265 = smul.addr %s264, 8
      %s266 = scalar_lea.vmem %s4, %s265
      %s267 = smul.u32 32, %s20
      %p268 = scmp.lt.s32.totalorder %s267, 63
      %s269 = scalar_select %p268, %s267, 63
      %p270 = scmp.lt.s32.totalorder %s22, 0
      %s271 = scalar_select %p270, %s22, 0
      %s272 = sadd.s32 %s271, %s269
      %s273 = smul.addr %s272, 4
      %s274 = scalar_lea.vmem %s0, %s273
      %s275 = smul.u32 32, %s20
      %s276 = smul.u32 16, %s22
      %p277 = scmp.lt.s32.totalorder %s276, 15
      %s278 = scalar_select %p277, %s276, 15
      %p279 = scmp.lt.s32.totalorder %s21, 0
      %s280 = scalar_select %p279, %s21, 0
      %s281 = sadd.s32 %s280, %s278
      %s282 = smul.addr %s281, 4
      %s283 = scalar_lea.vmem %s1, %s282
      %s284 = smul.u32 16, %s22
      %p285 = scmp.lt.s32.totalorder %s21, 0
      %s286 = scalar_select %p285, %s21, 0
      %s287 = scalar_lea.vmem %s2, %s286
      %p288 = scmp.lt.s32.totalorder %s21, 0
      %s289 = scalar_select %p288, %s21, 0
      %s290 = scalar_lea.vmem %s3, %s289
      %s291 = smul.u32 32, %s20
      %p292 = scmp.lt.s32.totalorder %s291, 63
      %s293 = scalar_select %p292, %s291, 63
      %p294 = scmp.lt.s32.totalorder %s21, 0
      %s295 = scalar_select %p294, %s21, 0
      %s296 = sadd.s32 %s295, %s293
      %s297 = smul.addr %s296, 8
      %s298 = scalar_lea.vmem %s4, %s297
      %s299 = smul.u32 32, %s20
      %p301 = scmp.eq.s32.totalorder %s22, 0
      // Predicated region
      $region37: #{_lambda_.22} parent=35 // pred_check
        %p302 = pneg %p301
      $region38: #{_lambda_.22} parent=35 // pred_check_branch
        %304 = sbr.rel (%p302) target = $region40
      $region39: #{_lambda_.22} parent=35 // pred_region
        %305 = vst [vmem:[#allocation2] sm:$0xff] 0.0
        %306 = vst [vmem:[#allocation2 + $0x8] sm:$0xff] 0.0
        %307 = vst [vmem:[#allocation2 + $0x10] sm:$0xff] 0.0
        %308 = vst [vmem:[#allocation2 + $0x18] sm:$0xff] 0.0
        %309 = vst [vmem:[#allocation2 + $0x20] sm:$0xff] 0.0
        %310 = vst [vmem:[#allocation2 + $0x28] sm:$0xff] 0.0
        %311 = vst [vmem:[#allocation2 + $0x30] sm:$0xff] 0.0
        %312 = vst [vmem:[#allocation2 + $0x38] sm:$0xff] 0.0
        %313 = vst [vmem:[#allocation2 + $0x40] sm:$0xff] 0.0
        %314 = vst [vmem:[#allocation2 + $0x48] sm:$0xff] 0.0
        %315 = vst [vmem:[#allocation2 + $0x50] sm:$0xff] 0.0
        %316 = vst [vmem:[#allocation2 + $0x58] sm:$0xff] 0.0
        %317 = vst [vmem:[#allocation2 + $0x60] sm:$0xff] 0.0
        %318 = vst [vmem:[#allocation2 + $0x68] sm:$0xff] 0.0
        %319 = vst [vmem:[#allocation2 + $0x70] sm:$0xff] 0.0
        %320 = vst [vmem:[#allocation2 + $0x78] sm:$0xff] 0.0
        %321 = vst [vmem:[#allocation2 + $0x80] sm:$0xff] 0.0
        %322 = vst [vmem:[#allocation2 + $0x88] sm:$0xff] 0.0
        %323 = vst [vmem:[#allocation2 + $0x90] sm:$0xff] 0.0
        %324 = vst [vmem:[#allocation2 + $0x98] sm:$0xff] 0.0
        %325 = vst [vmem:[#allocation2 + $0xa0] sm:$0xff] 0.0
        %326 = vst [vmem:[#allocation2 + $0xa8] sm:$0xff] 0.0
        %327 = vst [vmem:[#allocation2 + $0xb0] sm:$0xff] 0.0
        %328 = vst [vmem:[#allocation2 + $0xb8] sm:$0xff] 0.0
        %329 = vst [vmem:[#allocation2 + $0xc0] sm:$0xff] 0.0
        %330 = vst [vmem:[#allocation2 + $0xc8] sm:$0xff] 0.0
        %331 = vst [vmem:[#allocation2 + $0xd0] sm:$0xff] 0.0
        %332 = vst [vmem:[#allocation2 + $0xd8] sm:$0xff] 0.0
        %333 = vst [vmem:[#allocation2 + $0xe0] sm:$0xff] 0.0
        %334 = vst [vmem:[#allocation2 + $0xe8] sm:$0xff] 0.0
        %335 = vst [vmem:[#allocation2 + $0xf0] sm:$0xff] 0.0
        %336 = vst [vmem:[#allocation2 + $0xf8] sm:$0xff] 0.0
      $region40: #{_lambda_.22} parent=35 // pred_fallthru
        _
      %v337 = vld [vmem:[#allocation2] sm:$0xff]
      %v338 = vld [vmem:[#allocation2 + $0x8] sm:$0xff]
      %v339 = vld [vmem:[#allocation2 + $0x10] sm:$0xff]
      %v340 = vld [vmem:[#allocation2 + $0x18] sm:$0xff]
      %v341 = vld [vmem:[#allocation2 + $0x20] sm:$0xff]
      %v342 = vld [vmem:[#allocation2 + $0x28] sm:$0xff]
      %v343 = vld [vmem:[#allocation2 + $0x30] sm:$0xff]
      %v344 = vld [vmem:[#allocation2 + $0x38] sm:$0xff]
      %v345 = vld [vmem:[#allocation2 + $0x40] sm:$0xff]
      %v346 = vld [vmem:[#allocation2 + $0x48] sm:$0xff]
      %v347 = vld [vmem:[#allocation2 + $0x50] sm:$0xff]
      %v348 = vld [vmem:[#allocation2 + $0x58] sm:$0xff]
      %v349 = vld [vmem:[#allocation2 + $0x60] sm:$0xff]
      %v350 = vld [vmem:[#allocation2 + $0x68] sm:$0xff]
      %v351 = vld [vmem:[#allocation2 + $0x70] sm:$0xff]
      %v352 = vld [vmem:[#allocation2 + $0x78] sm:$0xff]
      %v353 = vld [vmem:[#allocation2 + $0x80] sm:$0xff]
      %v354 = vld [vmem:[#allocation2 + $0x88] sm:$0xff]
      %v355 = vld [vmem:[#allocation2 + $0x90] sm:$0xff]
      %v356 = vld [vmem:[#allocation2 + $0x98] sm:$0xff]
      %v357 = vld [vmem:[#allocation2 + $0xa0] sm:$0xff]
      %v358 = vld [vmem:[#allocation2 + $0xa8] sm:$0xff]
      %v359 = vld [vmem:[#allocation2 + $0xb0] sm:$0xff]
      %v360 = vld [vmem:[#allocation2 + $0xb8] sm:$0xff]
      %v361 = vld [vmem:[#allocation2 + $0xc0] sm:$0xff]
      %v362 = vld [vmem:[#allocation2 + $0xc8] sm:$0xff]
      %v363 = vld [vmem:[#allocation2 + $0xd0] sm:$0xff]
      %v364 = vld [vmem:[#allocation2 + $0xd8] sm:$0xff]
      %v365 = vld [vmem:[#allocation2 + $0xe0] sm:$0xff]
      %v366 = vld [vmem:[#allocation2 + $0xe8] sm:$0xff]
      %v367 = vld [vmem:[#allocation2 + $0xf0] sm:$0xff]
      %v368 = vld [vmem:[#allocation2 + $0xf8] sm:$0xff]
      %v369 = vld [vmem:[%s274] sm:$0xf]
      %v370 = vld [vmem:[%s274 + $0x4] sm:$0xf]
      %v371 = vld [vmem:[%s274 + $0x8] sm:$0xf]
      %v372 = vld [vmem:[%s274 + $0xc] sm:$0xf]
      %v373 = vld [vmem:[%s274 + $0x10] sm:$0xf]
      %v374 = vld [vmem:[%s274 + $0x14] sm:$0xf]
      %v375 = vld [vmem:[%s274 + $0x18] sm:$0xf]
      %v376 = vld [vmem:[%s274 + $0x1c] sm:$0xf]
      %v377 = vld [vmem:[%s274 + $0x20] sm:$0xf]
      %v378 = vld [vmem:[%s274 + $0x24] sm:$0xf]
      %v379 = vld [vmem:[%s274 + $0x28] sm:$0xf]
      %v380 = vld [vmem:[%s274 + $0x2c] sm:$0xf]
      %v381 = vld [vmem:[%s274 + $0x30] sm:$0xf]
      %v382 = vld [vmem:[%s274 + $0x34] sm:$0xf]
      %v383 = vld [vmem:[%s274 + $0x38] sm:$0xf]
      %v384 = vld [vmem:[%s274 + $0x3c] sm:$0xf]
      %v385 = vld [vmem:[%s274 + $0x40] sm:$0xf]
      %v386 = vld [vmem:[%s274 + $0x44] sm:$0xf]
      %v387 = vld [vmem:[%s274 + $0x48] sm:$0xf]
      %v388 = vld [vmem:[%s274 + $0x4c] sm:$0xf]
      %v389 = vld [vmem:[%s274 + $0x50] sm:$0xf]
      %v390 = vld [vmem:[%s274 + $0x54] sm:$0xf]
      %v391 = vld [vmem:[%s274 + $0x58] sm:$0xf]
      %v392 = vld [vmem:[%s274 + $0x5c] sm:$0xf]
      %v393 = vld [vmem:[%s274 + $0x60] sm:$0xf]
      %v394 = vld [vmem:[%s274 + $0x64] sm:$0xf]
      %v395 = vld [vmem:[%s274 + $0x68] sm:$0xf]
      %v396 = vld [vmem:[%s274 + $0x6c] sm:$0xf]
      %v397 = vld [vmem:[%s274 + $0x70] sm:$0xf]
      %v398 = vld [vmem:[%s274 + $0x74] sm:$0xf]
      %v399 = vld [vmem:[%s274 + $0x78] sm:$0xf]
      %v400 = vld [vmem:[%s274 + $0x7c] sm:$0xf]
      %v401 = vld [vmem:[%s283] sm:$0xf]
      %v402 = vld [vmem:[%s283 + $0x4] sm:$0xf]
      %v403 = vld [vmem:[%s283 + $0x8] sm:$0xf]
      %v404 = vld [vmem:[%s283 + $0xc] sm:$0xf]
      %v405 = vld [vmem:[%s283 + $0x10] sm:$0xf]
      %v406 = vld [vmem:[%s283 + $0x14] sm:$0xf]
      %v407 = vld [vmem:[%s283 + $0x18] sm:$0xf]
      %v408 = vld [vmem:[%s283 + $0x1c] sm:$0xf]
      %v409 = vld [vmem:[%s283 + $0x20] sm:$0xf]
      %v410 = vld [vmem:[%s283 + $0x24] sm:$0xf]
      %v411 = vld [vmem:[%s283 + $0x28] sm:$0xf]
      %v412 = vld [vmem:[%s283 + $0x2c] sm:$0xf]
      %v413 = vld [vmem:[%s283 + $0x30] sm:$0xf]
      %v414 = vld [vmem:[%s283 + $0x34] sm:$0xf]
      %v415 = vld [vmem:[%s283 + $0x38] sm:$0xf]
      %v416 = vld [vmem:[%s283 + $0x3c] sm:$0xf]
      %v449 = vunpack.c.l.b16 %v369
      %v450 = vunpack.c.l.b16 %v370
      %v451 = vunpack.c.l.b16 %v371
      %v452 = vunpack.c.l.b16 %v372
      %v453 = vunpack.c.l.b16 %v373
      %v454 = vunpack.c.l.b16 %v374
      %v455 = vunpack.c.l.b16 %v375
      %v456 = vunpack.c.l.b16 %v376
      %v457 = vunpack.c.l.b16 %v377
      %v458 = vunpack.c.l.b16 %v378
      %v459 = vunpack.c.l.b16 %v379
      %v460 = vunpack.c.l.b16 %v380
      %v461 = vunpack.c.l.b16 %v381
      %v462 = vunpack.c.l.b16 %v382
      %v463 = vunpack.c.l.b16 %v383
      %v464 = vunpack.c.l.b16 %v384
      %v465 = vunpack.c.l.b16 %v385
      %v466 = vunpack.c.l.b16 %v386
      %v467 = vunpack.c.l.b16 %v387
      %v468 = vunpack.c.l.b16 %v388
      %v469 = vunpack.c.l.b16 %v389
      %v470 = vunpack.c.l.b16 %v390
      %v471 = vunpack.c.l.b16 %v391
      %v472 = vunpack.c.l.b16 %v392
      %v473 = vunpack.c.l.b16 %v393
      %v474 = vunpack.c.l.b16 %v394
      %v475 = vunpack.c.l.b16 %v395
      %v476 = vunpack.c.l.b16 %v396
      %v477 = vunpack.c.l.b16 %v397
      %v478 = vunpack.c.l.b16 %v398
      %v479 = vunpack.c.l.b16 %v399
      %v480 = vunpack.c.l.b16 %v400
      %v481 = vpack.c.b16 %v450, %v449
      %v482 = vpack.c.b16 %v452, %v451
      %v483 = vpack.c.b16 %v454, %v453
      %v484 = vpack.c.b16 %v456, %v455
      %v485 = vpack.c.b16 %v458, %v457
      %v486 = vpack.c.b16 %v460, %v459
      %v487 = vpack.c.b16 %v462, %v461
      %v488 = vpack.c.b16 %v464, %v463
      %v489 = vpack.c.b16 %v466, %v465
      %v490 = vpack.c.b16 %v468, %v467
      %v491 = vpack.c.b16 %v470, %v469
      %v492 = vpack.c.b16 %v472, %v471
      %v493 = vpack.c.b16 %v474, %v473
      %v494 = vpack.c.b16 %v476, %v475
      %v495 = vpack.c.b16 %v478, %v477
      %v496 = vpack.c.b16 %v480, %v479
      %v529 = vunpack.c.l.b16 %v401
      %v530 = vunpack.c.l.b16 %v402
      %v531 = vunpack.c.l.b16 %v403
      %v532 = vunpack.c.l.b16 %v404
      %v533 = vunpack.c.l.b16 %v405
      %v534 = vunpack.c.l.b16 %v406
      %v535 = vunpack.c.l.b16 %v407
      %v536 = vunpack.c.l.b16 %v408
      %v537 = vunpack.c.l.b16 %v409
      %v538 = vunpack.c.l.b16 %v410
      %v539 = vunpack.c.l.b16 %v411
      %v540 = vunpack.c.l.b16 %v412
      %v541 = vunpack.c.l.b16 %v413
      %v542 = vunpack.c.l.b16 %v414
      %v543 = vunpack.c.l.b16 %v415
      %v544 = vunpack.c.l.b16 %v416
      %v545 = vpack.c.b16 %v530, %v529
      %v546 = vpack.c.b16 %v532, %v531
      %v547 = vpack.c.b16 %v534, %v533
      %v548 = vpack.c.b16 %v536, %v535
      %v549 = vpack.c.b16 %v538, %v537
      %v550 = vpack.c.b16 %v540, %v539
      %v551 = vpack.c.b16 %v542, %v541
      %v552 = vpack.c.b16 %v544, %v543
      %561 = vmatprep.subr.bf16.mxu0 0
      %562 = vmatpush1.bf16.msra.mxu0 %v545
      %563 = vmatprep.subr.bf16.mxu0 0
      %564 = vmatpush1.bf16.msra.mxu0 %v546
      %565 = vmatprep.subr.bf16.mxu0 0
      %566 = vmatpush1.bf16.msra.mxu0 %v547
      %567 = vmatprep.subr.bf16.mxu0 0
      %568 = vmatpush1.bf16.msra.mxu0 %v548
      %569 = vmatprep.subr.bf16.mxu0 0
      %570 = vmatpush1.bf16.msra.mxu0 %v549
      %571 = vmatprep.subr.bf16.mxu0 0
      %572 = vmatpush1.bf16.msra.mxu0 %v550
      %573 = vmatprep.subr.bf16.mxu0 0
      %574 = vmatpush1.bf16.msra.mxu0 %v551
      %575 = vmatprep.subr.bf16.mxu0 0
      %576 = vmatpush1.bf16.msra.mxu0 %v552
      %577 = vmatprep.subr.bf16.mxu0 0
      %578 = vmatpush1.bf16.msra.mxu0 0
      %579 = vmatprep.subr.bf16.mxu0 0
      %580 = vmatpush1.bf16.msra.mxu0 0
      %581 = vmatprep.subr.bf16.mxu0 0
      %582 = vmatpush1.bf16.msra.mxu0 0
      %583 = vmatprep.subr.bf16.mxu0 0
      %584 = vmatpush1.bf16.msra.mxu0 0
      %585 = vmatprep.subr.bf16.mxu0 0
      %586 = vmatpush1.bf16.msra.mxu0 0
      %587 = vmatprep.subr.bf16.mxu0 0
      %588 = vmatpush1.bf16.msra.mxu0 0
      %589 = vmatprep.subr.bf16.mxu0 0
      %590 = vmatpush1.bf16.msra.mxu0 0
      %591 = vmatprep.subr.bf16.mxu0 0
      %592 = vmatpush1.bf16.msra.mxu0 0
      %593 = vmatprep.mubr.bf16.mxu0 0
      %594 = vmatmul.mubr.bf16.gmra.mrb[0].mxu0 %v481
      %v595 = vpop.f32.mrb[0].mxu0
      %v596 = vadd.f32 0.0, %v595
      %v597 = vpop.f32.mrb[0].mxu0
      %v598 = vpop.f32.mrb[0].mxu0
      %v599 = vadd.f32 0.0, %v598
      %v600 = vpop.f32.mrb[0].mxu0
      %601 = vmatprep.mubr.bf16.mxu0 0
      %602 = vmatmul.mubr.bf16.gmra.mrb[0].mxu0 %v482
      %v603 = vpop.f32.mrb[0].mxu0
      %v604 = vadd.f32 0.0, %v603
      %v605 = vpop.f32.mrb[0].mxu0
      %v606 = vpop.f32.mrb[0].mxu0
      %v607 = vadd.f32 0.0, %v606
      %v608 = vpop.f32.mrb[0].mxu0
      %609 = vmatprep.mubr.bf16.mxu0 0
      %610 = vmatmul.mubr.bf16.gmra.mrb[0].mxu0 %v483
      %v611 = vpop.f32.mrb[0].mxu0
      %v612 = vadd.f32 0.0, %v611
      %v613 = vpop.f32.mrb[0].mxu0
      %v614 = vpop.f32.mrb[0].mxu0
      %v615 = vadd.f32 0.0, %v614
      %v616 = vpop.f32.mrb[0].mxu0
      %617 = vmatprep.mubr.bf16.mxu0 0
      %618 = vmatmul.mubr.bf16.gmra.mrb[0].mxu0 %v484
      %v619 = vpop.f32.mrb[0].mxu0
      %v620 = vadd.f32 0.0, %v619
      %v621 = vpop.f32.mrb[0].mxu0
      %v622 = vpop.f32.mrb[0].mxu0
      %v623 = vadd.f32 0.0, %v622
      %v624 = vpop.f32.mrb[0].mxu0
      %625 = vmatprep.mubr.bf16.mxu0 0
      %626 = vmatmul.mubr.bf16.gmra.mrb[0].mxu0 %v485
      %v627 = vpop.f32.mrb[0].mxu0
      %v628 = vadd.f32 0.0, %v627
      %v629 = vpop.f32.mrb[0].mxu0
      %v630 = vpop.f32.mrb[0].mxu0
      %v631 = vadd.f32 0.0, %v630
      %v632 = vpop.f32.mrb[0].mxu0
      %633 = vmatprep.mubr.bf16.mxu0 0
      %634 = vmatmul.mubr.bf16.gmra.mrb[0].mxu0 %v486
      %v635 = vpop.f32.mrb[0].mxu0
      %v636 = vadd.f32 0.0, %v635
      %v637 = vpop.f32.mrb[0].mxu0
      %v638 = vpop.f32.mrb[0].mxu0
      %v639 = vadd.f32 0.0, %v638
      %v640 = vpop.f32.mrb[0].mxu0
      %641 = vmatprep.mubr.bf16.mxu0 0
      %642 = vmatmul.mubr.bf16.gmra.mrb[0].mxu0 %v487
      %v643 = vpop.f32.mrb[0].mxu0
      %v644 = vadd.f32 0.0, %v643
      %v645 = vpop.f32.mrb[0].mxu0
      %v646 = vpop.f32.mrb[0].mxu0
      %v647 = vadd.f32 0.0, %v646
      %v648 = vpop.f32.mrb[0].mxu0
      %649 = vmatprep.mubr.bf16.mxu0 0
      %650 = vmatmul.mubr.bf16.gmra.mrb[0].mxu0 %v488
      %v651 = vpop.f32.mrb[0].mxu0
      %v652 = vadd.f32 0.0, %v651
      %v653 = vpop.f32.mrb[0].mxu0
      %v654 = vpop.f32.mrb[0].mxu0
      %v655 = vadd.f32 0.0, %v654
      %v656 = vpop.f32.mrb[0].mxu0
      %657 = vmatprep.mubr.bf16.mxu0 0
      %658 = vmatmul.mubr.bf16.gmra.mrb[0].mxu0 %v489
      %v659 = vpop.f32.mrb[0].mxu0
      %v660 = vadd.f32 0.0, %v659
      %v661 = vpop.f32.mrb[0].mxu0
      %v662 = vpop.f32.mrb[0].mxu0
      %v663 = vadd.f32 0.0, %v662
      %v664 = vpop.f32.mrb[0].mxu0
      %665 = vmatprep.mubr.bf16.mxu0 0
      %666 = vmatmul.mubr.bf16.gmra.mrb[0].mxu0 %v490
      %v667 = vpop.f32.mrb[0].mxu0
      %v668 = vadd.f32 0.0, %v667
      %v669 = vpop.f32.mrb[0].mxu0
      %v670 = vpop.f32.mrb[0].mxu0
      %v671 = vadd.f32 0.0, %v670
      %v672 = vpop.f32.mrb[0].mxu0
      %673 = vmatprep.mubr.bf16.mxu0 0
      %674 = vmatmul.mubr.bf16.gmra.mrb[0].mxu0 %v491
      %v675 = vpop.f32.mrb[0].mxu0
      %v676 = vadd.f32 0.0, %v675
      %v677 = vpop.f32.mrb[0].mxu0
      %v678 = vpop.f32.mrb[0].mxu0
      %v679 = vadd.f32 0.0, %v678
      %v680 = vpop.f32.mrb[0].mxu0
      %681 = vmatprep.mubr.bf16.mxu0 0
      %682 = vmatmul.mubr.bf16.gmra.mrb[0].mxu0 %v492
      %v683 = vpop.f32.mrb[0].mxu0
      %v684 = vadd.f32 0.0, %v683
      %v685 = vpop.f32.mrb[0].mxu0
      %v686 = vpop.f32.mrb[0].mxu0
      %v687 = vadd.f32 0.0, %v686
      %v688 = vpop.f32.mrb[0].mxu0
      %689 = vmatprep.mubr.bf16.mxu0 0
      %690 = vmatmul.mubr.bf16.gmra.mrb[0].mxu0 %v493
      %v691 = vpop.f32.mrb[0].mxu0
      %v692 = vadd.f32 0.0, %v691
      %v693 = vpop.f32.mrb[0].mxu0
      %v694 = vpop.f32.mrb[0].mxu0
      %v695 = vadd.f32 0.0, %v694
      %v696 = vpop.f32.mrb[0].mxu0
      %697 = vmatprep.mubr.bf16.mxu0 0
      %698 = vmatmul.mubr.bf16.gmra.mrb[0].mxu0 %v494
      %v699 = vpop.f32.mrb[0].mxu0
      %v700 = vadd.f32 0.0, %v699
      %v701 = vpop.f32.mrb[0].mxu0
      %v702 = vpop.f32.mrb[0].mxu0
      %v703 = vadd.f32 0.0, %v702
      %v704 = vpop.f32.mrb[0].mxu0
      %705 = vmatprep.mubr.bf16.mxu0 0
      %706 = vmatmul.mubr.bf16.gmra.mrb[0].mxu0 %v495
      %v707 = vpop.f32.mrb[0].mxu0
      %v708 = vadd.f32 0.0, %v707
      %v709 = vpop.f32.mrb[0].mxu0
      %v710 = vpop.f32.mrb[0].mxu0
      %v711 = vadd.f32 0.0, %v710
      %v712 = vpop.f32.mrb[0].mxu0
      %713 = vmatprep.mubr.bf16.mxu0 0
      %714 = vmatmul.mubr.bf16.gmra.mrb[0].mxu0 %v496
      %v715 = vpop.f32.mrb[0].mxu0
      %v716 = vadd.f32 0.0, %v715
      %v717 = vpop.f32.mrb[0].mxu0
      %v718 = vpop.f32.mrb[0].mxu0
      %v719 = vadd.f32 0.0, %v718
      %v720 = vpop.f32.mrb[0].mxu0
      %721 = vdwg.mxu0
      %v722 = vadd.f32 %v337, %v596
      %v723 = vadd.f32 %v338, %v599
      %v724 = vadd.f32 %v339, %v604
      %v725 = vadd.f32 %v340, %v607
      %v726 = vadd.f32 %v341, %v612
      %v727 = vadd.f32 %v342, %v615
      %v728 = vadd.f32 %v343, %v620
      %v729 = vadd.f32 %v344, %v623
      %v730 = vadd.f32 %v345, %v628
      %v731 = vadd.f32 %v346, %v631
      %v732 = vadd.f32 %v347, %v636
      %v733 = vadd.f32 %v348, %v639
      %v734 = vadd.f32 %v349, %v644
      %v735 = vadd.f32 %v350, %v647
      %v736 = vadd.f32 %v351, %v652
      %v737 = vadd.f32 %v352, %v655
      %v738 = vadd.f32 %v353, %v660
      %v739 = vadd.f32 %v354, %v663
      %v740 = vadd.f32 %v355, %v668
      %v741 = vadd.f32 %v356, %v671
      %v742 = vadd.f32 %v357, %v676
      %v743 = vadd.f32 %v358, %v679
      %v744 = vadd.f32 %v359, %v684
      %v745 = vadd.f32 %v360, %v687
      %v746 = vadd.f32 %v361, %v692
      %v747 = vadd.f32 %v362, %v695
      %v748 = vadd.f32 %v363, %v700
      %v749 = vadd.f32 %v364, %v703
      %v750 = vadd.f32 %v365, %v708
      %v751 = vadd.f32 %v366, %v711
      %v752 = vadd.f32 %v367, %v716
      %v753 = vadd.f32 %v368, %v719
      %754 = vst [vmem:[#allocation2] sm:$0xff] %v722
      %755 = vst [vmem:[#allocation2 + $0x8] sm:$0xff] %v723
      %756 = vst [vmem:[#allocation2 + $0x10] sm:$0xff] %v724
      %757 = vst [vmem:[#allocation2 + $0x18] sm:$0xff] %v725
      %758 = vst [vmem:[#allocation2 + $0x20] sm:$0xff] %v726
      %759 = vst [vmem:[#allocation2 + $0x28] sm:$0xff] %v727
      %760 = vst [vmem:[#allocation2 + $0x30] sm:$0xff] %v728
      %761 = vst [vmem:[#allocation2 + $0x38] sm:$0xff] %v729
      %762 = vst [vmem:[#allocation2 + $0x40] sm:$0xff] %v730
      %763 = vst [vmem:[#allocation2 + $0x48] sm:$0xff] %v731
      %764 = vst [vmem:[#allocation2 + $0x50] sm:$0xff] %v732
      %765 = vst [vmem:[#allocation2 + $0x58] sm:$0xff] %v733
      %766 = vst [vmem:[#allocation2 + $0x60] sm:$0xff] %v734
      %767 = vst [vmem:[#allocation2 + $0x68] sm:$0xff] %v735
      %768 = vst [vmem:[#allocation2 + $0x70] sm:$0xff] %v736
      %769 = vst [vmem:[#allocation2 + $0x78] sm:$0xff] %v737
      %770 = vst [vmem:[#allocation2 + $0x80] sm:$0xff] %v738
      %771 = vst [vmem:[#allocation2 + $0x88] sm:$0xff] %v739
      %772 = vst [vmem:[#allocation2 + $0x90] sm:$0xff] %v740
      %773 = vst [vmem:[#allocation2 + $0x98] sm:$0xff] %v741
      %774 = vst [vmem:[#allocation2 + $0xa0] sm:$0xff] %v742
      %775 = vst [vmem:[#allocation2 + $0xa8] sm:$0xff] %v743
      %776 = vst [vmem:[#allocation2 + $0xb0] sm:$0xff] %v744
      %777 = vst [vmem:[#allocation2 + $0xb8] sm:$0xff] %v745
      %778 = vst [vmem:[#allocation2 + $0xc0] sm:$0xff] %v746
      %779 = vst [vmem:[#allocation2 + $0xc8] sm:$0xff] %v747
      %780 = vst [vmem:[#allocation2 + $0xd0] sm:$0xff] %v748
      %781 = vst [vmem:[#allocation2 + $0xd8] sm:$0xff] %v749
      %782 = vst [vmem:[#allocation2 + $0xe0] sm:$0xff] %v750
      %783 = vst [vmem:[#allocation2 + $0xe8] sm:$0xff] %v751
      %784 = vst [vmem:[#allocation2 + $0xf0] sm:$0xff] %v752
      %785 = vst [vmem:[#allocation2 + $0xf8] sm:$0xff] %v753
      // Predicated region
      $region41: #{_lambda_.22} parent=35 // pred_check
        %p786 = pneg %p301
      $region42: #{_lambda_.22} parent=35 // pred_check_branch
        %788 = sbr.rel (%p786) target = $region44
      $region43: #{_lambda_.22} parent=35 // pred_region
        %v789 = vld [vmem:[#allocation2] sm:$0xff]
        %v790 = vld [vmem:[#allocation2 + $0x8] sm:$0xff]
        %v791 = vld [vmem:[#allocation2 + $0x10] sm:$0xff]
        %v792 = vld [vmem:[#allocation2 + $0x18] sm:$0xff]
        %v793 = vld [vmem:[#allocation2 + $0x20] sm:$0xff]
        %v794 = vld [vmem:[#allocation2 + $0x28] sm:$0xff]
        %v795 = vld [vmem:[#allocation2 + $0x30] sm:$0xff]
        %v796 = vld [vmem:[#allocation2 + $0x38] sm:$0xff]
        %v797 = vld [vmem:[#allocation2 + $0x40] sm:$0xff]
        %v798 = vld [vmem:[#allocation2 + $0x48] sm:$0xff]
        %v799 = vld [vmem:[#allocation2 + $0x50] sm:$0xff]
        %v800 = vld [vmem:[#allocation2 + $0x58] sm:$0xff]
        %v801 = vld [vmem:[#allocation2 + $0x60] sm:$0xff]
        %v802 = vld [vmem:[#allocation2 + $0x68] sm:$0xff]
        %v803 = vld [vmem:[#allocation2 + $0x70] sm:$0xff]
        %v804 = vld [vmem:[#allocation2 + $0x78] sm:$0xff]
        %v805 = vld [vmem:[#allocation2 + $0x80] sm:$0xff]
        %v806 = vld [vmem:[#allocation2 + $0x88] sm:$0xff]
        %v807 = vld [vmem:[#allocation2 + $0x90] sm:$0xff]
        %v808 = vld [vmem:[#allocation2 + $0x98] sm:$0xff]
        %v809 = vld [vmem:[#allocation2 + $0xa0] sm:$0xff]
        %v810 = vld [vmem:[#allocation2 + $0xa8] sm:$0xff]
        %v811 = vld [vmem:[#allocation2 + $0xb0] sm:$0xff]
        %v812 = vld [vmem:[#allocation2 + $0xb8] sm:$0xff]
        %v813 = vld [vmem:[#allocation2 + $0xc0] sm:$0xff]
        %v814 = vld [vmem:[#allocation2 + $0xc8] sm:$0xff]
        %v815 = vld [vmem:[#allocation2 + $0xd0] sm:$0xff]
        %v816 = vld [vmem:[#allocation2 + $0xd8] sm:$0xff]
        %v817 = vld [vmem:[#allocation2 + $0xe0] sm:$0xff]
        %v818 = vld [vmem:[#allocation2 + $0xe8] sm:$0xff]
        %v819 = vld [vmem:[#allocation2 + $0xf0] sm:$0xff]
        %v820 = vld [vmem:[#allocation2 + $0xf8] sm:$0xff]
        %v821 = vld [vmem:[%s287] sm:$0x1]
        %v823 = vlaneseq
        %v824 = vshrl.u32 %v823, 7
        %v825 = vsub.s32 0, %v824
        %v826 = vrot.slane %v821, %v825
        %v828 = vmul.f32 %v789, %v826
        %v829 = vmul.f32 %v790, %v826
        %v830 = vmul.f32 %v791, %v826
        %v831 = vmul.f32 %v792, %v826
        %v832 = vmul.f32 %v793, %v826
        %v833 = vmul.f32 %v794, %v826
        %v834 = vmul.f32 %v795, %v826
        %v835 = vmul.f32 %v796, %v826
        %v836 = vmul.f32 %v797, %v826
        %v837 = vmul.f32 %v798, %v826
        %v838 = vmul.f32 %v799, %v826
        %v839 = vmul.f32 %v800, %v826
        %v840 = vmul.f32 %v801, %v826
        %v841 = vmul.f32 %v802, %v826
        %v842 = vmul.f32 %v803, %v826
        %v843 = vmul.f32 %v804, %v826
        %v844 = vmul.f32 %v805, %v826
        %v845 = vmul.f32 %v806, %v826
        %v846 = vmul.f32 %v807, %v826
        %v847 = vmul.f32 %v808, %v826
        %v848 = vmul.f32 %v809, %v826
        %v849 = vmul.f32 %v810, %v826
        %v850 = vmul.f32 %v811, %v826
        %v851 = vmul.f32 %v812, %v826
        %v852 = vmul.f32 %v813, %v826
        %v853 = vmul.f32 %v814, %v826
        %v854 = vmul.f32 %v815, %v826
        %v855 = vmul.f32 %v816, %v826
        %v856 = vmul.f32 %v817, %v826
        %v857 = vmul.f32 %v818, %v826
        %v858 = vmul.f32 %v819, %v826
        %v859 = vmul.f32 %v820, %v826
        %v860 = vld [vmem:[%s290] sm:$0x1]
        %v862 = vlaneseq
        %v863 = vshrl.u32 %v862, 7
        %v864 = vsub.s32 0, %v863
        %v865 = vrot.slane %v860, %v864
        %v867 = vadd.f32 %v828, %v865
        %v868 = vadd.f32 %v829, %v865
        %v869 = vadd.f32 %v830, %v865
        %v870 = vadd.f32 %v831, %v865
        %v871 = vadd.f32 %v832, %v865
        %v872 = vadd.f32 %v833, %v865
        %v873 = vadd.f32 %v834, %v865
        %v874 = vadd.f32 %v835, %v865
        %v875 = vadd.f32 %v836, %v865
        %v876 = vadd.f32 %v837, %v865
        %v877 = vadd.f32 %v838, %v865
        %v878 = vadd.f32 %v839, %v865
        %v879 = vadd.f32 %v840, %v865
        %v880 = vadd.f32 %v841, %v865
        %v881 = vadd.f32 %v842, %v865
        %v882 = vadd.f32 %v843, %v865
        %v883 = vadd.f32 %v844, %v865
        %v884 = vadd.f32 %v845, %v865
        %v885 = vadd.f32 %v846, %v865
        %v886 = vadd.f32 %v847, %v865
        %v887 = vadd.f32 %v848, %v865
        %v888 = vadd.f32 %v849, %v865
        %v889 = vadd.f32 %v850, %v865
        %v890 = vadd.f32 %v851, %v865
        %v891 = vadd.f32 %v852, %v865
        %v892 = vadd.f32 %v853, %v865
        %v893 = vadd.f32 %v854, %v865
        %v894 = vadd.f32 %v855, %v865
        %v895 = vadd.f32 %v856, %v865
        %v896 = vadd.f32 %v857, %v865
        %v897 = vadd.f32 %v858, %v865
        %v898 = vadd.f32 %v859, %v865
        %v899 = vmax.f32 %v867, 0.0
        %v900 = vmax.f32 %v868, 0.0
        %v901 = vmax.f32 %v869, 0.0
        %v902 = vmax.f32 %v870, 0.0
        %v903 = vmax.f32 %v871, 0.0
        %v904 = vmax.f32 %v872, 0.0
        %v905 = vmax.f32 %v873, 0.0
        %v906 = vmax.f32 %v874, 0.0
        %v907 = vmax.f32 %v875, 0.0
        %v908 = vmax.f32 %v876, 0.0
        %v909 = vmax.f32 %v877, 0.0
        %v910 = vmax.f32 %v878, 0.0
        %v911 = vmax.f32 %v879, 0.0
        %v912 = vmax.f32 %v880, 0.0
        %v913 = vmax.f32 %v881, 0.0
        %v914 = vmax.f32 %v882, 0.0
        %v915 = vmax.f32 %v883, 0.0
        %v916 = vmax.f32 %v884, 0.0
        %v917 = vmax.f32 %v885, 0.0
        %v918 = vmax.f32 %v886, 0.0
        %v919 = vmax.f32 %v887, 0.0
        %v920 = vmax.f32 %v888, 0.0
        %v921 = vmax.f32 %v889, 0.0
        %v922 = vmax.f32 %v890, 0.0
        %v923 = vmax.f32 %v891, 0.0
        %v924 = vmax.f32 %v892, 0.0
        %v925 = vmax.f32 %v893, 0.0
        %v926 = vmax.f32 %v894, 0.0
        %v927 = vmax.f32 %v895, 0.0
        %v928 = vmax.f32 %v896, 0.0
        %v929 = vmax.f32 %v897, 0.0
        %v930 = vmax.f32 %v898, 0.0
        %931 = vst [vmem:[%s298] sm:$0xff] %v899
        %932 = vst [vmem:[%s298 + $0x8] sm:$0xff] %v900
        %933 = vst [vmem:[%s298 + $0x10] sm:$0xff] %v901
        %934 = vst [vmem:[%s298 + $0x18] sm:$0xff] %v902
        %935 = vst [vmem:[%s298 + $0x20] sm:$0xff] %v903
        %936 = vst [vmem:[%s298 + $0x28] sm:$0xff] %v904
        %937 = vst [vmem:[%s298 + $0x30] sm:$0xff] %v905
        %938 = vst [vmem:[%s298 + $0x38] sm:$0xff] %v906
        %939 = vst [vmem:[%s298 + $0x40] sm:$0xff] %v907
        %940 = vst [vmem:[%s298 + $0x48] sm:$0xff] %v908
        %941 = vst [vmem:[%s298 + $0x50] sm:$0xff] %v909
        %942 = vst [vmem:[%s298 + $0x58] sm:$0xff] %v910
        %943 = vst [vmem:[%s298 + $0x60] sm:$0xff] %v911
        %944 = vst [vmem:[%s298 + $0x68] sm:$0xff] %v912
        %945 = vst [vmem:[%s298 + $0x70] sm:$0xff] %v913
        %946 = vst [vmem:[%s298 + $0x78] sm:$0xff] %v914
        %947 = vst [vmem:[%s298 + $0x80] sm:$0xff] %v915
        %948 = vst [vmem:[%s298 + $0x88] sm:$0xff] %v916
        %949 = vst [vmem:[%s298 + $0x90] sm:$0xff] %v917
        %950 = vst [vmem:[%s298 + $0x98] sm:$0xff] %v918
        %951 = vst [vmem:[%s298 + $0xa0] sm:$0xff] %v919
        %952 = vst [vmem:[%s298 + $0xa8] sm:$0xff] %v920
        %953 = vst [vmem:[%s298 + $0xb0] sm:$0xff] %v921
        %954 = vst [vmem:[%s298 + $0xb8] sm:$0xff] %v922
        %955 = vst [vmem:[%s298 + $0xc0] sm:$0xff] %v923
        %956 = vst [vmem:[%s298 + $0xc8] sm:$0xff] %v924
        %957 = vst [vmem:[%s298 + $0xd0] sm:$0xff] %v925
        %958 = vst [vmem:[%s298 + $0xd8] sm:$0xff] %v926
        %959 = vst [vmem:[%s298 + $0xe0] sm:$0xff] %v927
        %960 = vst [vmem:[%s298 + $0xe8] sm:$0xff] %v928
        %961 = vst [vmem:[%s298 + $0xf0] sm:$0xff] %v929
        %962 = vst [vmem:[%s298 + $0xf8] sm:$0xff] %v930
      $region44: #{_lambda_.22} parent=35 // pred_fallthru
        _
      %s963 = smul.u32 32, %s20
      %p964 = scmp.lt.s32.totalorder %s963, 63
      %s965 = scalar_select %p964, %s963, 63
      %p966 = scmp.lt.s32.totalorder %s21, 0
      %s967 = scalar_select %p966, %s21, 0
      %s968 = sadd.s32 %s967, %s965
      %s969 = smul.addr %s968, 8
      %s970 = scalar_lea.vmem %s4, %s969
      // Predicated region
      $region45: #{_lambda_.22} parent=35 // pred_check
        %p971 = pneg %p162
      $region46: #{_lambda_.22} parent=35 // pred_check_branch
        %973 = sbr.rel (%p971) target = $region48
      $region47: #{_lambda_.22} parent=35 // pred_region
        %s974 = smul.u32 32, %s20
      $region48: #{_lambda_.22} parent=35 // pred_fallthru
        _
    $region36: #{_lambda_.22} parent=5 // pred_fallthru
      _
    %p975 = scmp.le.s32.totalorder 2, %s10
    // Predicated region
    $region49: #{_lambda_.22} parent=5 // pred_check
      %p976 = pneg %p975
    $region50: #{_lambda_.22} parent=5 // pred_check_branch
      %978 = sbr.rel (%p976) target = $region52
    $region51: #{_lambda_.22} parent=5 // pred_region
      %s979 = ssub.s32 %s10, 2
      // Predicated region
      $region53: #{_lambda_.22} parent=51 // pred_check
        %p980 = pneg %p168
      $region54: #{_lambda_.22} parent=51 // pred_check_branch
        %982 = sbr.rel (%p980) target = $region56
      $region55: #{_lambda_.22} parent=51 // pred_region
        %s983 = smul.u32 32, %s23
        %p984 = scmp.lt.s32.totalorder %s983, 63
        %s985 = scalar_select %p984, %s983, 63
        %p986 = scmp.lt.s32.totalorder %s24, 0
        %s987 = scalar_select %p986, %s24, 0
        %s988 = sadd.s32 %s987, %s985
        %s989 = smul.addr %s988, 8
        %s990 = scalar_lea.vmem %s4, %s989
      $region56: #{_lambda_.22} parent=51 // pred_fallthru
        _
    $region52: #{_lambda_.22} parent=5 // pred_fallthru
      _
  $region6: #{_lambda_.22} parent=0 // loop_footer
    %s14 = sadd.s32 1, %s10
  $region7: #{_lambda_.22} parent=0 // loop_footer_branch
    %9 = sbr.rel target = $region3
  $region8: #{_lambda_.22} parent=0 // loop_exit
    _

// kernel: _lambda_.24
$region0: #{_lambda_.24}
  #allocation0 [shape = 'u32[]', space=smem, size = 0x4, offset = 0x4, fixed_abs, tag = 'smem constant byte address 0x4 - core index']
  #allocation1 [shape = 'u32[144,128]{1,0:T(1,128)}', space=vmem, size = 0x12000, scoped, tag = 'internal scratch']
  #allocation2 [shape = 'f32[256,128]{1,0:T(8,128)}', space=vmem, size = 0x20000, scoped, tag = 'scratch operand']
  %s0 = inlined_call_operand.vmem [shape: bf16[512,128], index: 0, kind: input, shape index: {}]
  %s1 = inlined_call_operand.vmem [shape: bf16[128,128], index: 1, kind: input, shape index: {}]
  %s2 = inlined_call_operand.vmem [shape: f32[1,128], index: 2, kind: input, shape index: {}]
  %s3 = inlined_call_operand.vmem [shape: f32[1,128], index: 3, kind: input, shape index: {}]
  %s4 = inlined_call_operand.vmem [shape: f32[512,128], index: 4, kind: input, shape index: {}]
  %s5 = inlined_call_operand.vmem [shape: f32[512,128], index: 5, kind: output, shape index: {}]
  %s6 = sld [smem:[#allocation0]]
  $region61: #{_lambda_.24} parent=0
    _
  %s8 = ssub.s32 1, %s6
  %s9 = scalar_select 0, %s8, %s6
  loop: start=0, step=1, limit=4
  $region2: #{_lambda_.24} parent=0 // loop_pre_header
    _
  $region3: #{_lambda_.24} parent=0 // loop_header
    %s11 = sphi 0, %s15
    %p12 = scmp.ge.s32.totalorder %s11, 4
    %s18 = sphi 0, %s37
    %s19 = sphi 0, %s33
    %s20 = sphi 0, %s29
    %s21 = sphi 0, %s18
    %s22 = sphi 0, %s19
    %s23 = sphi 0, %s20
    %s24 = sphi 0, %s21
    %s25 = sphi 0, %s22
    %s26 = sphi 0, %s23
    %s42 = sphi 0, %s44
    %s45 = sphi 0, %s42
    %s46 = sphi 0, %s45
    %s62 = sphi 0, %s46
    %s70 = sphi 0, %s72
    %s73 = sphi 0, %s70
    %s74 = sphi 0, %s73
    %s90 = sphi 0, %s74
    %s96 = sphi 0, %s98
    %s99 = sphi 0, %s96
    %s100 = sphi 0, %s99
    %s116 = sphi 0, %s100
    %s122 = sphi 0, %s124
    %s125 = sphi 0, %s122
    %s126 = sphi 0, %s125
    %s142 = sphi 0, %s126
    %s150 = sphi 0, %s152
    %s153 = sphi 0, %s150
    %s154 = sphi 0, %s153
    %s170 = sphi 0, %s154
    %s178 = sphi 0, %s180
    %s181 = sphi 0, %s178
    %s182 = sphi 0, %s181
    %s198 = sphi 0, %s182
  $region4: #{_lambda_.24} parent=0 // loop_header_branch
    %14 = sbr.rel (%p12) target = $region8
  $region5: #{_lambda_.24} parent=0 // loop_body
    %s16 = ssub.s32 %s11, 1
    %s17 = ssub.s32 %s11, 2
    %s27 = sadd.s32 1, %s20
    %p28 = scmp.ge.s32.totalorder %s27, 1
    %s29 = scalar_select %p28, 0, %s27
    %s30 = sadd.s32 1, %s19
    %s31 = scalar_select %p28, %s30, %s19
    %p32 = scmp.ge.s32.totalorder %s31, 1
    %s33 = scalar_select %p32, 0, %s31
    %s34 = sadd.s32 1, %s18
    %s35 = scalar_select %p32, %s34, %s18
    %p36 = scmp.ge.s32.totalorder %s35, 2
    %s37 = scalar_select %p36, 0, %s35
    %s38 = ssub.s32 %s18, %s37
    %s39 = ssub.s32 %s20, %s29
    %s40 = sor.u32 %s38, %s39
    %p41 = scmp.eq.s32.totalorder %s40, 0
    %s43 = sadd.s32 %s42, 1
    %s44 = scalar_select %p41, %s42, %s43
    %p47 = pneg %p41
    %p48 = scmp.eq.s32.totalorder %s11, 1
    %p49 = por %p47, %p48
    %p50 = scmp.ne.s32.totalorder %s42, %s45
    %p51 = scmp.eq.s32.totalorder %s11, 0
    %p52 = por %p50, %p51
    %p53 = scmp.ne.s32.totalorder %s42, %s45
    %p54 = scmp.eq.s32.totalorder %s16, 1
    %p55 = por %p53, %p54
    %p56 = scmp.ne.s32.totalorder %s45, %s46
    %p57 = scmp.eq.s32.totalorder %s16, 0
    %p58 = por %p56, %p57
    %p59 = scmp.ne.s32.totalorder %s45, %s46
    %p60 = scmp.eq.s32.totalorder %s17, 1
    %p61 = por %p59, %p60
    %p63 = scmp.ne.s32.totalorder %s46, %s62
    %p64 = scmp.eq.s32.totalorder %s17, 0
    %p65 = por %p63, %p64
    %s66 = ssub.s32 %s20, %s29
    %s67 = ssub.s32 %s19, %s33
    %s68 = sor.u32 %s66, %s67
    %p69 = scmp.eq.s32.totalorder %s68, 0
    %s71 = sadd.s32 %s70, 1
    %s72 = scalar_select %p69, %s70, %s71
    %p75 = pneg %p69
    %p76 = scmp.eq.s32.totalorder %s11, 1
    %p77 = por %p75, %p76
    %p78 = scmp.ne.s32.totalorder %s70, %s73
    %p79 = scmp.eq.s32.totalorder %s11, 0
    %p80 = por %p78, %p79
    %p81 = scmp.ne.s32.totalorder %s70, %s73
    %p82 = scmp.eq.s32.totalorder %s16, 1
    %p83 = por %p81, %p82
    %p84 = scmp.ne.s32.totalorder %s73, %s74
    %p85 = scmp.eq.s32.totalorder %s16, 0
    %p86 = por %p84, %p85
    %p87 = scmp.ne.s32.totalorder %s73, %s74
    %p88 = scmp.eq.s32.totalorder %s17, 1
    %p89 = por %p87, %p88
    %p91 = scmp.ne.s32.totalorder %s74, %s90
    %p92 = scmp.eq.s32.totalorder %s17, 0
    %p93 = por %p91, %p92
    %s94 = ssub.s32 %s19, %s33
    %p95 = scmp.eq.s32.totalorder %s94, 0
    %s97 = sadd.s32 %s96, 1
    %s98 = scalar_select %p95, %s96, %s97
    %p101 = pneg %p95
    %p102 = scmp.eq.s32.totalorder %s11, 1
    %p103 = por %p101, %p102
    %p104 = scmp.ne.s32.totalorder %s96, %s99
    %p105 = scmp.eq.s32.totalorder %s11, 0
    %p106 = por %p104, %p105
    %p107 = scmp.ne.s32.totalorder %s96, %s99
    %p108 = scmp.eq.s32.totalorder %s16, 1
    %p109 = por %p107, %p108
    %p110 = scmp.ne.s32.totalorder %s99, %s100
    %p111 = scmp.eq.s32.totalorder %s16, 0
    %p112 = por %p110, %p111
    %p113 = scmp.ne.s32.totalorder %s99, %s100
    %p114 = scmp.eq.s32.totalorder %s17, 1
    %p115 = por %p113, %p114
    %p117 = scmp.ne.s32.totalorder %s100, %s116
    %p118 = scmp.eq.s32.totalorder %s17, 0
    %p119 = por %p117, %p118
    %s120 = ssub.s32 %s19, %s33
    %p121 = scmp.eq.s32.totalorder %s120, 0
    %s123 = sadd.s32 %s122, 1
    %s124 = scalar_select %p121, %s122, %s123
    %p127 = pneg %p121
    %p128 = scmp.eq.s32.totalorder %s11, 1
    %p129 = por %p127, %p128
    %p130 = scmp.ne.s32.totalorder %s122, %s125
    %p131 = scmp.eq.s32.totalorder %s11, 0
    %p132 = por %p130, %p131
    %p133 = scmp.ne.s32.totalorder %s122, %s125
    %p134 = scmp.eq.s32.totalorder %s16, 1
    %p135 = por %p133, %p134
    %p136 = scmp.ne.s32.totalorder %s125, %s126
    %p137 = scmp.eq.s32.totalorder %s16, 0
    %p138 = por %p136, %p137
    %p139 = scmp.ne.s32.totalorder %s125, %s126
    %p140 = scmp.eq.s32.totalorder %s17, 1
    %p141 = por %p139, %p140
    %p143 = scmp.ne.s32.totalorder %s126, %s142
    %p144 = scmp.eq.s32.totalorder %s17, 0
    %p145 = por %p143, %p144
    %s146 = ssub.s32 %s18, %s37
    %s147 = ssub.s32 %s19, %s33
    %s148 = sor.u32 %s146, %s147
    %p149 = scmp.eq.s32.totalorder %s148, 0
    %s151 = sadd.s32 %s150, 1
    %s152 = scalar_select %p149, %s150, %s151
    %p155 = pneg %p149
    %p156 = scmp.eq.s32.totalorder %s11, 1
    %p157 = por %p155, %p156
    %p158 = scmp.ne.s32.totalorder %s150, %s153
    %p159 = scmp.eq.s32.totalorder %s11, 0
    %p160 = por %p158, %p159
    %p161 = scmp.ne.s32.totalorder %s150, %s153
    %p162 = scmp.eq.s32.totalorder %s16, 1
    %p163 = por %p161, %p162
    %p164 = scmp.ne.s32.totalorder %s153, %s154
    %p165 = scmp.eq.s32.totalorder %s16, 0
    %p166 = por %p164, %p165
    %p167 = scmp.ne.s32.totalorder %s153, %s154
    %p168 = scmp.eq.s32.totalorder %s17, 1
    %p169 = por %p167, %p168
    %p171 = scmp.ne.s32.totalorder %s154, %s170
    %p172 = scmp.eq.s32.totalorder %s17, 0
    %p173 = por %p171, %p172
    %s174 = ssub.s32 %s18, %s37
    %s175 = ssub.s32 %s19, %s33
    %s176 = sor.u32 %s174, %s175
    %p177 = scmp.eq.s32.totalorder %s176, 0
    %s179 = sadd.s32 %s178, 1
    %s180 = scalar_select %p177, %s178, %s179
    %p183 = pneg %p177
    %p184 = scmp.eq.s32.totalorder %s11, 1
    %p185 = por %p183, %p184
    %p186 = scmp.ne.s32.totalorder %s178, %s181
    %p187 = scmp.eq.s32.totalorder %s11, 0
    %p188 = por %p186, %p187
    %p189 = scmp.ne.s32.totalorder %s178, %s181
    %p190 = scmp.eq.s32.totalorder %s16, 1
    %p191 = por %p189, %p190
    %p192 = scmp.ne.s32.totalorder %s181, %s182
    %p193 = scmp.eq.s32.totalorder %s16, 0
    %p194 = por %p192, %p193
    %p195 = scmp.ne.s32.totalorder %s181, %s182
    %p196 = scmp.eq.s32.totalorder %s17, 1
    %p197 = por %p195, %p196
    %p199 = scmp.ne.s32.totalorder %s182, %s198
    %p200 = scmp.eq.s32.totalorder %s17, 0
    %p201 = por %p199, %p200
    %p202 = scmp.le.s32.totalorder 1, %s11
    %p203 = scmp.lt.s32.totalorder %s11, 3
    %p204 = pnand %p202, %p203
    %p205 = pneg %p204
    // Predicated region
    $region9: #{_lambda_.24} parent=5 // pred_check
      _
    $region10: #{_lambda_.24} parent=5 // pred_check_branch
      %207 = sbr.rel (%p204) target = $region12
    $region11: #{_lambda_.24} parent=5 // pred_region
      %s208 = ssub.s32 %s11, 1
      // Predicated region
      $region13: #{_lambda_.24} parent=11 // pred_check
        %p209 = pneg %p86
      $region14: #{_lambda_.24} parent=11 // pred_check_branch
        %211 = sbr.rel (%p209) target = $region16
      $region15: #{_lambda_.24} parent=11 // pred_region
        %s212 = smul.u32 16, %s23
        %p213 = scmp.lt.s32.totalorder %s212, 15
        %s214 = scalar_select %p213, %s212, 15
        %p215 = scmp.lt.s32.totalorder %s22, 0
        %s216 = scalar_select %p215, %s22, 0
        %s217 = sadd.s32 %s216, %s214
        %s218 = smul.addr %s217, 4
        %s219 = scalar_lea.vmem %s1, %s218
        %s220 = smul.u32 16, %s23
      $region16: #{_lambda_.24} parent=11 // pred_fallthru
        _
      // Predicated region
      $region17: #{_lambda_.24} parent=11 // pred_check
        %p221 = pneg %p112
      $region18: #{_lambda_.24} parent=11 // pred_check_branch
        %223 = sbr.rel (%p221) target = $region20
      $region19: #{_lambda_.24} parent=11 // pred_region
        %p224 = scmp.lt.s32.totalorder %s22, 0
        %s225 = scalar_select %p224, %s22, 0
        %s226 = scalar_lea.vmem %s2, %s225
      $region20: #{_lambda_.24} parent=11 // pred_fallthru
        _
      // Predicated region
      $region21: #{_lambda_.24} parent=11 // pred_check
        %p227 = pneg %p138
      $region22: #{_lambda_.24} parent=11 // pred_check_branch
        %229 = sbr.rel (%p227) target = $region24
      $region23: #{_lambda_.24} parent=11 // pred_region
        %p230 = scmp.lt.s32.totalorder %s22, 0
        %s231 = scalar_select %p230, %s22, 0
        %s232 = scalar_lea.vmem %s3, %s231
      $region24: #{_lambda_.24} parent=11 // pred_fallthru
        _
    $region12: #{_lambda_.24} parent=5 // pred_fallthru
      _
    %p233 = scmp.lt.s32.totalorder %s11, 2
    // Predicated region
    $region25: #{_lambda_.24} parent=5 // pred_check
      %p234 = pneg %p233
    $region26: #{_lambda_.24} parent=5 // pred_check_branch
      %236 = sbr.rel (%p234) target = $region28
    $region27: #{_lambda_.24} parent=5 // pred_region
      // Predicated region
      $region29: #{_lambda_.24} parent=27 // pred_check
        %p237 = pneg %p52
      $region30: #{_lambda_.24} parent=27 // pred_check_branch
        %239 = sbr.rel (%p237) target = $region32
      $region31: #{_lambda_.24} parent=27 // pred_region
        %s240 = smul.u32 32, %s18
        %p241 = scmp.lt.s32.totalorder %s240, 63
        %s242 = scalar_select %p241, %s240, 63
        %p243 = scmp.lt.s32.totalorder %s20, 0
        %s244 = scalar_select %p243, %s20, 0
        %s245 = sadd.s32 %s244, %s242
        %s246 = smul.addr %s245, 4
        %s247 = scalar_lea.vmem %s0, %s246
        %s248 = smul.u32 32, %s18
      $region32: #{_lambda_.24} parent=27 // pred_fallthru
        _
      // Predicated region
      $region33: #{_lambda_.24} parent=27 // pred_check
        %p249 = pneg %p160
      $region34: #{_lambda_.24} parent=27 // pred_check_branch
        %251 = sbr.rel (%p249) target = $region36
      $region35: #{_lambda_.24} parent=27 // pred_region
        %s252 = smul.u32 32, %s18
        %p253 = scmp.lt.s32.totalorder %s252, 63
        %s254 = scalar_select %p253, %s252, 63
        %p255 = scmp.lt.s32.totalorder %s19, 0
        %s256 = scalar_select %p255, %s19, 0
        %s257 = sadd.s32 %s256, %s254
        %s258 = smul.addr %s257, 8
        %s259 = scalar_lea.vmem %s4, %s258
        %s260 = smul.u32 32, %s18
      $region36: #{_lambda_.24} parent=27 // pred_fallthru
        _
    $region28: #{_lambda_.24} parent=5 // pred_fallthru
      _
    %p261 = scmp.le.s32.totalorder 1, %s11
    %p262 = scmp.lt.s32.totalorder %s11, 3
    %p263 = pnand %p261, %p262
    %p264 = pneg %p263
    // Predicated region
    $region37: #{_lambda_.24} parent=5 // pred_check
      _
    $region38: #{_lambda_.24} parent=5 // pred_check_branch
      %266 = sbr.rel (%p263) target = $region40
    $region39: #{_lambda_.24} parent=5 // pred_region
      %s267 = ssub.s32 %s11, 1
      %s268 = smul.u32 32, %s21
      %p269 = scmp.lt.s32.totalorder %s268, 63
      %s270 = scalar_select %p269, %s268, 63
      %p271 = scmp.lt.s32.totalorder %s23, 0
      %s272 = scalar_select %p271, %s23, 0
      %s273 = sadd.s32 %s272, %s270
      %s274 = smul.addr %s273, 4
      %s275 = scalar_lea.vmem %s0, %s274
      %p276 = pneg %p58
      %p277 = pneg %p55
      %s278 = smul.u32 16, %s23
      %p279 = scmp.lt.s32.totalorder %s278, 15
      %s280 = scalar_select %p279, %s278, 15
      %p281 = scmp.lt.s32.totalorder %s22, 0
      %s282 = scalar_select %p281, %s22, 0
      %s283 = sadd.s32 %s282, %s280
      %s284 = smul.addr %s283, 4
      %s285 = scalar_lea.vmem %s1, %s284
      %p286 = pneg %p86
      %p287 = pneg %p83
      %p288 = scmp.lt.s32.totalorder %s22, 0
      %s289 = scalar_select %p288, %s22, 0
      %s290 = scalar_lea.vmem %s2, %s289
      %p291 = pneg %p112
      %p292 = pneg %p109
      %p293 = scmp.lt.s32.totalorder %s22, 0
      %s294 = scalar_select %p293, %s22, 0
      %s295 = scalar_lea.vmem %s3, %s294
      %p296 = pneg %p138
      %p297 = pneg %p135
      %s298 = smul.u32 32, %s21
      %p299 = scmp.lt.s32.totalorder %s298, 63
      %s300 = scalar_select %p299, %s298, 63
      %p301 = scmp.lt.s32.totalorder %s22, 0
      %s302 = scalar_select %p301, %s22, 0
      %s303 = sadd.s32 %s302, %s300
      %s304 = smul.addr %s303, 8
      %s305 = scalar_lea.vmem %s4, %s304
      %p306 = pneg %p166
      %p307 = pneg %p163
      %p308 = pneg %p194
      %p309 = pneg %p191
      %s310 = smul.u32 32, %s21
      %p311 = scmp.lt.s32.totalorder %s310, 63
      %s312 = scalar_select %p311, %s310, 63
      %p313 = scmp.lt.s32.totalorder %s22, 0
      %s314 = scalar_select %p313, %s22, 0
      %s315 = sadd.s32 %s314, %s312
      %s316 = smul.addr %s315, 8
      %s317 = scalar_lea.vmem %s5, %s316
      %s318 = smul.u32 32, %s21
      %p319 = scmp.lt.s32.totalorder %s318, 63
      %s320 = scalar_select %p319, %s318, 63
      %p321 = scmp.lt.s32.totalorder %s23, 0
      %s322 = scalar_select %p321, %s23, 0
      %s323 = sadd.s32 %s322, %s320
      %s324 = smul.addr %s323, 4
      %s325 = scalar_lea.vmem %s0, %s324
      %s326 = smul.u32 32, %s21
      %s327 = smul.u32 16, %s23
      %p328 = scmp.lt.s32.totalorder %s327, 15
      %s329 = scalar_select %p328, %s327, 15
      %p330 = scmp.lt.s32.totalorder %s22, 0
      %s331 = scalar_select %p330, %s22, 0
      %s332 = sadd.s32 %s331, %s329
      %s333 = smul.addr %s332, 4
      %s334 = scalar_lea.vmem %s1, %s333
      %s335 = smul.u32 16, %s23
      %p336 = scmp.lt.s32.totalorder %s22, 0
      %s337 = scalar_select %p336, %s22, 0
      %s338 = scalar_lea.vmem %s2, %s337
      %p339 = scmp.lt.s32.totalorder %s22, 0
      %s340 = scalar_select %p339, %s22, 0
      %s341 = scalar_lea.vmem %s3, %s340
      %s342 = smul.u32 32, %s21
      %p343 = scmp.lt.s32.totalorder %s342, 63
      %s344 = scalar_select %p343, %s342, 63
      %p345 = scmp.lt.s32.totalorder %s22, 0
      %s346 = scalar_select %p345, %s22, 0
      %s347 = sadd.s32 %s346, %s344
      %s348 = smul.addr %s347, 8
      %s349 = scalar_lea.vmem %s4, %s348
      %s350 = smul.u32 32, %s21
      %s351 = smul.u32 32, %s21
      %p352 = scmp.lt.s32.totalorder %s351, 63
      %s353 = scalar_select %p352, %s351, 63
      %p354 = scmp.lt.s32.totalorder %s22, 0
      %s355 = scalar_select %p354, %s22, 0
      %s356 = sadd.s32 %s355, %s353
      %s357 = smul.addr %s356, 8
      %s358 = scalar_lea.vmem %s5, %s357
      %s359 = smul.u32 32, %s21
      %p361 = scmp.eq.s32.totalorder %s23, 0
      // Predicated region
      $region41: #{_lambda_.24} parent=39 // pred_check
        %p362 = pneg %p361
      $region42: #{_lambda_.24} parent=39 // pred_check_branch
        %364 = sbr.rel (%p362) target = $region44
      $region43: #{_lambda_.24} parent=39 // pred_region
        %365 = vst [vmem:[#allocation2] sm:$0xff] 0.0
        %366 = vst [vmem:[#allocation2 + $0x8] sm:$0xff] 0.0
        %367 = vst [vmem:[#allocation2 + $0x10] sm:$0xff] 0.0
        %368 = vst [vmem:[#allocation2 + $0x18] sm:$0xff] 0.0
        %369 = vst [vmem:[#allocation2 + $0x20] sm:$0xff] 0.0
        %370 = vst [vmem:[#allocation2 + $0x28] sm:$0xff] 0.0
        %371 = vst [vmem:[#allocation2 + $0x30] sm:$0xff] 0.0
        %372 = vst [vmem:[#allocation2 + $0x38] sm:$0xff] 0.0
        %373 = vst [vmem:[#allocation2 + $0x40] sm:$0xff] 0.0
        %374 = vst [vmem:[#allocation2 + $0x48] sm:$0xff] 0.0
        %375 = vst [vmem:[#allocation2 + $0x50] sm:$0xff] 0.0
        %376 = vst [vmem:[#allocation2 + $0x58] sm:$0xff] 0.0
        %377 = vst [vmem:[#allocation2 + $0x60] sm:$0xff] 0.0
        %378 = vst [vmem:[#allocation2 + $0x68] sm:$0xff] 0.0
        %379 = vst [vmem:[#allocation2 + $0x70] sm:$0xff] 0.0
        %380 = vst [vmem:[#allocation2 + $0x78] sm:$0xff] 0.0
        %381 = vst [vmem:[#allocation2 + $0x80] sm:$0xff] 0.0
        %382 = vst [vmem:[#allocation2 + $0x88] sm:$0xff] 0.0
        %383 = vst [vmem:[#allocation2 + $0x90] sm:$0xff] 0.0
        %384 = vst [vmem:[#allocation2 + $0x98] sm:$0xff] 0.0
        %385 = vst [vmem:[#allocation2 + $0xa0] sm:$0xff] 0.0
        %386 = vst [vmem:[#allocation2 + $0xa8] sm:$0xff] 0.0
        %387 = vst [vmem:[#allocation2 + $0xb0] sm:$0xff] 0.0
        %388 = vst [vmem:[#allocation2 + $0xb8] sm:$0xff] 0.0
        %389 = vst [vmem:[#allocation2 + $0xc0] sm:$0xff] 0.0
        %390 = vst [vmem:[#allocation2 + $0xc8] sm:$0xff] 0.0
        %391 = vst [vmem:[#allocation2 + $0xd0] sm:$0xff] 0.0
        %392 = vst [vmem:[#allocation2 + $0xd8] sm:$0xff] 0.0
        %393 = vst [vmem:[#allocation2 + $0xe0] sm:$0xff] 0.0
        %394 = vst [vmem:[#allocation2 + $0xe8] sm:$0xff] 0.0
        %395 = vst [vmem:[#allocation2 + $0xf0] sm:$0xff] 0.0
        %396 = vst [vmem:[#allocation2 + $0xf8] sm:$0xff] 0.0
      $region44: #{_lambda_.24} parent=39 // pred_fallthru
        _
      %v397 = vld [vmem:[#allocation2] sm:$0xff]
      %v398 = vld [vmem:[#allocation2 + $0x8] sm:$0xff]
      %v399 = vld [vmem:[#allocation2 + $0x10] sm:$0xff]
      %v400 = vld [vmem:[#allocation2 + $0x18] sm:$0xff]
      %v401 = vld [vmem:[#allocation2 + $0x20] sm:$0xff]
      %v402 = vld [vmem:[#allocation2 + $0x28] sm:$0xff]
      %v403 = vld [vmem:[#allocation2 + $0x30] sm:$0xff]
      %v404 = vld [vmem:[#allocation2 + $0x38] sm:$0xff]
      %v405 = vld [vmem:[#allocation2 + $0x40] sm:$0xff]
      %v406 = vld [vmem:[#allocation2 + $0x48] sm:$0xff]
      %v407 = vld [vmem:[#allocation2 + $0x50] sm:$0xff]
      %v408 = vld [vmem:[#allocation2 + $0x58] sm:$0xff]
      %v409 = vld [vmem:[#allocation2 + $0x60] sm:$0xff]
      %v410 = vld [vmem:[#allocation2 + $0x68] sm:$0xff]
      %v411 = vld [vmem:[#allocation2 + $0x70] sm:$0xff]
      %v412 = vld [vmem:[#allocation2 + $0x78] sm:$0xff]
      %v413 = vld [vmem:[#allocation2 + $0x80] sm:$0xff]
      %v414 = vld [vmem:[#allocation2 + $0x88] sm:$0xff]
      %v415 = vld [vmem:[#allocation2 + $0x90] sm:$0xff]
      %v416 = vld [vmem:[#allocation2 + $0x98] sm:$0xff]
      %v417 = vld [vmem:[#allocation2 + $0xa0] sm:$0xff]
      %v418 = vld [vmem:[#allocation2 + $0xa8] sm:$0xff]
      %v419 = vld [vmem:[#allocation2 + $0xb0] sm:$0xff]
      %v420 = vld [vmem:[#allocation2 + $0xb8] sm:$0xff]
      %v421 = vld [vmem:[#allocation2 + $0xc0] sm:$0xff]
      %v422 = vld [vmem:[#allocation2 + $0xc8] sm:$0xff]
      %v423 = vld [vmem:[#allocation2 + $0xd0] sm:$0xff]
      %v424 = vld [vmem:[#allocation2 + $0xd8] sm:$0xff]
      %v425 = vld [vmem:[#allocation2 + $0xe0] sm:$0xff]
      %v426 = vld [vmem:[#allocation2 + $0xe8] sm:$0xff]
      %v427 = vld [vmem:[#allocation2 + $0xf0] sm:$0xff]
      %v428 = vld [vmem:[#allocation2 + $0xf8] sm:$0xff]
      %v429 = vld [vmem:[%s325] sm:$0xf]
      %v430 = vld [vmem:[%s325 + $0x4] sm:$0xf]
      %v431 = vld [vmem:[%s325 + $0x8] sm:$0xf]
      %v432 = vld [vmem:[%s325 + $0xc] sm:$0xf]
      %v433 = vld [vmem:[%s325 + $0x10] sm:$0xf]
      %v434 = vld [vmem:[%s325 + $0x14] sm:$0xf]
      %v435 = vld [vmem:[%s325 + $0x18] sm:$0xf]
      %v436 = vld [vmem:[%s325 + $0x1c] sm:$0xf]
      %v437 = vld [vmem:[%s325 + $0x20] sm:$0xf]
      %v438 = vld [vmem:[%s325 + $0x24] sm:$0xf]
      %v439 = vld [vmem:[%s325 + $0x28] sm:$0xf]
      %v440 = vld [vmem:[%s325 + $0x2c] sm:$0xf]
      %v441 = vld [vmem:[%s325 + $0x30] sm:$0xf]
      %v442 = vld [vmem:[%s325 + $0x34] sm:$0xf]
      %v443 = vld [vmem:[%s325 + $0x38] sm:$0xf]
      %v444 = vld [vmem:[%s325 + $0x3c] sm:$0xf]
      %v445 = vld [vmem:[%s325 + $0x40] sm:$0xf]
      %v446 = vld [vmem:[%s325 + $0x44] sm:$0xf]
      %v447 = vld [vmem:[%s325 + $0x48] sm:$0xf]
      %v448 = vld [vmem:[%s325 + $0x4c] sm:$0xf]
      %v449 = vld [vmem:[%s325 + $0x50] sm:$0xf]
      %v450 = vld [vmem:[%s325 + $0x54] sm:$0xf]
      %v451 = vld [vmem:[%s325 + $0x58] sm:$0xf]
      %v452 = vld [vmem:[%s325 + $0x5c] sm:$0xf]
      %v453 = vld [vmem:[%s325 + $0x60] sm:$0xf]
      %v454 = vld [vmem:[%s325 + $0x64] sm:$0xf]
      %v455 = vld [vmem:[%s325 + $0x68] sm:$0xf]
      %v456 = vld [vmem:[%s325 + $0x6c] sm:$0xf]
      %v457 = vld [vmem:[%s325 + $0x70] sm:$0xf]
      %v458 = vld [vmem:[%s325 + $0x74] sm:$0xf]
      %v459 = vld [vmem:[%s325 + $0x78] sm:$0xf]
      %v460 = vld [vmem:[%s325 + $0x7c] sm:$0xf]
      %v461 = vld [vmem:[%s334] sm:$0xf]
      %v462 = vld [vmem:[%s334 + $0x4] sm:$0xf]
      %v463 = vld [vmem:[%s334 + $0x8] sm:$0xf]
      %v464 = vld [vmem:[%s334 + $0xc] sm:$0xf]
      %v465 = vld [vmem:[%s334 + $0x10] sm:$0xf]
      %v466 = vld [vmem:[%s334 + $0x14] sm:$0xf]
      %v467 = vld [vmem:[%s334 + $0x18] sm:$0xf]
      %v468 = vld [vmem:[%s334 + $0x1c] sm:$0xf]
      %v469 = vld [vmem:[%s334 + $0x20] sm:$0xf]
      %v470 = vld [vmem:[%s334 + $0x24] sm:$0xf]
      %v471 = vld [vmem:[%s334 + $0x28] sm:$0xf]
      %v472 = vld [vmem:[%s334 + $0x2c] sm:$0xf]
      %v473 = vld [vmem:[%s334 + $0x30] sm:$0xf]
      %v474 = vld [vmem:[%s334 + $0x34] sm:$0xf]
      %v475 = vld [vmem:[%s334 + $0x38] sm:$0xf]
      %v476 = vld [vmem:[%s334 + $0x3c] sm:$0xf]
      %v509 = vunpack.c.l.b16 %v429
      %v510 = vunpack.c.l.b16 %v430
      %v511 = vunpack.c.l.b16 %v431
      %v512 = vunpack.c.l.b16 %v432
      %v513 = vunpack.c.l.b16 %v433
      %v514 = vunpack.c.l.b16 %v434
      %v515 = vunpack.c.l.b16 %v435
      %v516 = vunpack.c.l.b16 %v436
      %v517 = vunpack.c.l.b16 %v437
      %v518 = vunpack.c.l.b16 %v438
      %v519 = vunpack.c.l.b16 %v439
      %v520 = vunpack.c.l.b16 %v440
      %v521 = vunpack.c.l.b16 %v441
      %v522 = vunpack.c.l.b16 %v442
      %v523 = vunpack.c.l.b16 %v443
      %v524 = vunpack.c.l.b16 %v444
      %v525 = vunpack.c.l.b16 %v445
      %v526 = vunpack.c.l.b16 %v446
      %v527 = vunpack.c.l.b16 %v447
      %v528 = vunpack.c.l.b16 %v448
      %v529 = vunpack.c.l.b16 %v449
      %v530 = vunpack.c.l.b16 %v450
      %v531 = vunpack.c.l.b16 %v451
      %v532 = vunpack.c.l.b16 %v452
      %v533 = vunpack.c.l.b16 %v453
      %v534 = vunpack.c.l.b16 %v454
      %v535 = vunpack.c.l.b16 %v455
      %v536 = vunpack.c.l.b16 %v456
      %v537 = vunpack.c.l.b16 %v457
      %v538 = vunpack.c.l.b16 %v458
      %v539 = vunpack.c.l.b16 %v459
      %v540 = vunpack.c.l.b16 %v460
      %v541 = vpack.c.b16 %v510, %v509
      %v542 = vpack.c.b16 %v512, %v511
      %v543 = vpack.c.b16 %v514, %v513
      %v544 = vpack.c.b16 %v516, %v515
      %v545 = vpack.c.b16 %v518, %v517
      %v546 = vpack.c.b16 %v520, %v519
      %v547 = vpack.c.b16 %v522, %v521
      %v548 = vpack.c.b16 %v524, %v523
      %v549 = vpack.c.b16 %v526, %v525
      %v550 = vpack.c.b16 %v528, %v527
      %v551 = vpack.c.b16 %v530, %v529
      %v552 = vpack.c.b16 %v532, %v531
      %v553 = vpack.c.b16 %v534, %v533
      %v554 = vpack.c.b16 %v536, %v535
      %v555 = vpack.c.b16 %v538, %v537
      %v556 = vpack.c.b16 %v540, %v539
      %v589 = vunpack.c.l.b16 %v461
      %v590 = vunpack.c.l.b16 %v462
      %v591 = vunpack.c.l.b16 %v463
      %v592 = vunpack.c.l.b16 %v464
      %v593 = vunpack.c.l.b16 %v465
      %v594 = vunpack.c.l.b16 %v466
      %v595 = vunpack.c.l.b16 %v467
      %v596 = vunpack.c.l.b16 %v468
      %v597 = vunpack.c.l.b16 %v469
      %v598 = vunpack.c.l.b16 %v470
      %v599 = vunpack.c.l.b16 %v471
      %v600 = vunpack.c.l.b16 %v472
      %v601 = vunpack.c.l.b16 %v473
      %v602 = vunpack.c.l.b16 %v474
      %v603 = vunpack.c.l.b16 %v475
      %v604 = vunpack.c.l.b16 %v476
      %v605 = vpack.c.b16 %v590, %v589
      %v606 = vpack.c.b16 %v592, %v591
      %v607 = vpack.c.b16 %v594, %v593
      %v608 = vpack.c.b16 %v596, %v595
      %v609 = vpack.c.b16 %v598, %v597
      %v610 = vpack.c.b16 %v600, %v599
      %v611 = vpack.c.b16 %v602, %v601
      %v612 = vpack.c.b16 %v604, %v603
      %621 = vmatprep.subr.bf16.mxu0 0
      %622 = vmatpush1.bf16.msra.mxu0 %v605
      %623 = vmatprep.subr.bf16.mxu0 0
      %624 = vmatpush1.bf16.msra.mxu0 %v606
      %625 = vmatprep.subr.bf16.mxu0 0
      %626 = vmatpush1.bf16.msra.mxu0 %v607
      %627 = vmatprep.subr.bf16.mxu0 0
      %628 = vmatpush1.bf16.msra.mxu0 %v608
      %629 = vmatprep.subr.bf16.mxu0 0
      %630 = vmatpush1.bf16.msra.mxu0 %v609
      %631 = vmatprep.subr.bf16.mxu0 0
      %632 = vmatpush1.bf16.msra.mxu0 %v610
      %633 = vmatprep.subr.bf16.mxu0 0
      %634 = vmatpush1.bf16.msra.mxu0 %v611
      %635 = vmatprep.subr.bf16.mxu0 0
      %636 = vmatpush1.bf16.msra.mxu0 %v612
      %637 = vmatprep.subr.bf16.mxu0 0
      %638 = vmatpush1.bf16.msra.mxu0 0
      %639 = vmatprep.subr.bf16.mxu0 0
      %640 = vmatpush1.bf16.msra.mxu0 0
      %641 = vmatprep.subr.bf16.mxu0 0
      %642 = vmatpush1.bf16.msra.mxu0 0
      %643 = vmatprep.subr.bf16.mxu0 0
      %644 = vmatpush1.bf16.msra.mxu0 0
      %645 = vmatprep.subr.bf16.mxu0 0
      %646 = vmatpush1.bf16.msra.mxu0 0
      %647 = vmatprep.subr.bf16.mxu0 0
      %648 = vmatpush1.bf16.msra.mxu0 0
      %649 = vmatprep.subr.bf16.mxu0 0
      %650 = vmatpush1.bf16.msra.mxu0 0
      %651 = vmatprep.subr.bf16.mxu0 0
      %652 = vmatpush1.bf16.msra.mxu0 0
      %653 = vmatprep.mubr.bf16.mxu0 0
      %654 = vmatmul.mubr.bf16.gmra.mrb[0].mxu0 %v541
      %v655 = vpop.f32.mrb[0].mxu0
      %v656 = vadd.f32 0.0, %v655
      %v657 = vpop.f32.mrb[0].mxu0
      %v658 = vpop.f32.mrb[0].mxu0
      %v659 = vadd.f32 0.0, %v658
      %v660 = vpop.f32.mrb[0].mxu0
      %661 = vmatprep.mubr.bf16.mxu0 0
      %662 = vmatmul.mubr.bf16.gmra.mrb[0].mxu0 %v542
      %v663 = vpop.f32.mrb[0].mxu0
      %v664 = vadd.f32 0.0, %v663
      %v665 = vpop.f32.mrb[0].mxu0
      %v666 = vpop.f32.mrb[0].mxu0
      %v667 = vadd.f32 0.0, %v666
      %v668 = vpop.f32.mrb[0].mxu0
      %669 = vmatprep.mubr.bf16.mxu0 0
      %670 = vmatmul.mubr.bf16.gmra.mrb[0].mxu0 %v543
      %v671 = vpop.f32.mrb[0].mxu0
      %v672 = vadd.f32 0.0, %v671
      %v673 = vpop.f32.mrb[0].mxu0
      %v674 = vpop.f32.mrb[0].mxu0
      %v675 = vadd.f32 0.0, %v674
      %v676 = vpop.f32.mrb[0].mxu0
      %677 = vmatprep.mubr.bf16.mxu0 0
      %678 = vmatmul.mubr.bf16.gmra.mrb[0].mxu0 %v544
      %v679 = vpop.f32.mrb[0].mxu0
      %v680 = vadd.f32 0.0, %v679
      %v681 = vpop.f32.mrb[0].mxu0
      %v682 = vpop.f32.mrb[0].mxu0
      %v683 = vadd.f32 0.0, %v682
      %v684 = vpop.f32.mrb[0].mxu0
      %685 = vmatprep.mubr.bf16.mxu0 0
      %686 = vmatmul.mubr.bf16.gmra.mrb[0].mxu0 %v545
      %v687 = vpop.f32.mrb[0].mxu0
      %v688 = vadd.f32 0.0, %v687
      %v689 = vpop.f32.mrb[0].mxu0
      %v690 = vpop.f32.mrb[0].mxu0
      %v691 = vadd.f32 0.0, %v690
      %v692 = vpop.f32.mrb[0].mxu0
      %693 = vmatprep.mubr.bf16.mxu0 0
      %694 = vmatmul.mubr.bf16.gmra.mrb[0].mxu0 %v546
      %v695 = vpop.f32.mrb[0].mxu0
      %v696 = vadd.f32 0.0, %v695
      %v697 = vpop.f32.mrb[0].mxu0
      %v698 = vpop.f32.mrb[0].mxu0
      %v699 = vadd.f32 0.0, %v698
      %v700 = vpop.f32.mrb[0].mxu0
      %701 = vmatprep.mubr.bf16.mxu0 0
      %702 = vmatmul.mubr.bf16.gmra.mrb[0].mxu0 %v547
      %v703 = vpop.f32.mrb[0].mxu0
      %v704 = vadd.f32 0.0, %v703
      %v705 = vpop.f32.mrb[0].mxu0
      %v706 = vpop.f32.mrb[0].mxu0
      %v707 = vadd.f32 0.0, %v706
      %v708 = vpop.f32.mrb[0].mxu0
      %709 = vmatprep.mubr.bf16.mxu0 0
      %710 = vmatmul.mubr.bf16.gmra.mrb[0].mxu0 %v548
      %v711 = vpop.f32.mrb[0].mxu0
      %v712 = vadd.f32 0.0, %v711
      %v713 = vpop.f32.mrb[0].mxu0
      %v714 = vpop.f32.mrb[0].mxu0
      %v715 = vadd.f32 0.0, %v714
      %v716 = vpop.f32.mrb[0].mxu0
      %717 = vmatprep.mubr.bf16.mxu0 0
      %718 = vmatmul.mubr.bf16.gmra.mrb[0].mxu0 %v549
      %v719 = vpop.f32.mrb[0].mxu0
      %v720 = vadd.f32 0.0, %v719
      %v721 = vpop.f32.mrb[0].mxu0
      %v722 = vpop.f32.mrb[0].mxu0
      %v723 = vadd.f32 0.0, %v722
      %v724 = vpop.f32.mrb[0].mxu0
      %725 = vmatprep.mubr.bf16.mxu0 0
      %726 = vmatmul.mubr.bf16.gmra.mrb[0].mxu0 %v550
      %v727 = vpop.f32.mrb[0].mxu0
      %v728 = vadd.f32 0.0, %v727
      %v729 = vpop.f32.mrb[0].mxu0
      %v730 = vpop.f32.mrb[0].mxu0
      %v731 = vadd.f32 0.0, %v730
      %v732 = vpop.f32.mrb[0].mxu0
      %733 = vmatprep.mubr.bf16.mxu0 0
      %734 = vmatmul.mubr.bf16.gmra.mrb[0].mxu0 %v551
      %v735 = vpop.f32.mrb[0].mxu0
      %v736 = vadd.f32 0.0, %v735
      %v737 = vpop.f32.mrb[0].mxu0
      %v738 = vpop.f32.mrb[0].mxu0
      %v739 = vadd.f32 0.0, %v738
      %v740 = vpop.f32.mrb[0].mxu0
      %741 = vmatprep.mubr.bf16.mxu0 0
      %742 = vmatmul.mubr.bf16.gmra.mrb[0].mxu0 %v552
      %v743 = vpop.f32.mrb[0].mxu0
      %v744 = vadd.f32 0.0, %v743
      %v745 = vpop.f32.mrb[0].mxu0
      %v746 = vpop.f32.mrb[0].mxu0
      %v747 = vadd.f32 0.0, %v746
      %v748 = vpop.f32.mrb[0].mxu0
      %749 = vmatprep.mubr.bf16.mxu0 0
      %750 = vmatmul.mubr.bf16.gmra.mrb[0].mxu0 %v553
      %v751 = vpop.f32.mrb[0].mxu0
      %v752 = vadd.f32 0.0, %v751
      %v753 = vpop.f32.mrb[0].mxu0
      %v754 = vpop.f32.mrb[0].mxu0
      %v755 = vadd.f32 0.0, %v754
      %v756 = vpop.f32.mrb[0].mxu0
      %757 = vmatprep.mubr.bf16.mxu0 0
      %758 = vmatmul.mubr.bf16.gmra.mrb[0].mxu0 %v554
      %v759 = vpop.f32.mrb[0].mxu0
      %v760 = vadd.f32 0.0, %v759
      %v761 = vpop.f32.mrb[0].mxu0
      %v762 = vpop.f32.mrb[0].mxu0
      %v763 = vadd.f32 0.0, %v762
      %v764 = vpop.f32.mrb[0].mxu0
      %765 = vmatprep.mubr.bf16.mxu0 0
      %766 = vmatmul.mubr.bf16.gmra.mrb[0].mxu0 %v555
      %v767 = vpop.f32.mrb[0].mxu0
      %v768 = vadd.f32 0.0, %v767
      %v769 = vpop.f32.mrb[0].mxu0
      %v770 = vpop.f32.mrb[0].mxu0
      %v771 = vadd.f32 0.0, %v770
      %v772 = vpop.f32.mrb[0].mxu0
      %773 = vmatprep.mubr.bf16.mxu0 0
      %774 = vmatmul.mubr.bf16.gmra.mrb[0].mxu0 %v556
      %v775 = vpop.f32.mrb[0].mxu0
      %v776 = vadd.f32 0.0, %v775
      %v777 = vpop.f32.mrb[0].mxu0
      %v778 = vpop.f32.mrb[0].mxu0
      %v779 = vadd.f32 0.0, %v778
      %v780 = vpop.f32.mrb[0].mxu0
      %781 = vdwg.mxu0
      %v782 = vadd.f32 %v397, %v656
      %v783 = vadd.f32 %v398, %v659
      %v784 = vadd.f32 %v399, %v664
      %v785 = vadd.f32 %v400, %v667
      %v786 = vadd.f32 %v401, %v672
      %v787 = vadd.f32 %v402, %v675
      %v788 = vadd.f32 %v403, %v680
      %v789 = vadd.f32 %v404, %v683
      %v790 = vadd.f32 %v405, %v688
      %v791 = vadd.f32 %v406, %v691
      %v792 = vadd.f32 %v407, %v696
      %v793 = vadd.f32 %v408, %v699
      %v794 = vadd.f32 %v409, %v704
      %v795 = vadd.f32 %v410, %v707
      %v796 = vadd.f32 %v411, %v712
      %v797 = vadd.f32 %v412, %v715
      %v798 = vadd.f32 %v413, %v720
      %v799 = vadd.f32 %v414, %v723
      %v800 = vadd.f32 %v415, %v728
      %v801 = vadd.f32 %v416, %v731
      %v802 = vadd.f32 %v417, %v736
      %v803 = vadd.f32 %v418, %v739
      %v804 = vadd.f32 %v419, %v744
      %v805 = vadd.f32 %v420, %v747
      %v806 = vadd.f32 %v421, %v752
      %v807 = vadd.f32 %v422, %v755
      %v808 = vadd.f32 %v423, %v760
      %v809 = vadd.f32 %v424, %v763
      %v810 = vadd.f32 %v425, %v768
      %v811 = vadd.f32 %v426, %v771
      %v812 = vadd.f32 %v427, %v776
      %v813 = vadd.f32 %v428, %v779
      %814 = vst [vmem:[#allocation2] sm:$0xff] %v782
      %815 = vst [vmem:[#allocation2 + $0x8] sm:$0xff] %v783
      %816 = vst [vmem:[#allocation2 + $0x10] sm:$0xff] %v784
      %817 = vst [vmem:[#allocation2 + $0x18] sm:$0xff] %v785
      %818 = vst [vmem:[#allocation2 + $0x20] sm:$0xff] %v786
      %819 = vst [vmem:[#allocation2 + $0x28] sm:$0xff] %v787
      %820 = vst [vmem:[#allocation2 + $0x30] sm:$0xff] %v788
      %821 = vst [vmem:[#allocation2 + $0x38] sm:$0xff] %v789
      %822 = vst [vmem:[#allocation2 + $0x40] sm:$0xff] %v790
      %823 = vst [vmem:[#allocation2 + $0x48] sm:$0xff] %v791
      %824 = vst [vmem:[#allocation2 + $0x50] sm:$0xff] %v792
      %825 = vst [vmem:[#allocation2 + $0x58] sm:$0xff] %v793
      %826 = vst [vmem:[#allocation2 + $0x60] sm:$0xff] %v794
      %827 = vst [vmem:[#allocation2 + $0x68] sm:$0xff] %v795
      %828 = vst [vmem:[#allocation2 + $0x70] sm:$0xff] %v796
      %829 = vst [vmem:[#allocation2 + $0x78] sm:$0xff] %v797
      %830 = vst [vmem:[#allocation2 + $0x80] sm:$0xff] %v798
      %831 = vst [vmem:[#allocation2 + $0x88] sm:$0xff] %v799
      %832 = vst [vmem:[#allocation2 + $0x90] sm:$0xff] %v800
      %833 = vst [vmem:[#allocation2 + $0x98] sm:$0xff] %v801
      %834 = vst [vmem:[#allocation2 + $0xa0] sm:$0xff] %v802
      %835 = vst [vmem:[#allocation2 + $0xa8] sm:$0xff] %v803
      %836 = vst [vmem:[#allocation2 + $0xb0] sm:$0xff] %v804
      %837 = vst [vmem:[#allocation2 + $0xb8] sm:$0xff] %v805
      %838 = vst [vmem:[#allocation2 + $0xc0] sm:$0xff] %v806
      %839 = vst [vmem:[#allocation2 + $0xc8] sm:$0xff] %v807
      %840 = vst [vmem:[#allocation2 + $0xd0] sm:$0xff] %v808
      %841 = vst [vmem:[#allocation2 + $0xd8] sm:$0xff] %v809
      %842 = vst [vmem:[#allocation2 + $0xe0] sm:$0xff] %v810
      %843 = vst [vmem:[#allocation2 + $0xe8] sm:$0xff] %v811
      %844 = vst [vmem:[#allocation2 + $0xf0] sm:$0xff] %v812
      %845 = vst [vmem:[#allocation2 + $0xf8] sm:$0xff] %v813
      // Predicated region
      $region45: #{_lambda_.24} parent=39 // pred_check
        %p846 = pneg %p361
      $region46: #{_lambda_.24} parent=39 // pred_check_branch
        %848 = sbr.rel (%p846) target = $region48
      $region47: #{_lambda_.24} parent=39 // pred_region
        %v849 = vld [vmem:[#allocation2] sm:$0xff]
        %v850 = vld [vmem:[#allocation2 + $0x8] sm:$0xff]
        %v851 = vld [vmem:[#allocation2 + $0x10] sm:$0xff]
        %v852 = vld [vmem:[#allocation2 + $0x18] sm:$0xff]
        %v853 = vld [vmem:[#allocation2 + $0x20] sm:$0xff]
        %v854 = vld [vmem:[#allocation2 + $0x28] sm:$0xff]
        %v855 = vld [vmem:[#allocation2 + $0x30] sm:$0xff]
        %v856 = vld [vmem:[#allocation2 + $0x38] sm:$0xff]
        %v857 = vld [vmem:[#allocation2 + $0x40] sm:$0xff]
        %v858 = vld [vmem:[#allocation2 + $0x48] sm:$0xff]
        %v859 = vld [vmem:[#allocation2 + $0x50] sm:$0xff]
        %v860 = vld [vmem:[#allocation2 + $0x58] sm:$0xff]
        %v861 = vld [vmem:[#allocation2 + $0x60] sm:$0xff]
        %v862 = vld [vmem:[#allocation2 + $0x68] sm:$0xff]
        %v863 = vld [vmem:[#allocation2 + $0x70] sm:$0xff]
        %v864 = vld [vmem:[#allocation2 + $0x78] sm:$0xff]
        %v865 = vld [vmem:[#allocation2 + $0x80] sm:$0xff]
        %v866 = vld [vmem:[#allocation2 + $0x88] sm:$0xff]
        %v867 = vld [vmem:[#allocation2 + $0x90] sm:$0xff]
        %v868 = vld [vmem:[#allocation2 + $0x98] sm:$0xff]
        %v869 = vld [vmem:[#allocation2 + $0xa0] sm:$0xff]
        %v870 = vld [vmem:[#allocation2 + $0xa8] sm:$0xff]
        %v871 = vld [vmem:[#allocation2 + $0xb0] sm:$0xff]
        %v872 = vld [vmem:[#allocation2 + $0xb8] sm:$0xff]
        %v873 = vld [vmem:[#allocation2 + $0xc0] sm:$0xff]
        %v874 = vld [vmem:[#allocation2 + $0xc8] sm:$0xff]
        %v875 = vld [vmem:[#allocation2 + $0xd0] sm:$0xff]
        %v876 = vld [vmem:[#allocation2 + $0xd8] sm:$0xff]
        %v877 = vld [vmem:[#allocation2 + $0xe0] sm:$0xff]
        %v878 = vld [vmem:[#allocation2 + $0xe8] sm:$0xff]
        %v879 = vld [vmem:[#allocation2 + $0xf0] sm:$0xff]
        %v880 = vld [vmem:[#allocation2 + $0xf8] sm:$0xff]
        %v881 = vld [vmem:[%s338] sm:$0x1]
        %v883 = vlaneseq
        %v884 = vshrl.u32 %v883, 7
        %v885 = vsub.s32 0, %v884
        %v886 = vrot.slane %v881, %v885
        %v888 = vmul.f32 %v849, %v886
        %v889 = vmul.f32 %v850, %v886
        %v890 = vmul.f32 %v851, %v886
        %v891 = vmul.f32 %v852, %v886
        %v892 = vmul.f32 %v853, %v886
        %v893 = vmul.f32 %v854, %v886
        %v894 = vmul.f32 %v855, %v886
        %v895 = vmul.f32 %v856, %v886
        %v896 = vmul.f32 %v857, %v886
        %v897 = vmul.f32 %v858, %v886
        %v898 = vmul.f32 %v859, %v886
        %v899 = vmul.f32 %v860, %v886
        %v900 = vmul.f32 %v861, %v886
        %v901 = vmul.f32 %v862, %v886
        %v902 = vmul.f32 %v863, %v886
        %v903 = vmul.f32 %v864, %v886
        %v904 = vmul.f32 %v865, %v886
        %v905 = vmul.f32 %v866, %v886
        %v906 = vmul.f32 %v867, %v886
        %v907 = vmul.f32 %v868, %v886
        %v908 = vmul.f32 %v869, %v886
        %v909 = vmul.f32 %v870, %v886
        %v910 = vmul.f32 %v871, %v886
        %v911 = vmul.f32 %v872, %v886
        %v912 = vmul.f32 %v873, %v886
        %v913 = vmul.f32 %v874, %v886
        %v914 = vmul.f32 %v875, %v886
        %v915 = vmul.f32 %v876, %v886
        %v916 = vmul.f32 %v877, %v886
        %v917 = vmul.f32 %v878, %v886
        %v918 = vmul.f32 %v879, %v886
        %v919 = vmul.f32 %v880, %v886
        %v920 = vld [vmem:[%s341] sm:$0x1]
        %v922 = vlaneseq
        %v923 = vshrl.u32 %v922, 7
        %v924 = vsub.s32 0, %v923
        %v925 = vrot.slane %v920, %v924
        %v927 = vadd.f32 %v888, %v925
        %v928 = vadd.f32 %v889, %v925
        %v929 = vadd.f32 %v890, %v925
        %v930 = vadd.f32 %v891, %v925
        %v931 = vadd.f32 %v892, %v925
        %v932 = vadd.f32 %v893, %v925
        %v933 = vadd.f32 %v894, %v925
        %v934 = vadd.f32 %v895, %v925
        %v935 = vadd.f32 %v896, %v925
        %v936 = vadd.f32 %v897, %v925
        %v937 = vadd.f32 %v898, %v925
        %v938 = vadd.f32 %v899, %v925
        %v939 = vadd.f32 %v900, %v925
        %v940 = vadd.f32 %v901, %v925
        %v941 = vadd.f32 %v902, %v925
        %v942 = vadd.f32 %v903, %v925
        %v943 = vadd.f32 %v904, %v925
        %v944 = vadd.f32 %v905, %v925
        %v945 = vadd.f32 %v906, %v925
        %v946 = vadd.f32 %v907, %v925
        %v947 = vadd.f32 %v908, %v925
        %v948 = vadd.f32 %v909, %v925
        %v949 = vadd.f32 %v910, %v925
        %v950 = vadd.f32 %v911, %v925
        %v951 = vadd.f32 %v912, %v925
        %v952 = vadd.f32 %v913, %v925
        %v953 = vadd.f32 %v914, %v925
        %v954 = vadd.f32 %v915, %v925
        %v955 = vadd.f32 %v916, %v925
        %v956 = vadd.f32 %v917, %v925
        %v957 = vadd.f32 %v918, %v925
        %v958 = vadd.f32 %v919, %v925
        %v959 = vld [vmem:[%s349] sm:$0xff]
        %v960 = vld [vmem:[%s349 + $0x8] sm:$0xff]
        %v961 = vld [vmem:[%s349 + $0x10] sm:$0xff]
        %v962 = vld [vmem:[%s349 + $0x18] sm:$0xff]
        %v963 = vld [vmem:[%s349 + $0x20] sm:$0xff]
        %v964 = vld [vmem:[%s349 + $0x28] sm:$0xff]
        %v965 = vld [vmem:[%s349 + $0x30] sm:$0xff]
        %v966 = vld [vmem:[%s349 + $0x38] sm:$0xff]
        %v967 = vld [vmem:[%s349 + $0x40] sm:$0xff]
        %v968 = vld [vmem:[%s349 + $0x48] sm:$0xff]
        %v969 = vld [vmem:[%s349 + $0x50] sm:$0xff]
        %v970 = vld [vmem:[%s349 + $0x58] sm:$0xff]
        %v971 = vld [vmem:[%s349 + $0x60] sm:$0xff]
        %v972 = vld [vmem:[%s349 + $0x68] sm:$0xff]
        %v973 = vld [vmem:[%s349 + $0x70] sm:$0xff]
        %v974 = vld [vmem:[%s349 + $0x78] sm:$0xff]
        %v975 = vld [vmem:[%s349 + $0x80] sm:$0xff]
        %v976 = vld [vmem:[%s349 + $0x88] sm:$0xff]
        %v977 = vld [vmem:[%s349 + $0x90] sm:$0xff]
        %v978 = vld [vmem:[%s349 + $0x98] sm:$0xff]
        %v979 = vld [vmem:[%s349 + $0xa0] sm:$0xff]
        %v980 = vld [vmem:[%s349 + $0xa8] sm:$0xff]
        %v981 = vld [vmem:[%s349 + $0xb0] sm:$0xff]
        %v982 = vld [vmem:[%s349 + $0xb8] sm:$0xff]
        %v983 = vld [vmem:[%s349 + $0xc0] sm:$0xff]
        %v984 = vld [vmem:[%s349 + $0xc8] sm:$0xff]
        %v985 = vld [vmem:[%s349 + $0xd0] sm:$0xff]
        %v986 = vld [vmem:[%s349 + $0xd8] sm:$0xff]
        %v987 = vld [vmem:[%s349 + $0xe0] sm:$0xff]
        %v988 = vld [vmem:[%s349 + $0xe8] sm:$0xff]
        %v989 = vld [vmem:[%s349 + $0xf0] sm:$0xff]
        %v990 = vld [vmem:[%s349 + $0xf8] sm:$0xff]
        %v991 = vadd.f32 %v927, %v959
        %v992 = vadd.f32 %v928, %v960
        %v993 = vadd.f32 %v929, %v961
        %v994 = vadd.f32 %v930, %v962
        %v995 = vadd.f32 %v931, %v963
        %v996 = vadd.f32 %v932, %v964
        %v997 = vadd.f32 %v933, %v965
        %v998 = vadd.f32 %v934, %v966
        %v999 = vadd.f32 %v935, %v967
        %v1000 = vadd.f32 %v936, %v968
        %v1001 = vadd.f32 %v937, %v969
        %v1002 = vadd.f32 %v938, %v970
        %v1003 = vadd.f32 %v939, %v971
        %v1004 = vadd.f32 %v940, %v972
        %v1005 = vadd.f32 %v941, %v973
        %v1006 = vadd.f32 %v942, %v974
        %v1007 = vadd.f32 %v943, %v975
        %v1008 = vadd.f32 %v944, %v976
        %v1009 = vadd.f32 %v945, %v977
        %v1010 = vadd.f32 %v946, %v978
        %v1011 = vadd.f32 %v947, %v979
        %v1012 = vadd.f32 %v948, %v980
        %v1013 = vadd.f32 %v949, %v981
        %v1014 = vadd.f32 %v950, %v982
        %v1015 = vadd.f32 %v951, %v983
        %v1016 = vadd.f32 %v952, %v984
        %v1017 = vadd.f32 %v953, %v985
        %v1018 = vadd.f32 %v954, %v986
        %v1019 = vadd.f32 %v955, %v987
        %v1020 = vadd.f32 %v956, %v988
        %v1021 = vadd.f32 %v957, %v989
        %v1022 = vadd.f32 %v958, %v990
        %v1023 = vmax.f32 %v991, 0.0
        %v1024 = vmax.f32 %v992, 0.0
        %v1025 = vmax.f32 %v993, 0.0
        %v1026 = vmax.f32 %v994, 0.0
        %v1027 = vmax.f32 %v995, 0.0
        %v1028 = vmax.f32 %v996, 0.0
        %v1029 = vmax.f32 %v997, 0.0
        %v1030 = vmax.f32 %v998, 0.0
        %v1031 = vmax.f32 %v999, 0.0
        %v1032 = vmax.f32 %v1000, 0.0
        %v1033 = vmax.f32 %v1001, 0.0
        %v1034 = vmax.f32 %v1002, 0.0
        %v1035 = vmax.f32 %v1003, 0.0
        %v1036 = vmax.f32 %v1004, 0.0
        %v1037 = vmax.f32 %v1005, 0.0
        %v1038 = vmax.f32 %v1006, 0.0
        %v1039 = vmax.f32 %v1007, 0.0
        %v1040 = vmax.f32 %v1008, 0.0
        %v1041 = vmax.f32 %v1009, 0.0
        %v1042 = vmax.f32 %v1010, 0.0
        %v1043 = vmax.f32 %v1011, 0.0
        %v1044 = vmax.f32 %v1012, 0.0
        %v1045 = vmax.f32 %v1013, 0.0
        %v1046 = vmax.f32 %v1014, 0.0
        %v1047 = vmax.f32 %v1015, 0.0
        %v1048 = vmax.f32 %v1016, 0.0
        %v1049 = vmax.f32 %v1017, 0.0
        %v1050 = vmax.f32 %v1018, 0.0
        %v1051 = vmax.f32 %v1019, 0.0
        %v1052 = vmax.f32 %v1020, 0.0
        %v1053 = vmax.f32 %v1021, 0.0
        %v1054 = vmax.f32 %v1022, 0.0
        %1055 = vst [vmem:[%s358] sm:$0xff] %v1023
        %1056 = vst [vmem:[%s358 + $0x8] sm:$0xff] %v1024
        %1057 = vst [vmem:[%s358 + $0x10] sm:$0xff] %v1025
        %1058 = vst [vmem:[%s358 + $0x18] sm:$0xff] %v1026
        %1059 = vst [vmem:[%s358 + $0x20] sm:$0xff] %v1027
        %1060 = vst [vmem:[%s358 + $0x28] sm:$0xff] %v1028
        %1061 = vst [vmem:[%s358 + $0x30] sm:$0xff] %v1029
        %1062 = vst [vmem:[%s358 + $0x38] sm:$0xff] %v1030
        %1063 = vst [vmem:[%s358 + $0x40] sm:$0xff] %v1031
        %1064 = vst [vmem:[%s358 + $0x48] sm:$0xff] %v1032
        %1065 = vst [vmem:[%s358 + $0x50] sm:$0xff] %v1033
        %1066 = vst [vmem:[%s358 + $0x58] sm:$0xff] %v1034
        %1067 = vst [vmem:[%s358 + $0x60] sm:$0xff] %v1035
        %1068 = vst [vmem:[%s358 + $0x68] sm:$0xff] %v1036
        %1069 = vst [vmem:[%s358 + $0x70] sm:$0xff] %v1037
        %1070 = vst [vmem:[%s358 + $0x78] sm:$0xff] %v1038
        %1071 = vst [vmem:[%s358 + $0x80] sm:$0xff] %v1039
        %1072 = vst [vmem:[%s358 + $0x88] sm:$0xff] %v1040
        %1073 = vst [vmem:[%s358 + $0x90] sm:$0xff] %v1041
        %1074 = vst [vmem:[%s358 + $0x98] sm:$0xff] %v1042
        %1075 = vst [vmem:[%s358 + $0xa0] sm:$0xff] %v1043
        %1076 = vst [vmem:[%s358 + $0xa8] sm:$0xff] %v1044
        %1077 = vst [vmem:[%s358 + $0xb0] sm:$0xff] %v1045
        %1078 = vst [vmem:[%s358 + $0xb8] sm:$0xff] %v1046
        %1079 = vst [vmem:[%s358 + $0xc0] sm:$0xff] %v1047
        %1080 = vst [vmem:[%s358 + $0xc8] sm:$0xff] %v1048
        %1081 = vst [vmem:[%s358 + $0xd0] sm:$0xff] %v1049
        %1082 = vst [vmem:[%s358 + $0xd8] sm:$0xff] %v1050
        %1083 = vst [vmem:[%s358 + $0xe0] sm:$0xff] %v1051
        %1084 = vst [vmem:[%s358 + $0xe8] sm:$0xff] %v1052
        %1085 = vst [vmem:[%s358 + $0xf0] sm:$0xff] %v1053
        %1086 = vst [vmem:[%s358 + $0xf8] sm:$0xff] %v1054
      $region48: #{_lambda_.24} parent=39 // pred_fallthru
        _
      %s1087 = smul.u32 32, %s21
      %p1088 = scmp.lt.s32.totalorder %s1087, 63
      %s1089 = scalar_select %p1088, %s1087, 63
      %p1090 = scmp.lt.s32.totalorder %s22, 0
      %s1091 = scalar_select %p1090, %s22, 0
      %s1092 = sadd.s32 %s1091, %s1089
      %s1093 = smul.addr %s1092, 8
      %s1094 = scalar_lea.vmem %s5, %s1093
      // Predicated region
      $region49: #{_lambda_.24} parent=39 // pred_check
        %p1095 = pneg %p191
      $region50: #{_lambda_.24} parent=39 // pred_check_branch
        %1097 = sbr.rel (%p1095) target = $region52
      $region51: #{_lambda_.24} parent=39 // pred_region
        %s1098 = smul.u32 32, %s21
      $region52: #{_lambda_.24} parent=39 // pred_fallthru
        _
    $region40: #{_lambda_.24} parent=5 // pred_fallthru
      _
    %p1099 = scmp.le.s32.totalorder 2, %s11
    // Predicated region
    $region53: #{_lambda_.24} parent=5 // pred_check
      %p1100 = pneg %p1099
    $region54: #{_lambda_.24} parent=5 // pred_check_branch
      %1102 = sbr.rel (%p1100) target = $region56
    $region55: #{_lambda_.24} parent=5 // pred_region
      %s1103 = ssub.s32 %s11, 2
      // Predicated region
      $region57: #{_lambda_.24} parent=55 // pred_check
        %p1104 = pneg %p197
      $region58: #{_lambda_.24} parent=55 // pred_check_branch
        %1106 = sbr.rel (%p1104) target = $region60
      $region59: #{_lambda_.24} parent=55 // pred_region
        %s1107 = smul.u32 32, %s24
        %p1108 = scmp.lt.s32.totalorder %s1107, 63
        %s1109 = scalar_select %p1108, %s1107, 63
        %p1110 = scmp.lt.s32.totalorder %s25, 0
        %s1111 = scalar_select %p1110, %s25, 0
        %s1112 = sadd.s32 %s1111, %s1109
        %s1113 = smul.addr %s1112, 8
        %s1114 = scalar_lea.vmem %s5, %s1113
      $region60: #{_lambda_.24} parent=55 // pred_fallthru
        _
    $region56: #{_lambda_.24} parent=5 // pred_fallthru
      _
  $region6: #{_lambda_.24} parent=0 // loop_footer
    %s15 = sadd.s32 1, %s11
  $region7: #{_lambda_.24} parent=0 // loop_footer_branch
    %10 = sbr.rel target = $region3
  $region8: #{_lambda_.24} parent=0 // loop_exit
    _

// kernel: _lambda_.25
$region0: #{_lambda_.25}
  #allocation0 [shape = 'u32[]', space=smem, size = 0x4, offset = 0x4, fixed_abs, tag = 'smem constant byte address 0x4 - core index']
  #allocation1 [shape = 'u32[144,128]{1,0:T(1,128)}', space=vmem, size = 0x12000, scoped, tag = 'internal scratch']
  #allocation2 [shape = 'f32[1,1]{1,0:T(1,128)S(1)}', space=vmem, size = 0x200, scoped, tag = 'scoped memory for _lambda_.25']
  %s0 = inlined_call_operand.vmem [shape: f32[2,256,8], index: 0, kind: input, shape index: {}]
  %s1 = inlined_call_operand.vmem [shape: f32[8,1], index: 1, kind: input, shape index: {}]
  %s2 = inlined_call_operand.<no memory space> [shape: f32[1,1], index: 2, kind: input, shape index: {}]
  %s3 = inlined_call_operand.vmem [shape: f32[1,8], index: 3, kind: input, shape index: {}]
  %s4 = inlined_call_operand.vmem [shape: f32[1,8], index: 4, kind: input, shape index: {}]
  %s5 = inlined_call_operand.vmem [shape: f32[2,256,8], index: 5, kind: output, shape index: {}]
  %s6 = sld [smem:[#allocation0]]
  $region53: #{_lambda_.25} parent=0
    _
  %s8 = ssub.s32 1, %s6
  %s9 = scalar_select 0, %s8, %s6
  %v10 = vstv %s2
  %11 = vst [vmem:[#allocation2] sm:$0x1] %v10
  loop: start=0, step=1, limit=4
  $region2: #{_lambda_.25} parent=0 // loop_pre_header
    _
  $region3: #{_lambda_.25} parent=0 // loop_header
    %s13 = sphi 0, %s17
    %p14 = scmp.ge.s32.totalorder %s13, 4
    %s23 = sphi 0, %s25
    %s26 = sphi 0, %s23
    %s27 = sphi 0, %s26
    %s43 = sphi 0, %s27
    %s47 = sphi 0, %s47
    %s49 = sphi 0, %s47
    %s50 = sphi 0, %s49
    %s64 = sphi 0, %s50
    %s68 = sphi 0, %s68
    %s70 = sphi 0, %s68
    %s71 = sphi 0, %s70
    %s85 = sphi 0, %s71
    %s89 = sphi 0, %s89
    %s91 = sphi 0, %s89
    %s92 = sphi 0, %s91
    %s106 = sphi 0, %s92
    %s110 = sphi 0, %s110
    %s112 = sphi 0, %s110
    %s113 = sphi 0, %s112
    %s127 = sphi 0, %s113
    %s133 = sphi 0, %s135
    %s136 = sphi 0, %s133
    %s137 = sphi 0, %s136
    %s153 = sphi 0, %s137
  $region4: #{_lambda_.25} parent=0 // loop_header_branch
    %16 = sbr.rel (%p14) target = $region8
  $region5: #{_lambda_.25} parent=0 // loop_body
    %s18 = ssub.s32 %s13, 1
    %s19 = ssub.s32 %s13, 2
    %s20 = sadd.s32 %s13, 1
    %s21 = ssub.s32 %s13, %s20
    %p22 = scmp.eq.s32.totalorder %s21, 0
    %s24 = sadd.s32 %s23, 1
    %s25 = scalar_select %p22, %s23, %s24
    %p28 = pneg %p22
    %p29 = scmp.eq.s32.totalorder %s13, 1
    %p30 = por %p28, %p29
    %p31 = scmp.ne.s32.totalorder %s23, %s26
    %p32 = scmp.eq.s32.totalorder %s13, 0
    %p33 = por %p31, %p32
    %p34 = scmp.ne.s32.totalorder %s23, %s26
    %p35 = scmp.eq.s32.totalorder %s18, 1
    %p36 = por %p34, %p35
    %p37 = scmp.ne.s32.totalorder %s26, %s27
    %p38 = scmp.eq.s32.totalorder %s18, 0
    %p39 = por %p37, %p38
    %p40 = scmp.ne.s32.totalorder %s26, %s27
    %p41 = scmp.eq.s32.totalorder %s19, 1
    %p42 = por %p40, %p41
    %p44 = scmp.ne.s32.totalorder %s27, %s43
    %p45 = scmp.eq.s32.totalorder %s19, 0
    %p46 = por %p44, %p45
    %s48 = sadd.s32 %s47, 1
    %p51 = scmp.eq.s32.totalorder %s13, 1
    %p52 = scmp.ne.s32.totalorder %s47, %s49
    %p53 = scmp.eq.s32.totalorder %s13, 0
    %p54 = por %p52, %p53
    %p55 = scmp.ne.s32.totalorder %s47, %s49
    %p56 = scmp.eq.s32.totalorder %s18, 1
    %p57 = por %p55, %p56
    %p58 = scmp.ne.s32.totalorder %s49, %s50
    %p59 = scmp.eq.s32.totalorder %s18, 0
    %p60 = por %p58, %p59
    %p61 = scmp.ne.s32.totalorder %s49, %s50
    %p62 = scmp.eq.s32.totalorder %s19, 1
    %p63 = por %p61, %p62
    %p65 = scmp.ne.s32.totalorder %s50, %s64
    %p66 = scmp.eq.s32.totalorder %s19, 0
    %p67 = por %p65, %p66
    %s69 = sadd.s32 %s68, 1
    %p72 = scmp.eq.s32.totalorder %s13, 1
    %p73 = scmp.ne.s32.totalorder %s68, %s70
    %p74 = scmp.eq.s32.totalorder %s13, 0
    %p75 = por %p73, %p74
    %p76 = scmp.ne.s32.totalorder %s68, %s70
    %p77 = scmp.eq.s32.totalorder %s18, 1
    %p78 = por %p76, %p77
    %p79 = scmp.ne.s32.totalorder %s70, %s71
    %p80 = scmp.eq.s32.totalorder %s18, 0
    %p81 = por %p79, %p80
    %p82 = scmp.ne.s32.totalorder %s70, %s71
    %p83 = scmp.eq.s32.totalorder %s19, 1
    %p84 = por %p82, %p83
    %p86 = scmp.ne.s32.totalorder %s71, %s85
    %p87 = scmp.eq.s32.totalorder %s19, 0
    %p88 = por %p86, %p87
    %s90 = sadd.s32 %s89, 1
    %p93 = scmp.eq.s32.totalorder %s13, 1
    %p94 = scmp.ne.s32.totalorder %s89, %s91
    %p95 = scmp.eq.s32.totalorder %s13, 0
    %p96 = por %p94, %p95
    %p97 = scmp.ne.s32.totalorder %s89, %s91
    %p98 = scmp.eq.s32.totalorder %s18, 1
    %p99 = por %p97, %p98
    %p100 = scmp.ne.s32.totalorder %s91, %s92
    %p101 = scmp.eq.s32.totalorder %s18, 0
    %p102 = por %p100, %p101
    %p103 = scmp.ne.s32.totalorder %s91, %s92
    %p104 = scmp.eq.s32.totalorder %s19, 1
    %p105 = por %p103, %p104
    %p107 = scmp.ne.s32.totalorder %s92, %s106
    %p108 = scmp.eq.s32.totalorder %s19, 0
    %p109 = por %p107, %p108
    %s111 = sadd.s32 %s110, 1
    %p114 = scmp.eq.s32.totalorder %s13, 1
    %p115 = scmp.ne.s32.totalorder %s110, %s112
    %p116 = scmp.eq.s32.totalorder %s13, 0
    %p117 = por %p115, %p116
    %p118 = scmp.ne.s32.totalorder %s110, %s112
    %p119 = scmp.eq.s32.totalorder %s18, 1
    %p120 = por %p118, %p119
    %p121 = scmp.ne.s32.totalorder %s112, %s113
    %p122 = scmp.eq.s32.totalorder %s18, 0
    %p123 = por %p121, %p122
    %p124 = scmp.ne.s32.totalorder %s112, %s113
    %p125 = scmp.eq.s32.totalorder %s19, 1
    %p126 = por %p124, %p125
    %p128 = scmp.ne.s32.totalorder %s113, %s127
    %p129 = scmp.eq.s32.totalorder %s19, 0
    %p130 = por %p128, %p129
    %s131 = ssub.s32 %s13, %s20
    %p132 = scmp.eq.s32.totalorder %s131, 0
    %s134 = sadd.s32 %s133, 1
    %s135 = scalar_select %p132, %s133, %s134
    %p138 = pneg %p132
    %p139 = scmp.eq.s32.totalorder %s13, 1
    %p140 = por %p138, %p139
    %p141 = scmp.ne.s32.totalorder %s133, %s136
    %p142 = scmp.eq.s32.totalorder %s13, 0
    %p143 = por %p141, %p142
    %p144 = scmp.ne.s32.totalorder %s133, %s136
    %p145 = scmp.eq.s32.totalorder %s18, 1
    %p146 = por %p144, %p145
    %p147 = scmp.ne.s32.totalorder %s136, %s137
    %p148 = scmp.eq.s32.totalorder %s18, 0
    %p149 = por %p147, %p148
    %p150 = scmp.ne.s32.totalorder %s136, %s137
    %p151 = scmp.eq.s32.totalorder %s19, 1
    %p152 = por %p150, %p151
    %p154 = scmp.ne.s32.totalorder %s137, %s153
    %p155 = scmp.eq.s32.totalorder %s19, 0
    %p156 = por %p154, %p155
    %p157 = scmp.le.s32.totalorder 1, %s13
    %p158 = scmp.lt.s32.totalorder %s13, 3
    %p159 = pnand %p157, %p158
    %p160 = pneg %p159
    // Predicated region
    $region9: #{_lambda_.25} parent=5 // pred_check
      _
    $region10: #{_lambda_.25} parent=5 // pred_check_branch
      %162 = sbr.rel (%p159) target = $region12
    $region11: #{_lambda_.25} parent=5 // pred_region
      %s163 = ssub.s32 %s13, 1
      // Predicated region
      $region13: #{_lambda_.25} parent=11 // pred_check
        %p164 = pneg %p60
      $region14: #{_lambda_.25} parent=11 // pred_check_branch
        %166 = sbr.rel (%p164) target = $region16
      $region15: #{_lambda_.25} parent=11 // pred_region
        _
      $region16: #{_lambda_.25} parent=11 // pred_fallthru
        _
      // Predicated region
      $region17: #{_lambda_.25} parent=11 // pred_check
        %p167 = pneg %p81
      $region18: #{_lambda_.25} parent=11 // pred_check_branch
        %169 = sbr.rel (%p167) target = $region20
      $region19: #{_lambda_.25} parent=11 // pred_region
        _
      $region20: #{_lambda_.25} parent=11 // pred_fallthru
        _
      // Predicated region
      $region21: #{_lambda_.25} parent=11 // pred_check
        %p170 = pneg %p102
      $region22: #{_lambda_.25} parent=11 // pred_check_branch
        %172 = sbr.rel (%p170) target = $region24
      $region23: #{_lambda_.25} parent=11 // pred_region
        _
      $region24: #{_lambda_.25} parent=11 // pred_fallthru
        _
      // Predicated region
      $region25: #{_lambda_.25} parent=11 // pred_check
        %p173 = pneg %p123
      $region26: #{_lambda_.25} parent=11 // pred_check_branch
        %175 = sbr.rel (%p173) target = $region28
      $region27: #{_lambda_.25} parent=11 // pred_region
        _
      $region28: #{_lambda_.25} parent=11 // pred_fallthru
        _
    $region12: #{_lambda_.25} parent=5 // pred_fallthru
      _
    %p176 = scmp.lt.s32.totalorder %s13, 2
    // Predicated region
    $region29: #{_lambda_.25} parent=5 // pred_check
      %p177 = pneg %p176
    $region30: #{_lambda_.25} parent=5 // pred_check_branch
      %179 = sbr.rel (%p177) target = $region32
    $region31: #{_lambda_.25} parent=5 // pred_region
      // Predicated region
      $region33: #{_lambda_.25} parent=31 // pred_check
        %p180 = pneg %p33
      $region34: #{_lambda_.25} parent=31 // pred_check_branch
        %182 = sbr.rel (%p180) target = $region36
      $region35: #{_lambda_.25} parent=31 // pred_region
        %p183 = scmp.lt.s32.totalorder %s13, 1
        %s184 = scalar_select %p183, %s13, 1
        %s185 = smul.addr %s184, 32
        %s186 = smul.addr %s185, 8
        %s187 = scalar_lea.vmem %s0, %s186
      $region36: #{_lambda_.25} parent=31 // pred_fallthru
        _
    $region32: #{_lambda_.25} parent=5 // pred_fallthru
      _
    %p188 = scmp.le.s32.totalorder 1, %s13
    %p189 = scmp.lt.s32.totalorder %s13, 3
    %p190 = pnand %p188, %p189
    %p191 = pneg %p190
    // Predicated region
    $region37: #{_lambda_.25} parent=5 // pred_check
      _
    $region38: #{_lambda_.25} parent=5 // pred_check_branch
      %193 = sbr.rel (%p190) target = $region40
    $region39: #{_lambda_.25} parent=5 // pred_region
      %s194 = ssub.s32 %s13, 1
      %p195 = scmp.lt.s32.totalorder %s18, 1
      %s196 = scalar_select %p195, %s18, 1
      %s197 = smul.addr %s196, 32
      %s198 = smul.addr %s197, 8
      %s199 = scalar_lea.vmem %s0, %s198
      %p200 = pneg %p39
      %p201 = pneg %p36
      %p202 = pneg %p60
      %p203 = pneg %p57
      %p204 = pneg %p81
      %p205 = pneg %p78
      %p206 = pneg %p102
      %p207 = pneg %p99
      %p208 = pneg %p123
      %p209 = pneg %p120
      %p210 = pneg %p149
      %p211 = pneg %p146
      %p212 = scmp.lt.s32.totalorder %s18, 1
      %s213 = scalar_select %p212, %s18, 1
      %s214 = smul.addr %s213, 32
      %s215 = smul.addr %s214, 8
      %s216 = scalar_lea.vmem %s5, %s215
      %p217 = scmp.lt.s32.totalorder %s18, 1
      %s218 = scalar_select %p217, %s18, 1
      %s219 = smul.addr %s218, 32
      %s220 = smul.addr %s219, 8
      %s221 = scalar_lea.vmem %s0, %s220
      %p222 = scmp.lt.s32.totalorder %s18, 1
      %s223 = scalar_select %p222, %s18, 1
      %s224 = smul.addr %s223, 32
      %s225 = smul.addr %s224, 8
      %s226 = scalar_lea.vmem %s5, %s225
      %v227 = vld [vmem:[%s221] sm:$0xff]
      %v228 = vld [vmem:[%s221 + $0x8] sm:$0xff]
      %v229 = vld [vmem:[%s221 + $0x10] sm:$0xff]
      %v230 = vld [vmem:[%s221 + $0x18] sm:$0xff]
      %v231 = vld [vmem:[%s221 + $0x20] sm:$0xff]
      %v232 = vld [vmem:[%s221 + $0x28] sm:$0xff]
      %v233 = vld [vmem:[%s221 + $0x30] sm:$0xff]
      %v234 = vld [vmem:[%s221 + $0x38] sm:$0xff]
      %v235 = vld [vmem:[%s221 + $0x40] sm:$0xff]
      %v236 = vld [vmem:[%s221 + $0x48] sm:$0xff]
      %v237 = vld [vmem:[%s221 + $0x50] sm:$0xff]
      %v238 = vld [vmem:[%s221 + $0x58] sm:$0xff]
      %v239 = vld [vmem:[%s221 + $0x60] sm:$0xff]
      %v240 = vld [vmem:[%s221 + $0x68] sm:$0xff]
      %v241 = vld [vmem:[%s221 + $0x70] sm:$0xff]
      %v242 = vld [vmem:[%s221 + $0x78] sm:$0xff]
      %v243 = vld [vmem:[%s221 + $0x80] sm:$0xff]
      %v244 = vld [vmem:[%s221 + $0x88] sm:$0xff]
      %v245 = vld [vmem:[%s221 + $0x90] sm:$0xff]
      %v246 = vld [vmem:[%s221 + $0x98] sm:$0xff]
      %v247 = vld [vmem:[%s221 + $0xa0] sm:$0xff]
      %v248 = vld [vmem:[%s221 + $0xa8] sm:$0xff]
      %v249 = vld [vmem:[%s221 + $0xb0] sm:$0xff]
      %v250 = vld [vmem:[%s221 + $0xb8] sm:$0xff]
      %v251 = vld [vmem:[%s221 + $0xc0] sm:$0xff]
      %v252 = vld [vmem:[%s221 + $0xc8] sm:$0xff]
      %v253 = vld [vmem:[%s221 + $0xd0] sm:$0xff]
      %v254 = vld [vmem:[%s221 + $0xd8] sm:$0xff]
      %v255 = vld [vmem:[%s221 + $0xe0] sm:$0xff]
      %v256 = vld [vmem:[%s221 + $0xe8] sm:$0xff]
      %v257 = vld [vmem:[%s221 + $0xf0] sm:$0xff]
      %v258 = vld [vmem:[%s221 + $0xf8] sm:$0xff]
      %vm259 = vcmask 64512
      %v260 = vsel %vm259, %v227, 0.0
      %v261 = vsel %vm259, %v228, 0.0
      %v262 = vadd.f32 %v260, %v261
      %v263 = vsel %vm259, %v229, 0.0
      %v264 = vadd.f32 %v262, %v263
      %v265 = vsel %vm259, %v230, 0.0
      %v266 = vadd.f32 %v264, %v265
      %v267 = vsel %vm259, %v231, 0.0
      %v268 = vadd.f32 %v266, %v267
      %v269 = vsel %vm259, %v232, 0.0
      %v270 = vadd.f32 %v268, %v269
      %v271 = vsel %vm259, %v233, 0.0
      %v272 = vadd.f32 %v270, %v271
      %v273 = vsel %vm259, %v234, 0.0
      %v274 = vadd.f32 %v272, %v273
      %v275 = vsel %vm259, %v235, 0.0
      %v276 = vadd.f32 %v274, %v275
      %v277 = vsel %vm259, %v236, 0.0
      %v278 = vadd.f32 %v276, %v277
      %v279 = vsel %vm259, %v237, 0.0
      %v280 = vadd.f32 %v278, %v279
      %v281 = vsel %vm259, %v238, 0.0
      %v282 = vadd.f32 %v280, %v281
      %v283 = vsel %vm259, %v239, 0.0
      %v284 = vadd.f32 %v282, %v283
      %v285 = vsel %vm259, %v240, 0.0
      %v286 = vadd.f32 %v284, %v285
      %v287 = vsel %vm259, %v241, 0.0
      %v288 = vadd.f32 %v286, %v287
      %v289 = vsel %vm259, %v242, 0.0
      %v290 = vadd.f32 %v288, %v289
      %v291 = vsel %vm259, %v243, 0.0
      %v292 = vadd.f32 %v290, %v291
      %v293 = vsel %vm259, %v244, 0.0
      %v294 = vadd.f32 %v292, %v293
      %v295 = vsel %vm259, %v245, 0.0
      %v296 = vadd.f32 %v294, %v295
      %v297 = vsel %vm259, %v246, 0.0
      %v298 = vadd.f32 %v296, %v297
      %v299 = vsel %vm259, %v247, 0.0
      %v300 = vadd.f32 %v298, %v299
      %v301 = vsel %vm259, %v248, 0.0
      %v302 = vadd.f32 %v300, %v301
      %v303 = vsel %vm259, %v249, 0.0
      %v304 = vadd.f32 %v302, %v303
      %v305 = vsel %vm259, %v250, 0.0
      %v306 = vadd.f32 %v304, %v305
      %v307 = vsel %vm259, %v251, 0.0
      %v308 = vadd.f32 %v306, %v307
      %v309 = vsel %vm259, %v252, 0.0
      %v310 = vadd.f32 %v308, %v309
      %v311 = vsel %vm259, %v253, 0.0
      %v312 = vadd.f32 %v310, %v311
      %v313 = vsel %vm259, %v254, 0.0
      %v314 = vadd.f32 %v312, %v313
      %v315 = vsel %vm259, %v255, 0.0
      %v316 = vadd.f32 %v314, %v315
      %v317 = vsel %vm259, %v256, 0.0
      %v318 = vadd.f32 %v316, %v317
      %v319 = vsel %vm259, %v257, 0.0
      %v320 = vadd.f32 %v318, %v319
      %v321 = vsel %vm259, %v258, 0.0
      %v322 = vadd.f32 %v320, %v321
      %v323 = vrot.slane %v322, 4
      %v324 = vadd.f32 %v322, %v323
      %v325 = vrot.slane %v324, 2
      %v326 = vadd.f32 %v324, %v325
      %v327 = vrot.slane %v326, 1
      %v328 = vadd.f32 %v326, %v327
      %v329 = vrcp.pop 256.0
      %v330 = vmul.f32 %v328, %v329
      %v331 = vld [vmem:[%s1] sm:$0xff]
      %v332 = vld [vmem:[#allocation2] sm:$0x1]
      %v334 = vsel %vm259, %v330, 0
      %336 = vmatprep.subr.mxu0 0.0
      %337 = vmatpush1.msra.mxu0 %v331
      %338 = vmatprep.subr.mxu0 0.0
      %339 = vmatpush1.msra.mxu0 0.0
      %340 = vmatprep.subr.mxu0 0.0
      %341 = vmatpush1.msra.mxu0 0.0
      %342 = vmatprep.subr.mxu0 0.0
      %343 = vmatpush1.msra.mxu0 0.0
      %344 = vmatprep.subr.mxu0 0.0
      %345 = vmatpush1.msra.mxu0 0.0
      %346 = vmatprep.subr.mxu0 0.0
      %347 = vmatpush1.msra.mxu0 0.0
      %348 = vmatprep.subr.mxu0 0.0
      %349 = vmatpush1.msra.mxu0 0.0
      %350 = vmatprep.subr.mxu0 0.0
      %351 = vmatpush1.msra.mxu0 0.0
      %352 = vmatprep.subr.mxu0 0.0
      %353 = vmatpush1.msra.mxu0 0.0
      %354 = vmatprep.subr.mxu0 0.0
      %355 = vmatpush1.msra.mxu0 0.0
      %356 = vmatprep.subr.mxu0 0.0
      %357 = vmatpush1.msra.mxu0 0.0
      %358 = vmatprep.subr.mxu0 0.0
      %359 = vmatpush1.msra.mxu0 0.0
      %360 = vmatprep.subr.mxu0 0.0
      %361 = vmatpush1.msra.mxu0 0.0
      %362 = vmatprep.subr.mxu0 0.0
      %363 = vmatpush1.msra.mxu0 0.0
      %364 = vmatprep.subr.mxu0 0.0
      %365 = vmatpush1.msra.mxu0 0.0
      %366 = vmatprep.subr.mxu0 0.0
      %367 = vmatpush1.msra.mxu0 0.0
      %368 = vmatprep.subr.mxu0 0.0
      %369 = vmatpush1.msra.mxu0 0.0
      %370 = vmatprep.subr.mxu0 0.0
      %371 = vmatpush1.msra.mxu0 0.0
      %372 = vmatprep.subr.mxu0 0.0
      %373 = vmatpush1.msra.mxu0 0.0
      %374 = vmatprep.subr.mxu0 0.0
      %375 = vmatpush1.msra.mxu0 0.0
      %376 = vmatprep.subr.mxu0 0.0
      %377 = vmatpush1.msra.mxu0 0.0
      %378 = vmatprep.subr.mxu0 0.0
      %379 = vmatpush1.msra.mxu0 0.0
      %380 = vmatprep.subr.mxu0 0.0
      %381 = vmatpush1.msra.mxu0 0.0
      %382 = vmatprep.subr.mxu0 0.0
      %383 = vmatpush1.msra.mxu0 0.0
      %384 = vmatprep.subr.mxu0 0.0
      %385 = vmatpush1.msra.mxu0 0.0
      %386 = vmatprep.subr.mxu0 0.0
      %387 = vmatpush1.msra.mxu0 0.0
      %388 = vmatprep.subr.mxu0 0.0
      %389 = vmatpush1.msra.mxu0 0.0
      %390 = vmatprep.subr.mxu0 0.0
      %391 = vmatpush1.msra.mxu0 0.0
      %392 = vmatprep.subr.mxu0 0.0
      %393 = vmatpush1.msra.mxu0 0.0
      %394 = vmatprep.subr.mxu0 0.0
      %395 = vmatpush1.msra.mxu0 0.0
      %396 = vmatprep.subr.mxu0 0.0
      %397 = vmatpush1.msra.mxu0 0.0
      %398 = vmatprep.subr.mxu0 0.0
      %399 = vmatpush1.msra.mxu0 0.0
      %400 = vmatprep.mubr.f32.mxu0 0.0
      %401 = vmatmul.mubr.f32.gmra.mrb[0].mxu0 %v334
      %v402 = vpop.f32.mrb[0].mxu0
      %v403 = vadd.f32 %v332, %v402
      %v404 = vpop.f32.mrb[0].mxu0
      %405 = vdwg.mxu0
      %v406 = vmax.f32 %v403, 0.0
      %v407 = vld [vmem:[%s3] sm:$0x1]
      %v408 = vld [vmem:[%s4] sm:$0x1]
      %vm409 = vcmask 7168
      %v411 = vsel %vm409, %v406, 0
      %vm413 = vcmask 1040384
      %v415 = vsel %vm413, %v407, 0
      %417 = vmatprep.subr.mxu0 0.0
      %418 = vmatpush1.msra.mxu0 %v415
      %419 = vmatprep.subr.mxu0 0.0
      %420 = vmatpush1.msra.mxu0 0.0
      %421 = vmatprep.subr.mxu0 0.0
      %422 = vmatpush1.msra.mxu0 0.0
      %423 = vmatprep.subr.mxu0 0.0
      %424 = vmatpush1.msra.mxu0 0.0
      %425 = vmatprep.subr.mxu0 0.0
      %426 = vmatpush1.msra.mxu0 0.0
      %427 = vmatprep.subr.mxu0 0.0
      %428 = vmatpush1.msra.mxu0 0.0
      %429 = vmatprep.subr.mxu0 0.0
      %430 = vmatpush1.msra.mxu0 0.0
      %431 = vmatprep.subr.mxu0 0.0
      %432 = vmatpush1.msra.mxu0 0.0
      %433 = vmatprep.subr.mxu0 0.0
      %434 = vmatpush1.msra.mxu0 0.0
      %435 = vmatprep.subr.mxu0 0.0
      %436 = vmatpush1.msra.mxu0 0.0
      %437 = vmatprep.subr.mxu0 0.0
      %438 = vmatpush1.msra.mxu0 0.0
      %439 = vmatprep.subr.mxu0 0.0
      %440 = vmatpush1.msra.mxu0 0.0
      %441 = vmatprep.subr.mxu0 0.0
      %442 = vmatpush1.msra.mxu0 0.0
      %443 = vmatprep.subr.mxu0 0.0
      %444 = vmatpush1.msra.mxu0 0.0
      %445 = vmatprep.subr.mxu0 0.0
      %446 = vmatpush1.msra.mxu0 0.0
      %447 = vmatprep.subr.mxu0 0.0
      %448 = vmatpush1.msra.mxu0 0.0
      %449 = vmatprep.subr.mxu0 0.0
      %450 = vmatpush1.msra.mxu0 0.0
      %451 = vmatprep.subr.mxu0 0.0
      %452 = vmatpush1.msra.mxu0 0.0
      %453 = vmatprep.subr.mxu0 0.0
      %454 = vmatpush1.msra.mxu0 0.0
      %455 = vmatprep.subr.mxu0 0.0
      %456 = vmatpush1.msra.mxu0 0.0
      %457 = vmatprep.subr.mxu0 0.0
      %458 = vmatpush1.msra.mxu0 0.0
      %459 = vmatprep.subr.mxu0 0.0
      %460 = vmatpush1.msra.mxu0 0.0
      %461 = vmatprep.subr.mxu0 0.0
      %462 = vmatpush1.msra.mxu0 0.0
      %463 = vmatprep.subr.mxu0 0.0
      %464 = vmatpush1.msra.mxu0 0.0
      %465 = vmatprep.subr.mxu0 0.0
      %466 = vmatpush1.msra.mxu0 0.0
      %467 = vmatprep.subr.mxu0 0.0
      %468 = vmatpush1.msra.mxu0 0.0
      %469 = vmatprep.subr.mxu0 0.0
      %470 = vmatpush1.msra.mxu0 0.0
      %471 = vmatprep.subr.mxu0 0.0
      %472 = vmatpush1.msra.mxu0 0.0
      %473 = vmatprep.subr.mxu0 0.0
      %474 = vmatpush1.msra.mxu0 0.0
      %475 = vmatprep.subr.mxu0 0.0
      %476 = vmatpush1.msra.mxu0 0.0
      %477 = vmatprep.subr.mxu0 0.0
      %478 = vmatpush1.msra.mxu0 0.0
      %479 = vmatprep.subr.mxu0 0.0
      %480 = vmatpush1.msra.mxu0 0.0
      %481 = vmatprep.mubr.f32.mxu0 0.0
      %482 = vmatmul.mubr.f32.gmra.mrb[0].mxu0 %v411
      %v483 = vpop.f32.mrb[0].mxu0
      %v484 = vadd.f32 %v408, %v483
      %v485 = vpop.f32.mrb[0].mxu0
      %486 = vdwg.mxu0
      %v487 = vxor.u32 %v484, 2147483648
      %v488 = vmul.f32 %v487, 1.442695
      %v489 = vpow.pop %v488
      %v490 = vadd.f32 %v489, 1.0
      %v491 = vrcp.pop %v490
      %v492 = vmul.f32 1.0, %v491
      %v493 = vlaneseq
      %v494 = vshrl.u32 %v493, 7
      %v495 = vsub.s32 0, %v494
      %v496 = vrot.slane %v492, %v495
      %v497 = vmul.f32 %v227, %v496
      %v498 = vmul.f32 %v228, %v496
      %v499 = vmul.f32 %v229, %v496
      %v500 = vmul.f32 %v230, %v496
      %v501 = vmul.f32 %v231, %v496
      %v502 = vmul.f32 %v232, %v496
      %v503 = vmul.f32 %v233, %v496
      %v504 = vmul.f32 %v234, %v496
      %v505 = vmul.f32 %v235, %v496
      %v506 = vmul.f32 %v236, %v496
      %v507 = vmul.f32 %v237, %v496
      %v508 = vmul.f32 %v238, %v496
      %v509 = vmul.f32 %v239, %v496
      %v510 = vmul.f32 %v240, %v496
      %v511 = vmul.f32 %v241, %v496
      %v512 = vmul.f32 %v242, %v496
      %v513 = vmul.f32 %v243, %v496
      %v514 = vmul.f32 %v244, %v496
      %v515 = vmul.f32 %v245, %v496
      %v516 = vmul.f32 %v246, %v496
      %v517 = vmul.f32 %v247, %v496
      %v518 = vmul.f32 %v248, %v496
      %v519 = vmul.f32 %v249, %v496
      %v520 = vmul.f32 %v250, %v496
      %v521 = vmul.f32 %v251, %v496
      %v522 = vmul.f32 %v252, %v496
      %v523 = vmul.f32 %v253, %v496
      %v524 = vmul.f32 %v254, %v496
      %v525 = vmul.f32 %v255, %v496
      %v526 = vmul.f32 %v256, %v496
      %v527 = vmul.f32 %v257, %v496
      %v528 = vmul.f32 %v258, %v496
      %529 = vst.msk [vmem:[%s226] sm:$0xff] %vm259, %v497
      %530 = vst.msk [vmem:[%s226 + $0x8] sm:$0xff] %vm259, %v498
      %531 = vst.msk [vmem:[%s226 + $0x10] sm:$0xff] %vm259, %v499
      %532 = vst.msk [vmem:[%s226 + $0x18] sm:$0xff] %vm259, %v500
      %533 = vst.msk [vmem:[%s226 + $0x20] sm:$0xff] %vm259, %v501
      %534 = vst.msk [vmem:[%s226 + $0x28] sm:$0xff] %vm259, %v502
      %535 = vst.msk [vmem:[%s226 + $0x30] sm:$0xff] %vm259, %v503
      %536 = vst.msk [vmem:[%s226 + $0x38] sm:$0xff] %vm259, %v504
      %537 = vst.msk [vmem:[%s226 + $0x40] sm:$0xff] %vm259, %v505
      %538 = vst.msk [vmem:[%s226 + $0x48] sm:$0xff] %vm259, %v506
      %539 = vst.msk [vmem:[%s226 + $0x50] sm:$0xff] %vm259, %v507
      %540 = vst.msk [vmem:[%s226 + $0x58] sm:$0xff] %vm259, %v508
      %541 = vst.msk [vmem:[%s226 + $0x60] sm:$0xff] %vm259, %v509
      %542 = vst.msk [vmem:[%s226 + $0x68] sm:$0xff] %vm259, %v510
      %543 = vst.msk [vmem:[%s226 + $0x70] sm:$0xff] %vm259, %v511
      %544 = vst.msk [vmem:[%s226 + $0x78] sm:$0xff] %vm259, %v512
      %545 = vst.msk [vmem:[%s226 + $0x80] sm:$0xff] %vm259, %v513
      %546 = vst.msk [vmem:[%s226 + $0x88] sm:$0xff] %vm259, %v514
      %547 = vst.msk [vmem:[%s226 + $0x90] sm:$0xff] %vm259, %v515
      %548 = vst.msk [vmem:[%s226 + $0x98] sm:$0xff] %vm259, %v516
      %549 = vst.msk [vmem:[%s226 + $0xa0] sm:$0xff] %vm259, %v517
      %550 = vst.msk [vmem:[%s226 + $0xa8] sm:$0xff] %vm259, %v518
      %551 = vst.msk [vmem:[%s226 + $0xb0] sm:$0xff] %vm259, %v519
      %552 = vst.msk [vmem:[%s226 + $0xb8] sm:$0xff] %vm259, %v520
      %553 = vst.msk [vmem:[%s226 + $0xc0] sm:$0xff] %vm259, %v521
      %554 = vst.msk [vmem:[%s226 + $0xc8] sm:$0xff] %vm259, %v522
      %555 = vst.msk [vmem:[%s226 + $0xd0] sm:$0xff] %vm259, %v523
      %556 = vst.msk [vmem:[%s226 + $0xd8] sm:$0xff] %vm259, %v524
      %557 = vst.msk [vmem:[%s226 + $0xe0] sm:$0xff] %vm259, %v525
      %558 = vst.msk [vmem:[%s226 + $0xe8] sm:$0xff] %vm259, %v526
      %559 = vst.msk [vmem:[%s226 + $0xf0] sm:$0xff] %vm259, %v527
      %560 = vst.msk [vmem:[%s226 + $0xf8] sm:$0xff] %vm259, %v528
      %p561 = scmp.lt.s32.totalorder %s18, 1
      %s562 = scalar_select %p561, %s18, 1
      %s563 = smul.addr %s562, 32
      %s564 = smul.addr %s563, 8
      %s565 = scalar_lea.vmem %s5, %s564
      // Predicated region
      $region41: #{_lambda_.25} parent=39 // pred_check
        %p566 = pneg %p146
      $region42: #{_lambda_.25} parent=39 // pred_check_branch
        %568 = sbr.rel (%p566) target = $region44
      $region43: #{_lambda_.25} parent=39 // pred_region
        _
      $region44: #{_lambda_.25} parent=39 // pred_fallthru
        _
    $region40: #{_lambda_.25} parent=5 // pred_fallthru
      _
    %p569 = scmp.le.s32.totalorder 2, %s13
    // Predicated region
    $region45: #{_lambda_.25} parent=5 // pred_check
      %p570 = pneg %p569
    $region46: #{_lambda_.25} parent=5 // pred_check_branch
      %572 = sbr.rel (%p570) target = $region48
    $region47: #{_lambda_.25} parent=5 // pred_region
      %s573 = ssub.s32 %s13, 2
      // Predicated region
      $region49: #{_lambda_.25} parent=47 // pred_check
        %p574 = pneg %p152
      $region50: #{_lambda_.25} parent=47 // pred_check_branch
        %576 = sbr.rel (%p574) target = $region52
      $region51: #{_lambda_.25} parent=47 // pred_region
        %p577 = scmp.lt.s32.totalorder %s19, 1
        %s578 = scalar_select %p577, %s19, 1
        %s579 = smul.addr %s578, 32
        %s580 = smul.addr %s579, 8
        %s581 = scalar_lea.vmem %s5, %s580
      $region52: #{_lambda_.25} parent=47 // pred_fallthru
        _
    $region48: #{_lambda_.25} parent=5 // pred_fallthru
      _
  $region6: #{_lambda_.25} parent=0 // loop_footer
    %s17 = sadd.s32 1, %s13
  $region7: #{_lambda_.25} parent=0 // loop_footer_branch
    %12 = sbr.rel target = $region3
  $region8: #{_lambda_.25} parent=0 // loop_exit
    _

// kernel: _lambda_.26
$region0: #{_lambda_.26}
  #allocation0 [shape = 'u32[]', space=smem, size = 0x4, offset = 0x4, fixed_abs, tag = 'smem constant byte address 0x4 - core index']
  #allocation1 [shape = 'u32[144,128]{1,0:T(1,128)}', space=vmem, size = 0x12000, scoped, tag = 'internal scratch']
  #allocation2 [shape = 'f32[128,128]{1,0:T(8,128)}', space=vmem, size = 0x10000, scoped, tag = 'scratch operand']
  %s0 = inlined_call_operand.vmem [shape: bf16[128,128], index: 0, kind: input, shape index: {}]
  %s1 = inlined_call_operand.vmem [shape: bf16[128,128], index: 1, kind: input, shape index: {}]
  %s2 = inlined_call_operand.vmem [shape: f32[1,128], index: 2, kind: input, shape index: {}]
  %s3 = inlined_call_operand.vmem [shape: f32[1,128], index: 3, kind: input, shape index: {}]
  %s4 = inlined_call_operand.vmem [shape: f32[128,128], index: 4, kind: output, shape index: {}]
  %s5 = sld [smem:[#allocation0]]
  $region34: #{_lambda_.26} parent=0
    _
  %s7 = ssub.s32 1, %s5
  %s8 = scalar_select 0, %s7, %s5
  // Predicated region
  $region2: #{_lambda_.26} parent=0 // pred_check
    _
  $region3: #{_lambda_.26} parent=0 // pred_check_branch
    %10 = sbr.rel (0) target = $region5
  $region4: #{_lambda_.26} parent=0 // pred_region
    _
  $region5: #{_lambda_.26} parent=0 // pred_fallthru
    _
  // Predicated region
  $region6: #{_lambda_.26} parent=0 // pred_check
    _
  $region7: #{_lambda_.26} parent=0 // pred_check_branch
    %12 = sbr.rel (0) target = $region9
  $region8: #{_lambda_.26} parent=0 // pred_region
    _
  $region9: #{_lambda_.26} parent=0 // pred_fallthru
    _
  // Predicated region
  $region10: #{_lambda_.26} parent=0 // pred_check
    _
  $region11: #{_lambda_.26} parent=0 // pred_check_branch
    %14 = sbr.rel (0) target = $region13
  $region12: #{_lambda_.26} parent=0 // pred_region
    _
  $region13: #{_lambda_.26} parent=0 // pred_fallthru
    _
  // Predicated region
  $region14: #{_lambda_.26} parent=0 // pred_check
    _
  $region15: #{_lambda_.26} parent=0 // pred_check_branch
    %16 = sbr.rel (0) target = $region17
  $region16: #{_lambda_.26} parent=0 // pred_region
    _
  $region17: #{_lambda_.26} parent=0 // pred_fallthru
    _
  %p18 = scmp.eq.s32.totalorder 0, 0
  // Predicated region
  $region18: #{_lambda_.26} parent=0 // pred_check
    %p19 = pneg %p18
  $region19: #{_lambda_.26} parent=0 // pred_check_branch
    %21 = sbr.rel (%p19) target = $region21
  $region20: #{_lambda_.26} parent=0 // pred_region
    %22 = vst [vmem:[#allocation2] sm:$0xff] 0.0
    %23 = vst [vmem:[#allocation2 + $0x8] sm:$0xff] 0.0
    %24 = vst [vmem:[#allocation2 + $0x10] sm:$0xff] 0.0
    %25 = vst [vmem:[#allocation2 + $0x18] sm:$0xff] 0.0
    %26 = vst [vmem:[#allocation2 + $0x20] sm:$0xff] 0.0
    %27 = vst [vmem:[#allocation2 + $0x28] sm:$0xff] 0.0
    %28 = vst [vmem:[#allocation2 + $0x30] sm:$0xff] 0.0
    %29 = vst [vmem:[#allocation2 + $0x38] sm:$0xff] 0.0
    %30 = vst [vmem:[#allocation2 + $0x40] sm:$0xff] 0.0
    %31 = vst [vmem:[#allocation2 + $0x48] sm:$0xff] 0.0
    %32 = vst [vmem:[#allocation2 + $0x50] sm:$0xff] 0.0
    %33 = vst [vmem:[#allocation2 + $0x58] sm:$0xff] 0.0
    %34 = vst [vmem:[#allocation2 + $0x60] sm:$0xff] 0.0
    %35 = vst [vmem:[#allocation2 + $0x68] sm:$0xff] 0.0
    %36 = vst [vmem:[#allocation2 + $0x70] sm:$0xff] 0.0
    %37 = vst [vmem:[#allocation2 + $0x78] sm:$0xff] 0.0
  $region21: #{_lambda_.26} parent=0 // pred_fallthru
    _
  %v38 = vld [vmem:[#allocation2] sm:$0xff]
  %v39 = vld [vmem:[#allocation2 + $0x8] sm:$0xff]
  %v40 = vld [vmem:[#allocation2 + $0x10] sm:$0xff]
  %v41 = vld [vmem:[#allocation2 + $0x18] sm:$0xff]
  %v42 = vld [vmem:[#allocation2 + $0x20] sm:$0xff]
  %v43 = vld [vmem:[#allocation2 + $0x28] sm:$0xff]
  %v44 = vld [vmem:[#allocation2 + $0x30] sm:$0xff]
  %v45 = vld [vmem:[#allocation2 + $0x38] sm:$0xff]
  %v46 = vld [vmem:[#allocation2 + $0x40] sm:$0xff]
  %v47 = vld [vmem:[#allocation2 + $0x48] sm:$0xff]
  %v48 = vld [vmem:[#allocation2 + $0x50] sm:$0xff]
  %v49 = vld [vmem:[#allocation2 + $0x58] sm:$0xff]
  %v50 = vld [vmem:[#allocation2 + $0x60] sm:$0xff]
  %v51 = vld [vmem:[#allocation2 + $0x68] sm:$0xff]
  %v52 = vld [vmem:[#allocation2 + $0x70] sm:$0xff]
  %v53 = vld [vmem:[#allocation2 + $0x78] sm:$0xff]
  %v54 = vld [vmem:[%s0] sm:$0xf]
  %v55 = vld [vmem:[%s0 + $0x4] sm:$0xf]
  %v56 = vld [vmem:[%s0 + $0x8] sm:$0xf]
  %v57 = vld [vmem:[%s0 + $0xc] sm:$0xf]
  %v58 = vld [vmem:[%s0 + $0x10] sm:$0xf]
  %v59 = vld [vmem:[%s0 + $0x14] sm:$0xf]
  %v60 = vld [vmem:[%s0 + $0x18] sm:$0xf]
  %v61 = vld [vmem:[%s0 + $0x1c] sm:$0xf]
  %v62 = vld [vmem:[%s0 + $0x20] sm:$0xf]
  %v63 = vld [vmem:[%s0 + $0x24] sm:$0xf]
  %v64 = vld [vmem:[%s0 + $0x28] sm:$0xf]
  %v65 = vld [vmem:[%s0 + $0x2c] sm:$0xf]
  %v66 = vld [vmem:[%s0 + $0x30] sm:$0xf]
  %v67 = vld [vmem:[%s0 + $0x34] sm:$0xf]
  %v68 = vld [vmem:[%s0 + $0x38] sm:$0xf]
  %v69 = vld [vmem:[%s0 + $0x3c] sm:$0xf]
  %v70 = vld [vmem:[%s1] sm:$0xf]
  %v71 = vld [vmem:[%s1 + $0x4] sm:$0xf]
  %v72 = vld [vmem:[%s1 + $0x8] sm:$0xf]
  %v73 = vld [vmem:[%s1 + $0xc] sm:$0xf]
  %v74 = vld [vmem:[%s1 + $0x10] sm:$0xf]
  %v75 = vld [vmem:[%s1 + $0x14] sm:$0xf]
  %v76 = vld [vmem:[%s1 + $0x18] sm:$0xf]
  %v77 = vld [vmem:[%s1 + $0x1c] sm:$0xf]
  %v78 = vld [vmem:[%s1 + $0x20] sm:$0xf]
  %v79 = vld [vmem:[%s1 + $0x24] sm:$0xf]
  %v80 = vld [vmem:[%s1 + $0x28] sm:$0xf]
  %v81 = vld [vmem:[%s1 + $0x2c] sm:$0xf]
  %v82 = vld [vmem:[%s1 + $0x30] sm:$0xf]
  %v83 = vld [vmem:[%s1 + $0x34] sm:$0xf]
  %v84 = vld [vmem:[%s1 + $0x38] sm:$0xf]
  %v85 = vld [vmem:[%s1 + $0x3c] sm:$0xf]
  %v102 = vunpack.c.l.b16 %v54
  %v103 = vunpack.c.l.b16 %v55
  %v104 = vunpack.c.l.b16 %v56
  %v105 = vunpack.c.l.b16 %v57
  %v106 = vunpack.c.l.b16 %v58
  %v107 = vunpack.c.l.b16 %v59
  %v108 = vunpack.c.l.b16 %v60
  %v109 = vunpack.c.l.b16 %v61
  %v110 = vunpack.c.l.b16 %v62
  %v111 = vunpack.c.l.b16 %v63
  %v112 = vunpack.c.l.b16 %v64
  %v113 = vunpack.c.l.b16 %v65
  %v114 = vunpack.c.l.b16 %v66
  %v115 = vunpack.c.l.b16 %v67
  %v116 = vunpack.c.l.b16 %v68
  %v117 = vunpack.c.l.b16 %v69
  %v118 = vpack.c.b16 %v103, %v102
  %v119 = vpack.c.b16 %v105, %v104
  %v120 = vpack.c.b16 %v107, %v106
  %v121 = vpack.c.b16 %v109, %v108
  %v122 = vpack.c.b16 %v111, %v110
  %v123 = vpack.c.b16 %v113, %v112
  %v124 = vpack.c.b16 %v115, %v114
  %v125 = vpack.c.b16 %v117, %v116
  %v150 = vunpack.c.l.b16 %v70
  %v151 = vunpack.c.l.b16 %v71
  %v152 = vunpack.c.l.b16 %v72
  %v153 = vunpack.c.l.b16 %v73
  %v154 = vunpack.c.l.b16 %v74
  %v155 = vunpack.c.l.b16 %v75
  %v156 = vunpack.c.l.b16 %v76
  %v157 = vunpack.c.l.b16 %v77
  %v158 = vunpack.c.l.b16 %v78
  %v159 = vunpack.c.l.b16 %v79
  %v160 = vunpack.c.l.b16 %v80
  %v161 = vunpack.c.l.b16 %v81
  %v162 = vunpack.c.l.b16 %v82
  %v163 = vunpack.c.l.b16 %v83
  %v164 = vunpack.c.l.b16 %v84
  %v165 = vunpack.c.l.b16 %v85
  %v166 = vpack.c.b16 %v151, %v150
  %v167 = vpack.c.b16 %v153, %v152
  %v168 = vpack.c.b16 %v155, %v154
  %v169 = vpack.c.b16 %v157, %v156
  %v170 = vpack.c.b16 %v159, %v158
  %v171 = vpack.c.b16 %v161, %v160
  %v172 = vpack.c.b16 %v163, %v162
  %v173 = vpack.c.b16 %v165, %v164
  %182 = vmatprep.subr.bf16.mxu0 0
  %183 = vmatpush1.bf16.msra.mxu0 %v166
  %184 = vmatprep.subr.bf16.mxu0 0
  %185 = vmatpush1.bf16.msra.mxu0 %v167
  %186 = vmatprep.subr.bf16.mxu0 0
  %187 = vmatpush1.bf16.msra.mxu0 %v168
  %188 = vmatprep.subr.bf16.mxu0 0
  %189 = vmatpush1.bf16.msra.mxu0 %v169
  %190 = vmatprep.subr.bf16.mxu0 0
  %191 = vmatpush1.bf16.msra.mxu0 %v170
  %192 = vmatprep.subr.bf16.mxu0 0
  %193 = vmatpush1.bf16.msra.mxu0 %v171
  %194 = vmatprep.subr.bf16.mxu0 0
  %195 = vmatpush1.bf16.msra.mxu0 %v172
  %196 = vmatprep.subr.bf16.mxu0 0
  %197 = vmatpush1.bf16.msra.mxu0 %v173
  %198 = vmatprep.subr.bf16.mxu0 0
  %199 = vmatpush1.bf16.msra.mxu0 0
  %200 = vmatprep.subr.bf16.mxu0 0
  %201 = vmatpush1.bf16.msra.mxu0 0
  %202 = vmatprep.subr.bf16.mxu0 0
  %203 = vmatpush1.bf16.msra.mxu0 0
  %204 = vmatprep.subr.bf16.mxu0 0
  %205 = vmatpush1.bf16.msra.mxu0 0
  %206 = vmatprep.subr.bf16.mxu0 0
  %207 = vmatpush1.bf16.msra.mxu0 0
  %208 = vmatprep.subr.bf16.mxu0 0
  %209 = vmatpush1.bf16.msra.mxu0 0
  %210 = vmatprep.subr.bf16.mxu0 0
  %211 = vmatpush1.bf16.msra.mxu0 0
  %212 = vmatprep.subr.bf16.mxu0 0
  %213 = vmatpush1.bf16.msra.mxu0 0
  %214 = vmatprep.mubr.bf16.mxu0 0
  %215 = vmatmul.mubr.bf16.gmra.mrb[0].mxu0 %v118
  %v216 = vpop.f32.mrb[0].mxu0
  %v217 = vadd.f32 0.0, %v216
  %v218 = vpop.f32.mrb[0].mxu0
  %v219 = vpop.f32.mrb[0].mxu0
  %v220 = vadd.f32 0.0, %v219
  %v221 = vpop.f32.mrb[0].mxu0
  %222 = vmatprep.mubr.bf16.mxu0 0
  %223 = vmatmul.mubr.bf16.gmra.mrb[0].mxu0 %v119
  %v224 = vpop.f32.mrb[0].mxu0
  %v225 = vadd.f32 0.0, %v224
  %v226 = vpop.f32.mrb[0].mxu0
  %v227 = vpop.f32.mrb[0].mxu0
  %v228 = vadd.f32 0.0, %v227
  %v229 = vpop.f32.mrb[0].mxu0
  %230 = vmatprep.mubr.bf16.mxu0 0
  %231 = vmatmul.mubr.bf16.gmra.mrb[0].mxu0 %v120
  %v232 = vpop.f32.mrb[0].mxu0
  %v233 = vadd.f32 0.0, %v232
  %v234 = vpop.f32.mrb[0].mxu0
  %v235 = vpop.f32.mrb[0].mxu0
  %v236 = vadd.f32 0.0, %v235
  %v237 = vpop.f32.mrb[0].mxu0
  %238 = vmatprep.mubr.bf16.mxu0 0
  %239 = vmatmul.mubr.bf16.gmra.mrb[0].mxu0 %v121
  %v240 = vpop.f32.mrb[0].mxu0
  %v241 = vadd.f32 0.0, %v240
  %v242 = vpop.f32.mrb[0].mxu0
  %v243 = vpop.f32.mrb[0].mxu0
  %v244 = vadd.f32 0.0, %v243
  %v245 = vpop.f32.mrb[0].mxu0
  %246 = vmatprep.mubr.bf16.mxu0 0
  %247 = vmatmul.mubr.bf16.gmra.mrb[0].mxu0 %v122
  %v248 = vpop.f32.mrb[0].mxu0
  %v249 = vadd.f32 0.0, %v248
  %v250 = vpop.f32.mrb[0].mxu0
  %v251 = vpop.f32.mrb[0].mxu0
  %v252 = vadd.f32 0.0, %v251
  %v253 = vpop.f32.mrb[0].mxu0
  %254 = vmatprep.mubr.bf16.mxu0 0
  %255 = vmatmul.mubr.bf16.gmra.mrb[0].mxu0 %v123
  %v256 = vpop.f32.mrb[0].mxu0
  %v257 = vadd.f32 0.0, %v256
  %v258 = vpop.f32.mrb[0].mxu0
  %v259 = vpop.f32.mrb[0].mxu0
  %v260 = vadd.f32 0.0, %v259
  %v261 = vpop.f32.mrb[0].mxu0
  %262 = vmatprep.mubr.bf16.mxu0 0
  %263 = vmatmul.mubr.bf16.gmra.mrb[0].mxu0 %v124
  %v264 = vpop.f32.mrb[0].mxu0
  %v265 = vadd.f32 0.0, %v264
  %v266 = vpop.f32.mrb[0].mxu0
  %v267 = vpop.f32.mrb[0].mxu0
  %v268 = vadd.f32 0.0, %v267
  %v269 = vpop.f32.mrb[0].mxu0
  %270 = vmatprep.mubr.bf16.mxu0 0
  %271 = vmatmul.mubr.bf16.gmra.mrb[0].mxu0 %v125
  %v272 = vpop.f32.mrb[0].mxu0
  %v273 = vadd.f32 0.0, %v272
  %v274 = vpop.f32.mrb[0].mxu0
  %v275 = vpop.f32.mrb[0].mxu0
  %v276 = vadd.f32 0.0, %v275
  %v277 = vpop.f32.mrb[0].mxu0
  %278 = vdwg.mxu0
  %v279 = vadd.f32 %v38, %v217
  %v280 = vadd.f32 %v39, %v220
  %v281 = vadd.f32 %v40, %v225
  %v282 = vadd.f32 %v41, %v228
  %v283 = vadd.f32 %v42, %v233
  %v284 = vadd.f32 %v43, %v236
  %v285 = vadd.f32 %v44, %v241
  %v286 = vadd.f32 %v45, %v244
  %v287 = vadd.f32 %v46, %v249
  %v288 = vadd.f32 %v47, %v252
  %v289 = vadd.f32 %v48, %v257
  %v290 = vadd.f32 %v49, %v260
  %v291 = vadd.f32 %v50, %v265
  %v292 = vadd.f32 %v51, %v268
  %v293 = vadd.f32 %v52, %v273
  %v294 = vadd.f32 %v53, %v276
  %295 = vst [vmem:[#allocation2] sm:$0xff] %v279
  %296 = vst [vmem:[#allocation2 + $0x8] sm:$0xff] %v280
  %297 = vst [vmem:[#allocation2 + $0x10] sm:$0xff] %v281
  %298 = vst [vmem:[#allocation2 + $0x18] sm:$0xff] %v282
  %299 = vst [vmem:[#allocation2 + $0x20] sm:$0xff] %v283
  %300 = vst [vmem:[#allocation2 + $0x28] sm:$0xff] %v284
  %301 = vst [vmem:[#allocation2 + $0x30] sm:$0xff] %v285
  %302 = vst [vmem:[#allocation2 + $0x38] sm:$0xff] %v286
  %303 = vst [vmem:[#allocation2 + $0x40] sm:$0xff] %v287
  %304 = vst [vmem:[#allocation2 + $0x48] sm:$0xff] %v288
  %305 = vst [vmem:[#allocation2 + $0x50] sm:$0xff] %v289
  %306 = vst [vmem:[#allocation2 + $0x58] sm:$0xff] %v290
  %307 = vst [vmem:[#allocation2 + $0x60] sm:$0xff] %v291
  %308 = vst [vmem:[#allocation2 + $0x68] sm:$0xff] %v292
  %309 = vst [vmem:[#allocation2 + $0x70] sm:$0xff] %v293
  %310 = vst [vmem:[#allocation2 + $0x78] sm:$0xff] %v294
  // Predicated region
  $region22: #{_lambda_.26} parent=0 // pred_check
    %p311 = pneg %p18
  $region23: #{_lambda_.26} parent=0 // pred_check_branch
    %313 = sbr.rel (%p311) target = $region25
  $region24: #{_lambda_.26} parent=0 // pred_region
    %v314 = vld [vmem:[#allocation2] sm:$0xff]
    %v315 = vld [vmem:[#allocation2 + $0x8] sm:$0xff]
    %v316 = vld [vmem:[#allocation2 + $0x10] sm:$0xff]
    %v317 = vld [vmem:[#allocation2 + $0x18] sm:$0xff]
    %v318 = vld [vmem:[#allocation2 + $0x20] sm:$0xff]
    %v319 = vld [vmem:[#allocation2 + $0x28] sm:$0xff]
    %v320 = vld [vmem:[#allocation2 + $0x30] sm:$0xff]
    %v321 = vld [vmem:[#allocation2 + $0x38] sm:$0xff]
    %v322 = vld [vmem:[#allocation2 + $0x40] sm:$0xff]
    %v323 = vld [vmem:[#allocation2 + $0x48] sm:$0xff]
    %v324 = vld [vmem:[#allocation2 + $0x50] sm:$0xff]
    %v325 = vld [vmem:[#allocation2 + $0x58] sm:$0xff]
    %v326 = vld [vmem:[#allocation2 + $0x60] sm:$0xff]
    %v327 = vld [vmem:[#allocation2 + $0x68] sm:$0xff]
    %v328 = vld [vmem:[#allocation2 + $0x70] sm:$0xff]
    %v329 = vld [vmem:[#allocation2 + $0x78] sm:$0xff]
    %v330 = vld [vmem:[%s2] sm:$0x1]
    %v332 = vlaneseq
    %v333 = vshrl.u32 %v332, 7
    %v334 = vsub.s32 0, %v333
    %v335 = vrot.slane %v330, %v334
    %v337 = vmul.f32 %v314, %v335
    %v338 = vmul.f32 %v315, %v335
    %v339 = vmul.f32 %v316, %v335
    %v340 = vmul.f32 %v317, %v335
    %v341 = vmul.f32 %v318, %v335
    %v342 = vmul.f32 %v319, %v335
    %v343 = vmul.f32 %v320, %v335
    %v344 = vmul.f32 %v321, %v335
    %v345 = vmul.f32 %v322, %v335
    %v346 = vmul.f32 %v323, %v335
    %v347 = vmul.f32 %v324, %v335
    %v348 = vmul.f32 %v325, %v335
    %v349 = vmul.f32 %v326, %v335
    %v350 = vmul.f32 %v327, %v335
    %v351 = vmul.f32 %v328, %v335
    %v352 = vmul.f32 %v329, %v335
    %v353 = vld [vmem:[%s3] sm:$0x1]
    %v355 = vlaneseq
    %v356 = vshrl.u32 %v355, 7
    %v357 = vsub.s32 0, %v356
    %v358 = vrot.slane %v353, %v357
    %v360 = vadd.f32 %v337, %v358
    %v361 = vadd.f32 %v338, %v358
    %v362 = vadd.f32 %v339, %v358
    %v363 = vadd.f32 %v340, %v358
    %v364 = vadd.f32 %v341, %v358
    %v365 = vadd.f32 %v342, %v358
    %v366 = vadd.f32 %v343, %v358
    %v367 = vadd.f32 %v344, %v358
    %v368 = vadd.f32 %v345, %v358
    %v369 = vadd.f32 %v346, %v358
    %v370 = vadd.f32 %v347, %v358
    %v371 = vadd.f32 %v348, %v358
    %v372 = vadd.f32 %v349, %v358
    %v373 = vadd.f32 %v350, %v358
    %v374 = vadd.f32 %v351, %v358
    %v375 = vadd.f32 %v352, %v358
    %v376 = vmax.f32 %v360, 0.0
    %v377 = vmax.f32 %v361, 0.0
    %v378 = vmax.f32 %v362, 0.0
    %v379 = vmax.f32 %v363, 0.0
    %v380 = vmax.f32 %v364, 0.0
    %v381 = vmax.f32 %v365, 0.0
    %v382 = vmax.f32 %v366, 0.0
    %v383 = vmax.f32 %v367, 0.0
    %v384 = vmax.f32 %v368, 0.0
    %v385 = vmax.f32 %v369, 0.0
    %v386 = vmax.f32 %v370, 0.0
    %v387 = vmax.f32 %v371, 0.0
    %v388 = vmax.f32 %v372, 0.0
    %v389 = vmax.f32 %v373, 0.0
    %v390 = vmax.f32 %v374, 0.0
    %v391 = vmax.f32 %v375, 0.0
    %392 = vst [vmem:[%s4] sm:$0xff] %v376
    %393 = vst [vmem:[%s4 + $0x8] sm:$0xff] %v377
    %394 = vst [vmem:[%s4 + $0x10] sm:$0xff] %v378
    %395 = vst [vmem:[%s4 + $0x18] sm:$0xff] %v379
    %396 = vst [vmem:[%s4 + $0x20] sm:$0xff] %v380
    %397 = vst [vmem:[%s4 + $0x28] sm:$0xff] %v381
    %398 = vst [vmem:[%s4 + $0x30] sm:$0xff] %v382
    %399 = vst [vmem:[%s4 + $0x38] sm:$0xff] %v383
    %400 = vst [vmem:[%s4 + $0x40] sm:$0xff] %v384
    %401 = vst [vmem:[%s4 + $0x48] sm:$0xff] %v385
    %402 = vst [vmem:[%s4 + $0x50] sm:$0xff] %v386
    %403 = vst [vmem:[%s4 + $0x58] sm:$0xff] %v387
    %404 = vst [vmem:[%s4 + $0x60] sm:$0xff] %v388
    %405 = vst [vmem:[%s4 + $0x68] sm:$0xff] %v389
    %406 = vst [vmem:[%s4 + $0x70] sm:$0xff] %v390
    %407 = vst [vmem:[%s4 + $0x78] sm:$0xff] %v391
  $region25: #{_lambda_.26} parent=0 // pred_fallthru
    _
  // Predicated region
  $region26: #{_lambda_.26} parent=0 // pred_check
    _
  $region27: #{_lambda_.26} parent=0 // pred_check_branch
    %409 = sbr.rel (0) target = $region29
  $region28: #{_lambda_.26} parent=0 // pred_region
    _
  $region29: #{_lambda_.26} parent=0 // pred_fallthru
    _
  // Predicated region
  $region30: #{_lambda_.26} parent=0 // pred_check
    _
  $region31: #{_lambda_.26} parent=0 // pred_check_branch
    %411 = sbr.rel (0) target = $region33
  $region32: #{_lambda_.26} parent=0 // pred_region
    _
  $region33: #{_lambda_.26} parent=0 // pred_fallthru
    _

// kernel: _lambda_.27
$region0: #{_lambda_.27}
  #allocation0 [shape = 'u32[]', space=smem, size = 0x4, offset = 0x4, fixed_abs, tag = 'smem constant byte address 0x4 - core index']
  #allocation1 [shape = 'u32[144,128]{1,0:T(1,128)}', space=vmem, size = 0x12000, scoped, tag = 'internal scratch']
  #allocation2 [shape = 'f32[128,128]{1,0:T(8,128)}', space=vmem, size = 0x10000, scoped, tag = 'scratch operand']
  %s0 = inlined_call_operand.vmem [shape: bf16[128,128], index: 0, kind: input, shape index: {}]
  %s1 = inlined_call_operand.vmem [shape: bf16[128,128], index: 1, kind: input, shape index: {}]
  %s2 = inlined_call_operand.vmem [shape: f32[1,128], index: 2, kind: input, shape index: {}]
  %s3 = inlined_call_operand.vmem [shape: f32[1,128], index: 3, kind: input, shape index: {}]
  %s4 = inlined_call_operand.vmem [shape: f32[128,128], index: 4, kind: output, shape index: {}]
  %s5 = sld [smem:[#allocation0]]
  $region34: #{_lambda_.27} parent=0
    _
  %s7 = ssub.s32 1, %s5
  %s8 = scalar_select 0, %s7, %s5
  // Predicated region
  $region2: #{_lambda_.27} parent=0 // pred_check
    _
  $region3: #{_lambda_.27} parent=0 // pred_check_branch
    %10 = sbr.rel (0) target = $region5
  $region4: #{_lambda_.27} parent=0 // pred_region
    _
  $region5: #{_lambda_.27} parent=0 // pred_fallthru
    _
  // Predicated region
  $region6: #{_lambda_.27} parent=0 // pred_check
    _
  $region7: #{_lambda_.27} parent=0 // pred_check_branch
    %12 = sbr.rel (0) target = $region9
  $region8: #{_lambda_.27} parent=0 // pred_region
    _
  $region9: #{_lambda_.27} parent=0 // pred_fallthru
    _
  // Predicated region
  $region10: #{_lambda_.27} parent=0 // pred_check
    _
  $region11: #{_lambda_.27} parent=0 // pred_check_branch
    %14 = sbr.rel (0) target = $region13
  $region12: #{_lambda_.27} parent=0 // pred_region
    _
  $region13: #{_lambda_.27} parent=0 // pred_fallthru
    _
  // Predicated region
  $region14: #{_lambda_.27} parent=0 // pred_check
    _
  $region15: #{_lambda_.27} parent=0 // pred_check_branch
    %16 = sbr.rel (0) target = $region17
  $region16: #{_lambda_.27} parent=0 // pred_region
    _
  $region17: #{_lambda_.27} parent=0 // pred_fallthru
    _
  %p18 = scmp.eq.s32.totalorder 0, 0
  // Predicated region
  $region18: #{_lambda_.27} parent=0 // pred_check
    %p19 = pneg %p18
  $region19: #{_lambda_.27} parent=0 // pred_check_branch
    %21 = sbr.rel (%p19) target = $region21
  $region20: #{_lambda_.27} parent=0 // pred_region
    %22 = vst [vmem:[#allocation2] sm:$0xff] 0.0
    %23 = vst [vmem:[#allocation2 + $0x8] sm:$0xff] 0.0
    %24 = vst [vmem:[#allocation2 + $0x10] sm:$0xff] 0.0
    %25 = vst [vmem:[#allocation2 + $0x18] sm:$0xff] 0.0
    %26 = vst [vmem:[#allocation2 + $0x20] sm:$0xff] 0.0
    %27 = vst [vmem:[#allocation2 + $0x28] sm:$0xff] 0.0
    %28 = vst [vmem:[#allocation2 + $0x30] sm:$0xff] 0.0
    %29 = vst [vmem:[#allocation2 + $0x38] sm:$0xff] 0.0
    %30 = vst [vmem:[#allocation2 + $0x40] sm:$0xff] 0.0
    %31 = vst [vmem:[#allocation2 + $0x48] sm:$0xff] 0.0
    %32 = vst [vmem:[#allocation2 + $0x50] sm:$0xff] 0.0
    %33 = vst [vmem:[#allocation2 + $0x58] sm:$0xff] 0.0
    %34 = vst [vmem:[#allocation2 + $0x60] sm:$0xff] 0.0
    %35 = vst [vmem:[#allocation2 + $0x68] sm:$0xff] 0.0
    %36 = vst [vmem:[#allocation2 + $0x70] sm:$0xff] 0.0
    %37 = vst [vmem:[#allocation2 + $0x78] sm:$0xff] 0.0
  $region21: #{_lambda_.27} parent=0 // pred_fallthru
    _
  %v38 = vld [vmem:[#allocation2] sm:$0xff]
  %v39 = vld [vmem:[#allocation2 + $0x8] sm:$0xff]
  %v40 = vld [vmem:[#allocation2 + $0x10] sm:$0xff]
  %v41 = vld [vmem:[#allocation2 + $0x18] sm:$0xff]
  %v42 = vld [vmem:[#allocation2 + $0x20] sm:$0xff]
  %v43 = vld [vmem:[#allocation2 + $0x28] sm:$0xff]
  %v44 = vld [vmem:[#allocation2 + $0x30] sm:$0xff]
  %v45 = vld [vmem:[#allocation2 + $0x38] sm:$0xff]
  %v46 = vld [vmem:[#allocation2 + $0x40] sm:$0xff]
  %v47 = vld [vmem:[#allocation2 + $0x48] sm:$0xff]
  %v48 = vld [vmem:[#allocation2 + $0x50] sm:$0xff]
  %v49 = vld [vmem:[#allocation2 + $0x58] sm:$0xff]
  %v50 = vld [vmem:[#allocation2 + $0x60] sm:$0xff]
  %v51 = vld [vmem:[#allocation2 + $0x68] sm:$0xff]
  %v52 = vld [vmem:[#allocation2 + $0x70] sm:$0xff]
  %v53 = vld [vmem:[#allocation2 + $0x78] sm:$0xff]
  %v54 = vld [vmem:[%s0] sm:$0xf]
  %v55 = vld [vmem:[%s0 + $0x4] sm:$0xf]
  %v56 = vld [vmem:[%s0 + $0x8] sm:$0xf]
  %v57 = vld [vmem:[%s0 + $0xc] sm:$0xf]
  %v58 = vld [vmem:[%s0 + $0x10] sm:$0xf]
  %v59 = vld [vmem:[%s0 + $0x14] sm:$0xf]
  %v60 = vld [vmem:[%s0 + $0x18] sm:$0xf]
  %v61 = vld [vmem:[%s0 + $0x1c] sm:$0xf]
  %v62 = vld [vmem:[%s0 + $0x20] sm:$0xf]
  %v63 = vld [vmem:[%s0 + $0x24] sm:$0xf]
  %v64 = vld [vmem:[%s0 + $0x28] sm:$0xf]
  %v65 = vld [vmem:[%s0 + $0x2c] sm:$0xf]
  %v66 = vld [vmem:[%s0 + $0x30] sm:$0xf]
  %v67 = vld [vmem:[%s0 + $0x34] sm:$0xf]
  %v68 = vld [vmem:[%s0 + $0x38] sm:$0xf]
  %v69 = vld [vmem:[%s0 + $0x3c] sm:$0xf]
  %v70 = vld [vmem:[%s1] sm:$0xf]
  %v71 = vld [vmem:[%s1 + $0x4] sm:$0xf]
  %v72 = vld [vmem:[%s1 + $0x8] sm:$0xf]
  %v73 = vld [vmem:[%s1 + $0xc] sm:$0xf]
  %v74 = vld [vmem:[%s1 + $0x10] sm:$0xf]
  %v75 = vld [vmem:[%s1 + $0x14] sm:$0xf]
  %v76 = vld [vmem:[%s1 + $0x18] sm:$0xf]
  %v77 = vld [vmem:[%s1 + $0x1c] sm:$0xf]
  %v78 = vld [vmem:[%s1 + $0x20] sm:$0xf]
  %v79 = vld [vmem:[%s1 + $0x24] sm:$0xf]
  %v80 = vld [vmem:[%s1 + $0x28] sm:$0xf]
  %v81 = vld [vmem:[%s1 + $0x2c] sm:$0xf]
  %v82 = vld [vmem:[%s1 + $0x30] sm:$0xf]
  %v83 = vld [vmem:[%s1 + $0x34] sm:$0xf]
  %v84 = vld [vmem:[%s1 + $0x38] sm:$0xf]
  %v85 = vld [vmem:[%s1 + $0x3c] sm:$0xf]
  %v102 = vunpack.c.l.b16 %v54
  %v103 = vunpack.c.l.b16 %v55
  %v104 = vunpack.c.l.b16 %v56
  %v105 = vunpack.c.l.b16 %v57
  %v106 = vunpack.c.l.b16 %v58
  %v107 = vunpack.c.l.b16 %v59
  %v108 = vunpack.c.l.b16 %v60
  %v109 = vunpack.c.l.b16 %v61
  %v110 = vunpack.c.l.b16 %v62
  %v111 = vunpack.c.l.b16 %v63
  %v112 = vunpack.c.l.b16 %v64
  %v113 = vunpack.c.l.b16 %v65
  %v114 = vunpack.c.l.b16 %v66
  %v115 = vunpack.c.l.b16 %v67
  %v116 = vunpack.c.l.b16 %v68
  %v117 = vunpack.c.l.b16 %v69
  %v118 = vpack.c.b16 %v103, %v102
  %v119 = vpack.c.b16 %v105, %v104
  %v120 = vpack.c.b16 %v107, %v106
  %v121 = vpack.c.b16 %v109, %v108
  %v122 = vpack.c.b16 %v111, %v110
  %v123 = vpack.c.b16 %v113, %v112
  %v124 = vpack.c.b16 %v115, %v114
  %v125 = vpack.c.b16 %v117, %v116
  %v150 = vunpack.c.l.b16 %v70
  %v151 = vunpack.c.l.b16 %v71
  %v152 = vunpack.c.l.b16 %v72
  %v153 = vunpack.c.l.b16 %v73
  %v154 = vunpack.c.l.b16 %v74
  %v155 = vunpack.c.l.b16 %v75
  %v156 = vunpack.c.l.b16 %v76
  %v157 = vunpack.c.l.b16 %v77
  %v158 = vunpack.c.l.b16 %v78
  %v159 = vunpack.c.l.b16 %v79
  %v160 = vunpack.c.l.b16 %v80
  %v161 = vunpack.c.l.b16 %v81
  %v162 = vunpack.c.l.b16 %v82
  %v163 = vunpack.c.l.b16 %v83
  %v164 = vunpack.c.l.b16 %v84
  %v165 = vunpack.c.l.b16 %v85
  %v166 = vpack.c.b16 %v151, %v150
  %v167 = vpack.c.b16 %v153, %v152
  %v168 = vpack.c.b16 %v155, %v154
  %v169 = vpack.c.b16 %v157, %v156
  %v170 = vpack.c.b16 %v159, %v158
  %v171 = vpack.c.b16 %v161, %v160
  %v172 = vpack.c.b16 %v163, %v162
  %v173 = vpack.c.b16 %v165, %v164
  %182 = vmatprep.subr.bf16.mxu0 0
  %183 = vmatpush1.bf16.msra.mxu0 %v166
  %184 = vmatprep.subr.bf16.mxu0 0
  %185 = vmatpush1.bf16.msra.mxu0 %v167
  %186 = vmatprep.subr.bf16.mxu0 0
  %187 = vmatpush1.bf16.msra.mxu0 %v168
  %188 = vmatprep.subr.bf16.mxu0 0
  %189 = vmatpush1.bf16.msra.mxu0 %v169
  %190 = vmatprep.subr.bf16.mxu0 0
  %191 = vmatpush1.bf16.msra.mxu0 %v170
  %192 = vmatprep.subr.bf16.mxu0 0
  %193 = vmatpush1.bf16.msra.mxu0 %v171
  %194 = vmatprep.subr.bf16.mxu0 0
  %195 = vmatpush1.bf16.msra.mxu0 %v172
  %196 = vmatprep.subr.bf16.mxu0 0
  %197 = vmatpush1.bf16.msra.mxu0 %v173
  %198 = vmatprep.subr.bf16.mxu0 0
  %199 = vmatpush1.bf16.msra.mxu0 0
  %200 = vmatprep.subr.bf16.mxu0 0
  %201 = vmatpush1.bf16.msra.mxu0 0
  %202 = vmatprep.subr.bf16.mxu0 0
  %203 = vmatpush1.bf16.msra.mxu0 0
  %204 = vmatprep.subr.bf16.mxu0 0
  %205 = vmatpush1.bf16.msra.mxu0 0
  %206 = vmatprep.subr.bf16.mxu0 0
  %207 = vmatpush1.bf16.msra.mxu0 0
  %208 = vmatprep.subr.bf16.mxu0 0
  %209 = vmatpush1.bf16.msra.mxu0 0
  %210 = vmatprep.subr.bf16.mxu0 0
  %211 = vmatpush1.bf16.msra.mxu0 0
  %212 = vmatprep.subr.bf16.mxu0 0
  %213 = vmatpush1.bf16.msra.mxu0 0
  %214 = vmatprep.mubr.bf16.mxu0 0
  %215 = vmatmul.mubr.bf16.gmra.mrb[0].mxu0 %v118
  %v216 = vpop.f32.mrb[0].mxu0
  %v217 = vadd.f32 0.0, %v216
  %v218 = vpop.f32.mrb[0].mxu0
  %v219 = vpop.f32.mrb[0].mxu0
  %v220 = vadd.f32 0.0, %v219
  %v221 = vpop.f32.mrb[0].mxu0
  %222 = vmatprep.mubr.bf16.mxu0 0
  %223 = vmatmul.mubr.bf16.gmra.mrb[0].mxu0 %v119
  %v224 = vpop.f32.mrb[0].mxu0
  %v225 = vadd.f32 0.0, %v224
  %v226 = vpop.f32.mrb[0].mxu0
  %v227 = vpop.f32.mrb[0].mxu0
  %v228 = vadd.f32 0.0, %v227
  %v229 = vpop.f32.mrb[0].mxu0
  %230 = vmatprep.mubr.bf16.mxu0 0
  %231 = vmatmul.mubr.bf16.gmra.mrb[0].mxu0 %v120
  %v232 = vpop.f32.mrb[0].mxu0
  %v233 = vadd.f32 0.0, %v232
  %v234 = vpop.f32.mrb[0].mxu0
  %v235 = vpop.f32.mrb[0].mxu0
  %v236 = vadd.f32 0.0, %v235
  %v237 = vpop.f32.mrb[0].mxu0
  %238 = vmatprep.mubr.bf16.mxu0 0
  %239 = vmatmul.mubr.bf16.gmra.mrb[0].mxu0 %v121
  %v240 = vpop.f32.mrb[0].mxu0
  %v241 = vadd.f32 0.0, %v240
  %v242 = vpop.f32.mrb[0].mxu0
  %v243 = vpop.f32.mrb[0].mxu0
  %v244 = vadd.f32 0.0, %v243
  %v245 = vpop.f32.mrb[0].mxu0
  %246 = vmatprep.mubr.bf16.mxu0 0
  %247 = vmatmul.mubr.bf16.gmra.mrb[0].mxu0 %v122
  %v248 = vpop.f32.mrb[0].mxu0
  %v249 = vadd.f32 0.0, %v248
  %v250 = vpop.f32.mrb[0].mxu0
  %v251 = vpop.f32.mrb[0].mxu0
  %v252 = vadd.f32 0.0, %v251
  %v253 = vpop.f32.mrb[0].mxu0
  %254 = vmatprep.mubr.bf16.mxu0 0
  %255 = vmatmul.mubr.bf16.gmra.mrb[0].mxu0 %v123
  %v256 = vpop.f32.mrb[0].mxu0
  %v257 = vadd.f32 0.0, %v256
  %v258 = vpop.f32.mrb[0].mxu0
  %v259 = vpop.f32.mrb[0].mxu0
  %v260 = vadd.f32 0.0, %v259
  %v261 = vpop.f32.mrb[0].mxu0
  %262 = vmatprep.mubr.bf16.mxu0 0
  %263 = vmatmul.mubr.bf16.gmra.mrb[0].mxu0 %v124
  %v264 = vpop.f32.mrb[0].mxu0
  %v265 = vadd.f32 0.0, %v264
  %v266 = vpop.f32.mrb[0].mxu0
  %v267 = vpop.f32.mrb[0].mxu0
  %v268 = vadd.f32 0.0, %v267
  %v269 = vpop.f32.mrb[0].mxu0
  %270 = vmatprep.mubr.bf16.mxu0 0
  %271 = vmatmul.mubr.bf16.gmra.mrb[0].mxu0 %v125
  %v272 = vpop.f32.mrb[0].mxu0
  %v273 = vadd.f32 0.0, %v272
  %v274 = vpop.f32.mrb[0].mxu0
  %v275 = vpop.f32.mrb[0].mxu0
  %v276 = vadd.f32 0.0, %v275
  %v277 = vpop.f32.mrb[0].mxu0
  %278 = vdwg.mxu0
  %v279 = vadd.f32 %v38, %v217
  %v280 = vadd.f32 %v39, %v220
  %v281 = vadd.f32 %v40, %v225
  %v282 = vadd.f32 %v41, %v228
  %v283 = vadd.f32 %v42, %v233
  %v284 = vadd.f32 %v43, %v236
  %v285 = vadd.f32 %v44, %v241
  %v286 = vadd.f32 %v45, %v244
  %v287 = vadd.f32 %v46, %v249
  %v288 = vadd.f32 %v47, %v252
  %v289 = vadd.f32 %v48, %v257
  %v290 = vadd.f32 %v49, %v260
  %v291 = vadd.f32 %v50, %v265
  %v292 = vadd.f32 %v51, %v268
  %v293 = vadd.f32 %v52, %v273
  %v294 = vadd.f32 %v53, %v276
  %295 = vst [vmem:[#allocation2] sm:$0xff] %v279
  %296 = vst [vmem:[#allocation2 + $0x8] sm:$0xff] %v280
  %297 = vst [vmem:[#allocation2 + $0x10] sm:$0xff] %v281
  %298 = vst [vmem:[#allocation2 + $0x18] sm:$0xff] %v282
  %299 = vst [vmem:[#allocation2 + $0x20] sm:$0xff] %v283
  %300 = vst [vmem:[#allocation2 + $0x28] sm:$0xff] %v284
  %301 = vst [vmem:[#allocation2 + $0x30] sm:$0xff] %v285
  %302 = vst [vmem:[#allocation2 + $0x38] sm:$0xff] %v286
  %303 = vst [vmem:[#allocation2 + $0x40] sm:$0xff] %v287
  %304 = vst [vmem:[#allocation2 + $0x48] sm:$0xff] %v288
  %305 = vst [vmem:[#allocation2 + $0x50] sm:$0xff] %v289
  %306 = vst [vmem:[#allocation2 + $0x58] sm:$0xff] %v290
  %307 = vst [vmem:[#allocation2 + $0x60] sm:$0xff] %v291
  %308 = vst [vmem:[#allocation2 + $0x68] sm:$0xff] %v292
  %309 = vst [vmem:[#allocation2 + $0x70] sm:$0xff] %v293
  %310 = vst [vmem:[#allocation2 + $0x78] sm:$0xff] %v294
  // Predicated region
  $region22: #{_lambda_.27} parent=0 // pred_check
    %p311 = pneg %p18
  $region23: #{_lambda_.27} parent=0 // pred_check_branch
    %313 = sbr.rel (%p311) target = $region25
  $region24: #{_lambda_.27} parent=0 // pred_region
    %v314 = vld [vmem:[#allocation2] sm:$0xff]
    %v315 = vld [vmem:[#allocation2 + $0x8] sm:$0xff]
    %v316 = vld [vmem:[#allocation2 + $0x10] sm:$0xff]
    %v317 = vld [vmem:[#allocation2 + $0x18] sm:$0xff]
    %v318 = vld [vmem:[#allocation2 + $0x20] sm:$0xff]
    %v319 = vld [vmem:[#allocation2 + $0x28] sm:$0xff]
    %v320 = vld [vmem:[#allocation2 + $0x30] sm:$0xff]
    %v321 = vld [vmem:[#allocation2 + $0x38] sm:$0xff]
    %v322 = vld [vmem:[#allocation2 + $0x40] sm:$0xff]
    %v323 = vld [vmem:[#allocation2 + $0x48] sm:$0xff]
    %v324 = vld [vmem:[#allocation2 + $0x50] sm:$0xff]
    %v325 = vld [vmem:[#allocation2 + $0x58] sm:$0xff]
    %v326 = vld [vmem:[#allocation2 + $0x60] sm:$0xff]
    %v327 = vld [vmem:[#allocation2 + $0x68] sm:$0xff]
    %v328 = vld [vmem:[#allocation2 + $0x70] sm:$0xff]
    %v329 = vld [vmem:[#allocation2 + $0x78] sm:$0xff]
    %v330 = vld [vmem:[%s2] sm:$0x1]
    %v332 = vlaneseq
    %v333 = vshrl.u32 %v332, 7
    %v334 = vsub.s32 0, %v333
    %v335 = vrot.slane %v330, %v334
    %v337 = vmul.f32 %v314, %v335
    %v338 = vmul.f32 %v315, %v335
    %v339 = vmul.f32 %v316, %v335
    %v340 = vmul.f32 %v317, %v335
    %v341 = vmul.f32 %v318, %v335
    %v342 = vmul.f32 %v319, %v335
    %v343 = vmul.f32 %v320, %v335
    %v344 = vmul.f32 %v321, %v335
    %v345 = vmul.f32 %v322, %v335
    %v346 = vmul.f32 %v323, %v335
    %v347 = vmul.f32 %v324, %v335
    %v348 = vmul.f32 %v325, %v335
    %v349 = vmul.f32 %v326, %v335
    %v350 = vmul.f32 %v327, %v335
    %v351 = vmul.f32 %v328, %v335
    %v352 = vmul.f32 %v329, %v335
    %v353 = vld [vmem:[%s3] sm:$0x1]
    %v355 = vlaneseq
    %v356 = vshrl.u32 %v355, 7
    %v357 = vsub.s32 0, %v356
    %v358 = vrot.slane %v353, %v357
    %v360 = vadd.f32 %v337, %v358
    %v361 = vadd.f32 %v338, %v358
    %v362 = vadd.f32 %v339, %v358
    %v363 = vadd.f32 %v340, %v358
    %v364 = vadd.f32 %v341, %v358
    %v365 = vadd.f32 %v342, %v358
    %v366 = vadd.f32 %v343, %v358
    %v367 = vadd.f32 %v344, %v358
    %v368 = vadd.f32 %v345, %v358
    %v369 = vadd.f32 %v346, %v358
    %v370 = vadd.f32 %v347, %v358
    %v371 = vadd.f32 %v348, %v358
    %v372 = vadd.f32 %v349, %v358
    %v373 = vadd.f32 %v350, %v358
    %v374 = vadd.f32 %v351, %v358
    %v375 = vadd.f32 %v352, %v358
    %376 = vst [vmem:[%s4] sm:$0xff] %v360
    %377 = vst [vmem:[%s4 + $0x8] sm:$0xff] %v361
    %378 = vst [vmem:[%s4 + $0x10] sm:$0xff] %v362
    %379 = vst [vmem:[%s4 + $0x18] sm:$0xff] %v363
    %380 = vst [vmem:[%s4 + $0x20] sm:$0xff] %v364
    %381 = vst [vmem:[%s4 + $0x28] sm:$0xff] %v365
    %382 = vst [vmem:[%s4 + $0x30] sm:$0xff] %v366
    %383 = vst [vmem:[%s4 + $0x38] sm:$0xff] %v367
    %384 = vst [vmem:[%s4 + $0x40] sm:$0xff] %v368
    %385 = vst [vmem:[%s4 + $0x48] sm:$0xff] %v369
    %386 = vst [vmem:[%s4 + $0x50] sm:$0xff] %v370
    %387 = vst [vmem:[%s4 + $0x58] sm:$0xff] %v371
    %388 = vst [vmem:[%s4 + $0x60] sm:$0xff] %v372
    %389 = vst [vmem:[%s4 + $0x68] sm:$0xff] %v373
    %390 = vst [vmem:[%s4 + $0x70] sm:$0xff] %v374
    %391 = vst [vmem:[%s4 + $0x78] sm:$0xff] %v375
  $region25: #{_lambda_.27} parent=0 // pred_fallthru
    _
  // Predicated region
  $region26: #{_lambda_.27} parent=0 // pred_check
    _
  $region27: #{_lambda_.27} parent=0 // pred_check_branch
    %393 = sbr.rel (0) target = $region29
  $region28: #{_lambda_.27} parent=0 // pred_region
    _
  $region29: #{_lambda_.27} parent=0 // pred_fallthru
    _
  // Predicated region
  $region30: #{_lambda_.27} parent=0 // pred_check
    _
  $region31: #{_lambda_.27} parent=0 // pred_check_branch
    %395 = sbr.rel (0) target = $region33
  $region32: #{_lambda_.27} parent=0 // pred_region
    _
  $region33: #{_lambda_.27} parent=0 // pred_fallthru
    _

// kernel: _lambda_.29
$region0: #{_lambda_.29}
  #allocation0 [shape = 'u32[]', space=smem, size = 0x4, offset = 0x4, fixed_abs, tag = 'smem constant byte address 0x4 - core index']
  #allocation1 [shape = 'u32[144,128]{1,0:T(1,128)}', space=vmem, size = 0x12000, scoped, tag = 'internal scratch']
  %s0 = inlined_call_operand.vmem [shape: f32[2,64,16], index: 0, kind: input, shape index: {}]
  %s1 = inlined_call_operand.vmem [shape: f32[16,2], index: 1, kind: input, shape index: {}]
  %s2 = inlined_call_operand.vmem [shape: f32[1,2], index: 2, kind: input, shape index: {}]
  %s3 = inlined_call_operand.vmem [shape: f32[2,16], index: 3, kind: input, shape index: {}]
  %s4 = inlined_call_operand.vmem [shape: f32[1,16], index: 4, kind: input, shape index: {}]
  %s5 = inlined_call_operand.vmem [shape: f32[2,64,16], index: 5, kind: output, shape index: {}]
  %s6 = sld [smem:[#allocation0]]
  $region53: #{_lambda_.29} parent=0
    _
  %s8 = ssub.s32 1, %s6
  %s9 = scalar_select 0, %s8, %s6
  loop: start=0, step=1, limit=4
  $region2: #{_lambda_.29} parent=0 // loop_pre_header
    _
  $region3: #{_lambda_.29} parent=0 // loop_header
    %s11 = sphi 0, %s15
    %p12 = scmp.ge.s32.totalorder %s11, 4
    %s21 = sphi 0, %s23
    %s24 = sphi 0, %s21
    %s25 = sphi 0, %s24
    %s41 = sphi 0, %s25
    %s45 = sphi 0, %s45
    %s47 = sphi 0, %s45
    %s48 = sphi 0, %s47
    %s62 = sphi 0, %s48
    %s66 = sphi 0, %s66
    %s68 = sphi 0, %s66
    %s69 = sphi 0, %s68
    %s83 = sphi 0, %s69
    %s87 = sphi 0, %s87
    %s89 = sphi 0, %s87
    %s90 = sphi 0, %s89
    %s104 = sphi 0, %s90
    %s108 = sphi 0, %s108
    %s110 = sphi 0, %s108
    %s111 = sphi 0, %s110
    %s125 = sphi 0, %s111
    %s131 = sphi 0, %s133
    %s134 = sphi 0, %s131
    %s135 = sphi 0, %s134
    %s151 = sphi 0, %s135
  $region4: #{_lambda_.29} parent=0 // loop_header_branch
    %14 = sbr.rel (%p12) target = $region8
  $region5: #{_lambda_.29} parent=0 // loop_body
    %s16 = ssub.s32 %s11, 1
    %s17 = ssub.s32 %s11, 2
    %s18 = sadd.s32 %s11, 1
    %s19 = ssub.s32 %s11, %s18
    %p20 = scmp.eq.s32.totalorder %s19, 0
    %s22 = sadd.s32 %s21, 1
    %s23 = scalar_select %p20, %s21, %s22
    %p26 = pneg %p20
    %p27 = scmp.eq.s32.totalorder %s11, 1
    %p28 = por %p26, %p27
    %p29 = scmp.ne.s32.totalorder %s21, %s24
    %p30 = scmp.eq.s32.totalorder %s11, 0
    %p31 = por %p29, %p30
    %p32 = scmp.ne.s32.totalorder %s21, %s24
    %p33 = scmp.eq.s32.totalorder %s16, 1
    %p34 = por %p32, %p33
    %p35 = scmp.ne.s32.totalorder %s24, %s25
    %p36 = scmp.eq.s32.totalorder %s16, 0
    %p37 = por %p35, %p36
    %p38 = scmp.ne.s32.totalorder %s24, %s25
    %p39 = scmp.eq.s32.totalorder %s17, 1
    %p40 = por %p38, %p39
    %p42 = scmp.ne.s32.totalorder %s25, %s41
    %p43 = scmp.eq.s32.totalorder %s17, 0
    %p44 = por %p42, %p43
    %s46 = sadd.s32 %s45, 1
    %p49 = scmp.eq.s32.totalorder %s11, 1
    %p50 = scmp.ne.s32.totalorder %s45, %s47
    %p51 = scmp.eq.s32.totalorder %s11, 0
    %p52 = por %p50, %p51
    %p53 = scmp.ne.s32.totalorder %s45, %s47
    %p54 = scmp.eq.s32.totalorder %s16, 1
    %p55 = por %p53, %p54
    %p56 = scmp.ne.s32.totalorder %s47, %s48
    %p57 = scmp.eq.s32.totalorder %s16, 0
    %p58 = por %p56, %p57
    %p59 = scmp.ne.s32.totalorder %s47, %s48
    %p60 = scmp.eq.s32.totalorder %s17, 1
    %p61 = por %p59, %p60
    %p63 = scmp.ne.s32.totalorder %s48, %s62
    %p64 = scmp.eq.s32.totalorder %s17, 0
    %p65 = por %p63, %p64
    %s67 = sadd.s32 %s66, 1
    %p70 = scmp.eq.s32.totalorder %s11, 1
    %p71 = scmp.ne.s32.totalorder %s66, %s68
    %p72 = scmp.eq.s32.totalorder %s11, 0
    %p73 = por %p71, %p72
    %p74 = scmp.ne.s32.totalorder %s66, %s68
    %p75 = scmp.eq.s32.totalorder %s16, 1
    %p76 = por %p74, %p75
    %p77 = scmp.ne.s32.totalorder %s68, %s69
    %p78 = scmp.eq.s32.totalorder %s16, 0
    %p79 = por %p77, %p78
    %p80 = scmp.ne.s32.totalorder %s68, %s69
    %p81 = scmp.eq.s32.totalorder %s17, 1
    %p82 = por %p80, %p81
    %p84 = scmp.ne.s32.totalorder %s69, %s83
    %p85 = scmp.eq.s32.totalorder %s17, 0
    %p86 = por %p84, %p85
    %s88 = sadd.s32 %s87, 1
    %p91 = scmp.eq.s32.totalorder %s11, 1
    %p92 = scmp.ne.s32.totalorder %s87, %s89
    %p93 = scmp.eq.s32.totalorder %s11, 0
    %p94 = por %p92, %p93
    %p95 = scmp.ne.s32.totalorder %s87, %s89
    %p96 = scmp.eq.s32.totalorder %s16, 1
    %p97 = por %p95, %p96
    %p98 = scmp.ne.s32.totalorder %s89, %s90
    %p99 = scmp.eq.s32.totalorder %s16, 0
    %p100 = por %p98, %p99
    %p101 = scmp.ne.s32.totalorder %s89, %s90
    %p102 = scmp.eq.s32.totalorder %s17, 1
    %p103 = por %p101, %p102
    %p105 = scmp.ne.s32.totalorder %s90, %s104
    %p106 = scmp.eq.s32.totalorder %s17, 0
    %p107 = por %p105, %p106
    %s109 = sadd.s32 %s108, 1
    %p112 = scmp.eq.s32.totalorder %s11, 1
    %p113 = scmp.ne.s32.totalorder %s108, %s110
    %p114 = scmp.eq.s32.totalorder %s11, 0
    %p115 = por %p113, %p114
    %p116 = scmp.ne.s32.totalorder %s108, %s110
    %p117 = scmp.eq.s32.totalorder %s16, 1
    %p118 = por %p116, %p117
    %p119 = scmp.ne.s32.totalorder %s110, %s111
    %p120 = scmp.eq.s32.totalorder %s16, 0
    %p121 = por %p119, %p120
    %p122 = scmp.ne.s32.totalorder %s110, %s111
    %p123 = scmp.eq.s32.totalorder %s17, 1
    %p124 = por %p122, %p123
    %p126 = scmp.ne.s32.totalorder %s111, %s125
    %p127 = scmp.eq.s32.totalorder %s17, 0
    %p128 = por %p126, %p127
    %s129 = ssub.s32 %s11, %s18
    %p130 = scmp.eq.s32.totalorder %s129, 0
    %s132 = sadd.s32 %s131, 1
    %s133 = scalar_select %p130, %s131, %s132
    %p136 = pneg %p130
    %p137 = scmp.eq.s32.totalorder %s11, 1
    %p138 = por %p136, %p137
    %p139 = scmp.ne.s32.totalorder %s131, %s134
    %p140 = scmp.eq.s32.totalorder %s11, 0
    %p141 = por %p139, %p140
    %p142 = scmp.ne.s32.totalorder %s131, %s134
    %p143 = scmp.eq.s32.totalorder %s16, 1
    %p144 = por %p142, %p143
    %p145 = scmp.ne.s32.totalorder %s134, %s135
    %p146 = scmp.eq.s32.totalorder %s16, 0
    %p147 = por %p145, %p146
    %p148 = scmp.ne.s32.totalorder %s134, %s135
    %p149 = scmp.eq.s32.totalorder %s17, 1
    %p150 = por %p148, %p149
    %p152 = scmp.ne.s32.totalorder %s135, %s151
    %p153 = scmp.eq.s32.totalorder %s17, 0
    %p154 = por %p152, %p153
    %p155 = scmp.le.s32.totalorder 1, %s11
    %p156 = scmp.lt.s32.totalorder %s11, 3
    %p157 = pnand %p155, %p156
    %p158 = pneg %p157
    // Predicated region
    $region9: #{_lambda_.29} parent=5 // pred_check
      _
    $region10: #{_lambda_.29} parent=5 // pred_check_branch
      %160 = sbr.rel (%p157) target = $region12
    $region11: #{_lambda_.29} parent=5 // pred_region
      %s161 = ssub.s32 %s11, 1
      // Predicated region
      $region13: #{_lambda_.29} parent=11 // pred_check
        %p162 = pneg %p58
      $region14: #{_lambda_.29} parent=11 // pred_check_branch
        %164 = sbr.rel (%p162) target = $region16
      $region15: #{_lambda_.29} parent=11 // pred_region
        _
      $region16: #{_lambda_.29} parent=11 // pred_fallthru
        _
      // Predicated region
      $region17: #{_lambda_.29} parent=11 // pred_check
        %p165 = pneg %p79
      $region18: #{_lambda_.29} parent=11 // pred_check_branch
        %167 = sbr.rel (%p165) target = $region20
      $region19: #{_lambda_.29} parent=11 // pred_region
        _
      $region20: #{_lambda_.29} parent=11 // pred_fallthru
        _
      // Predicated region
      $region21: #{_lambda_.29} parent=11 // pred_check
        %p168 = pneg %p100
      $region22: #{_lambda_.29} parent=11 // pred_check_branch
        %170 = sbr.rel (%p168) target = $region24
      $region23: #{_lambda_.29} parent=11 // pred_region
        _
      $region24: #{_lambda_.29} parent=11 // pred_fallthru
        _
      // Predicated region
      $region25: #{_lambda_.29} parent=11 // pred_check
        %p171 = pneg %p121
      $region26: #{_lambda_.29} parent=11 // pred_check_branch
        %173 = sbr.rel (%p171) target = $region28
      $region27: #{_lambda_.29} parent=11 // pred_region
        _
      $region28: #{_lambda_.29} parent=11 // pred_fallthru
        _
    $region12: #{_lambda_.29} parent=5 // pred_fallthru
      _
    %p174 = scmp.lt.s32.totalorder %s11, 2
    // Predicated region
    $region29: #{_lambda_.29} parent=5 // pred_check
      %p175 = pneg %p174
    $region30: #{_lambda_.29} parent=5 // pred_check_branch
      %177 = sbr.rel (%p175) target = $region32
    $region31: #{_lambda_.29} parent=5 // pred_region
      // Predicated region
      $region33: #{_lambda_.29} parent=31 // pred_check
        %p178 = pneg %p31
      $region34: #{_lambda_.29} parent=31 // pred_check_branch
        %180 = sbr.rel (%p178) target = $region36
      $region35: #{_lambda_.29} parent=31 // pred_region
        %p181 = scmp.lt.s32.totalorder %s11, 1
        %s182 = scalar_select %p181, %s11, 1
        %s183 = smul.addr %s182, 8
        %s184 = smul.addr %s183, 8
        %s185 = scalar_lea.vmem %s0, %s184
      $region36: #{_lambda_.29} parent=31 // pred_fallthru
        _
    $region32: #{_lambda_.29} parent=5 // pred_fallthru
      _
    %p186 = scmp.le.s32.totalorder 1, %s11
    %p187 = scmp.lt.s32.totalorder %s11, 3
    %p188 = pnand %p186, %p187
    %p189 = pneg %p188
    // Predicated region
    $region37: #{_lambda_.29} parent=5 // pred_check
      _
    $region38: #{_lambda_.29} parent=5 // pred_check_branch
      %191 = sbr.rel (%p188) target = $region40
    $region39: #{_lambda_.29} parent=5 // pred_region
      %s192 = ssub.s32 %s11, 1
      %p193 = scmp.lt.s32.totalorder %s16, 1
      %s194 = scalar_select %p193, %s16, 1
      %s195 = smul.addr %s194, 8
      %s196 = smul.addr %s195, 8
      %s197 = scalar_lea.vmem %s0, %s196
      %p198 = pneg %p37
      %p199 = pneg %p34
      %p200 = pneg %p58
      %p201 = pneg %p55
      %p202 = pneg %p79
      %p203 = pneg %p76
      %p204 = pneg %p100
      %p205 = pneg %p97
      %p206 = pneg %p121
      %p207 = pneg %p118
      %p208 = pneg %p147
      %p209 = pneg %p144
      %p210 = scmp.lt.s32.totalorder %s16, 1
      %s211 = scalar_select %p210, %s16, 1
      %s212 = smul.addr %s211, 8
      %s213 = smul.addr %s212, 8
      %s214 = scalar_lea.vmem %s5, %s213
      %p215 = scmp.lt.s32.totalorder %s16, 1
      %s216 = scalar_select %p215, %s16, 1
      %s217 = smul.addr %s216, 8
      %s218 = smul.addr %s217, 8
      %s219 = scalar_lea.vmem %s0, %s218
      %p220 = scmp.lt.s32.totalorder %s16, 1
      %s221 = scalar_select %p220, %s16, 1
      %s222 = smul.addr %s221, 8
      %s223 = smul.addr %s222, 8
      %s224 = scalar_lea.vmem %s5, %s223
      %v225 = vld [vmem:[%s219] sm:$0xff]
      %v226 = vld [vmem:[%s219 + $0x8] sm:$0xff]
      %v227 = vld [vmem:[%s219 + $0x10] sm:$0xff]
      %v228 = vld [vmem:[%s219 + $0x18] sm:$0xff]
      %v229 = vld [vmem:[%s219 + $0x20] sm:$0xff]
      %v230 = vld [vmem:[%s219 + $0x28] sm:$0xff]
      %v231 = vld [vmem:[%s219 + $0x30] sm:$0xff]
      %v232 = vld [vmem:[%s219 + $0x38] sm:$0xff]
      %vm233 = vcmask 130048
      %v234 = vsel %vm233, %v225, 0.0
      %v235 = vsel %vm233, %v226, 0.0
      %v236 = vadd.f32 %v234, %v235
      %v237 = vsel %vm233, %v227, 0.0
      %v238 = vadd.f32 %v236, %v237
      %v239 = vsel %vm233, %v228, 0.0
      %v240 = vadd.f32 %v238, %v239
      %v241 = vsel %vm233, %v229, 0.0
      %v242 = vadd.f32 %v240, %v241
      %v243 = vsel %vm233, %v230, 0.0
      %v244 = vadd.f32 %v242, %v243
      %v245 = vsel %vm233, %v231, 0.0
      %v246 = vadd.f32 %v244, %v245
      %v247 = vsel %vm233, %v232, 0.0
      %v248 = vadd.f32 %v246, %v247
      %v249 = vrot.slane %v248, 4
      %v250 = vadd.f32 %v248, %v249
      %v251 = vrot.slane %v250, 2
      %v252 = vadd.f32 %v250, %v251
      %v253 = vrot.slane %v252, 1
      %v254 = vadd.f32 %v252, %v253
      %v255 = vrcp.pop 64.0
      %v256 = vmul.f32 %v254, %v255
      %v257 = vld [vmem:[%s1] sm:$0xff]
      %v258 = vld [vmem:[%s1 + $0x8] sm:$0xff]
      %v259 = vld [vmem:[%s2] sm:$0x1]
      %v261 = vsel %vm233, %v256, 0
      %263 = vmatprep.subr.mxu0 0.0
      %264 = vmatpush1.msra.mxu0 %v257
      %265 = vmatprep.subr.mxu0 0.0
      %266 = vmatpush1.msra.mxu0 %v258
      %267 = vmatprep.subr.mxu0 0.0
      %268 = vmatpush1.msra.mxu0 0.0
      %269 = vmatprep.subr.mxu0 0.0
      %270 = vmatpush1.msra.mxu0 0.0
      %271 = vmatprep.subr.mxu0 0.0
      %272 = vmatpush1.msra.mxu0 0.0
      %273 = vmatprep.subr.mxu0 0.0
      %274 = vmatpush1.msra.mxu0 0.0
      %275 = vmatprep.subr.mxu0 0.0
      %276 = vmatpush1.msra.mxu0 0.0
      %277 = vmatprep.subr.mxu0 0.0
      %278 = vmatpush1.msra.mxu0 0.0
      %279 = vmatprep.subr.mxu0 0.0
      %280 = vmatpush1.msra.mxu0 0.0
      %281 = vmatprep.subr.mxu0 0.0
      %282 = vmatpush1.msra.mxu0 0.0
      %283 = vmatprep.subr.mxu0 0.0
      %284 = vmatpush1.msra.mxu0 0.0
      %285 = vmatprep.subr.mxu0 0.0
      %286 = vmatpush1.msra.mxu0 0.0
      %287 = vmatprep.subr.mxu0 0.0
      %288 = vmatpush1.msra.mxu0 0.0
      %289 = vmatprep.subr.mxu0 0.0
      %290 = vmatpush1.msra.mxu0 0.0
      %291 = vmatprep.subr.mxu0 0.0
      %292 = vmatpush1.msra.mxu0 0.0
      %293 = vmatprep.subr.mxu0 0.0
      %294 = vmatpush1.msra.mxu0 0.0
      %295 = vmatprep.subr.mxu0 0.0
      %296 = vmatpush1.msra.mxu0 0.0
      %297 = vmatprep.subr.mxu0 0.0
      %298 = vmatpush1.msra.mxu0 0.0
      %299 = vmatprep.subr.mxu0 0.0
      %300 = vmatpush1.msra.mxu0 0.0
      %301 = vmatprep.subr.mxu0 0.0
      %302 = vmatpush1.msra.mxu0 0.0
      %303 = vmatprep.subr.mxu0 0.0
      %304 = vmatpush1.msra.mxu0 0.0
      %305 = vmatprep.subr.mxu0 0.0
      %306 = vmatpush1.msra.mxu0 0.0
      %307 = vmatprep.subr.mxu0 0.0
      %308 = vmatpush1.msra.mxu0 0.0
      %309 = vmatprep.subr.mxu0 0.0
      %310 = vmatpush1.msra.mxu0 0.0
      %311 = vmatprep.subr.mxu0 0.0
      %312 = vmatpush1.msra.mxu0 0.0
      %313 = vmatprep.subr.mxu0 0.0
      %314 = vmatpush1.msra.mxu0 0.0
      %315 = vmatprep.subr.mxu0 0.0
      %316 = vmatpush1.msra.mxu0 0.0
      %317 = vmatprep.subr.mxu0 0.0
      %318 = vmatpush1.msra.mxu0 0.0
      %319 = vmatprep.subr.mxu0 0.0
      %320 = vmatpush1.msra.mxu0 0.0
      %321 = vmatprep.subr.mxu0 0.0
      %322 = vmatpush1.msra.mxu0 0.0
      %323 = vmatprep.subr.mxu0 0.0
      %324 = vmatpush1.msra.mxu0 0.0
      %325 = vmatprep.subr.mxu0 0.0
      %326 = vmatpush1.msra.mxu0 0.0
      %327 = vmatprep.mubr.f32.mxu0 0.0
      %328 = vmatmul.mubr.f32.gmra.mrb[0].mxu0 %v261
      %v329 = vpop.f32.mrb[0].mxu0
      %v330 = vadd.f32 %v259, %v329
      %v331 = vpop.f32.mrb[0].mxu0
      %332 = vdwg.mxu0
      %v333 = vmax.f32 %v330, 0.0
      %v334 = vld [vmem:[%s3] sm:$0x3]
      %v335 = vld [vmem:[%s4] sm:$0x1]
      %vm336 = vcmask 15360
      %v338 = vsel %vm336, %v333, 0
      %vm340 = vcmask 1041408
      %v342 = vsel %vm340, %v334, 0
      %344 = vmatprep.subr.mxu0 0.0
      %345 = vmatpush1.msra.mxu0 %v342
      %346 = vmatprep.subr.mxu0 0.0
      %347 = vmatpush1.msra.mxu0 0.0
      %348 = vmatprep.subr.mxu0 0.0
      %349 = vmatpush1.msra.mxu0 0.0
      %350 = vmatprep.subr.mxu0 0.0
      %351 = vmatpush1.msra.mxu0 0.0
      %352 = vmatprep.subr.mxu0 0.0
      %353 = vmatpush1.msra.mxu0 0.0
      %354 = vmatprep.subr.mxu0 0.0
      %355 = vmatpush1.msra.mxu0 0.0
      %356 = vmatprep.subr.mxu0 0.0
      %357 = vmatpush1.msra.mxu0 0.0
      %358 = vmatprep.subr.mxu0 0.0
      %359 = vmatpush1.msra.mxu0 0.0
      %360 = vmatprep.subr.mxu0 0.0
      %361 = vmatpush1.msra.mxu0 0.0
      %362 = vmatprep.subr.mxu0 0.0
      %363 = vmatpush1.msra.mxu0 0.0
      %364 = vmatprep.subr.mxu0 0.0
      %365 = vmatpush1.msra.mxu0 0.0
      %366 = vmatprep.subr.mxu0 0.0
      %367 = vmatpush1.msra.mxu0 0.0
      %368 = vmatprep.subr.mxu0 0.0
      %369 = vmatpush1.msra.mxu0 0.0
      %370 = vmatprep.subr.mxu0 0.0
      %371 = vmatpush1.msra.mxu0 0.0
      %372 = vmatprep.subr.mxu0 0.0
      %373 = vmatpush1.msra.mxu0 0.0
      %374 = vmatprep.subr.mxu0 0.0
      %375 = vmatpush1.msra.mxu0 0.0
      %376 = vmatprep.subr.mxu0 0.0
      %377 = vmatpush1.msra.mxu0 0.0
      %378 = vmatprep.subr.mxu0 0.0
      %379 = vmatpush1.msra.mxu0 0.0
      %380 = vmatprep.subr.mxu0 0.0
      %381 = vmatpush1.msra.mxu0 0.0
      %382 = vmatprep.subr.mxu0 0.0
      %383 = vmatpush1.msra.mxu0 0.0
      %384 = vmatprep.subr.mxu0 0.0
      %385 = vmatpush1.msra.mxu0 0.0
      %386 = vmatprep.subr.mxu0 0.0
      %387 = vmatpush1.msra.mxu0 0.0
      %388 = vmatprep.subr.mxu0 0.0
      %389 = vmatpush1.msra.mxu0 0.0
      %390 = vmatprep.subr.mxu0 0.0
      %391 = vmatpush1.msra.mxu0 0.0
      %392 = vmatprep.subr.mxu0 0.0
      %393 = vmatpush1.msra.mxu0 0.0
      %394 = vmatprep.subr.mxu0 0.0
      %395 = vmatpush1.msra.mxu0 0.0
      %396 = vmatprep.subr.mxu0 0.0
      %397 = vmatpush1.msra.mxu0 0.0
      %398 = vmatprep.subr.mxu0 0.0
      %399 = vmatpush1.msra.mxu0 0.0
      %400 = vmatprep.subr.mxu0 0.0
      %401 = vmatpush1.msra.mxu0 0.0
      %402 = vmatprep.subr.mxu0 0.0
      %403 = vmatpush1.msra.mxu0 0.0
      %404 = vmatprep.subr.mxu0 0.0
      %405 = vmatpush1.msra.mxu0 0.0
      %406 = vmatprep.subr.mxu0 0.0
      %407 = vmatpush1.msra.mxu0 0.0
      %408 = vmatprep.mubr.f32.mxu0 0.0
      %409 = vmatmul.mubr.f32.gmra.mrb[0].mxu0 %v338
      %v410 = vpop.f32.mrb[0].mxu0
      %v411 = vadd.f32 %v335, %v410
      %v412 = vpop.f32.mrb[0].mxu0
      %413 = vdwg.mxu0
      %v414 = vxor.u32 %v411, 2147483648
      %v415 = vmul.f32 %v414, 1.442695
      %v416 = vpow.pop %v415
      %v417 = vadd.f32 %v416, 1.0
      %v418 = vrcp.pop %v417
      %v419 = vmul.f32 1.0, %v418
      %v420 = vlaneseq
      %v421 = vshrl.u32 %v420, 7
      %v422 = vsub.s32 0, %v421
      %v423 = vrot.slane %v419, %v422
      %v424 = vmul.f32 %v225, %v423
      %v425 = vmul.f32 %v226, %v423
      %v426 = vmul.f32 %v227, %v423
      %v427 = vmul.f32 %v228, %v423
      %v428 = vmul.f32 %v229, %v423
      %v429 = vmul.f32 %v230, %v423
      %v430 = vmul.f32 %v231, %v423
      %v431 = vmul.f32 %v232, %v423
      %432 = vst.msk [vmem:[%s224] sm:$0xff] %vm233, %v424
      %433 = vst.msk [vmem:[%s224 + $0x8] sm:$0xff] %vm233, %v425
      %434 = vst.msk [vmem:[%s224 + $0x10] sm:$0xff] %vm233, %v426
      %435 = vst.msk [vmem:[%s224 + $0x18] sm:$0xff] %vm233, %v427
      %436 = vst.msk [vmem:[%s224 + $0x20] sm:$0xff] %vm233, %v428
      %437 = vst.msk [vmem:[%s224 + $0x28] sm:$0xff] %vm233, %v429
      %438 = vst.msk [vmem:[%s224 + $0x30] sm:$0xff] %vm233, %v430
      %439 = vst.msk [vmem:[%s224 + $0x38] sm:$0xff] %vm233, %v431
      %p440 = scmp.lt.s32.totalorder %s16, 1
      %s441 = scalar_select %p440, %s16, 1
      %s442 = smul.addr %s441, 8
      %s443 = smul.addr %s442, 8
      %s444 = scalar_lea.vmem %s5, %s443
      // Predicated region
      $region41: #{_lambda_.29} parent=39 // pred_check
        %p445 = pneg %p144
      $region42: #{_lambda_.29} parent=39 // pred_check_branch
        %447 = sbr.rel (%p445) target = $region44
      $region43: #{_lambda_.29} parent=39 // pred_region
        _
      $region44: #{_lambda_.29} parent=39 // pred_fallthru
        _
    $region40: #{_lambda_.29} parent=5 // pred_fallthru
      _
    %p448 = scmp.le.s32.totalorder 2, %s11
    // Predicated region
    $region45: #{_lambda_.29} parent=5 // pred_check
      %p449 = pneg %p448
    $region46: #{_lambda_.29} parent=5 // pred_check_branch
      %451 = sbr.rel (%p449) target = $region48
    $region47: #{_lambda_.29} parent=5 // pred_region
      %s452 = ssub.s32 %s11, 2
      // Predicated region
      $region49: #{_lambda_.29} parent=47 // pred_check
        %p453 = pneg %p150
      $region50: #{_lambda_.29} parent=47 // pred_check_branch
        %455 = sbr.rel (%p453) target = $region52
      $region51: #{_lambda_.29} parent=47 // pred_region
        %p456 = scmp.lt.s32.totalorder %s17, 1
        %s457 = scalar_select %p456, %s17, 1
        %s458 = smul.addr %s457, 8
        %s459 = smul.addr %s458, 8
        %s460 = scalar_lea.vmem %s5, %s459
      $region52: #{_lambda_.29} parent=47 // pred_fallthru
        _
    $region48: #{_lambda_.29} parent=5 // pred_fallthru
      _
  $region6: #{_lambda_.29} parent=0 // loop_footer
    %s15 = sadd.s32 1, %s11
  $region7: #{_lambda_.29} parent=0 // loop_footer_branch
    %10 = sbr.rel target = $region3
  $region8: #{_lambda_.29} parent=0 // loop_exit
    _

// kernel: _lambda_.28
$region0: #{_lambda_.28}
  #allocation0 [shape = 'u32[]', space=smem, size = 0x4, offset = 0x4, fixed_abs, tag = 'smem constant byte address 0x4 - core index']
  #allocation1 [shape = 'u32[144,128]{1,0:T(1,128)}', space=vmem, size = 0x12000, scoped, tag = 'internal scratch']
  #allocation2 [shape = 'f32[128,128]{1,0:T(8,128)}', space=vmem, size = 0x10000, scoped, tag = 'scratch operand']
  %s0 = inlined_call_operand.vmem [shape: bf16[128,256], index: 0, kind: input, shape index: {}]
  %s1 = inlined_call_operand.vmem [shape: bf16[256,128], index: 1, kind: input, shape index: {}]
  %s2 = inlined_call_operand.vmem [shape: f32[1,128], index: 2, kind: input, shape index: {}]
  %s3 = inlined_call_operand.vmem [shape: f32[1,128], index: 3, kind: input, shape index: {}]
  %s4 = inlined_call_operand.vmem [shape: f32[128,128], index: 4, kind: input, shape index: {}]
  %s5 = inlined_call_operand.vmem [shape: f32[128,128], index: 5, kind: output, shape index: {}]
  %s6 = sld [smem:[#allocation0]]
  $region38: #{_lambda_.28} parent=0
    _
  %s8 = ssub.s32 1, %s6
  %s9 = scalar_select 0, %s8, %s6
  // Predicated region
  $region2: #{_lambda_.28} parent=0 // pred_check
    _
  $region3: #{_lambda_.28} parent=0 // pred_check_branch
    %11 = sbr.rel (0) target = $region5
  $region4: #{_lambda_.28} parent=0 // pred_region
    _
  $region5: #{_lambda_.28} parent=0 // pred_fallthru
    _
  // Predicated region
  $region6: #{_lambda_.28} parent=0 // pred_check
    _
  $region7: #{_lambda_.28} parent=0 // pred_check_branch
    %13 = sbr.rel (0) target = $region9
  $region8: #{_lambda_.28} parent=0 // pred_region
    _
  $region9: #{_lambda_.28} parent=0 // pred_fallthru
    _
  // Predicated region
  $region10: #{_lambda_.28} parent=0 // pred_check
    _
  $region11: #{_lambda_.28} parent=0 // pred_check_branch
    %15 = sbr.rel (0) target = $region13
  $region12: #{_lambda_.28} parent=0 // pred_region
    _
  $region13: #{_lambda_.28} parent=0 // pred_fallthru
    _
  // Predicated region
  $region14: #{_lambda_.28} parent=0 // pred_check
    _
  $region15: #{_lambda_.28} parent=0 // pred_check_branch
    %17 = sbr.rel (0) target = $region17
  $region16: #{_lambda_.28} parent=0 // pred_region
    _
  $region17: #{_lambda_.28} parent=0 // pred_fallthru
    _
  // Predicated region
  $region18: #{_lambda_.28} parent=0 // pred_check
    _
  $region19: #{_lambda_.28} parent=0 // pred_check_branch
    %19 = sbr.rel (0) target = $region21
  $region20: #{_lambda_.28} parent=0 // pred_region
    _
  $region21: #{_lambda_.28} parent=0 // pred_fallthru
    _
  %p21 = scmp.eq.s32.totalorder 0, 0
  // Predicated region
  $region22: #{_lambda_.28} parent=0 // pred_check
    %p22 = pneg %p21
  $region23: #{_lambda_.28} parent=0 // pred_check_branch
    %24 = sbr.rel (%p22) target = $region25
  $region24: #{_lambda_.28} parent=0 // pred_region
    %25 = vst [vmem:[#allocation2] sm:$0xff] 0.0
    %26 = vst [vmem:[#allocation2 + $0x8] sm:$0xff] 0.0
    %27 = vst [vmem:[#allocation2 + $0x10] sm:$0xff] 0.0
    %28 = vst [vmem:[#allocation2 + $0x18] sm:$0xff] 0.0
    %29 = vst [vmem:[#allocation2 + $0x20] sm:$0xff] 0.0
    %30 = vst [vmem:[#allocation2 + $0x28] sm:$0xff] 0.0
    %31 = vst [vmem:[#allocation2 + $0x30] sm:$0xff] 0.0
    %32 = vst [vmem:[#allocation2 + $0x38] sm:$0xff] 0.0
    %33 = vst [vmem:[#allocation2 + $0x40] sm:$0xff] 0.0
    %34 = vst [vmem:[#allocation2 + $0x48] sm:$0xff] 0.0
    %35 = vst [vmem:[#allocation2 + $0x50] sm:$0xff] 0.0
    %36 = vst [vmem:[#allocation2 + $0x58] sm:$0xff] 0.0
    %37 = vst [vmem:[#allocation2 + $0x60] sm:$0xff] 0.0
    %38 = vst [vmem:[#allocation2 + $0x68] sm:$0xff] 0.0
    %39 = vst [vmem:[#allocation2 + $0x70] sm:$0xff] 0.0
    %40 = vst [vmem:[#allocation2 + $0x78] sm:$0xff] 0.0
  $region25: #{_lambda_.28} parent=0 // pred_fallthru
    _
  %v41 = vld [vmem:[#allocation2] sm:$0xff]
  %v42 = vld [vmem:[#allocation2 + $0x8] sm:$0xff]
  %v43 = vld [vmem:[#allocation2 + $0x10] sm:$0xff]
  %v44 = vld [vmem:[#allocation2 + $0x18] sm:$0xff]
  %v45 = vld [vmem:[#allocation2 + $0x20] sm:$0xff]
  %v46 = vld [vmem:[#allocation2 + $0x28] sm:$0xff]
  %v47 = vld [vmem:[#allocation2 + $0x30] sm:$0xff]
  %v48 = vld [vmem:[#allocation2 + $0x38] sm:$0xff]
  %v49 = vld [vmem:[#allocation2 + $0x40] sm:$0xff]
  %v50 = vld [vmem:[#allocation2 + $0x48] sm:$0xff]
  %v51 = vld [vmem:[#allocation2 + $0x50] sm:$0xff]
  %v52 = vld [vmem:[#allocation2 + $0x58] sm:$0xff]
  %v53 = vld [vmem:[#allocation2 + $0x60] sm:$0xff]
  %v54 = vld [vmem:[#allocation2 + $0x68] sm:$0xff]
  %v55 = vld [vmem:[#allocation2 + $0x70] sm:$0xff]
  %v56 = vld [vmem:[#allocation2 + $0x78] sm:$0xff]
  %v57 = vld [vmem:[%s0] sm:$0xff]
  %v58 = vld [vmem:[%s0 + $0x8] sm:$0xff]
  %v59 = vld [vmem:[%s0 + $0x10] sm:$0xff]
  %v60 = vld [vmem:[%s0 + $0x18] sm:$0xff]
  %v61 = vld [vmem:[%s0 + $0x20] sm:$0xff]
  %v62 = vld [vmem:[%s0 + $0x28] sm:$0xff]
  %v63 = vld [vmem:[%s0 + $0x30] sm:$0xff]
  %v64 = vld [vmem:[%s0 + $0x38] sm:$0xff]
  %v65 = vld [vmem:[%s0 + $0x40] sm:$0xff]
  %v66 = vld [vmem:[%s0 + $0x48] sm:$0xff]
  %v67 = vld [vmem:[%s0 + $0x50] sm:$0xff]
  %v68 = vld [vmem:[%s0 + $0x58] sm:$0xff]
  %v69 = vld [vmem:[%s0 + $0x60] sm:$0xff]
  %v70 = vld [vmem:[%s0 + $0x68] sm:$0xff]
  %v71 = vld [vmem:[%s0 + $0x70] sm:$0xff]
  %v72 = vld [vmem:[%s0 + $0x78] sm:$0xff]
  %v73 = vld [vmem:[%s1] sm:$0xf]
  %v74 = vld [vmem:[%s1 + $0x4] sm:$0xf]
  %v75 = vld [vmem:[%s1 + $0x8] sm:$0xf]
  %v76 = vld [vmem:[%s1 + $0xc] sm:$0xf]
  %v77 = vld [vmem:[%s1 + $0x10] sm:$0xf]
  %v78 = vld [vmem:[%s1 + $0x14] sm:$0xf]
  %v79 = vld [vmem:[%s1 + $0x18] sm:$0xf]
  %v80 = vld [vmem:[%s1 + $0x1c] sm:$0xf]
  %v81 = vld [vmem:[%s1 + $0x20] sm:$0xf]
  %v82 = vld [vmem:[%s1 + $0x24] sm:$0xf]
  %v83 = vld [vmem:[%s1 + $0x28] sm:$0xf]
  %v84 = vld [vmem:[%s1 + $0x2c] sm:$0xf]
  %v85 = vld [vmem:[%s1 + $0x30] sm:$0xf]
  %v86 = vld [vmem:[%s1 + $0x34] sm:$0xf]
  %v87 = vld [vmem:[%s1 + $0x38] sm:$0xf]
  %v88 = vld [vmem:[%s1 + $0x3c] sm:$0xf]
  %v89 = vld [vmem:[%s1 + $0x40] sm:$0xf]
  %v90 = vld [vmem:[%s1 + $0x44] sm:$0xf]
  %v91 = vld [vmem:[%s1 + $0x48] sm:$0xf]
  %v92 = vld [vmem:[%s1 + $0x4c] sm:$0xf]
  %v93 = vld [vmem:[%s1 + $0x50] sm:$0xf]
  %v94 = vld [vmem:[%s1 + $0x54] sm:$0xf]
  %v95 = vld [vmem:[%s1 + $0x58] sm:$0xf]
  %v96 = vld [vmem:[%s1 + $0x5c] sm:$0xf]
  %v97 = vld [vmem:[%s1 + $0x60] sm:$0xf]
  %v98 = vld [vmem:[%s1 + $0x64] sm:$0xf]
  %v99 = vld [vmem:[%s1 + $0x68] sm:$0xf]
  %v100 = vld [vmem:[%s1 + $0x6c] sm:$0xf]
  %v101 = vld [vmem:[%s1 + $0x70] sm:$0xf]
  %v102 = vld [vmem:[%s1 + $0x74] sm:$0xf]
  %v103 = vld [vmem:[%s1 + $0x78] sm:$0xf]
  %v104 = vld [vmem:[%s1 + $0x7c] sm:$0xf]
  %v121 = vunpack.c.l.b16 %v57
  %v122 = vunpack.c.h.b16 %v57
  %v123 = vunpack.c.l.b16 %v58
  %v124 = vunpack.c.h.b16 %v58
  %v125 = vunpack.c.l.b16 %v59
  %v126 = vunpack.c.h.b16 %v59
  %v127 = vunpack.c.l.b16 %v60
  %v128 = vunpack.c.h.b16 %v60
  %v129 = vunpack.c.l.b16 %v61
  %v130 = vunpack.c.h.b16 %v61
  %v131 = vunpack.c.l.b16 %v62
  %v132 = vunpack.c.h.b16 %v62
  %v133 = vunpack.c.l.b16 %v63
  %v134 = vunpack.c.h.b16 %v63
  %v135 = vunpack.c.l.b16 %v64
  %v136 = vunpack.c.h.b16 %v64
  %v137 = vunpack.c.l.b16 %v65
  %v138 = vunpack.c.h.b16 %v65
  %v139 = vunpack.c.l.b16 %v66
  %v140 = vunpack.c.h.b16 %v66
  %v141 = vunpack.c.l.b16 %v67
  %v142 = vunpack.c.h.b16 %v67
  %v143 = vunpack.c.l.b16 %v68
  %v144 = vunpack.c.h.b16 %v68
  %v145 = vunpack.c.l.b16 %v69
  %v146 = vunpack.c.h.b16 %v69
  %v147 = vunpack.c.l.b16 %v70
  %v148 = vunpack.c.h.b16 %v70
  %v149 = vunpack.c.l.b16 %v71
  %v150 = vunpack.c.h.b16 %v71
  %v151 = vunpack.c.l.b16 %v72
  %v152 = vunpack.c.h.b16 %v72
  %v153 = vpack.c.b16 %v123, %v121
  %v154 = vpack.c.b16 %v124, %v122
  %v155 = vpack.c.b16 %v127, %v125
  %v156 = vpack.c.b16 %v128, %v126
  %v157 = vpack.c.b16 %v131, %v129
  %v158 = vpack.c.b16 %v132, %v130
  %v159 = vpack.c.b16 %v135, %v133
  %v160 = vpack.c.b16 %v136, %v134
  %v161 = vpack.c.b16 %v139, %v137
  %v162 = vpack.c.b16 %v140, %v138
  %v163 = vpack.c.b16 %v143, %v141
  %v164 = vpack.c.b16 %v144, %v142
  %v165 = vpack.c.b16 %v147, %v145
  %v166 = vpack.c.b16 %v148, %v146
  %v167 = vpack.c.b16 %v151, %v149
  %v168 = vpack.c.b16 %v152, %v150
  %v217 = vunpack.c.l.b16 %v73
  %v218 = vunpack.c.l.b16 %v74
  %v219 = vunpack.c.l.b16 %v75
  %v220 = vunpack.c.l.b16 %v76
  %v221 = vunpack.c.l.b16 %v77
  %v222 = vunpack.c.l.b16 %v78
  %v223 = vunpack.c.l.b16 %v79
  %v224 = vunpack.c.l.b16 %v80
  %v225 = vunpack.c.l.b16 %v81
  %v226 = vunpack.c.l.b16 %v82
  %v227 = vunpack.c.l.b16 %v83
  %v228 = vunpack.c.l.b16 %v84
  %v229 = vunpack.c.l.b16 %v85
  %v230 = vunpack.c.l.b16 %v86
  %v231 = vunpack.c.l.b16 %v87
  %v232 = vunpack.c.l.b16 %v88
  %v233 = vunpack.c.l.b16 %v89
  %v234 = vunpack.c.l.b16 %v90
  %v235 = vunpack.c.l.b16 %v91
  %v236 = vunpack.c.l.b16 %v92
  %v237 = vunpack.c.l.b16 %v93
  %v238 = vunpack.c.l.b16 %v94
  %v239 = vunpack.c.l.b16 %v95
  %v240 = vunpack.c.l.b16 %v96
  %v241 = vunpack.c.l.b16 %v97
  %v242 = vunpack.c.l.b16 %v98
  %v243 = vunpack.c.l.b16 %v99
  %v244 = vunpack.c.l.b16 %v100
  %v245 = vunpack.c.l.b16 %v101
  %v246 = vunpack.c.l.b16 %v102
  %v247 = vunpack.c.l.b16 %v103
  %v248 = vunpack.c.l.b16 %v104
  %v249 = vpack.c.b16 %v218, %v217
  %v250 = vpack.c.b16 %v220, %v219
  %v251 = vpack.c.b16 %v222, %v221
  %v252 = vpack.c.b16 %v224, %v223
  %v253 = vpack.c.b16 %v226, %v225
  %v254 = vpack.c.b16 %v228, %v227
  %v255 = vpack.c.b16 %v230, %v229
  %v256 = vpack.c.b16 %v232, %v231
  %v257 = vpack.c.b16 %v234, %v233
  %v258 = vpack.c.b16 %v236, %v235
  %v259 = vpack.c.b16 %v238, %v237
  %v260 = vpack.c.b16 %v240, %v239
  %v261 = vpack.c.b16 %v242, %v241
  %v262 = vpack.c.b16 %v244, %v243
  %v263 = vpack.c.b16 %v246, %v245
  %v264 = vpack.c.b16 %v248, %v247
  %281 = vmatprep.subr.bf16.mxu0 0
  %282 = vmatpush1.bf16.msra.mxu0 %v249
  %283 = vmatprep.subr.bf16.mxu0 0
  %284 = vmatpush1.bf16.msra.mxu0 %v250
  %285 = vmatprep.subr.bf16.mxu0 0
  %286 = vmatpush1.bf16.msra.mxu0 %v251
  %287 = vmatprep.subr.bf16.mxu0 0
  %288 = vmatpush1.bf16.msra.mxu0 %v252
  %289 = vmatprep.subr.bf16.mxu0 0
  %290 = vmatpush1.bf16.msra.mxu0 %v253
  %291 = vmatprep.subr.bf16.mxu0 0
  %292 = vmatpush1.bf16.msra.mxu0 %v254
  %293 = vmatprep.subr.bf16.mxu0 0
  %294 = vmatpush1.bf16.msra.mxu0 %v255
  %295 = vmatprep.subr.bf16.mxu0 0
  %296 = vmatpush1.bf16.msra.mxu0 %v256
  %297 = vmatprep.subr.bf16.mxu0 0
  %298 = vmatpush1.bf16.msra.mxu0 %v257
  %299 = vmatprep.subr.bf16.mxu0 0
  %300 = vmatpush1.bf16.msra.mxu0 %v258
  %301 = vmatprep.subr.bf16.mxu0 0
  %302 = vmatpush1.bf16.msra.mxu0 %v259
  %303 = vmatprep.subr.bf16.mxu0 0
  %304 = vmatpush1.bf16.msra.mxu0 %v260
  %305 = vmatprep.subr.bf16.mxu0 0
  %306 = vmatpush1.bf16.msra.mxu0 %v261
  %307 = vmatprep.subr.bf16.mxu0 0
  %308 = vmatpush1.bf16.msra.mxu0 %v262
  %309 = vmatprep.subr.bf16.mxu0 0
  %310 = vmatpush1.bf16.msra.mxu0 %v263
  %311 = vmatprep.subr.bf16.mxu0 0
  %312 = vmatpush1.bf16.msra.mxu0 %v264
  %313 = vmatprep.mubr.bf16.mxu0 %v154
  %314 = vmatmul.mubr.bf16.gmra.mrb[0].mxu0 %v153
  %v315 = vpop.f32.mrb[0].mxu0
  %v316 = vadd.f32 0.0, %v315
  %v317 = vpop.f32.mrb[0].mxu0
  %v318 = vpop.f32.mrb[0].mxu0
  %v319 = vadd.f32 0.0, %v318
  %v320 = vpop.f32.mrb[0].mxu0
  %321 = vmatprep.mubr.bf16.mxu0 %v156
  %322 = vmatmul.mubr.bf16.gmra.mrb[0].mxu0 %v155
  %v323 = vpop.f32.mrb[0].mxu0
  %v324 = vadd.f32 0.0, %v323
  %v325 = vpop.f32.mrb[0].mxu0
  %v326 = vpop.f32.mrb[0].mxu0
  %v327 = vadd.f32 0.0, %v326
  %v328 = vpop.f32.mrb[0].mxu0
  %329 = vmatprep.mubr.bf16.mxu0 %v158
  %330 = vmatmul.mubr.bf16.gmra.mrb[0].mxu0 %v157
  %v331 = vpop.f32.mrb[0].mxu0
  %v332 = vadd.f32 0.0, %v331
  %v333 = vpop.f32.mrb[0].mxu0
  %v334 = vpop.f32.mrb[0].mxu0
  %v335 = vadd.f32 0.0, %v334
  %v336 = vpop.f32.mrb[0].mxu0
  %337 = vmatprep.mubr.bf16.mxu0 %v160
  %338 = vmatmul.mubr.bf16.gmra.mrb[0].mxu0 %v159
  %v339 = vpop.f32.mrb[0].mxu0
  %v340 = vadd.f32 0.0, %v339
  %v341 = vpop.f32.mrb[0].mxu0
  %v342 = vpop.f32.mrb[0].mxu0
  %v343 = vadd.f32 0.0, %v342
  %v344 = vpop.f32.mrb[0].mxu0
  %345 = vmatprep.mubr.bf16.mxu0 %v162
  %346 = vmatmul.mubr.bf16.gmra.mrb[0].mxu0 %v161
  %v347 = vpop.f32.mrb[0].mxu0
  %v348 = vadd.f32 0.0, %v347
  %v349 = vpop.f32.mrb[0].mxu0
  %v350 = vpop.f32.mrb[0].mxu0
  %v351 = vadd.f32 0.0, %v350
  %v352 = vpop.f32.mrb[0].mxu0
  %353 = vmatprep.mubr.bf16.mxu0 %v164
  %354 = vmatmul.mubr.bf16.gmra.mrb[0].mxu0 %v163
  %v355 = vpop.f32.mrb[0].mxu0
  %v356 = vadd.f32 0.0, %v355
  %v357 = vpop.f32.mrb[0].mxu0
  %v358 = vpop.f32.mrb[0].mxu0
  %v359 = vadd.f32 0.0, %v358
  %v360 = vpop.f32.mrb[0].mxu0
  %361 = vmatprep.mubr.bf16.mxu0 %v166
  %362 = vmatmul.mubr.bf16.gmra.mrb[0].mxu0 %v165
  %v363 = vpop.f32.mrb[0].mxu0
  %v364 = vadd.f32 0.0, %v363
  %v365 = vpop.f32.mrb[0].mxu0
  %v366 = vpop.f32.mrb[0].mxu0
  %v367 = vadd.f32 0.0, %v366
  %v368 = vpop.f32.mrb[0].mxu0
  %369 = vmatprep.mubr.bf16.mxu0 %v168
  %370 = vmatmul.mubr.bf16.gmra.mrb[0].mxu0 %v167
  %v371 = vpop.f32.mrb[0].mxu0
  %v372 = vadd.f32 0.0, %v371
  %v373 = vpop.f32.mrb[0].mxu0
  %v374 = vpop.f32.mrb[0].mxu0
  %v375 = vadd.f32 0.0, %v374
  %v376 = vpop.f32.mrb[0].mxu0
  %377 = vdwg.mxu0
  %v378 = vadd.f32 %v41, %v316
  %v379 = vadd.f32 %v42, %v319
  %v380 = vadd.f32 %v43, %v324
  %v381 = vadd.f32 %v44, %v327
  %v382 = vadd.f32 %v45, %v332
  %v383 = vadd.f32 %v46, %v335
  %v384 = vadd.f32 %v47, %v340
  %v385 = vadd.f32 %v48, %v343
  %v386 = vadd.f32 %v49, %v348
  %v387 = vadd.f32 %v50, %v351
  %v388 = vadd.f32 %v51, %v356
  %v389 = vadd.f32 %v52, %v359
  %v390 = vadd.f32 %v53, %v364
  %v391 = vadd.f32 %v54, %v367
  %v392 = vadd.f32 %v55, %v372
  %v393 = vadd.f32 %v56, %v375
  %394 = vst [vmem:[#allocation2] sm:$0xff] %v378
  %395 = vst [vmem:[#allocation2 + $0x8] sm:$0xff] %v379
  %396 = vst [vmem:[#allocation2 + $0x10] sm:$0xff] %v380
  %397 = vst [vmem:[#allocation2 + $0x18] sm:$0xff] %v381
  %398 = vst [vmem:[#allocation2 + $0x20] sm:$0xff] %v382
  %399 = vst [vmem:[#allocation2 + $0x28] sm:$0xff] %v383
  %400 = vst [vmem:[#allocation2 + $0x30] sm:$0xff] %v384
  %401 = vst [vmem:[#allocation2 + $0x38] sm:$0xff] %v385
  %402 = vst [vmem:[#allocation2 + $0x40] sm:$0xff] %v386
  %403 = vst [vmem:[#allocation2 + $0x48] sm:$0xff] %v387
  %404 = vst [vmem:[#allocation2 + $0x50] sm:$0xff] %v388
  %405 = vst [vmem:[#allocation2 + $0x58] sm:$0xff] %v389
  %406 = vst [vmem:[#allocation2 + $0x60] sm:$0xff] %v390
  %407 = vst [vmem:[#allocation2 + $0x68] sm:$0xff] %v391
  %408 = vst [vmem:[#allocation2 + $0x70] sm:$0xff] %v392
  %409 = vst [vmem:[#allocation2 + $0x78] sm:$0xff] %v393
  // Predicated region
  $region26: #{_lambda_.28} parent=0 // pred_check
    %p410 = pneg %p21
  $region27: #{_lambda_.28} parent=0 // pred_check_branch
    %412 = sbr.rel (%p410) target = $region29
  $region28: #{_lambda_.28} parent=0 // pred_region
    %v413 = vld [vmem:[#allocation2] sm:$0xff]
    %v414 = vld [vmem:[#allocation2 + $0x8] sm:$0xff]
    %v415 = vld [vmem:[#allocation2 + $0x10] sm:$0xff]
    %v416 = vld [vmem:[#allocation2 + $0x18] sm:$0xff]
    %v417 = vld [vmem:[#allocation2 + $0x20] sm:$0xff]
    %v418 = vld [vmem:[#allocation2 + $0x28] sm:$0xff]
    %v419 = vld [vmem:[#allocation2 + $0x30] sm:$0xff]
    %v420 = vld [vmem:[#allocation2 + $0x38] sm:$0xff]
    %v421 = vld [vmem:[#allocation2 + $0x40] sm:$0xff]
    %v422 = vld [vmem:[#allocation2 + $0x48] sm:$0xff]
    %v423 = vld [vmem:[#allocation2 + $0x50] sm:$0xff]
    %v424 = vld [vmem:[#allocation2 + $0x58] sm:$0xff]
    %v425 = vld [vmem:[#allocation2 + $0x60] sm:$0xff]
    %v426 = vld [vmem:[#allocation2 + $0x68] sm:$0xff]
    %v427 = vld [vmem:[#allocation2 + $0x70] sm:$0xff]
    %v428 = vld [vmem:[#allocation2 + $0x78] sm:$0xff]
    %v429 = vld [vmem:[%s2] sm:$0x1]
    %v431 = vlaneseq
    %v432 = vshrl.u32 %v431, 7
    %v433 = vsub.s32 0, %v432
    %v434 = vrot.slane %v429, %v433
    %v436 = vmul.f32 %v413, %v434
    %v437 = vmul.f32 %v414, %v434
    %v438 = vmul.f32 %v415, %v434
    %v439 = vmul.f32 %v416, %v434
    %v440 = vmul.f32 %v417, %v434
    %v441 = vmul.f32 %v418, %v434
    %v442 = vmul.f32 %v419, %v434
    %v443 = vmul.f32 %v420, %v434
    %v444 = vmul.f32 %v421, %v434
    %v445 = vmul.f32 %v422, %v434
    %v446 = vmul.f32 %v423, %v434
    %v447 = vmul.f32 %v424, %v434
    %v448 = vmul.f32 %v425, %v434
    %v449 = vmul.f32 %v426, %v434
    %v450 = vmul.f32 %v427, %v434
    %v451 = vmul.f32 %v428, %v434
    %v452 = vld [vmem:[%s3] sm:$0x1]
    %v454 = vlaneseq
    %v455 = vshrl.u32 %v454, 7
    %v456 = vsub.s32 0, %v455
    %v457 = vrot.slane %v452, %v456
    %v459 = vadd.f32 %v436, %v457
    %v460 = vadd.f32 %v437, %v457
    %v461 = vadd.f32 %v438, %v457
    %v462 = vadd.f32 %v439, %v457
    %v463 = vadd.f32 %v440, %v457
    %v464 = vadd.f32 %v441, %v457
    %v465 = vadd.f32 %v442, %v457
    %v466 = vadd.f32 %v443, %v457
    %v467 = vadd.f32 %v444, %v457
    %v468 = vadd.f32 %v445, %v457
    %v469 = vadd.f32 %v446, %v457
    %v470 = vadd.f32 %v447, %v457
    %v471 = vadd.f32 %v448, %v457
    %v472 = vadd.f32 %v449, %v457
    %v473 = vadd.f32 %v450, %v457
    %v474 = vadd.f32 %v451, %v457
    %v475 = vld [vmem:[%s4] sm:$0xff]
    %v476 = vld [vmem:[%s4 + $0x8] sm:$0xff]
    %v477 = vld [vmem:[%s4 + $0x10] sm:$0xff]
    %v478 = vld [vmem:[%s4 + $0x18] sm:$0xff]
    %v479 = vld [vmem:[%s4 + $0x20] sm:$0xff]
    %v480 = vld [vmem:[%s4 + $0x28] sm:$0xff]
    %v481 = vld [vmem:[%s4 + $0x30] sm:$0xff]
    %v482 = vld [vmem:[%s4 + $0x38] sm:$0xff]
    %v483 = vld [vmem:[%s4 + $0x40] sm:$0xff]
    %v484 = vld [vmem:[%s4 + $0x48] sm:$0xff]
    %v485 = vld [vmem:[%s4 + $0x50] sm:$0xff]
    %v486 = vld [vmem:[%s4 + $0x58] sm:$0xff]
    %v487 = vld [vmem:[%s4 + $0x60] sm:$0xff]
    %v488 = vld [vmem:[%s4 + $0x68] sm:$0xff]
    %v489 = vld [vmem:[%s4 + $0x70] sm:$0xff]
    %v490 = vld [vmem:[%s4 + $0x78] sm:$0xff]
    %v491 = vadd.f32 %v459, %v475
    %v492 = vadd.f32 %v460, %v476
    %v493 = vadd.f32 %v461, %v477
    %v494 = vadd.f32 %v462, %v478
    %v495 = vadd.f32 %v463, %v479
    %v496 = vadd.f32 %v464, %v480
    %v497 = vadd.f32 %v465, %v481
    %v498 = vadd.f32 %v466, %v482
    %v499 = vadd.f32 %v467, %v483
    %v500 = vadd.f32 %v468, %v484
    %v501 = vadd.f32 %v469, %v485
    %v502 = vadd.f32 %v470, %v486
    %v503 = vadd.f32 %v471, %v487
    %v504 = vadd.f32 %v472, %v488
    %v505 = vadd.f32 %v473, %v489
    %v506 = vadd.f32 %v474, %v490
    %v507 = vmax.f32 %v491, 0.0
    %v508 = vmax.f32 %v492, 0.0
    %v509 = vmax.f32 %v493, 0.0
    %v510 = vmax.f32 %v494, 0.0
    %v511 = vmax.f32 %v495, 0.0
    %v512 = vmax.f32 %v496, 0.0
    %v513 = vmax.f32 %v497, 0.0
    %v514 = vmax.f32 %v498, 0.0
    %v515 = vmax.f32 %v499, 0.0
    %v516 = vmax.f32 %v500, 0.0
    %v517 = vmax.f32 %v501, 0.0
    %v518 = vmax.f32 %v502, 0.0
    %v519 = vmax.f32 %v503, 0.0
    %v520 = vmax.f32 %v504, 0.0
    %v521 = vmax.f32 %v505, 0.0
    %v522 = vmax.f32 %v506, 0.0
    %523 = vst [vmem:[%s5] sm:$0xff] %v507
    %524 = vst [vmem:[%s5 + $0x8] sm:$0xff] %v508
    %525 = vst [vmem:[%s5 + $0x10] sm:$0xff] %v509
    %526 = vst [vmem:[%s5 + $0x18] sm:$0xff] %v510
    %527 = vst [vmem:[%s5 + $0x20] sm:$0xff] %v511
    %528 = vst [vmem:[%s5 + $0x28] sm:$0xff] %v512
    %529 = vst [vmem:[%s5 + $0x30] sm:$0xff] %v513
    %530 = vst [vmem:[%s5 + $0x38] sm:$0xff] %v514
    %531 = vst [vmem:[%s5 + $0x40] sm:$0xff] %v515
    %532 = vst [vmem:[%s5 + $0x48] sm:$0xff] %v516
    %533 = vst [vmem:[%s5 + $0x50] sm:$0xff] %v517
    %534 = vst [vmem:[%s5 + $0x58] sm:$0xff] %v518
    %535 = vst [vmem:[%s5 + $0x60] sm:$0xff] %v519
    %536 = vst [vmem:[%s5 + $0x68] sm:$0xff] %v520
    %537 = vst [vmem:[%s5 + $0x70] sm:$0xff] %v521
    %538 = vst [vmem:[%s5 + $0x78] sm:$0xff] %v522
  $region29: #{_lambda_.28} parent=0 // pred_fallthru
    _
  // Predicated region
  $region30: #{_lambda_.28} parent=0 // pred_check
    _
  $region31: #{_lambda_.28} parent=0 // pred_check_branch
    %540 = sbr.rel (0) target = $region33
  $region32: #{_lambda_.28} parent=0 // pred_region
    _
  $region33: #{_lambda_.28} parent=0 // pred_fallthru
    _
  // Predicated region
  $region34: #{_lambda_.28} parent=0 // pred_check
    _
  $region35: #{_lambda_.28} parent=0 // pred_check_branch
    %542 = sbr.rel (0) target = $region37
  $region36: #{_lambda_.28} parent=0 // pred_region
    _
  $region37: #{_lambda_.28} parent=0 // pred_fallthru
    _

// kernel: _lambda_.30
$region0: #{_lambda_.30}
  #allocation0 [shape = 'u32[]', space=smem, size = 0x4, offset = 0x4, fixed_abs, tag = 'smem constant byte address 0x4 - core index']
  #allocation1 [shape = 'u32[144,128]{1,0:T(1,128)}', space=vmem, size = 0x12000, scoped, tag = 'internal scratch']
  #allocation2 [shape = 'f32[32,128]{1,0:T(8,128)}', space=vmem, size = 0x4000, scoped, tag = 'scratch operand']
  %s0 = inlined_call_operand.vmem [shape: bf16[32,256], index: 0, kind: input, shape index: {}]
  %s1 = inlined_call_operand.vmem [shape: bf16[256,128], index: 1, kind: input, shape index: {}]
  %s2 = inlined_call_operand.vmem [shape: f32[1,128], index: 2, kind: input, shape index: {}]
  %s3 = inlined_call_operand.vmem [shape: f32[1,128], index: 3, kind: input, shape index: {}]
  %s4 = inlined_call_operand.vmem [shape: f32[32,128], index: 4, kind: output, shape index: {}]
  %s5 = sld [smem:[#allocation0]]
  $region34: #{_lambda_.30} parent=0
    _
  %s7 = ssub.s32 1, %s5
  %s8 = scalar_select 0, %s7, %s5
  // Predicated region
  $region2: #{_lambda_.30} parent=0 // pred_check
    _
  $region3: #{_lambda_.30} parent=0 // pred_check_branch
    %10 = sbr.rel (0) target = $region5
  $region4: #{_lambda_.30} parent=0 // pred_region
    _
  $region5: #{_lambda_.30} parent=0 // pred_fallthru
    _
  // Predicated region
  $region6: #{_lambda_.30} parent=0 // pred_check
    _
  $region7: #{_lambda_.30} parent=0 // pred_check_branch
    %12 = sbr.rel (0) target = $region9
  $region8: #{_lambda_.30} parent=0 // pred_region
    _
  $region9: #{_lambda_.30} parent=0 // pred_fallthru
    _
  // Predicated region
  $region10: #{_lambda_.30} parent=0 // pred_check
    _
  $region11: #{_lambda_.30} parent=0 // pred_check_branch
    %14 = sbr.rel (0) target = $region13
  $region12: #{_lambda_.30} parent=0 // pred_region
    _
  $region13: #{_lambda_.30} parent=0 // pred_fallthru
    _
  // Predicated region
  $region14: #{_lambda_.30} parent=0 // pred_check
    _
  $region15: #{_lambda_.30} parent=0 // pred_check_branch
    %16 = sbr.rel (0) target = $region17
  $region16: #{_lambda_.30} parent=0 // pred_region
    _
  $region17: #{_lambda_.30} parent=0 // pred_fallthru
    _
  %p18 = scmp.eq.s32.totalorder 0, 0
  // Predicated region
  $region18: #{_lambda_.30} parent=0 // pred_check
    %p19 = pneg %p18
  $region19: #{_lambda_.30} parent=0 // pred_check_branch
    %21 = sbr.rel (%p19) target = $region21
  $region20: #{_lambda_.30} parent=0 // pred_region
    %22 = vst [vmem:[#allocation2] sm:$0xff] 0.0
    %23 = vst [vmem:[#allocation2 + $0x8] sm:$0xff] 0.0
    %24 = vst [vmem:[#allocation2 + $0x10] sm:$0xff] 0.0
    %25 = vst [vmem:[#allocation2 + $0x18] sm:$0xff] 0.0
  $region21: #{_lambda_.30} parent=0 // pred_fallthru
    _
  %v26 = vld [vmem:[#allocation2] sm:$0xff]
  %v27 = vld [vmem:[#allocation2 + $0x8] sm:$0xff]
  %v28 = vld [vmem:[#allocation2 + $0x10] sm:$0xff]
  %v29 = vld [vmem:[#allocation2 + $0x18] sm:$0xff]
  %v30 = vld [vmem:[%s0] sm:$0xff]
  %v31 = vld [vmem:[%s0 + $0x8] sm:$0xff]
  %v32 = vld [vmem:[%s0 + $0x10] sm:$0xff]
  %v33 = vld [vmem:[%s0 + $0x18] sm:$0xff]
  %v34 = vld [vmem:[%s1] sm:$0xf]
  %v35 = vld [vmem:[%s1 + $0x4] sm:$0xf]
  %v36 = vld [vmem:[%s1 + $0x8] sm:$0xf]
  %v37 = vld [vmem:[%s1 + $0xc] sm:$0xf]
  %v38 = vld [vmem:[%s1 + $0x10] sm:$0xf]
  %v39 = vld [vmem:[%s1 + $0x14] sm:$0xf]
  %v40 = vld [vmem:[%s1 + $0x18] sm:$0xf]
  %v41 = vld [vmem:[%s1 + $0x1c] sm:$0xf]
  %v42 = vld [vmem:[%s1 + $0x20] sm:$0xf]
  %v43 = vld [vmem:[%s1 + $0x24] sm:$0xf]
  %v44 = vld [vmem:[%s1 + $0x28] sm:$0xf]
  %v45 = vld [vmem:[%s1 + $0x2c] sm:$0xf]
  %v46 = vld [vmem:[%s1 + $0x30] sm:$0xf]
  %v47 = vld [vmem:[%s1 + $0x34] sm:$0xf]
  %v48 = vld [vmem:[%s1 + $0x38] sm:$0xf]
  %v49 = vld [vmem:[%s1 + $0x3c] sm:$0xf]
  %v50 = vld [vmem:[%s1 + $0x40] sm:$0xf]
  %v51 = vld [vmem:[%s1 + $0x44] sm:$0xf]
  %v52 = vld [vmem:[%s1 + $0x48] sm:$0xf]
  %v53 = vld [vmem:[%s1 + $0x4c] sm:$0xf]
  %v54 = vld [vmem:[%s1 + $0x50] sm:$0xf]
  %v55 = vld [vmem:[%s1 + $0x54] sm:$0xf]
  %v56 = vld [vmem:[%s1 + $0x58] sm:$0xf]
  %v57 = vld [vmem:[%s1 + $0x5c] sm:$0xf]
  %v58 = vld [vmem:[%s1 + $0x60] sm:$0xf]
  %v59 = vld [vmem:[%s1 + $0x64] sm:$0xf]
  %v60 = vld [vmem:[%s1 + $0x68] sm:$0xf]
  %v61 = vld [vmem:[%s1 + $0x6c] sm:$0xf]
  %v62 = vld [vmem:[%s1 + $0x70] sm:$0xf]
  %v63 = vld [vmem:[%s1 + $0x74] sm:$0xf]
  %v64 = vld [vmem:[%s1 + $0x78] sm:$0xf]
  %v65 = vld [vmem:[%s1 + $0x7c] sm:$0xf]
  %v70 = vunpack.c.l.b16 %v30
  %v71 = vunpack.c.h.b16 %v30
  %v72 = vunpack.c.l.b16 %v31
  %v73 = vunpack.c.h.b16 %v31
  %v74 = vunpack.c.l.b16 %v32
  %v75 = vunpack.c.h.b16 %v32
  %v76 = vunpack.c.l.b16 %v33
  %v77 = vunpack.c.h.b16 %v33
  %v78 = vpack.c.b16 %v72, %v70
  %v79 = vpack.c.b16 %v73, %v71
  %v80 = vpack.c.b16 %v76, %v74
  %v81 = vpack.c.b16 %v77, %v75
  %v118 = vunpack.c.l.b16 %v34
  %v119 = vunpack.c.l.b16 %v35
  %v120 = vunpack.c.l.b16 %v36
  %v121 = vunpack.c.l.b16 %v37
  %v122 = vunpack.c.l.b16 %v38
  %v123 = vunpack.c.l.b16 %v39
  %v124 = vunpack.c.l.b16 %v40
  %v125 = vunpack.c.l.b16 %v41
  %v126 = vunpack.c.l.b16 %v42
  %v127 = vunpack.c.l.b16 %v43
  %v128 = vunpack.c.l.b16 %v44
  %v129 = vunpack.c.l.b16 %v45
  %v130 = vunpack.c.l.b16 %v46
  %v131 = vunpack.c.l.b16 %v47
  %v132 = vunpack.c.l.b16 %v48
  %v133 = vunpack.c.l.b16 %v49
  %v134 = vunpack.c.l.b16 %v50
  %v135 = vunpack.c.l.b16 %v51
  %v136 = vunpack.c.l.b16 %v52
  %v137 = vunpack.c.l.b16 %v53
  %v138 = vunpack.c.l.b16 %v54
  %v139 = vunpack.c.l.b16 %v55
  %v140 = vunpack.c.l.b16 %v56
  %v141 = vunpack.c.l.b16 %v57
  %v142 = vunpack.c.l.b16 %v58
  %v143 = vunpack.c.l.b16 %v59
  %v144 = vunpack.c.l.b16 %v60
  %v145 = vunpack.c.l.b16 %v61
  %v146 = vunpack.c.l.b16 %v62
  %v147 = vunpack.c.l.b16 %v63
  %v148 = vunpack.c.l.b16 %v64
  %v149 = vunpack.c.l.b16 %v65
  %v150 = vpack.c.b16 %v119, %v118
  %v151 = vpack.c.b16 %v121, %v120
  %v152 = vpack.c.b16 %v123, %v122
  %v153 = vpack.c.b16 %v125, %v124
  %v154 = vpack.c.b16 %v127, %v126
  %v155 = vpack.c.b16 %v129, %v128
  %v156 = vpack.c.b16 %v131, %v130
  %v157 = vpack.c.b16 %v133, %v132
  %v158 = vpack.c.b16 %v135, %v134
  %v159 = vpack.c.b16 %v137, %v136
  %v160 = vpack.c.b16 %v139, %v138
  %v161 = vpack.c.b16 %v141, %v140
  %v162 = vpack.c.b16 %v143, %v142
  %v163 = vpack.c.b16 %v145, %v144
  %v164 = vpack.c.b16 %v147, %v146
  %v165 = vpack.c.b16 %v149, %v148
  %182 = vmatprep.subr.bf16.mxu0 0
  %183 = vmatpush1.bf16.msra.mxu0 %v150
  %184 = vmatprep.subr.bf16.mxu0 0
  %185 = vmatpush1.bf16.msra.mxu0 %v151
  %186 = vmatprep.subr.bf16.mxu0 0
  %187 = vmatpush1.bf16.msra.mxu0 %v152
  %188 = vmatprep.subr.bf16.mxu0 0
  %189 = vmatpush1.bf16.msra.mxu0 %v153
  %190 = vmatprep.subr.bf16.mxu0 0
  %191 = vmatpush1.bf16.msra.mxu0 %v154
  %192 = vmatprep.subr.bf16.mxu0 0
  %193 = vmatpush1.bf16.msra.mxu0 %v155
  %194 = vmatprep.subr.bf16.mxu0 0
  %195 = vmatpush1.bf16.msra.mxu0 %v156
  %196 = vmatprep.subr.bf16.mxu0 0
  %197 = vmatpush1.bf16.msra.mxu0 %v157
  %198 = vmatprep.subr.bf16.mxu0 0
  %199 = vmatpush1.bf16.msra.mxu0 %v158
  %200 = vmatprep.subr.bf16.mxu0 0
  %201 = vmatpush1.bf16.msra.mxu0 %v159
  %202 = vmatprep.subr.bf16.mxu0 0
  %203 = vmatpush1.bf16.msra.mxu0 %v160
  %204 = vmatprep.subr.bf16.mxu0 0
  %205 = vmatpush1.bf16.msra.mxu0 %v161
  %206 = vmatprep.subr.bf16.mxu0 0
  %207 = vmatpush1.bf16.msra.mxu0 %v162
  %208 = vmatprep.subr.bf16.mxu0 0
  %209 = vmatpush1.bf16.msra.mxu0 %v163
  %210 = vmatprep.subr.bf16.mxu0 0
  %211 = vmatpush1.bf16.msra.mxu0 %v164
  %212 = vmatprep.subr.bf16.mxu0 0
  %213 = vmatpush1.bf16.msra.mxu0 %v165
  %214 = vmatprep.mubr.bf16.mxu0 %v79
  %215 = vmatmul.mubr.bf16.gmra.mrb[0].mxu0 %v78
  %v216 = vpop.f32.mrb[0].mxu0
  %v217 = vadd.f32 0.0, %v216
  %v218 = vpop.f32.mrb[0].mxu0
  %v219 = vpop.f32.mrb[0].mxu0
  %v220 = vadd.f32 0.0, %v219
  %v221 = vpop.f32.mrb[0].mxu0
  %222 = vmatprep.mubr.bf16.mxu0 %v81
  %223 = vmatmul.mubr.bf16.gmra.mrb[0].mxu0 %v80
  %v224 = vpop.f32.mrb[0].mxu0
  %v225 = vadd.f32 0.0, %v224
  %v226 = vpop.f32.mrb[0].mxu0
  %v227 = vpop.f32.mrb[0].mxu0
  %v228 = vadd.f32 0.0, %v227
  %v229 = vpop.f32.mrb[0].mxu0
  %230 = vdwg.mxu0
  %v231 = vadd.f32 %v26, %v217
  %v232 = vadd.f32 %v27, %v220
  %v233 = vadd.f32 %v28, %v225
  %v234 = vadd.f32 %v29, %v228
  %235 = vst [vmem:[#allocation2] sm:$0xff] %v231
  %236 = vst [vmem:[#allocation2 + $0x8] sm:$0xff] %v232
  %237 = vst [vmem:[#allocation2 + $0x10] sm:$0xff] %v233
  %238 = vst [vmem:[#allocation2 + $0x18] sm:$0xff] %v234
  // Predicated region
  $region22: #{_lambda_.30} parent=0 // pred_check
    %p239 = pneg %p18
  $region23: #{_lambda_.30} parent=0 // pred_check_branch
    %241 = sbr.rel (%p239) target = $region25
  $region24: #{_lambda_.30} parent=0 // pred_region
    %v242 = vld [vmem:[#allocation2] sm:$0xff]
    %v243 = vld [vmem:[#allocation2 + $0x8] sm:$0xff]
    %v244 = vld [vmem:[#allocation2 + $0x10] sm:$0xff]
    %v245 = vld [vmem:[#allocation2 + $0x18] sm:$0xff]
    %v246 = vld [vmem:[%s2] sm:$0x1]
    %v248 = vlaneseq
    %v249 = vshrl.u32 %v248, 7
    %v250 = vsub.s32 0, %v249
    %v251 = vrot.slane %v246, %v250
    %v253 = vmul.f32 %v242, %v251
    %v254 = vmul.f32 %v243, %v251
    %v255 = vmul.f32 %v244, %v251
    %v256 = vmul.f32 %v245, %v251
    %v257 = vld [vmem:[%s3] sm:$0x1]
    %v259 = vlaneseq
    %v260 = vshrl.u32 %v259, 7
    %v261 = vsub.s32 0, %v260
    %v262 = vrot.slane %v257, %v261
    %v264 = vadd.f32 %v253, %v262
    %v265 = vadd.f32 %v254, %v262
    %v266 = vadd.f32 %v255, %v262
    %v267 = vadd.f32 %v256, %v262
    %v268 = vmax.f32 %v264, 0.0
    %v269 = vmax.f32 %v265, 0.0
    %v270 = vmax.f32 %v266, 0.0
    %v271 = vmax.f32 %v267, 0.0
    %272 = vst [vmem:[%s4] sm:$0xff] %v268
    %273 = vst [vmem:[%s4 + $0x8] sm:$0xff] %v269
    %274 = vst [vmem:[%s4 + $0x10] sm:$0xff] %v270
    %275 = vst [vmem:[%s4 + $0x18] sm:$0xff] %v271
  $region25: #{_lambda_.30} parent=0 // pred_fallthru
    _
  // Predicated region
  $region26: #{_lambda_.30} parent=0 // pred_check
    _
  $region27: #{_lambda_.30} parent=0 // pred_check_branch
    %277 = sbr.rel (0) target = $region29
  $region28: #{_lambda_.30} parent=0 // pred_region
    _
  $region29: #{_lambda_.30} parent=0 // pred_fallthru
    _
  // Predicated region
  $region30: #{_lambda_.30} parent=0 // pred_check
    _
  $region31: #{_lambda_.30} parent=0 // pred_check_branch
    %279 = sbr.rel (0) target = $region33
  $region32: #{_lambda_.30} parent=0 // pred_region
    _
  $region33: #{_lambda_.30} parent=0 // pred_fallthru
    _

// kernel: _lambda_.31
$region0: #{_lambda_.31}
  #allocation0 [shape = 'u32[]', space=smem, size = 0x4, offset = 0x4, fixed_abs, tag = 'smem constant byte address 0x4 - core index']
  #allocation1 [shape = 'u32[144,128]{1,0:T(1,128)}', space=vmem, size = 0x12000, scoped, tag = 'internal scratch']
  #allocation2 [shape = 'f32[32,128]{1,0:T(8,128)}', space=vmem, size = 0x4000, scoped, tag = 'scratch operand']
  %s0 = inlined_call_operand.vmem [shape: bf16[32,128], index: 0, kind: input, shape index: {}]
  %s1 = inlined_call_operand.vmem [shape: bf16[128,128], index: 1, kind: input, shape index: {}]
  %s2 = inlined_call_operand.vmem [shape: f32[1,128], index: 2, kind: input, shape index: {}]
  %s3 = inlined_call_operand.vmem [shape: f32[1,128], index: 3, kind: input, shape index: {}]
  %s4 = inlined_call_operand.vmem [shape: f32[32,128], index: 4, kind: output, shape index: {}]
  %s5 = sld [smem:[#allocation0]]
  $region34: #{_lambda_.31} parent=0
    _
  %s7 = ssub.s32 1, %s5
  %s8 = scalar_select 0, %s7, %s5
  // Predicated region
  $region2: #{_lambda_.31} parent=0 // pred_check
    _
  $region3: #{_lambda_.31} parent=0 // pred_check_branch
    %10 = sbr.rel (0) target = $region5
  $region4: #{_lambda_.31} parent=0 // pred_region
    _
  $region5: #{_lambda_.31} parent=0 // pred_fallthru
    _
  // Predicated region
  $region6: #{_lambda_.31} parent=0 // pred_check
    _
  $region7: #{_lambda_.31} parent=0 // pred_check_branch
    %12 = sbr.rel (0) target = $region9
  $region8: #{_lambda_.31} parent=0 // pred_region
    _
  $region9: #{_lambda_.31} parent=0 // pred_fallthru
    _
  // Predicated region
  $region10: #{_lambda_.31} parent=0 // pred_check
    _
  $region11: #{_lambda_.31} parent=0 // pred_check_branch
    %14 = sbr.rel (0) target = $region13
  $region12: #{_lambda_.31} parent=0 // pred_region
    _
  $region13: #{_lambda_.31} parent=0 // pred_fallthru
    _
  // Predicated region
  $region14: #{_lambda_.31} parent=0 // pred_check
    _
  $region15: #{_lambda_.31} parent=0 // pred_check_branch
    %16 = sbr.rel (0) target = $region17
  $region16: #{_lambda_.31} parent=0 // pred_region
    _
  $region17: #{_lambda_.31} parent=0 // pred_fallthru
    _
  %p18 = scmp.eq.s32.totalorder 0, 0
  // Predicated region
  $region18: #{_lambda_.31} parent=0 // pred_check
    %p19 = pneg %p18
  $region19: #{_lambda_.31} parent=0 // pred_check_branch
    %21 = sbr.rel (%p19) target = $region21
  $region20: #{_lambda_.31} parent=0 // pred_region
    %22 = vst [vmem:[#allocation2] sm:$0xff] 0.0
    %23 = vst [vmem:[#allocation2 + $0x8] sm:$0xff] 0.0
    %24 = vst [vmem:[#allocation2 + $0x10] sm:$0xff] 0.0
    %25 = vst [vmem:[#allocation2 + $0x18] sm:$0xff] 0.0
  $region21: #{_lambda_.31} parent=0 // pred_fallthru
    _
  %v26 = vld [vmem:[#allocation2] sm:$0xff]
  %v27 = vld [vmem:[#allocation2 + $0x8] sm:$0xff]
  %v28 = vld [vmem:[#allocation2 + $0x10] sm:$0xff]
  %v29 = vld [vmem:[#allocation2 + $0x18] sm:$0xff]
  %v30 = vld [vmem:[%s0] sm:$0xf]
  %v31 = vld [vmem:[%s0 + $0x4] sm:$0xf]
  %v32 = vld [vmem:[%s0 + $0x8] sm:$0xf]
  %v33 = vld [vmem:[%s0 + $0xc] sm:$0xf]
  %v34 = vld [vmem:[%s1] sm:$0xf]
  %v35 = vld [vmem:[%s1 + $0x4] sm:$0xf]
  %v36 = vld [vmem:[%s1 + $0x8] sm:$0xf]
  %v37 = vld [vmem:[%s1 + $0xc] sm:$0xf]
  %v38 = vld [vmem:[%s1 + $0x10] sm:$0xf]
  %v39 = vld [vmem:[%s1 + $0x14] sm:$0xf]
  %v40 = vld [vmem:[%s1 + $0x18] sm:$0xf]
  %v41 = vld [vmem:[%s1 + $0x1c] sm:$0xf]
  %v42 = vld [vmem:[%s1 + $0x20] sm:$0xf]
  %v43 = vld [vmem:[%s1 + $0x24] sm:$0xf]
  %v44 = vld [vmem:[%s1 + $0x28] sm:$0xf]
  %v45 = vld [vmem:[%s1 + $0x2c] sm:$0xf]
  %v46 = vld [vmem:[%s1 + $0x30] sm:$0xf]
  %v47 = vld [vmem:[%s1 + $0x34] sm:$0xf]
  %v48 = vld [vmem:[%s1 + $0x38] sm:$0xf]
  %v49 = vld [vmem:[%s1 + $0x3c] sm:$0xf]
  %v54 = vunpack.c.l.b16 %v30
  %v55 = vunpack.c.l.b16 %v31
  %v56 = vunpack.c.l.b16 %v32
  %v57 = vunpack.c.l.b16 %v33
  %v58 = vpack.c.b16 %v55, %v54
  %v59 = vpack.c.b16 %v57, %v56
  %v78 = vunpack.c.l.b16 %v34
  %v79 = vunpack.c.l.b16 %v35
  %v80 = vunpack.c.l.b16 %v36
  %v81 = vunpack.c.l.b16 %v37
  %v82 = vunpack.c.l.b16 %v38
  %v83 = vunpack.c.l.b16 %v39
  %v84 = vunpack.c.l.b16 %v40
  %v85 = vunpack.c.l.b16 %v41
  %v86 = vunpack.c.l.b16 %v42
  %v87 = vunpack.c.l.b16 %v43
  %v88 = vunpack.c.l.b16 %v44
  %v89 = vunpack.c.l.b16 %v45
  %v90 = vunpack.c.l.b16 %v46
  %v91 = vunpack.c.l.b16 %v47
  %v92 = vunpack.c.l.b16 %v48
  %v93 = vunpack.c.l.b16 %v49
  %v94 = vpack.c.b16 %v79, %v78
  %v95 = vpack.c.b16 %v81, %v80
  %v96 = vpack.c.b16 %v83, %v82
  %v97 = vpack.c.b16 %v85, %v84
  %v98 = vpack.c.b16 %v87, %v86
  %v99 = vpack.c.b16 %v89, %v88
  %v100 = vpack.c.b16 %v91, %v90
  %v101 = vpack.c.b16 %v93, %v92
  %110 = vmatprep.subr.bf16.mxu0 0
  %111 = vmatpush1.bf16.msra.mxu0 %v94
  %112 = vmatprep.subr.bf16.mxu0 0
  %113 = vmatpush1.bf16.msra.mxu0 %v95
  %114 = vmatprep.subr.bf16.mxu0 0
  %115 = vmatpush1.bf16.msra.mxu0 %v96
  %116 = vmatprep.subr.bf16.mxu0 0
  %117 = vmatpush1.bf16.msra.mxu0 %v97
  %118 = vmatprep.subr.bf16.mxu0 0
  %119 = vmatpush1.bf16.msra.mxu0 %v98
  %120 = vmatprep.subr.bf16.mxu0 0
  %121 = vmatpush1.bf16.msra.mxu0 %v99
  %122 = vmatprep.subr.bf16.mxu0 0
  %123 = vmatpush1.bf16.msra.mxu0 %v100
  %124 = vmatprep.subr.bf16.mxu0 0
  %125 = vmatpush1.bf16.msra.mxu0 %v101
  %126 = vmatprep.subr.bf16.mxu0 0
  %127 = vmatpush1.bf16.msra.mxu0 0
  %128 = vmatprep.subr.bf16.mxu0 0
  %129 = vmatpush1.bf16.msra.mxu0 0
  %130 = vmatprep.subr.bf16.mxu0 0
  %131 = vmatpush1.bf16.msra.mxu0 0
  %132 = vmatprep.subr.bf16.mxu0 0
  %133 = vmatpush1.bf16.msra.mxu0 0
  %134 = vmatprep.subr.bf16.mxu0 0
  %135 = vmatpush1.bf16.msra.mxu0 0
  %136 = vmatprep.subr.bf16.mxu0 0
  %137 = vmatpush1.bf16.msra.mxu0 0
  %138 = vmatprep.subr.bf16.mxu0 0
  %139 = vmatpush1.bf16.msra.mxu0 0
  %140 = vmatprep.subr.bf16.mxu0 0
  %141 = vmatpush1.bf16.msra.mxu0 0
  %142 = vmatprep.mubr.bf16.mxu0 0
  %143 = vmatmul.mubr.bf16.gmra.mrb[0].mxu0 %v58
  %v144 = vpop.f32.mrb[0].mxu0
  %v145 = vadd.f32 0.0, %v144
  %v146 = vpop.f32.mrb[0].mxu0
  %v147 = vpop.f32.mrb[0].mxu0
  %v148 = vadd.f32 0.0, %v147
  %v149 = vpop.f32.mrb[0].mxu0
  %150 = vmatprep.mubr.bf16.mxu0 0
  %151 = vmatmul.mubr.bf16.gmra.mrb[0].mxu0 %v59
  %v152 = vpop.f32.mrb[0].mxu0
  %v153 = vadd.f32 0.0, %v152
  %v154 = vpop.f32.mrb[0].mxu0
  %v155 = vpop.f32.mrb[0].mxu0
  %v156 = vadd.f32 0.0, %v155
  %v157 = vpop.f32.mrb[0].mxu0
  %158 = vdwg.mxu0
  %v159 = vadd.f32 %v26, %v145
  %v160 = vadd.f32 %v27, %v148
  %v161 = vadd.f32 %v28, %v153
  %v162 = vadd.f32 %v29, %v156
  %163 = vst [vmem:[#allocation2] sm:$0xff] %v159
  %164 = vst [vmem:[#allocation2 + $0x8] sm:$0xff] %v160
  %165 = vst [vmem:[#allocation2 + $0x10] sm:$0xff] %v161
  %166 = vst [vmem:[#allocation2 + $0x18] sm:$0xff] %v162
  // Predicated region
  $region22: #{_lambda_.31} parent=0 // pred_check
    %p167 = pneg %p18
  $region23: #{_lambda_.31} parent=0 // pred_check_branch
    %169 = sbr.rel (%p167) target = $region25
  $region24: #{_lambda_.31} parent=0 // pred_region
    %v170 = vld [vmem:[#allocation2] sm:$0xff]
    %v171 = vld [vmem:[#allocation2 + $0x8] sm:$0xff]
    %v172 = vld [vmem:[#allocation2 + $0x10] sm:$0xff]
    %v173 = vld [vmem:[#allocation2 + $0x18] sm:$0xff]
    %v174 = vld [vmem:[%s2] sm:$0x1]
    %v176 = vlaneseq
    %v177 = vshrl.u32 %v176, 7
    %v178 = vsub.s32 0, %v177
    %v179 = vrot.slane %v174, %v178
    %v181 = vmul.f32 %v170, %v179
    %v182 = vmul.f32 %v171, %v179
    %v183 = vmul.f32 %v172, %v179
    %v184 = vmul.f32 %v173, %v179
    %v185 = vld [vmem:[%s3] sm:$0x1]
    %v187 = vlaneseq
    %v188 = vshrl.u32 %v187, 7
    %v189 = vsub.s32 0, %v188
    %v190 = vrot.slane %v185, %v189
    %v192 = vadd.f32 %v181, %v190
    %v193 = vadd.f32 %v182, %v190
    %v194 = vadd.f32 %v183, %v190
    %v195 = vadd.f32 %v184, %v190
    %196 = vst [vmem:[%s4] sm:$0xff] %v192
    %197 = vst [vmem:[%s4 + $0x8] sm:$0xff] %v193
    %198 = vst [vmem:[%s4 + $0x10] sm:$0xff] %v194
    %199 = vst [vmem:[%s4 + $0x18] sm:$0xff] %v195
  $region25: #{_lambda_.31} parent=0 // pred_fallthru
    _
  // Predicated region
  $region26: #{_lambda_.31} parent=0 // pred_check
    _
  $region27: #{_lambda_.31} parent=0 // pred_check_branch
    %201 = sbr.rel (0) target = $region29
  $region28: #{_lambda_.31} parent=0 // pred_region
    _
  $region29: #{_lambda_.31} parent=0 // pred_fallthru
    _
  // Predicated region
  $region30: #{_lambda_.31} parent=0 // pred_check
    _
  $region31: #{_lambda_.31} parent=0 // pred_check_branch
    %203 = sbr.rel (0) target = $region33
  $region32: #{_lambda_.31} parent=0 // pred_region
    _
  $region33: #{_lambda_.31} parent=0 // pred_fallthru
    _

// kernel: _lambda_.33
$region0: #{_lambda_.33}
  #allocation0 [shape = 'u32[]', space=smem, size = 0x4, offset = 0x4, fixed_abs, tag = 'smem constant byte address 0x4 - core index']
  #allocation1 [shape = 'u32[144,128]{1,0:T(1,128)}', space=vmem, size = 0x12000, scoped, tag = 'internal scratch']
  %s0 = inlined_call_operand.vmem [shape: f32[2,16,32], index: 0, kind: input, shape index: {}]
  %s1 = inlined_call_operand.vmem [shape: f32[32,4], index: 1, kind: input, shape index: {}]
  %s2 = inlined_call_operand.vmem [shape: f32[1,4], index: 2, kind: input, shape index: {}]
  %s3 = inlined_call_operand.vmem [shape: f32[4,32], index: 3, kind: input, shape index: {}]
  %s4 = inlined_call_operand.vmem [shape: f32[1,32], index: 4, kind: input, shape index: {}]
  %s5 = inlined_call_operand.vmem [shape: f32[2,16,32], index: 5, kind: output, shape index: {}]
  %s6 = sld [smem:[#allocation0]]
  $region53: #{_lambda_.33} parent=0
    _
  %s8 = ssub.s32 1, %s6
  %s9 = scalar_select 0, %s8, %s6
  loop: start=0, step=1, limit=4
  $region2: #{_lambda_.33} parent=0 // loop_pre_header
    _
  $region3: #{_lambda_.33} parent=0 // loop_header
    %s11 = sphi 0, %s15
    %p12 = scmp.ge.s32.totalorder %s11, 4
    %s21 = sphi 0, %s23
    %s24 = sphi 0, %s21
    %s25 = sphi 0, %s24
    %s41 = sphi 0, %s25
    %s45 = sphi 0, %s45
    %s47 = sphi 0, %s45
    %s48 = sphi 0, %s47
    %s62 = sphi 0, %s48
    %s66 = sphi 0, %s66
    %s68 = sphi 0, %s66
    %s69 = sphi 0, %s68
    %s83 = sphi 0, %s69
    %s87 = sphi 0, %s87
    %s89 = sphi 0, %s87
    %s90 = sphi 0, %s89
    %s104 = sphi 0, %s90
    %s108 = sphi 0, %s108
    %s110 = sphi 0, %s108
    %s111 = sphi 0, %s110
    %s125 = sphi 0, %s111
    %s131 = sphi 0, %s133
    %s134 = sphi 0, %s131
    %s135 = sphi 0, %s134
    %s151 = sphi 0, %s135
  $region4: #{_lambda_.33} parent=0 // loop_header_branch
    %14 = sbr.rel (%p12) target = $region8
  $region5: #{_lambda_.33} parent=0 // loop_body
    %s16 = ssub.s32 %s11, 1
    %s17 = ssub.s32 %s11, 2
    %s18 = sadd.s32 %s11, 1
    %s19 = ssub.s32 %s11, %s18
    %p20 = scmp.eq.s32.totalorder %s19, 0
    %s22 = sadd.s32 %s21, 1
    %s23 = scalar_select %p20, %s21, %s22
    %p26 = pneg %p20
    %p27 = scmp.eq.s32.totalorder %s11, 1
    %p28 = por %p26, %p27
    %p29 = scmp.ne.s32.totalorder %s21, %s24
    %p30 = scmp.eq.s32.totalorder %s11, 0
    %p31 = por %p29, %p30
    %p32 = scmp.ne.s32.totalorder %s21, %s24
    %p33 = scmp.eq.s32.totalorder %s16, 1
    %p34 = por %p32, %p33
    %p35 = scmp.ne.s32.totalorder %s24, %s25
    %p36 = scmp.eq.s32.totalorder %s16, 0
    %p37 = por %p35, %p36
    %p38 = scmp.ne.s32.totalorder %s24, %s25
    %p39 = scmp.eq.s32.totalorder %s17, 1
    %p40 = por %p38, %p39
    %p42 = scmp.ne.s32.totalorder %s25, %s41
    %p43 = scmp.eq.s32.totalorder %s17, 0
    %p44 = por %p42, %p43
    %s46 = sadd.s32 %s45, 1
    %p49 = scmp.eq.s32.totalorder %s11, 1
    %p50 = scmp.ne.s32.totalorder %s45, %s47
    %p51 = scmp.eq.s32.totalorder %s11, 0
    %p52 = por %p50, %p51
    %p53 = scmp.ne.s32.totalorder %s45, %s47
    %p54 = scmp.eq.s32.totalorder %s16, 1
    %p55 = por %p53, %p54
    %p56 = scmp.ne.s32.totalorder %s47, %s48
    %p57 = scmp.eq.s32.totalorder %s16, 0
    %p58 = por %p56, %p57
    %p59 = scmp.ne.s32.totalorder %s47, %s48
    %p60 = scmp.eq.s32.totalorder %s17, 1
    %p61 = por %p59, %p60
    %p63 = scmp.ne.s32.totalorder %s48, %s62
    %p64 = scmp.eq.s32.totalorder %s17, 0
    %p65 = por %p63, %p64
    %s67 = sadd.s32 %s66, 1
    %p70 = scmp.eq.s32.totalorder %s11, 1
    %p71 = scmp.ne.s32.totalorder %s66, %s68
    %p72 = scmp.eq.s32.totalorder %s11, 0
    %p73 = por %p71, %p72
    %p74 = scmp.ne.s32.totalorder %s66, %s68
    %p75 = scmp.eq.s32.totalorder %s16, 1
    %p76 = por %p74, %p75
    %p77 = scmp.ne.s32.totalorder %s68, %s69
    %p78 = scmp.eq.s32.totalorder %s16, 0
    %p79 = por %p77, %p78
    %p80 = scmp.ne.s32.totalorder %s68, %s69
    %p81 = scmp.eq.s32.totalorder %s17, 1
    %p82 = por %p80, %p81
    %p84 = scmp.ne.s32.totalorder %s69, %s83
    %p85 = scmp.eq.s32.totalorder %s17, 0
    %p86 = por %p84, %p85
    %s88 = sadd.s32 %s87, 1
    %p91 = scmp.eq.s32.totalorder %s11, 1
    %p92 = scmp.ne.s32.totalorder %s87, %s89
    %p93 = scmp.eq.s32.totalorder %s11, 0
    %p94 = por %p92, %p93
    %p95 = scmp.ne.s32.totalorder %s87, %s89
    %p96 = scmp.eq.s32.totalorder %s16, 1
    %p97 = por %p95, %p96
    %p98 = scmp.ne.s32.totalorder %s89, %s90
    %p99 = scmp.eq.s32.totalorder %s16, 0
    %p100 = por %p98, %p99
    %p101 = scmp.ne.s32.totalorder %s89, %s90
    %p102 = scmp.eq.s32.totalorder %s17, 1
    %p103 = por %p101, %p102
    %p105 = scmp.ne.s32.totalorder %s90, %s104
    %p106 = scmp.eq.s32.totalorder %s17, 0
    %p107 = por %p105, %p106
    %s109 = sadd.s32 %s108, 1
    %p112 = scmp.eq.s32.totalorder %s11, 1
    %p113 = scmp.ne.s32.totalorder %s108, %s110
    %p114 = scmp.eq.s32.totalorder %s11, 0
    %p115 = por %p113, %p114
    %p116 = scmp.ne.s32.totalorder %s108, %s110
    %p117 = scmp.eq.s32.totalorder %s16, 1
    %p118 = por %p116, %p117
    %p119 = scmp.ne.s32.totalorder %s110, %s111
    %p120 = scmp.eq.s32.totalorder %s16, 0
    %p121 = por %p119, %p120
    %p122 = scmp.ne.s32.totalorder %s110, %s111
    %p123 = scmp.eq.s32.totalorder %s17, 1
    %p124 = por %p122, %p123
    %p126 = scmp.ne.s32.totalorder %s111, %s125
    %p127 = scmp.eq.s32.totalorder %s17, 0
    %p128 = por %p126, %p127
    %s129 = ssub.s32 %s11, %s18
    %p130 = scmp.eq.s32.totalorder %s129, 0
    %s132 = sadd.s32 %s131, 1
    %s133 = scalar_select %p130, %s131, %s132
    %p136 = pneg %p130
    %p137 = scmp.eq.s32.totalorder %s11, 1
    %p138 = por %p136, %p137
    %p139 = scmp.ne.s32.totalorder %s131, %s134
    %p140 = scmp.eq.s32.totalorder %s11, 0
    %p141 = por %p139, %p140
    %p142 = scmp.ne.s32.totalorder %s131, %s134
    %p143 = scmp.eq.s32.totalorder %s16, 1
    %p144 = por %p142, %p143
    %p145 = scmp.ne.s32.totalorder %s134, %s135
    %p146 = scmp.eq.s32.totalorder %s16, 0
    %p147 = por %p145, %p146
    %p148 = scmp.ne.s32.totalorder %s134, %s135
    %p149 = scmp.eq.s32.totalorder %s17, 1
    %p150 = por %p148, %p149
    %p152 = scmp.ne.s32.totalorder %s135, %s151
    %p153 = scmp.eq.s32.totalorder %s17, 0
    %p154 = por %p152, %p153
    %p155 = scmp.le.s32.totalorder 1, %s11
    %p156 = scmp.lt.s32.totalorder %s11, 3
    %p157 = pnand %p155, %p156
    %p158 = pneg %p157
    // Predicated region
    $region9: #{_lambda_.33} parent=5 // pred_check
      _
    $region10: #{_lambda_.33} parent=5 // pred_check_branch
      %160 = sbr.rel (%p157) target = $region12
    $region11: #{_lambda_.33} parent=5 // pred_region
      %s161 = ssub.s32 %s11, 1
      // Predicated region
      $region13: #{_lambda_.33} parent=11 // pred_check
        %p162 = pneg %p58
      $region14: #{_lambda_.33} parent=11 // pred_check_branch
        %164 = sbr.rel (%p162) target = $region16
      $region15: #{_lambda_.33} parent=11 // pred_region
        _
      $region16: #{_lambda_.33} parent=11 // pred_fallthru
        _
      // Predicated region
      $region17: #{_lambda_.33} parent=11 // pred_check
        %p165 = pneg %p79
      $region18: #{_lambda_.33} parent=11 // pred_check_branch
        %167 = sbr.rel (%p165) target = $region20
      $region19: #{_lambda_.33} parent=11 // pred_region
        _
      $region20: #{_lambda_.33} parent=11 // pred_fallthru
        _
      // Predicated region
      $region21: #{_lambda_.33} parent=11 // pred_check
        %p168 = pneg %p100
      $region22: #{_lambda_.33} parent=11 // pred_check_branch
        %170 = sbr.rel (%p168) target = $region24
      $region23: #{_lambda_.33} parent=11 // pred_region
        _
      $region24: #{_lambda_.33} parent=11 // pred_fallthru
        _
      // Predicated region
      $region25: #{_lambda_.33} parent=11 // pred_check
        %p171 = pneg %p121
      $region26: #{_lambda_.33} parent=11 // pred_check_branch
        %173 = sbr.rel (%p171) target = $region28
      $region27: #{_lambda_.33} parent=11 // pred_region
        _
      $region28: #{_lambda_.33} parent=11 // pred_fallthru
        _
    $region12: #{_lambda_.33} parent=5 // pred_fallthru
      _
    %p174 = scmp.lt.s32.totalorder %s11, 2
    // Predicated region
    $region29: #{_lambda_.33} parent=5 // pred_check
      %p175 = pneg %p174
    $region30: #{_lambda_.33} parent=5 // pred_check_branch
      %177 = sbr.rel (%p175) target = $region32
    $region31: #{_lambda_.33} parent=5 // pred_region
      // Predicated region
      $region33: #{_lambda_.33} parent=31 // pred_check
        %p178 = pneg %p31
      $region34: #{_lambda_.33} parent=31 // pred_check_branch
        %180 = sbr.rel (%p178) target = $region36
      $region35: #{_lambda_.33} parent=31 // pred_region
        %p181 = scmp.lt.s32.totalorder %s11, 1
        %s182 = scalar_select %p181, %s11, 1
        %s183 = smul.addr %s182, 2
        %s184 = smul.addr %s183, 8
        %s185 = scalar_lea.vmem %s0, %s184
      $region36: #{_lambda_.33} parent=31 // pred_fallthru
        _
    $region32: #{_lambda_.33} parent=5 // pred_fallthru
      _
    %p186 = scmp.le.s32.totalorder 1, %s11
    %p187 = scmp.lt.s32.totalorder %s11, 3
    %p188 = pnand %p186, %p187
    %p189 = pneg %p188
    // Predicated region
    $region37: #{_lambda_.33} parent=5 // pred_check
      _
    $region38: #{_lambda_.33} parent=5 // pred_check_branch
      %191 = sbr.rel (%p188) target = $region40
    $region39: #{_lambda_.33} parent=5 // pred_region
      %s192 = ssub.s32 %s11, 1
      %p193 = scmp.lt.s32.totalorder %s16, 1
      %s194 = scalar_select %p193, %s16, 1
      %s195 = smul.addr %s194, 2
      %s196 = smul.addr %s195, 8
      %s197 = scalar_lea.vmem %s0, %s196
      %p198 = pneg %p37
      %p199 = pneg %p34
      %p200 = pneg %p58
      %p201 = pneg %p55
      %p202 = pneg %p79
      %p203 = pneg %p76
      %p204 = pneg %p100
      %p205 = pneg %p97
      %p206 = pneg %p121
      %p207 = pneg %p118
      %p208 = pneg %p147
      %p209 = pneg %p144
      %p210 = scmp.lt.s32.totalorder %s16, 1
      %s211 = scalar_select %p210, %s16, 1
      %s212 = smul.addr %s211, 2
      %s213 = smul.addr %s212, 8
      %s214 = scalar_lea.vmem %s5, %s213
      %p215 = scmp.lt.s32.totalorder %s16, 1
      %s216 = scalar_select %p215, %s16, 1
      %s217 = smul.addr %s216, 2
      %s218 = smul.addr %s217, 8
      %s219 = scalar_lea.vmem %s0, %s218
      %p220 = scmp.lt.s32.totalorder %s16, 1
      %s221 = scalar_select %p220, %s16, 1
      %s222 = smul.addr %s221, 2
      %s223 = smul.addr %s222, 8
      %s224 = scalar_lea.vmem %s5, %s223
      %v225 = vld [vmem:[%s219] sm:$0xff]
      %v226 = vld [vmem:[%s219 + $0x8] sm:$0xff]
      %vm227 = vcmask 261120
      %v228 = vsel %vm227, %v225, 0.0
      %v229 = vsel %vm227, %v226, 0.0
      %v230 = vadd.f32 %v228, %v229
      %v231 = vrot.slane %v230, 4
      %v232 = vadd.f32 %v230, %v231
      %v233 = vrot.slane %v232, 2
      %v234 = vadd.f32 %v232, %v233
      %v235 = vrot.slane %v234, 1
      %v236 = vadd.f32 %v234, %v235
      %v237 = vrcp.pop 16.0
      %v238 = vmul.f32 %v236, %v237
      %v239 = vld [vmem:[%s1] sm:$0xff]
      %v240 = vld [vmem:[%s1 + $0x8] sm:$0xff]
      %v241 = vld [vmem:[%s1 + $0x10] sm:$0xff]
      %v242 = vld [vmem:[%s1 + $0x18] sm:$0xff]
      %v243 = vld [vmem:[%s2] sm:$0x1]
      %v245 = vsel %vm227, %v238, 0
      %247 = vmatprep.subr.mxu0 0.0
      %248 = vmatpush1.msra.mxu0 %v239
      %249 = vmatprep.subr.mxu0 0.0
      %250 = vmatpush1.msra.mxu0 %v240
      %251 = vmatprep.subr.mxu0 0.0
      %252 = vmatpush1.msra.mxu0 %v241
      %253 = vmatprep.subr.mxu0 0.0
      %254 = vmatpush1.msra.mxu0 %v242
      %255 = vmatprep.subr.mxu0 0.0
      %256 = vmatpush1.msra.mxu0 0.0
      %257 = vmatprep.subr.mxu0 0.0
      %258 = vmatpush1.msra.mxu0 0.0
      %259 = vmatprep.subr.mxu0 0.0
      %260 = vmatpush1.msra.mxu0 0.0
      %261 = vmatprep.subr.mxu0 0.0
      %262 = vmatpush1.msra.mxu0 0.0
      %263 = vmatprep.subr.mxu0 0.0
      %264 = vmatpush1.msra.mxu0 0.0
      %265 = vmatprep.subr.mxu0 0.0
      %266 = vmatpush1.msra.mxu0 0.0
      %267 = vmatprep.subr.mxu0 0.0
      %268 = vmatpush1.msra.mxu0 0.0
      %269 = vmatprep.subr.mxu0 0.0
      %270 = vmatpush1.msra.mxu0 0.0
      %271 = vmatprep.subr.mxu0 0.0
      %272 = vmatpush1.msra.mxu0 0.0
      %273 = vmatprep.subr.mxu0 0.0
      %274 = vmatpush1.msra.mxu0 0.0
      %275 = vmatprep.subr.mxu0 0.0
      %276 = vmatpush1.msra.mxu0 0.0
      %277 = vmatprep.subr.mxu0 0.0
      %278 = vmatpush1.msra.mxu0 0.0
      %279 = vmatprep.subr.mxu0 0.0
      %280 = vmatpush1.msra.mxu0 0.0
      %281 = vmatprep.subr.mxu0 0.0
      %282 = vmatpush1.msra.mxu0 0.0
      %283 = vmatprep.subr.mxu0 0.0
      %284 = vmatpush1.msra.mxu0 0.0
      %285 = vmatprep.subr.mxu0 0.0
      %286 = vmatpush1.msra.mxu0 0.0
      %287 = vmatprep.subr.mxu0 0.0
      %288 = vmatpush1.msra.mxu0 0.0
      %289 = vmatprep.subr.mxu0 0.0
      %290 = vmatpush1.msra.mxu0 0.0
      %291 = vmatprep.subr.mxu0 0.0
      %292 = vmatpush1.msra.mxu0 0.0
      %293 = vmatprep.subr.mxu0 0.0
      %294 = vmatpush1.msra.mxu0 0.0
      %295 = vmatprep.subr.mxu0 0.0
      %296 = vmatpush1.msra.mxu0 0.0
      %297 = vmatprep.subr.mxu0 0.0
      %298 = vmatpush1.msra.mxu0 0.0
      %299 = vmatprep.subr.mxu0 0.0
      %300 = vmatpush1.msra.mxu0 0.0
      %301 = vmatprep.subr.mxu0 0.0
      %302 = vmatpush1.msra.mxu0 0.0
      %303 = vmatprep.subr.mxu0 0.0
      %304 = vmatpush1.msra.mxu0 0.0
      %305 = vmatprep.subr.mxu0 0.0
      %306 = vmatpush1.msra.mxu0 0.0
      %307 = vmatprep.subr.mxu0 0.0
      %308 = vmatpush1.msra.mxu0 0.0
      %309 = vmatprep.subr.mxu0 0.0
      %310 = vmatpush1.msra.mxu0 0.0
      %311 = vmatprep.mubr.f32.mxu0 0.0
      %312 = vmatmul.mubr.f32.gmra.mrb[0].mxu0 %v245
      %v313 = vpop.f32.mrb[0].mxu0
      %v314 = vadd.f32 %v243, %v313
      %v315 = vpop.f32.mrb[0].mxu0
      %316 = vdwg.mxu0
      %v317 = vmax.f32 %v314, 0.0
      %v318 = vld [vmem:[%s3] sm:$0xf]
      %v319 = vld [vmem:[%s4] sm:$0x1]
      %vm320 = vcmask 31744
      %v322 = vsel %vm320, %v317, 0
      %vm324 = vcmask 1043456
      %v326 = vsel %vm324, %v318, 0
      %328 = vmatprep.subr.mxu0 0.0
      %329 = vmatpush1.msra.mxu0 %v326
      %330 = vmatprep.subr.mxu0 0.0
      %331 = vmatpush1.msra.mxu0 0.0
      %332 = vmatprep.subr.mxu0 0.0
      %333 = vmatpush1.msra.mxu0 0.0
      %334 = vmatprep.subr.mxu0 0.0
      %335 = vmatpush1.msra.mxu0 0.0
      %336 = vmatprep.subr.mxu0 0.0
      %337 = vmatpush1.msra.mxu0 0.0
      %338 = vmatprep.subr.mxu0 0.0
      %339 = vmatpush1.msra.mxu0 0.0
      %340 = vmatprep.subr.mxu0 0.0
      %341 = vmatpush1.msra.mxu0 0.0
      %342 = vmatprep.subr.mxu0 0.0
      %343 = vmatpush1.msra.mxu0 0.0
      %344 = vmatprep.subr.mxu0 0.0
      %345 = vmatpush1.msra.mxu0 0.0
      %346 = vmatprep.subr.mxu0 0.0
      %347 = vmatpush1.msra.mxu0 0.0
      %348 = vmatprep.subr.mxu0 0.0
      %349 = vmatpush1.msra.mxu0 0.0
      %350 = vmatprep.subr.mxu0 0.0
      %351 = vmatpush1.msra.mxu0 0.0
      %352 = vmatprep.subr.mxu0 0.0
      %353 = vmatpush1.msra.mxu0 0.0
      %354 = vmatprep.subr.mxu0 0.0
      %355 = vmatpush1.msra.mxu0 0.0
      %356 = vmatprep.subr.mxu0 0.0
      %357 = vmatpush1.msra.mxu0 0.0
      %358 = vmatprep.subr.mxu0 0.0
      %359 = vmatpush1.msra.mxu0 0.0
      %360 = vmatprep.subr.mxu0 0.0
      %361 = vmatpush1.msra.mxu0 0.0
      %362 = vmatprep.subr.mxu0 0.0
      %363 = vmatpush1.msra.mxu0 0.0
      %364 = vmatprep.subr.mxu0 0.0
      %365 = vmatpush1.msra.mxu0 0.0
      %366 = vmatprep.subr.mxu0 0.0
      %367 = vmatpush1.msra.mxu0 0.0
      %368 = vmatprep.subr.mxu0 0.0
      %369 = vmatpush1.msra.mxu0 0.0
      %370 = vmatprep.subr.mxu0 0.0
      %371 = vmatpush1.msra.mxu0 0.0
      %372 = vmatprep.subr.mxu0 0.0
      %373 = vmatpush1.msra.mxu0 0.0
      %374 = vmatprep.subr.mxu0 0.0
      %375 = vmatpush1.msra.mxu0 0.0
      %376 = vmatprep.subr.mxu0 0.0
      %377 = vmatpush1.msra.mxu0 0.0
      %378 = vmatprep.subr.mxu0 0.0
      %379 = vmatpush1.msra.mxu0 0.0
      %380 = vmatprep.subr.mxu0 0.0
      %381 = vmatpush1.msra.mxu0 0.0
      %382 = vmatprep.subr.mxu0 0.0
      %383 = vmatpush1.msra.mxu0 0.0
      %384 = vmatprep.subr.mxu0 0.0
      %385 = vmatpush1.msra.mxu0 0.0
      %386 = vmatprep.subr.mxu0 0.0
      %387 = vmatpush1.msra.mxu0 0.0
      %388 = vmatprep.subr.mxu0 0.0
      %389 = vmatpush1.msra.mxu0 0.0
      %390 = vmatprep.subr.mxu0 0.0
      %391 = vmatpush1.msra.mxu0 0.0
      %392 = vmatprep.mubr.f32.mxu0 0.0
      %393 = vmatmul.mubr.f32.gmra.mrb[0].mxu0 %v322
      %v394 = vpop.f32.mrb[0].mxu0
      %v395 = vadd.f32 %v319, %v394
      %v396 = vpop.f32.mrb[0].mxu0
      %397 = vdwg.mxu0
      %v398 = vxor.u32 %v395, 2147483648
      %v399 = vmul.f32 %v398, 1.442695
      %v400 = vpow.pop %v399
      %v401 = vadd.f32 %v400, 1.0
      %v402 = vrcp.pop %v401
      %v403 = vmul.f32 1.0, %v402
      %v404 = vlaneseq
      %v405 = vshrl.u32 %v404, 7
      %v406 = vsub.s32 0, %v405
      %v407 = vrot.slane %v403, %v406
      %v408 = vmul.f32 %v225, %v407
      %v409 = vmul.f32 %v226, %v407
      %410 = vst.msk [vmem:[%s224] sm:$0xff] %vm227, %v408
      %411 = vst.msk [vmem:[%s224 + $0x8] sm:$0xff] %vm227, %v409
      %p412 = scmp.lt.s32.totalorder %s16, 1
      %s413 = scalar_select %p412, %s16, 1
      %s414 = smul.addr %s413, 2
      %s415 = smul.addr %s414, 8
      %s416 = scalar_lea.vmem %s5, %s415
      // Predicated region
      $region41: #{_lambda_.33} parent=39 // pred_check
        %p417 = pneg %p144
      $region42: #{_lambda_.33} parent=39 // pred_check_branch
        %419 = sbr.rel (%p417) target = $region44
      $region43: #{_lambda_.33} parent=39 // pred_region
        _
      $region44: #{_lambda_.33} parent=39 // pred_fallthru
        _
    $region40: #{_lambda_.33} parent=5 // pred_fallthru
      _
    %p420 = scmp.le.s32.totalorder 2, %s11
    // Predicated region
    $region45: #{_lambda_.33} parent=5 // pred_check
      %p421 = pneg %p420
    $region46: #{_lambda_.33} parent=5 // pred_check_branch
      %423 = sbr.rel (%p421) target = $region48
    $region47: #{_lambda_.33} parent=5 // pred_region
      %s424 = ssub.s32 %s11, 2
      // Predicated region
      $region49: #{_lambda_.33} parent=47 // pred_check
        %p425 = pneg %p150
      $region50: #{_lambda_.33} parent=47 // pred_check_branch
        %427 = sbr.rel (%p425) target = $region52
      $region51: #{_lambda_.33} parent=47 // pred_region
        %p428 = scmp.lt.s32.totalorder %s17, 1
        %s429 = scalar_select %p428, %s17, 1
        %s430 = smul.addr %s429, 2
        %s431 = smul.addr %s430, 8
        %s432 = scalar_lea.vmem %s5, %s431
      $region52: #{_lambda_.33} parent=47 // pred_fallthru
        _
    $region48: #{_lambda_.33} parent=5 // pred_fallthru
      _
  $region6: #{_lambda_.33} parent=0 // loop_footer
    %s15 = sadd.s32 1, %s11
  $region7: #{_lambda_.33} parent=0 // loop_footer_branch
    %10 = sbr.rel target = $region3
  $region8: #{_lambda_.33} parent=0 // loop_exit
    _

// kernel: _lambda_.32
$region0: #{_lambda_.32}
  #allocation0 [shape = 'u32[]', space=smem, size = 0x4, offset = 0x4, fixed_abs, tag = 'smem constant byte address 0x4 - core index']
  #allocation1 [shape = 'u32[144,128]{1,0:T(1,128)}', space=vmem, size = 0x12000, scoped, tag = 'internal scratch']
  #allocation2 [shape = 'f32[32,128]{1,0:T(8,128)}', space=vmem, size = 0x4000, scoped, tag = 'scratch operand']
  %s0 = inlined_call_operand.vmem [shape: bf16[32,512], index: 0, kind: input, shape index: {}]
  %s1 = inlined_call_operand.vmem [shape: bf16[512,128], index: 1, kind: input, shape index: {}]
  %s2 = inlined_call_operand.vmem [shape: f32[1,128], index: 2, kind: input, shape index: {}]
  %s3 = inlined_call_operand.vmem [shape: f32[1,128], index: 3, kind: input, shape index: {}]
  %s4 = inlined_call_operand.vmem [shape: f32[32,128], index: 4, kind: input, shape index: {}]
  %s5 = inlined_call_operand.vmem [shape: f32[32,128], index: 5, kind: output, shape index: {}]
  %s6 = sld [smem:[#allocation0]]
  $region99: #{_lambda_.32} parent=0
    _
  %s8 = ssub.s32 1, %s6
  %s9 = scalar_select 0, %s8, %s6
  $region1: #{_lambda_.32} parent=0
    #allocation3 [shape = 'u8[32768]{0}', space=vmem, size = 0x8000, scoped, tag = 'input window, operand 0']
    loop: start=0, step=1, limit=4
    $region2: #{_lambda_.32} parent=1 // loop_pre_header
      _
    $region3: #{_lambda_.32} parent=1 // loop_header
      %s11 = sphi 0, %s15
      %p12 = scmp.ge.s32.totalorder %s11, 4
      %s18 = sphi 0, %s37
      %s19 = sphi 0, %s33
      %s20 = sphi 0, %s29
      %s21 = sphi 0, %s18
      %s22 = sphi 0, %s19
      %s23 = sphi 0, %s20
      %s24 = sphi 0, %s21
      %s25 = sphi 0, %s22
      %s26 = sphi 0, %s23
      %s42 = sphi 0, %s44
      %s45 = sphi 0, %s42
      %s46 = sphi 0, %s45
      %s62 = sphi 0, %s46
      %s70 = sphi 0, %s72
      %s73 = sphi 0, %s70
      %s74 = sphi 0, %s73
      %s90 = sphi 0, %s74
      %s96 = sphi 0, %s98
      %s99 = sphi 0, %s96
      %s100 = sphi 0, %s99
      %s116 = sphi 0, %s100
      %s122 = sphi 0, %s124
      %s125 = sphi 0, %s122
      %s126 = sphi 0, %s125
      %s142 = sphi 0, %s126
      %s150 = sphi 0, %s152
      %s153 = sphi 0, %s150
      %s154 = sphi 0, %s153
      %s170 = sphi 0, %s154
      %s178 = sphi 0, %s180
      %s181 = sphi 0, %s178
      %s182 = sphi 0, %s181
      %s198 = sphi 0, %s182
    $region4: #{_lambda_.32} parent=1 // loop_header_branch
      %14 = sbr.rel (%p12) target = $region8
    $region5: #{_lambda_.32} parent=1 // loop_body
      %s16 = ssub.s32 %s11, 1
      %s17 = ssub.s32 %s11, 2
      %s27 = sadd.s32 1, %s20
      %p28 = scmp.ge.s32.totalorder %s27, 2
      %s29 = scalar_select %p28, 0, %s27
      %s30 = sadd.s32 1, %s19
      %s31 = scalar_select %p28, %s30, %s19
      %p32 = scmp.ge.s32.totalorder %s31, 1
      %s33 = scalar_select %p32, 0, %s31
      %s34 = sadd.s32 1, %s18
      %s35 = scalar_select %p32, %s34, %s18
      %p36 = scmp.ge.s32.totalorder %s35, 1
      %s37 = scalar_select %p36, 0, %s35
      %s38 = ssub.s32 %s18, %s37
      %s39 = ssub.s32 %s20, %s29
      %s40 = sor.u32 %s38, %s39
      %p41 = scmp.eq.s32.totalorder %s40, 0
      %s43 = sadd.s32 %s42, 1
      %s44 = scalar_select %p41, %s42, %s43
      %p47 = pneg %p41
      %p48 = scmp.eq.s32.totalorder %s11, 1
      %p49 = por %p47, %p48
      %p50 = scmp.ne.s32.totalorder %s42, %s45
      %p51 = scmp.eq.s32.totalorder %s11, 0
      %p52 = por %p50, %p51
      %p53 = scmp.ne.s32.totalorder %s42, %s45
      %p54 = scmp.eq.s32.totalorder %s16, 1
      %p55 = por %p53, %p54
      %p56 = scmp.ne.s32.totalorder %s45, %s46
      %p57 = scmp.eq.s32.totalorder %s16, 0
      %p58 = por %p56, %p57
      %p59 = scmp.ne.s32.totalorder %s45, %s46
      %p60 = scmp.eq.s32.totalorder %s17, 1
      %p61 = por %p59, %p60
      %p63 = scmp.ne.s32.totalorder %s46, %s62
      %p64 = scmp.eq.s32.totalorder %s17, 0
      %p65 = por %p63, %p64
      %s66 = ssub.s32 %s20, %s29
      %s67 = ssub.s32 %s19, %s33
      %s68 = sor.u32 %s66, %s67
      %p69 = scmp.eq.s32.totalorder %s68, 0
      %s71 = sadd.s32 %s70, 1
      %s72 = scalar_select %p69, %s70, %s71
      %p75 = pneg %p69
      %p76 = scmp.eq.s32.totalorder %s11, 1
      %p77 = por %p75, %p76
      %p78 = scmp.ne.s32.totalorder %s70, %s73
      %p79 = scmp.eq.s32.totalorder %s11, 0
      %p80 = por %p78, %p79
      %p81 = scmp.ne.s32.totalorder %s70, %s73
      %p82 = scmp.eq.s32.totalorder %s16, 1
      %p83 = por %p81, %p82
      %p84 = scmp.ne.s32.totalorder %s73, %s74
      %p85 = scmp.eq.s32.totalorder %s16, 0
      %p86 = por %p84, %p85
      %p87 = scmp.ne.s32.totalorder %s73, %s74
      %p88 = scmp.eq.s32.totalorder %s17, 1
      %p89 = por %p87, %p88
      %p91 = scmp.ne.s32.totalorder %s74, %s90
      %p92 = scmp.eq.s32.totalorder %s17, 0
      %p93 = por %p91, %p92
      %s94 = ssub.s32 %s19, %s33
      %p95 = scmp.eq.s32.totalorder %s94, 0
      %s97 = sadd.s32 %s96, 1
      %s98 = scalar_select %p95, %s96, %s97
      %p101 = pneg %p95
      %p102 = scmp.eq.s32.totalorder %s11, 1
      %p103 = por %p101, %p102
      %p104 = scmp.ne.s32.totalorder %s96, %s99
      %p105 = scmp.eq.s32.totalorder %s11, 0
      %p106 = por %p104, %p105
      %p107 = scmp.ne.s32.totalorder %s96, %s99
      %p108 = scmp.eq.s32.totalorder %s16, 1
      %p109 = por %p107, %p108
      %p110 = scmp.ne.s32.totalorder %s99, %s100
      %p111 = scmp.eq.s32.totalorder %s16, 0
      %p112 = por %p110, %p111
      %p113 = scmp.ne.s32.totalorder %s99, %s100
      %p114 = scmp.eq.s32.totalorder %s17, 1
      %p115 = por %p113, %p114
      %p117 = scmp.ne.s32.totalorder %s100, %s116
      %p118 = scmp.eq.s32.totalorder %s17, 0
      %p119 = por %p117, %p118
      %s120 = ssub.s32 %s19, %s33
      %p121 = scmp.eq.s32.totalorder %s120, 0
      %s123 = sadd.s32 %s122, 1
      %s124 = scalar_select %p121, %s122, %s123
      %p127 = pneg %p121
      %p128 = scmp.eq.s32.totalorder %s11, 1
      %p129 = por %p127, %p128
      %p130 = scmp.ne.s32.totalorder %s122, %s125
      %p131 = scmp.eq.s32.totalorder %s11, 0
      %p132 = por %p130, %p131
      %p133 = scmp.ne.s32.totalorder %s122, %s125
      %p134 = scmp.eq.s32.totalorder %s16, 1
      %p135 = por %p133, %p134
      %p136 = scmp.ne.s32.totalorder %s125, %s126
      %p137 = scmp.eq.s32.totalorder %s16, 0
      %p138 = por %p136, %p137
      %p139 = scmp.ne.s32.totalorder %s125, %s126
      %p140 = scmp.eq.s32.totalorder %s17, 1
      %p141 = por %p139, %p140
      %p143 = scmp.ne.s32.totalorder %s126, %s142
      %p144 = scmp.eq.s32.totalorder %s17, 0
      %p145 = por %p143, %p144
      %s146 = ssub.s32 %s18, %s37
      %s147 = ssub.s32 %s19, %s33
      %s148 = sor.u32 %s146, %s147
      %p149 = scmp.eq.s32.totalorder %s148, 0
      %s151 = sadd.s32 %s150, 1
      %s152 = scalar_select %p149, %s150, %s151
      %p155 = pneg %p149
      %p156 = scmp.eq.s32.totalorder %s11, 1
      %p157 = por %p155, %p156
      %p158 = scmp.ne.s32.totalorder %s150, %s153
      %p159 = scmp.eq.s32.totalorder %s11, 0
      %p160 = por %p158, %p159
      %p161 = scmp.ne.s32.totalorder %s150, %s153
      %p162 = scmp.eq.s32.totalorder %s16, 1
      %p163 = por %p161, %p162
      %p164 = scmp.ne.s32.totalorder %s153, %s154
      %p165 = scmp.eq.s32.totalorder %s16, 0
      %p166 = por %p164, %p165
      %p167 = scmp.ne.s32.totalorder %s153, %s154
      %p168 = scmp.eq.s32.totalorder %s17, 1
      %p169 = por %p167, %p168
      %p171 = scmp.ne.s32.totalorder %s154, %s170
      %p172 = scmp.eq.s32.totalorder %s17, 0
      %p173 = por %p171, %p172
      %s174 = ssub.s32 %s18, %s37
      %s175 = ssub.s32 %s19, %s33
      %s176 = sor.u32 %s174, %s175
      %p177 = scmp.eq.s32.totalorder %s176, 0
      %s179 = sadd.s32 %s178, 1
      %s180 = scalar_select %p177, %s178, %s179
      %p183 = pneg %p177
      %p184 = scmp.eq.s32.totalorder %s11, 1
      %p185 = por %p183, %p184
      %p186 = scmp.ne.s32.totalorder %s178, %s181
      %p187 = scmp.eq.s32.totalorder %s11, 0
      %p188 = por %p186, %p187
      %p189 = scmp.ne.s32.totalorder %s178, %s181
      %p190 = scmp.eq.s32.totalorder %s16, 1
      %p191 = por %p189, %p190
      %p192 = scmp.ne.s32.totalorder %s181, %s182
      %p193 = scmp.eq.s32.totalorder %s16, 0
      %p194 = por %p192, %p193
      %p195 = scmp.ne.s32.totalorder %s181, %s182
      %p196 = scmp.eq.s32.totalorder %s17, 1
      %p197 = por %p195, %p196
      %p199 = scmp.ne.s32.totalorder %s182, %s198
      %p200 = scmp.eq.s32.totalorder %s17, 0
      %p201 = por %p199, %p200
      %p202 = scmp.le.s32.totalorder 1, %s11
      %p203 = scmp.lt.s32.totalorder %s11, 3
      %p204 = pnand %p202, %p203
      %p205 = pneg %p204
      // Predicated region
      $region9: #{_lambda_.32} parent=5 // pred_check
        _
      $region10: #{_lambda_.32} parent=5 // pred_check_branch
        %207 = sbr.rel (%p204) target = $region12
      $region11: #{_lambda_.32} parent=5 // pred_region
        %s208 = ssub.s32 %s11, 1
        // Predicated region
        $region13: #{_lambda_.32} parent=11 // pred_check
          %p209 = pneg %p112
        $region14: #{_lambda_.32} parent=11 // pred_check_branch
          %211 = sbr.rel (%p209) target = $region16
        $region15: #{_lambda_.32} parent=11 // pred_region
          %p212 = scmp.lt.s32.totalorder %s22, 0
          %s213 = scalar_select %p212, %s22, 0
          %s214 = scalar_lea.vmem %s2, %s213
        $region16: #{_lambda_.32} parent=11 // pred_fallthru
          _
        // Predicated region
        $region17: #{_lambda_.32} parent=11 // pred_check
          %p215 = pneg %p138
        $region18: #{_lambda_.32} parent=11 // pred_check_branch
          %217 = sbr.rel (%p215) target = $region20
        $region19: #{_lambda_.32} parent=11 // pred_region
          %p218 = scmp.lt.s32.totalorder %s22, 0
          %s219 = scalar_select %p218, %s22, 0
          %s220 = scalar_lea.vmem %s3, %s219
        $region20: #{_lambda_.32} parent=11 // pred_fallthru
          _
        // Predicated region
        $region21: #{_lambda_.32} parent=11 // pred_check
          %p221 = pneg %p166
        $region22: #{_lambda_.32} parent=11 // pred_check_branch
          %223 = sbr.rel (%p221) target = $region24
        $region23: #{_lambda_.32} parent=11 // pred_region
          %s224 = smul.u32 4, %s21
          %p225 = scmp.lt.s32.totalorder %s224, 3
          %s226 = scalar_select %p225, %s224, 3
          %p227 = scmp.lt.s32.totalorder %s22, 0
          %s228 = scalar_select %p227, %s22, 0
          %s229 = sadd.s32 %s228, %s226
          %s230 = smul.addr %s229, 8
          %s231 = scalar_lea.vmem %s4, %s230
          %s232 = smul.u32 4, %s21
        $region24: #{_lambda_.32} parent=11 // pred_fallthru
          _
      $region12: #{_lambda_.32} parent=5 // pred_fallthru
        _
      %p233 = scmp.lt.s32.totalorder %s11, 2
      // Predicated region
      $region25: #{_lambda_.32} parent=5 // pred_check
        %p234 = pneg %p233
      $region26: #{_lambda_.32} parent=5 // pred_check_branch
        %236 = sbr.rel (%p234) target = $region28
      $region27: #{_lambda_.32} parent=5 // pred_region
        // Predicated region
        $region29: #{_lambda_.32} parent=27 // pred_check
          %p237 = pneg %p52
        $region30: #{_lambda_.32} parent=27 // pred_check_branch
          %239 = sbr.rel (%p237) target = $region32
        $region31: #{_lambda_.32} parent=27 // pred_region
          %s240 = sand.u32 %s42, 1
          %s241 = sand.u32 %s42, 1
          %s242 = smul.addr %s241, 32
          %s243 = scalar_lea.vmem [#allocation3], %s242
          %s244 = smul.u32 4, %s18
          %s245 = smul.u32 2, %s20
          %s246 = smul.addr %s244, 4
          %s247 = sadd.s32 %s245, %s246
          %s248 = smul.addr %s247, 4
          %s249 = scalar_lea.vmem %s0, %s248
          // Predicated region
          $region33: #{_lambda_.32} parent=31 // pred_check
            _
          $region34: #{_lambda_.32} parent=31 // pred_check_branch
            %251 = sbr.rel (0) target = $region36
          $region35: #{_lambda_.32} parent=31 // pred_region
            // Predicated region
            $region37: #{_lambda_.32} parent=35 // pred_check
              _
            $region38: #{_lambda_.32} parent=35 // pred_check_branch
              %253 = sbr.rel (0) target = $region40
            $region39: #{_lambda_.32} parent=35 // pred_region
              // Predicated region
              $region52: #{_lambda_.32} parent=39 // pred_check
                _
              $region53: #{_lambda_.32} parent=39 // pred_check_branch
                %274 = sbr.rel (0) target = $region55
              $region54: #{_lambda_.32} parent=39 // pred_region
                loop: start=0, step=1, limit=1
                $region56: #{_lambda_.32} parent=54 // loop_pre_header
                  _
                $region57: #{_lambda_.32} parent=54 // loop_header
                  %s276 = sphi 0, %s280
                  %p277 = scmp.ge.s32.totalorder %s276, 1
                  %s281 = sphi %s249, %s249
                  %s282 = sphi %s243, %s243
                $region58: #{_lambda_.32} parent=54 // loop_header_branch
                  %279 = sbr.rel (%p277) target = $region62
                $region59: #{_lambda_.32} parent=54 // loop_body
                  %v283 = vld [vmem:[%s281] sm:$0xff]
                  %284 = vst [vmem:[%s282] sm:$0xff] %v283
                  %v285 = vld [vmem:[%s281 + $0x10] sm:$0xff]
                  %286 = vst [vmem:[%s282 + $0x8] sm:$0xff] %v285
                  %v287 = vld [vmem:[%s281 + $0x20] sm:$0xff]
                  %288 = vst [vmem:[%s282 + $0x10] sm:$0xff] %v287
                  %v289 = vld [vmem:[%s281 + $0x30] sm:$0xff]
                  %290 = vst [vmem:[%s282 + $0x18] sm:$0xff] %v289
                $region60: #{_lambda_.32} parent=54 // loop_footer
                  %s280 = sadd.s32 1, %s276
                $region61: #{_lambda_.32} parent=54 // loop_footer_branch
                  %275 = sbr.rel target = $region57
                $region62: #{_lambda_.32} parent=54 // loop_exit
                  _
              $region55: #{_lambda_.32} parent=39 // pred_fallthru
                _
              // Predicated region
              $region63: #{_lambda_.32} parent=39 // pred_check
                _
              $region64: #{_lambda_.32} parent=39 // pred_check_branch
                %292 = sbr.rel target = $region66
              $region65: #{_lambda_.32} parent=39 // pred_region
                _
              $region66: #{_lambda_.32} parent=39 // pred_fallthru
                _
            $region40: #{_lambda_.32} parent=35 // pred_fallthru
              _
            // Predicated region
            $region41: #{_lambda_.32} parent=35 // pred_check
              _
            $region42: #{_lambda_.32} parent=35 // pred_check_branch
              %255 = sbr.rel target = $region44
            $region43: #{_lambda_.32} parent=35 // pred_region
              loop: start=0, step=1, limit=1
              $region45: #{_lambda_.32} parent=43 // loop_pre_header
                _
              $region46: #{_lambda_.32} parent=43 // loop_header
                %s258 = sphi 0, %s262
                %p259 = scmp.ge.s32.totalorder %s258, 1
                %s263 = sphi %s249, %s249
                %s264 = sphi %s243, %s243
              $region47: #{_lambda_.32} parent=43 // loop_header_branch
                %261 = sbr.rel (%p259) target = $region51
              $region48: #{_lambda_.32} parent=43 // loop_body
                %v265 = vld [vmem:[%s263] sm:$0xff]
                %266 = vst [vmem:[%s264] sm:$0xff] %v265
                %v267 = vld [vmem:[%s263 + $0x10] sm:$0xff]
                %268 = vst [vmem:[%s264 + $0x8] sm:$0xff] %v267
                %v269 = vld [vmem:[%s263 + $0x20] sm:$0xff]
                %270 = vst [vmem:[%s264 + $0x10] sm:$0xff] %v269
                %v271 = vld [vmem:[%s263 + $0x30] sm:$0xff]
                %272 = vst [vmem:[%s264 + $0x18] sm:$0xff] %v271
              $region49: #{_lambda_.32} parent=43 // loop_footer
                %s262 = sadd.s32 1, %s258
              $region50: #{_lambda_.32} parent=43 // loop_footer_branch
                %257 = sbr.rel target = $region46
              $region51: #{_lambda_.32} parent=43 // loop_exit
                _
            $region44: #{_lambda_.32} parent=35 // pred_fallthru
              _
          $region36: #{_lambda_.32} parent=31 // pred_fallthru
            _
          %293 = vnop
        $region32: #{_lambda_.32} parent=27 // pred_fallthru
          _
        // Predicated region
        $region67: #{_lambda_.32} parent=27 // pred_check
          %p294 = pneg %p80
        $region68: #{_lambda_.32} parent=27 // pred_check_branch
          %296 = sbr.rel (%p294) target = $region70
        $region69: #{_lambda_.32} parent=27 // pred_region
          %s297 = smul.u32 32, %s20
          %p298 = scmp.lt.s32.totalorder %s297, 63
          %s299 = scalar_select %p298, %s297, 63
          %p300 = scmp.lt.s32.totalorder %s19, 0
          %s301 = scalar_select %p300, %s19, 0
          %s302 = sadd.s32 %s301, %s299
          %s303 = smul.addr %s302, 4
          %s304 = scalar_lea.vmem %s1, %s303
          %s305 = smul.u32 32, %s20
        $region70: #{_lambda_.32} parent=27 // pred_fallthru
          _
      $region28: #{_lambda_.32} parent=5 // pred_fallthru
        _
      %p306 = scmp.le.s32.totalorder 1, %s11
      %p307 = scmp.lt.s32.totalorder %s11, 3
      %p308 = pnand %p306, %p307
      %p309 = pneg %p308
      // Predicated region
      $region71: #{_lambda_.32} parent=5 // pred_check
        _
      $region72: #{_lambda_.32} parent=5 // pred_check_branch
        %311 = sbr.rel (%p308) target = $region74
      $region73: #{_lambda_.32} parent=5 // pred_region
        %s312 = ssub.s32 %s11, 1
        %s313 = sand.u32 %s45, 1
        %s314 = sand.u32 %s45, 1
        %s315 = smul.addr %s314, 32
        %s316 = scalar_lea.vmem [#allocation3], %s315
        // Predicated region
        $region75: #{_lambda_.32} parent=73 // pred_check
          %p317 = pneg %p58
        $region76: #{_lambda_.32} parent=73 // pred_check_branch
          %319 = sbr.rel (%p317) target = $region78
        $region77: #{_lambda_.32} parent=73 // pred_region
          _
        $region78: #{_lambda_.32} parent=73 // pred_fallthru
          _
        %s320 = sand.u32 %s45, 1
        %s321 = sand.u32 %s45, 1
        %s322 = smul.addr %s321, 32
        %s323 = scalar_lea.vmem [#allocation3], %s322
        %p324 = pneg %p58
        %p325 = pneg %p55
        %s326 = smul.u32 32, %s23
        %p327 = scmp.lt.s32.totalorder %s326, 63
        %s328 = scalar_select %p327, %s326, 63
        %p329 = scmp.lt.s32.totalorder %s22, 0
        %s330 = scalar_select %p329, %s22, 0
        %s331 = sadd.s32 %s330, %s328
        %s332 = smul.addr %s331, 4
        %s333 = scalar_lea.vmem %s1, %s332
        %p334 = pneg %p86
        %p335 = pneg %p83
        %p336 = scmp.lt.s32.totalorder %s22, 0
        %s337 = scalar_select %p336, %s22, 0
        %s338 = scalar_lea.vmem %s2, %s337
        %p339 = pneg %p112
        %p340 = pneg %p109
        %p341 = scmp.lt.s32.totalorder %s22, 0
        %s342 = scalar_select %p341, %s22, 0
        %s343 = scalar_lea.vmem %s3, %s342
        %p344 = pneg %p138
        %p345 = pneg %p135
        %s346 = smul.u32 4, %s21
        %p347 = scmp.lt.s32.totalorder %s346, 3
        %s348 = scalar_select %p347, %s346, 3
        %p349 = scmp.lt.s32.totalorder %s22, 0
        %s350 = scalar_select %p349, %s22, 0
        %s351 = sadd.s32 %s350, %s348
        %s352 = smul.addr %s351, 8
        %s353 = scalar_lea.vmem %s4, %s352
        %p354 = pneg %p166
        %p355 = pneg %p163
        %p356 = pneg %p194
        %p357 = pneg %p191
        %s358 = smul.u32 4, %s21
        %p359 = scmp.lt.s32.totalorder %s358, 3
        %s360 = scalar_select %p359, %s358, 3
        %p361 = scmp.lt.s32.totalorder %s22, 0
        %s362 = scalar_select %p361, %s22, 0
        %s363 = sadd.s32 %s362, %s360
        %s364 = smul.addr %s363, 8
        %s365 = scalar_lea.vmem %s5, %s364
        %s366 = smul.u32 4, %s21
        %s367 = smul.u32 2, %s23
        %s368 = smul.u32 32, %s23
        %p369 = scmp.lt.s32.totalorder %s368, 63
        %s370 = scalar_select %p369, %s368, 63
        %p371 = scmp.lt.s32.totalorder %s22, 0
        %s372 = scalar_select %p371, %s22, 0
        %s373 = sadd.s32 %s372, %s370
        %s374 = smul.addr %s373, 4
        %s375 = scalar_lea.vmem %s1, %s374
        %s376 = smul.u32 32, %s23
        %p377 = scmp.lt.s32.totalorder %s22, 0
        %s378 = scalar_select %p377, %s22, 0
        %s379 = scalar_lea.vmem %s2, %s378
        %p380 = scmp.lt.s32.totalorder %s22, 0
        %s381 = scalar_select %p380, %s22, 0
        %s382 = scalar_lea.vmem %s3, %s381
        %s383 = smul.u32 4, %s21
        %p384 = scmp.lt.s32.totalorder %s383, 3
        %s385 = scalar_select %p384, %s383, 3
        %p386 = scmp.lt.s32.totalorder %s22, 0
        %s387 = scalar_select %p386, %s22, 0
        %s388 = sadd.s32 %s387, %s385
        %s389 = smul.addr %s388, 8
        %s390 = scalar_lea.vmem %s4, %s389
        %s391 = smul.u32 4, %s21
        %s392 = smul.u32 4, %s21
        %p393 = scmp.lt.s32.totalorder %s392, 3
        %s394 = scalar_select %p393, %s392, 3
        %p395 = scmp.lt.s32.totalorder %s22, 0
        %s396 = scalar_select %p395, %s22, 0
        %s397 = sadd.s32 %s396, %s394
        %s398 = smul.addr %s397, 8
        %s399 = scalar_lea.vmem %s5, %s398
        %s400 = smul.u32 4, %s21
        %p402 = scmp.eq.s32.totalorder %s23, 0
        // Predicated region
        $region79: #{_lambda_.32} parent=73 // pred_check
          %p403 = pneg %p402
        $region80: #{_lambda_.32} parent=73 // pred_check_branch
          %405 = sbr.rel (%p403) target = $region82
        $region81: #{_lambda_.32} parent=73 // pred_region
          %406 = vst [vmem:[#allocation2] sm:$0xff] 0.0
          %407 = vst [vmem:[#allocation2 + $0x8] sm:$0xff] 0.0
          %408 = vst [vmem:[#allocation2 + $0x10] sm:$0xff] 0.0
          %409 = vst [vmem:[#allocation2 + $0x18] sm:$0xff] 0.0
        $region82: #{_lambda_.32} parent=73 // pred_fallthru
          _
        %v410 = vld [vmem:[#allocation2] sm:$0xff]
        %v411 = vld [vmem:[#allocation2 + $0x8] sm:$0xff]
        %v412 = vld [vmem:[#allocation2 + $0x10] sm:$0xff]
        %v413 = vld [vmem:[#allocation2 + $0x18] sm:$0xff]
        %v414 = vld [vmem:[%s316] sm:$0xff]
        %v415 = vld [vmem:[%s316 + $0x8] sm:$0xff]
        %v416 = vld [vmem:[%s316 + $0x10] sm:$0xff]
        %v417 = vld [vmem:[%s316 + $0x18] sm:$0xff]
        %v418 = vld [vmem:[%s375] sm:$0xf]
        %v419 = vld [vmem:[%s375 + $0x4] sm:$0xf]
        %v420 = vld [vmem:[%s375 + $0x8] sm:$0xf]
        %v421 = vld [vmem:[%s375 + $0xc] sm:$0xf]
        %v422 = vld [vmem:[%s375 + $0x10] sm:$0xf]
        %v423 = vld [vmem:[%s375 + $0x14] sm:$0xf]
        %v424 = vld [vmem:[%s375 + $0x18] sm:$0xf]
        %v425 = vld [vmem:[%s375 + $0x1c] sm:$0xf]
        %v426 = vld [vmem:[%s375 + $0x20] sm:$0xf]
        %v427 = vld [vmem:[%s375 + $0x24] sm:$0xf]
        %v428 = vld [vmem:[%s375 + $0x28] sm:$0xf]
        %v429 = vld [vmem:[%s375 + $0x2c] sm:$0xf]
        %v430 = vld [vmem:[%s375 + $0x30] sm:$0xf]
        %v431 = vld [vmem:[%s375 + $0x34] sm:$0xf]
        %v432 = vld [vmem:[%s375 + $0x38] sm:$0xf]
        %v433 = vld [vmem:[%s375 + $0x3c] sm:$0xf]
        %v434 = vld [vmem:[%s375 + $0x40] sm:$0xf]
        %v435 = vld [vmem:[%s375 + $0x44] sm:$0xf]
        %v436 = vld [vmem:[%s375 + $0x48] sm:$0xf]
        %v437 = vld [vmem:[%s375 + $0x4c] sm:$0xf]
        %v438 = vld [vmem:[%s375 + $0x50] sm:$0xf]
        %v439 = vld [vmem:[%s375 + $0x54] sm:$0xf]
        %v440 = vld [vmem:[%s375 + $0x58] sm:$0xf]
        %v441 = vld [vmem:[%s375 + $0x5c] sm:$0xf]
        %v442 = vld [vmem:[%s375 + $0x60] sm:$0xf]
        %v443 = vld [vmem:[%s375 + $0x64] sm:$0xf]
        %v444 = vld [vmem:[%s375 + $0x68] sm:$0xf]
        %v445 = vld [vmem:[%s375 + $0x6c] sm:$0xf]
        %v446 = vld [vmem:[%s375 + $0x70] sm:$0xf]
        %v447 = vld [vmem:[%s375 + $0x74] sm:$0xf]
        %v448 = vld [vmem:[%s375 + $0x78] sm:$0xf]
        %v449 = vld [vmem:[%s375 + $0x7c] sm:$0xf]
        %v454 = vunpack.c.l.b16 %v414
        %v455 = vunpack.c.h.b16 %v414
        %v456 = vunpack.c.l.b16 %v415
        %v457 = vunpack.c.h.b16 %v415
        %v458 = vunpack.c.l.b16 %v416
        %v459 = vunpack.c.h.b16 %v416
        %v460 = vunpack.c.l.b16 %v417
        %v461 = vunpack.c.h.b16 %v417
        %v462 = vpack.c.b16 %v456, %v454
        %v463 = vpack.c.b16 %v457, %v455
        %v464 = vpack.c.b16 %v460, %v458
        %v465 = vpack.c.b16 %v461, %v459
        %v502 = vunpack.c.l.b16 %v418
        %v503 = vunpack.c.l.b16 %v419
        %v504 = vunpack.c.l.b16 %v420
        %v505 = vunpack.c.l.b16 %v421
        %v506 = vunpack.c.l.b16 %v422
        %v507 = vunpack.c.l.b16 %v423
        %v508 = vunpack.c.l.b16 %v424
        %v509 = vunpack.c.l.b16 %v425
        %v510 = vunpack.c.l.b16 %v426
        %v511 = vunpack.c.l.b16 %v427
        %v512 = vunpack.c.l.b16 %v428
        %v513 = vunpack.c.l.b16 %v429
        %v514 = vunpack.c.l.b16 %v430
        %v515 = vunpack.c.l.b16 %v431
        %v516 = vunpack.c.l.b16 %v432
        %v517 = vunpack.c.l.b16 %v433
        %v518 = vunpack.c.l.b16 %v434
        %v519 = vunpack.c.l.b16 %v435
        %v520 = vunpack.c.l.b16 %v436
        %v521 = vunpack.c.l.b16 %v437
        %v522 = vunpack.c.l.b16 %v438
        %v523 = vunpack.c.l.b16 %v439
        %v524 = vunpack.c.l.b16 %v440
        %v525 = vunpack.c.l.b16 %v441
        %v526 = vunpack.c.l.b16 %v442
        %v527 = vunpack.c.l.b16 %v443
        %v528 = vunpack.c.l.b16 %v444
        %v529 = vunpack.c.l.b16 %v445
        %v530 = vunpack.c.l.b16 %v446
        %v531 = vunpack.c.l.b16 %v447
        %v532 = vunpack.c.l.b16 %v448
        %v533 = vunpack.c.l.b16 %v449
        %v534 = vpack.c.b16 %v503, %v502
        %v535 = vpack.c.b16 %v505, %v504
        %v536 = vpack.c.b16 %v507, %v506
        %v537 = vpack.c.b16 %v509, %v508
        %v538 = vpack.c.b16 %v511, %v510
        %v539 = vpack.c.b16 %v513, %v512
        %v540 = vpack.c.b16 %v515, %v514
        %v541 = vpack.c.b16 %v517, %v516
        %v542 = vpack.c.b16 %v519, %v518
        %v543 = vpack.c.b16 %v521, %v520
        %v544 = vpack.c.b16 %v523, %v522
        %v545 = vpack.c.b16 %v525, %v524
        %v546 = vpack.c.b16 %v527, %v526
        %v547 = vpack.c.b16 %v529, %v528
        %v548 = vpack.c.b16 %v531, %v530
        %v549 = vpack.c.b16 %v533, %v532
        %566 = vmatprep.subr.bf16.mxu0 0
        %567 = vmatpush1.bf16.msra.mxu0 %v534
        %568 = vmatprep.subr.bf16.mxu0 0
        %569 = vmatpush1.bf16.msra.mxu0 %v535
        %570 = vmatprep.subr.bf16.mxu0 0
        %571 = vmatpush1.bf16.msra.mxu0 %v536
        %572 = vmatprep.subr.bf16.mxu0 0
        %573 = vmatpush1.bf16.msra.mxu0 %v537
        %574 = vmatprep.subr.bf16.mxu0 0
        %575 = vmatpush1.bf16.msra.mxu0 %v538
        %576 = vmatprep.subr.bf16.mxu0 0
        %577 = vmatpush1.bf16.msra.mxu0 %v539
        %578 = vmatprep.subr.bf16.mxu0 0
        %579 = vmatpush1.bf16.msra.mxu0 %v540
        %580 = vmatprep.subr.bf16.mxu0 0
        %581 = vmatpush1.bf16.msra.mxu0 %v541
        %582 = vmatprep.subr.bf16.mxu0 0
        %583 = vmatpush1.bf16.msra.mxu0 %v542
        %584 = vmatprep.subr.bf16.mxu0 0
        %585 = vmatpush1.bf16.msra.mxu0 %v543
        %586 = vmatprep.subr.bf16.mxu0 0
        %587 = vmatpush1.bf16.msra.mxu0 %v544
        %588 = vmatprep.subr.bf16.mxu0 0
        %589 = vmatpush1.bf16.msra.mxu0 %v545
        %590 = vmatprep.subr.bf16.mxu0 0
        %591 = vmatpush1.bf16.msra.mxu0 %v546
        %592 = vmatprep.subr.bf16.mxu0 0
        %593 = vmatpush1.bf16.msra.mxu0 %v547
        %594 = vmatprep.subr.bf16.mxu0 0
        %595 = vmatpush1.bf16.msra.mxu0 %v548
        %596 = vmatprep.subr.bf16.mxu0 0
        %597 = vmatpush1.bf16.msra.mxu0 %v549
        %598 = vmatprep.mubr.bf16.mxu0 %v463
        %599 = vmatmul.mubr.bf16.gmra.mrb[0].mxu0 %v462
        %v600 = vpop.f32.mrb[0].mxu0
        %v601 = vadd.f32 0.0, %v600
        %v602 = vpop.f32.mrb[0].mxu0
        %v603 = vpop.f32.mrb[0].mxu0
        %v604 = vadd.f32 0.0, %v603
        %v605 = vpop.f32.mrb[0].mxu0
        %606 = vmatprep.mubr.bf16.mxu0 %v465
        %607 = vmatmul.mubr.bf16.gmra.mrb[0].mxu0 %v464
        %v608 = vpop.f32.mrb[0].mxu0
        %v609 = vadd.f32 0.0, %v608
        %v610 = vpop.f32.mrb[0].mxu0
        %v611 = vpop.f32.mrb[0].mxu0
        %v612 = vadd.f32 0.0, %v611
        %v613 = vpop.f32.mrb[0].mxu0
        %614 = vdwg.mxu0
        %v615 = vadd.f32 %v410, %v601
        %v616 = vadd.f32 %v411, %v604
        %v617 = vadd.f32 %v412, %v609
        %v618 = vadd.f32 %v413, %v612
        %619 = vst [vmem:[#allocation2] sm:$0xff] %v615
        %620 = vst [vmem:[#allocation2 + $0x8] sm:$0xff] %v616
        %621 = vst [vmem:[#allocation2 + $0x10] sm:$0xff] %v617
        %622 = vst [vmem:[#allocation2 + $0x18] sm:$0xff] %v618
        %p623 = scmp.eq.s32.totalorder %s23, 1
        // Predicated region
        $region83: #{_lambda_.32} parent=73 // pred_check
          %p624 = pneg %p623
        $region84: #{_lambda_.32} parent=73 // pred_check_branch
          %626 = sbr.rel (%p624) target = $region86
        $region85: #{_lambda_.32} parent=73 // pred_region
          %v627 = vld [vmem:[#allocation2] sm:$0xff]
          %v628 = vld [vmem:[#allocation2 + $0x8] sm:$0xff]
          %v629 = vld [vmem:[#allocation2 + $0x10] sm:$0xff]
          %v630 = vld [vmem:[#allocation2 + $0x18] sm:$0xff]
          %v631 = vld [vmem:[%s379] sm:$0x1]
          %v633 = vlaneseq
          %v634 = vshrl.u32 %v633, 7
          %v635 = vsub.s32 0, %v634
          %v636 = vrot.slane %v631, %v635
          %v638 = vmul.f32 %v627, %v636
          %v639 = vmul.f32 %v628, %v636
          %v640 = vmul.f32 %v629, %v636
          %v641 = vmul.f32 %v630, %v636
          %v642 = vld [vmem:[%s382] sm:$0x1]
          %v644 = vlaneseq
          %v645 = vshrl.u32 %v644, 7
          %v646 = vsub.s32 0, %v645
          %v647 = vrot.slane %v642, %v646
          %v649 = vadd.f32 %v638, %v647
          %v650 = vadd.f32 %v639, %v647
          %v651 = vadd.f32 %v640, %v647
          %v652 = vadd.f32 %v641, %v647
          %v653 = vld [vmem:[%s390] sm:$0xff]
          %v654 = vld [vmem:[%s390 + $0x8] sm:$0xff]
          %v655 = vld [vmem:[%s390 + $0x10] sm:$0xff]
          %v656 = vld [vmem:[%s390 + $0x18] sm:$0xff]
          %v657 = vadd.f32 %v649, %v653
          %v658 = vadd.f32 %v650, %v654
          %v659 = vadd.f32 %v651, %v655
          %v660 = vadd.f32 %v652, %v656
          %v661 = vmax.f32 %v657, 0.0
          %v662 = vmax.f32 %v658, 0.0
          %v663 = vmax.f32 %v659, 0.0
          %v664 = vmax.f32 %v660, 0.0
          %665 = vst [vmem:[%s399] sm:$0xff] %v661
          %666 = vst [vmem:[%s399 + $0x8] sm:$0xff] %v662
          %667 = vst [vmem:[%s399 + $0x10] sm:$0xff] %v663
          %668 = vst [vmem:[%s399 + $0x18] sm:$0xff] %v664
        $region86: #{_lambda_.32} parent=73 // pred_fallthru
          _
        %s669 = smul.u32 4, %s21
        %p670 = scmp.lt.s32.totalorder %s669, 3
        %s671 = scalar_select %p670, %s669, 3
        %p672 = scmp.lt.s32.totalorder %s22, 0
        %s673 = scalar_select %p672, %s22, 0
        %s674 = sadd.s32 %s673, %s671
        %s675 = smul.addr %s674, 8
        %s676 = scalar_lea.vmem %s5, %s675
        // Predicated region
        $region87: #{_lambda_.32} parent=73 // pred_check
          %p677 = pneg %p191
        $region88: #{_lambda_.32} parent=73 // pred_check_branch
          %679 = sbr.rel (%p677) target = $region90
        $region89: #{_lambda_.32} parent=73 // pred_region
          %s680 = smul.u32 4, %s21
        $region90: #{_lambda_.32} parent=73 // pred_fallthru
          _
        // Predicated region
        $region91: #{_lambda_.32} parent=73 // pred_check
          %p681 = pneg %p191
        $region92: #{_lambda_.32} parent=73 // pred_check_branch
          %683 = sbr.rel (%p681) target = $region94
        $region93: #{_lambda_.32} parent=73 // pred_region
          %s684 = smul.u32 4, %s21
          %p685 = scmp.lt.s32.totalorder %s684, 3
          %s686 = scalar_select %p685, %s684, 3
          %p687 = scmp.lt.s32.totalorder %s22, 0
          %s688 = scalar_select %p687, %s22, 0
          %s689 = sadd.s32 %s688, %s686
          %s690 = smul.addr %s689, 8
          %s691 = scalar_lea.vmem %s5, %s690
        $region94: #{_lambda_.32} parent=73 // pred_fallthru
          _
      $region74: #{_lambda_.32} parent=5 // pred_fallthru
        _
      %p692 = scmp.le.s32.totalorder 2, %s11
      // Predicated region
      $region95: #{_lambda_.32} parent=5 // pred_check
        %p693 = pneg %p692
      $region96: #{_lambda_.32} parent=5 // pred_check_branch
        %695 = sbr.rel (%p693) target = $region98
      $region97: #{_lambda_.32} parent=5 // pred_region
        %s696 = ssub.s32 %s11, 2
      $region98: #{_lambda_.32} parent=5 // pred_fallthru
        _
    $region6: #{_lambda_.32} parent=1 // loop_footer
      %s15 = sadd.s32 1, %s11
    $region7: #{_lambda_.32} parent=1 // loop_footer_branch
      %10 = sbr.rel target = $region3
    $region8: #{_lambda_.32} parent=1 // loop_exit
      _

// kernel: _lambda_.34
$region0: #{_lambda_.34}
  #allocation0 [shape = 'u32[]', space=smem, size = 0x4, offset = 0x4, fixed_abs, tag = 'smem constant byte address 0x4 - core index']
  #allocation1 [shape = 'u32[144,128]{1,0:T(1,128)}', space=vmem, size = 0x12000, scoped, tag = 'internal scratch']
  #allocation2 [shape = 'f32[8,128]{1,0:T(8,128)}', space=vmem, size = 0x1000, scoped, tag = 'scratch operand']
  %s0 = inlined_call_operand.vmem [shape: bf16[8,512], index: 0, kind: input, shape index: {}]
  %s1 = inlined_call_operand.vmem [shape: bf16[512,128], index: 1, kind: input, shape index: {}]
  %s2 = inlined_call_operand.vmem [shape: f32[1,128], index: 2, kind: input, shape index: {}]
  %s3 = inlined_call_operand.vmem [shape: f32[1,128], index: 3, kind: input, shape index: {}]
  %s4 = inlined_call_operand.vmem [shape: f32[8,128], index: 4, kind: output, shape index: {}]
  %s5 = sld [smem:[#allocation0]]
  $region57: #{_lambda_.34} parent=0
    _
  %s7 = ssub.s32 1, %s5
  %s8 = scalar_select 0, %s7, %s5
  loop: start=0, step=1, limit=4
  $region2: #{_lambda_.34} parent=0 // loop_pre_header
    _
  $region3: #{_lambda_.34} parent=0 // loop_header
    %s10 = sphi 0, %s14
    %p11 = scmp.ge.s32.totalorder %s10, 4
    %s17 = sphi 0, %s36
    %s18 = sphi 0, %s32
    %s19 = sphi 0, %s28
    %s20 = sphi 0, %s17
    %s21 = sphi 0, %s18
    %s22 = sphi 0, %s19
    %s23 = sphi 0, %s20
    %s24 = sphi 0, %s21
    %s25 = sphi 0, %s22
    %s41 = sphi 0, %s43
    %s44 = sphi 0, %s41
    %s45 = sphi 0, %s44
    %s61 = sphi 0, %s45
    %s69 = sphi 0, %s71
    %s72 = sphi 0, %s69
    %s73 = sphi 0, %s72
    %s89 = sphi 0, %s73
    %s95 = sphi 0, %s97
    %s98 = sphi 0, %s95
    %s99 = sphi 0, %s98
    %s115 = sphi 0, %s99
    %s121 = sphi 0, %s123
    %s124 = sphi 0, %s121
    %s125 = sphi 0, %s124
    %s141 = sphi 0, %s125
    %s149 = sphi 0, %s151
    %s152 = sphi 0, %s149
    %s153 = sphi 0, %s152
    %s169 = sphi 0, %s153
  $region4: #{_lambda_.34} parent=0 // loop_header_branch
    %13 = sbr.rel (%p11) target = $region8
  $region5: #{_lambda_.34} parent=0 // loop_body
    %s15 = ssub.s32 %s10, 1
    %s16 = ssub.s32 %s10, 2
    %s26 = sadd.s32 1, %s19
    %p27 = scmp.ge.s32.totalorder %s26, 2
    %s28 = scalar_select %p27, 0, %s26
    %s29 = sadd.s32 1, %s18
    %s30 = scalar_select %p27, %s29, %s18
    %p31 = scmp.ge.s32.totalorder %s30, 1
    %s32 = scalar_select %p31, 0, %s30
    %s33 = sadd.s32 1, %s17
    %s34 = scalar_select %p31, %s33, %s17
    %p35 = scmp.ge.s32.totalorder %s34, 1
    %s36 = scalar_select %p35, 0, %s34
    %s37 = ssub.s32 %s17, %s36
    %s38 = ssub.s32 %s19, %s28
    %s39 = sor.u32 %s37, %s38
    %p40 = scmp.eq.s32.totalorder %s39, 0
    %s42 = sadd.s32 %s41, 1
    %s43 = scalar_select %p40, %s41, %s42
    %p46 = pneg %p40
    %p47 = scmp.eq.s32.totalorder %s10, 1
    %p48 = por %p46, %p47
    %p49 = scmp.ne.s32.totalorder %s41, %s44
    %p50 = scmp.eq.s32.totalorder %s10, 0
    %p51 = por %p49, %p50
    %p52 = scmp.ne.s32.totalorder %s41, %s44
    %p53 = scmp.eq.s32.totalorder %s15, 1
    %p54 = por %p52, %p53
    %p55 = scmp.ne.s32.totalorder %s44, %s45
    %p56 = scmp.eq.s32.totalorder %s15, 0
    %p57 = por %p55, %p56
    %p58 = scmp.ne.s32.totalorder %s44, %s45
    %p59 = scmp.eq.s32.totalorder %s16, 1
    %p60 = por %p58, %p59
    %p62 = scmp.ne.s32.totalorder %s45, %s61
    %p63 = scmp.eq.s32.totalorder %s16, 0
    %p64 = por %p62, %p63
    %s65 = ssub.s32 %s19, %s28
    %s66 = ssub.s32 %s18, %s32
    %s67 = sor.u32 %s65, %s66
    %p68 = scmp.eq.s32.totalorder %s67, 0
    %s70 = sadd.s32 %s69, 1
    %s71 = scalar_select %p68, %s69, %s70
    %p74 = pneg %p68
    %p75 = scmp.eq.s32.totalorder %s10, 1
    %p76 = por %p74, %p75
    %p77 = scmp.ne.s32.totalorder %s69, %s72
    %p78 = scmp.eq.s32.totalorder %s10, 0
    %p79 = por %p77, %p78
    %p80 = scmp.ne.s32.totalorder %s69, %s72
    %p81 = scmp.eq.s32.totalorder %s15, 1
    %p82 = por %p80, %p81
    %p83 = scmp.ne.s32.totalorder %s72, %s73
    %p84 = scmp.eq.s32.totalorder %s15, 0
    %p85 = por %p83, %p84
    %p86 = scmp.ne.s32.totalorder %s72, %s73
    %p87 = scmp.eq.s32.totalorder %s16, 1
    %p88 = por %p86, %p87
    %p90 = scmp.ne.s32.totalorder %s73, %s89
    %p91 = scmp.eq.s32.totalorder %s16, 0
    %p92 = por %p90, %p91
    %s93 = ssub.s32 %s18, %s32
    %p94 = scmp.eq.s32.totalorder %s93, 0
    %s96 = sadd.s32 %s95, 1
    %s97 = scalar_select %p94, %s95, %s96
    %p100 = pneg %p94
    %p101 = scmp.eq.s32.totalorder %s10, 1
    %p102 = por %p100, %p101
    %p103 = scmp.ne.s32.totalorder %s95, %s98
    %p104 = scmp.eq.s32.totalorder %s10, 0
    %p105 = por %p103, %p104
    %p106 = scmp.ne.s32.totalorder %s95, %s98
    %p107 = scmp.eq.s32.totalorder %s15, 1
    %p108 = por %p106, %p107
    %p109 = scmp.ne.s32.totalorder %s98, %s99
    %p110 = scmp.eq.s32.totalorder %s15, 0
    %p111 = por %p109, %p110
    %p112 = scmp.ne.s32.totalorder %s98, %s99
    %p113 = scmp.eq.s32.totalorder %s16, 1
    %p114 = por %p112, %p113
    %p116 = scmp.ne.s32.totalorder %s99, %s115
    %p117 = scmp.eq.s32.totalorder %s16, 0
    %p118 = por %p116, %p117
    %s119 = ssub.s32 %s18, %s32
    %p120 = scmp.eq.s32.totalorder %s119, 0
    %s122 = sadd.s32 %s121, 1
    %s123 = scalar_select %p120, %s121, %s122
    %p126 = pneg %p120
    %p127 = scmp.eq.s32.totalorder %s10, 1
    %p128 = por %p126, %p127
    %p129 = scmp.ne.s32.totalorder %s121, %s124
    %p130 = scmp.eq.s32.totalorder %s10, 0
    %p131 = por %p129, %p130
    %p132 = scmp.ne.s32.totalorder %s121, %s124
    %p133 = scmp.eq.s32.totalorder %s15, 1
    %p134 = por %p132, %p133
    %p135 = scmp.ne.s32.totalorder %s124, %s125
    %p136 = scmp.eq.s32.totalorder %s15, 0
    %p137 = por %p135, %p136
    %p138 = scmp.ne.s32.totalorder %s124, %s125
    %p139 = scmp.eq.s32.totalorder %s16, 1
    %p140 = por %p138, %p139
    %p142 = scmp.ne.s32.totalorder %s125, %s141
    %p143 = scmp.eq.s32.totalorder %s16, 0
    %p144 = por %p142, %p143
    %s145 = ssub.s32 %s17, %s36
    %s146 = ssub.s32 %s18, %s32
    %s147 = sor.u32 %s145, %s146
    %p148 = scmp.eq.s32.totalorder %s147, 0
    %s150 = sadd.s32 %s149, 1
    %s151 = scalar_select %p148, %s149, %s150
    %p154 = pneg %p148
    %p155 = scmp.eq.s32.totalorder %s10, 1
    %p156 = por %p154, %p155
    %p157 = scmp.ne.s32.totalorder %s149, %s152
    %p158 = scmp.eq.s32.totalorder %s10, 0
    %p159 = por %p157, %p158
    %p160 = scmp.ne.s32.totalorder %s149, %s152
    %p161 = scmp.eq.s32.totalorder %s15, 1
    %p162 = por %p160, %p161
    %p163 = scmp.ne.s32.totalorder %s152, %s153
    %p164 = scmp.eq.s32.totalorder %s15, 0
    %p165 = por %p163, %p164
    %p166 = scmp.ne.s32.totalorder %s152, %s153
    %p167 = scmp.eq.s32.totalorder %s16, 1
    %p168 = por %p166, %p167
    %p170 = scmp.ne.s32.totalorder %s153, %s169
    %p171 = scmp.eq.s32.totalorder %s16, 0
    %p172 = por %p170, %p171
    %p173 = scmp.le.s32.totalorder 1, %s10
    %p174 = scmp.lt.s32.totalorder %s10, 3
    %p175 = pnand %p173, %p174
    %p176 = pneg %p175
    // Predicated region
    $region9: #{_lambda_.34} parent=5 // pred_check
      _
    $region10: #{_lambda_.34} parent=5 // pred_check_branch
      %178 = sbr.rel (%p175) target = $region12
    $region11: #{_lambda_.34} parent=5 // pred_region
      %s179 = ssub.s32 %s10, 1
      // Predicated region
      $region13: #{_lambda_.34} parent=11 // pred_check
        %p180 = pneg %p111
      $region14: #{_lambda_.34} parent=11 // pred_check_branch
        %182 = sbr.rel (%p180) target = $region16
      $region15: #{_lambda_.34} parent=11 // pred_region
        %p183 = scmp.lt.s32.totalorder %s21, 0
        %s184 = scalar_select %p183, %s21, 0
        %s185 = scalar_lea.vmem %s2, %s184
      $region16: #{_lambda_.34} parent=11 // pred_fallthru
        _
      // Predicated region
      $region17: #{_lambda_.34} parent=11 // pred_check
        %p186 = pneg %p137
      $region18: #{_lambda_.34} parent=11 // pred_check_branch
        %188 = sbr.rel (%p186) target = $region20
      $region19: #{_lambda_.34} parent=11 // pred_region
        %p189 = scmp.lt.s32.totalorder %s21, 0
        %s190 = scalar_select %p189, %s21, 0
        %s191 = scalar_lea.vmem %s3, %s190
      $region20: #{_lambda_.34} parent=11 // pred_fallthru
        _
    $region12: #{_lambda_.34} parent=5 // pred_fallthru
      _
    %p192 = scmp.lt.s32.totalorder %s10, 2
    // Predicated region
    $region21: #{_lambda_.34} parent=5 // pred_check
      %p193 = pneg %p192
    $region22: #{_lambda_.34} parent=5 // pred_check_branch
      %195 = sbr.rel (%p193) target = $region24
    $region23: #{_lambda_.34} parent=5 // pred_region
      // Predicated region
      $region25: #{_lambda_.34} parent=23 // pred_check
        %p196 = pneg %p51
      $region26: #{_lambda_.34} parent=23 // pred_check_branch
        %198 = sbr.rel (%p196) target = $region28
      $region27: #{_lambda_.34} parent=23 // pred_region
        %s199 = smul.u32 2, %s19
        %p200 = scmp.lt.s32.totalorder %s17, 0
        %s201 = scalar_select %p200, %s17, 0
        %p202 = scmp.lt.s32.totalorder %s199, 3
        %s203 = scalar_select %p202, %s199, 3
        %s204 = smul.addr %s201, 4
        %s205 = sadd.s32 %s203, %s204
        %s206 = smul.addr %s205, 4
        %s207 = scalar_lea.vmem %s0, %s206
        %s208 = smul.u32 2, %s19
      $region28: #{_lambda_.34} parent=23 // pred_fallthru
        _
      // Predicated region
      $region29: #{_lambda_.34} parent=23 // pred_check
        %p209 = pneg %p79
      $region30: #{_lambda_.34} parent=23 // pred_check_branch
        %211 = sbr.rel (%p209) target = $region32
      $region31: #{_lambda_.34} parent=23 // pred_region
        %s212 = smul.u32 32, %s19
        %p213 = scmp.lt.s32.totalorder %s212, 63
        %s214 = scalar_select %p213, %s212, 63
        %p215 = scmp.lt.s32.totalorder %s18, 0
        %s216 = scalar_select %p215, %s18, 0
        %s217 = sadd.s32 %s216, %s214
        %s218 = smul.addr %s217, 4
        %s219 = scalar_lea.vmem %s1, %s218
        %s220 = smul.u32 32, %s19
      $region32: #{_lambda_.34} parent=23 // pred_fallthru
        _
    $region24: #{_lambda_.34} parent=5 // pred_fallthru
      _
    %p221 = scmp.le.s32.totalorder 1, %s10
    %p222 = scmp.lt.s32.totalorder %s10, 3
    %p223 = pnand %p221, %p222
    %p224 = pneg %p223
    // Predicated region
    $region33: #{_lambda_.34} parent=5 // pred_check
      _
    $region34: #{_lambda_.34} parent=5 // pred_check_branch
      %226 = sbr.rel (%p223) target = $region36
    $region35: #{_lambda_.34} parent=5 // pred_region
      %s227 = ssub.s32 %s10, 1
      %s228 = smul.u32 2, %s22
      %p229 = scmp.lt.s32.totalorder %s20, 0
      %s230 = scalar_select %p229, %s20, 0
      %p231 = scmp.lt.s32.totalorder %s228, 3
      %s232 = scalar_select %p231, %s228, 3
      %s233 = smul.addr %s230, 4
      %s234 = sadd.s32 %s232, %s233
      %s235 = smul.addr %s234, 4
      %s236 = scalar_lea.vmem %s0, %s235
      %p237 = pneg %p57
      %p238 = pneg %p54
      %s239 = smul.u32 32, %s22
      %p240 = scmp.lt.s32.totalorder %s239, 63
      %s241 = scalar_select %p240, %s239, 63
      %p242 = scmp.lt.s32.totalorder %s21, 0
      %s243 = scalar_select %p242, %s21, 0
      %s244 = sadd.s32 %s243, %s241
      %s245 = smul.addr %s244, 4
      %s246 = scalar_lea.vmem %s1, %s245
      %p247 = pneg %p85
      %p248 = pneg %p82
      %p249 = scmp.lt.s32.totalorder %s21, 0
      %s250 = scalar_select %p249, %s21, 0
      %s251 = scalar_lea.vmem %s2, %s250
      %p252 = pneg %p111
      %p253 = pneg %p108
      %p254 = scmp.lt.s32.totalorder %s21, 0
      %s255 = scalar_select %p254, %s21, 0
      %s256 = scalar_lea.vmem %s3, %s255
      %p257 = pneg %p137
      %p258 = pneg %p134
      %p259 = pneg %p165
      %p260 = pneg %p162
      %p261 = scmp.lt.s32.totalorder %s20, 0
      %s262 = scalar_select %p261, %s20, 0
      %p263 = scmp.lt.s32.totalorder %s21, 0
      %s264 = scalar_select %p263, %s21, 0
      %s265 = sadd.s32 %s264, %s262
      %s266 = smul.addr %s265, 8
      %s267 = scalar_lea.vmem %s4, %s266
      %s268 = smul.u32 2, %s22
      %p269 = scmp.lt.s32.totalorder %s20, 0
      %s270 = scalar_select %p269, %s20, 0
      %p271 = scmp.lt.s32.totalorder %s268, 3
      %s272 = scalar_select %p271, %s268, 3
      %s273 = smul.addr %s270, 4
      %s274 = sadd.s32 %s272, %s273
      %s275 = smul.addr %s274, 4
      %s276 = scalar_lea.vmem %s0, %s275
      %s277 = smul.u32 2, %s22
      %s278 = smul.u32 32, %s22
      %p279 = scmp.lt.s32.totalorder %s278, 63
      %s280 = scalar_select %p279, %s278, 63
      %p281 = scmp.lt.s32.totalorder %s21, 0
      %s282 = scalar_select %p281, %s21, 0
      %s283 = sadd.s32 %s282, %s280
      %s284 = smul.addr %s283, 4
      %s285 = scalar_lea.vmem %s1, %s284
      %s286 = smul.u32 32, %s22
      %p287 = scmp.lt.s32.totalorder %s21, 0
      %s288 = scalar_select %p287, %s21, 0
      %s289 = scalar_lea.vmem %s2, %s288
      %p290 = scmp.lt.s32.totalorder %s21, 0
      %s291 = scalar_select %p290, %s21, 0
      %s292 = scalar_lea.vmem %s3, %s291
      %p293 = scmp.lt.s32.totalorder %s20, 0
      %s294 = scalar_select %p293, %s20, 0
      %p295 = scmp.lt.s32.totalorder %s21, 0
      %s296 = scalar_select %p295, %s21, 0
      %s297 = sadd.s32 %s296, %s294
      %s298 = smul.addr %s297, 8
      %s299 = scalar_lea.vmem %s4, %s298
      %p301 = scmp.eq.s32.totalorder %s22, 0
      // Predicated region
      $region37: #{_lambda_.34} parent=35 // pred_check
        %p302 = pneg %p301
      $region38: #{_lambda_.34} parent=35 // pred_check_branch
        %304 = sbr.rel (%p302) target = $region40
      $region39: #{_lambda_.34} parent=35 // pred_region
        %305 = vst [vmem:[#allocation2] sm:$0xff] 0.0
      $region40: #{_lambda_.34} parent=35 // pred_fallthru
        _
      %v306 = vld [vmem:[#allocation2] sm:$0xff]
      %v307 = vld [vmem:[%s276] sm:$0xff]
      %v308 = vld [vmem:[%s285] sm:$0xf]
      %v309 = vld [vmem:[%s285 + $0x4] sm:$0xf]
      %v310 = vld [vmem:[%s285 + $0x8] sm:$0xf]
      %v311 = vld [vmem:[%s285 + $0xc] sm:$0xf]
      %v312 = vld [vmem:[%s285 + $0x10] sm:$0xf]
      %v313 = vld [vmem:[%s285 + $0x14] sm:$0xf]
      %v314 = vld [vmem:[%s285 + $0x18] sm:$0xf]
      %v315 = vld [vmem:[%s285 + $0x1c] sm:$0xf]
      %v316 = vld [vmem:[%s285 + $0x20] sm:$0xf]
      %v317 = vld [vmem:[%s285 + $0x24] sm:$0xf]
      %v318 = vld [vmem:[%s285 + $0x28] sm:$0xf]
      %v319 = vld [vmem:[%s285 + $0x2c] sm:$0xf]
      %v320 = vld [vmem:[%s285 + $0x30] sm:$0xf]
      %v321 = vld [vmem:[%s285 + $0x34] sm:$0xf]
      %v322 = vld [vmem:[%s285 + $0x38] sm:$0xf]
      %v323 = vld [vmem:[%s285 + $0x3c] sm:$0xf]
      %v324 = vld [vmem:[%s285 + $0x40] sm:$0xf]
      %v325 = vld [vmem:[%s285 + $0x44] sm:$0xf]
      %v326 = vld [vmem:[%s285 + $0x48] sm:$0xf]
      %v327 = vld [vmem:[%s285 + $0x4c] sm:$0xf]
      %v328 = vld [vmem:[%s285 + $0x50] sm:$0xf]
      %v329 = vld [vmem:[%s285 + $0x54] sm:$0xf]
      %v330 = vld [vmem:[%s285 + $0x58] sm:$0xf]
      %v331 = vld [vmem:[%s285 + $0x5c] sm:$0xf]
      %v332 = vld [vmem:[%s285 + $0x60] sm:$0xf]
      %v333 = vld [vmem:[%s285 + $0x64] sm:$0xf]
      %v334 = vld [vmem:[%s285 + $0x68] sm:$0xf]
      %v335 = vld [vmem:[%s285 + $0x6c] sm:$0xf]
      %v336 = vld [vmem:[%s285 + $0x70] sm:$0xf]
      %v337 = vld [vmem:[%s285 + $0x74] sm:$0xf]
      %v338 = vld [vmem:[%s285 + $0x78] sm:$0xf]
      %v339 = vld [vmem:[%s285 + $0x7c] sm:$0xf]
      %v341 = vunpack.c.l.b16 %v307
      %v342 = vunpack.c.h.b16 %v307
      %v343 = vpack.c.b16 %v341, %v341
      %v344 = vpack.c.b16 %v342, %v342
      %v379 = vunpack.c.l.b16 %v308
      %v380 = vunpack.c.l.b16 %v309
      %v381 = vunpack.c.l.b16 %v310
      %v382 = vunpack.c.l.b16 %v311
      %v383 = vunpack.c.l.b16 %v312
      %v384 = vunpack.c.l.b16 %v313
      %v385 = vunpack.c.l.b16 %v314
      %v386 = vunpack.c.l.b16 %v315
      %v387 = vunpack.c.l.b16 %v316
      %v388 = vunpack.c.l.b16 %v317
      %v389 = vunpack.c.l.b16 %v318
      %v390 = vunpack.c.l.b16 %v319
      %v391 = vunpack.c.l.b16 %v320
      %v392 = vunpack.c.l.b16 %v321
      %v393 = vunpack.c.l.b16 %v322
      %v394 = vunpack.c.l.b16 %v323
      %v395 = vunpack.c.l.b16 %v324
      %v396 = vunpack.c.l.b16 %v325
      %v397 = vunpack.c.l.b16 %v326
      %v398 = vunpack.c.l.b16 %v327
      %v399 = vunpack.c.l.b16 %v328
      %v400 = vunpack.c.l.b16 %v329
      %v401 = vunpack.c.l.b16 %v330
      %v402 = vunpack.c.l.b16 %v331
      %v403 = vunpack.c.l.b16 %v332
      %v404 = vunpack.c.l.b16 %v333
      %v405 = vunpack.c.l.b16 %v334
      %v406 = vunpack.c.l.b16 %v335
      %v407 = vunpack.c.l.b16 %v336
      %v408 = vunpack.c.l.b16 %v337
      %v409 = vunpack.c.l.b16 %v338
      %v410 = vunpack.c.l.b16 %v339
      %v411 = vpack.c.b16 %v380, %v379
      %v412 = vpack.c.b16 %v382, %v381
      %v413 = vpack.c.b16 %v384, %v383
      %v414 = vpack.c.b16 %v386, %v385
      %v415 = vpack.c.b16 %v388, %v387
      %v416 = vpack.c.b16 %v390, %v389
      %v417 = vpack.c.b16 %v392, %v391
      %v418 = vpack.c.b16 %v394, %v393
      %v419 = vpack.c.b16 %v396, %v395
      %v420 = vpack.c.b16 %v398, %v397
      %v421 = vpack.c.b16 %v400, %v399
      %v422 = vpack.c.b16 %v402, %v401
      %v423 = vpack.c.b16 %v404, %v403
      %v424 = vpack.c.b16 %v406, %v405
      %v425 = vpack.c.b16 %v408, %v407
      %v426 = vpack.c.b16 %v410, %v409
      %443 = vmatprep.subr.bf16.mxu0 0
      %444 = vmatpush1.bf16.msra.mxu0 %v411
      %445 = vmatprep.subr.bf16.mxu0 0
      %446 = vmatpush1.bf16.msra.mxu0 %v412
      %447 = vmatprep.subr.bf16.mxu0 0
      %448 = vmatpush1.bf16.msra.mxu0 %v413
      %449 = vmatprep.subr.bf16.mxu0 0
      %450 = vmatpush1.bf16.msra.mxu0 %v414
      %451 = vmatprep.subr.bf16.mxu0 0
      %452 = vmatpush1.bf16.msra.mxu0 %v415
      %453 = vmatprep.subr.bf16.mxu0 0
      %454 = vmatpush1.bf16.msra.mxu0 %v416
      %455 = vmatprep.subr.bf16.mxu0 0
      %456 = vmatpush1.bf16.msra.mxu0 %v417
      %457 = vmatprep.subr.bf16.mxu0 0
      %458 = vmatpush1.bf16.msra.mxu0 %v418
      %459 = vmatprep.subr.bf16.mxu0 0
      %460 = vmatpush1.bf16.msra.mxu0 %v419
      %461 = vmatprep.subr.bf16.mxu0 0
      %462 = vmatpush1.bf16.msra.mxu0 %v420
      %463 = vmatprep.subr.bf16.mxu0 0
      %464 = vmatpush1.bf16.msra.mxu0 %v421
      %465 = vmatprep.subr.bf16.mxu0 0
      %466 = vmatpush1.bf16.msra.mxu0 %v422
      %467 = vmatprep.subr.bf16.mxu0 0
      %468 = vmatpush1.bf16.msra.mxu0 %v423
      %469 = vmatprep.subr.bf16.mxu0 0
      %470 = vmatpush1.bf16.msra.mxu0 %v424
      %471 = vmatprep.subr.bf16.mxu0 0
      %472 = vmatpush1.bf16.msra.mxu0 %v425
      %473 = vmatprep.subr.bf16.mxu0 0
      %474 = vmatpush1.bf16.msra.mxu0 %v426
      %475 = vmatprep.mubr.bf16.mxu0 %v344
      %476 = vmatmul.mubr.bf16.gmra.mrb[0].mxu0 %v343
      %v477 = vpop.f32.mrb[0].mxu0
      %v478 = vadd.f32 0.0, %v477
      %v479 = vpop.f32.mrb[0].mxu0
      %v480 = vpop.f32.mrb[0].mxu0
      %v481 = vpop.f32.mrb[0].mxu0
      %482 = vdwg.mxu0
      %v483 = vadd.f32 %v306, %v478
      %484 = vst [vmem:[#allocation2] sm:$0xff] %v483
      %p485 = scmp.eq.s32.totalorder %s22, 1
      // Predicated region
      $region41: #{_lambda_.34} parent=35 // pred_check
        %p486 = pneg %p485
      $region42: #{_lambda_.34} parent=35 // pred_check_branch
        %488 = sbr.rel (%p486) target = $region44
      $region43: #{_lambda_.34} parent=35 // pred_region
        %v489 = vld [vmem:[#allocation2] sm:$0xff]
        %v490 = vld [vmem:[%s289] sm:$0x1]
        %v492 = vlaneseq
        %v493 = vshrl.u32 %v492, 7
        %v494 = vsub.s32 0, %v493
        %v495 = vrot.slane %v490, %v494
        %v497 = vmul.f32 %v489, %v495
        %v498 = vld [vmem:[%s292] sm:$0x1]
        %v500 = vlaneseq
        %v501 = vshrl.u32 %v500, 7
        %v502 = vsub.s32 0, %v501
        %v503 = vrot.slane %v498, %v502
        %v505 = vadd.f32 %v497, %v503
        %v506 = vmax.f32 %v505, 0.0
        %507 = vst [vmem:[%s299] sm:$0xff] %v506
      $region44: #{_lambda_.34} parent=35 // pred_fallthru
        _
      %p508 = scmp.lt.s32.totalorder %s20, 0
      %s509 = scalar_select %p508, %s20, 0
      %p510 = scmp.lt.s32.totalorder %s21, 0
      %s511 = scalar_select %p510, %s21, 0
      %s512 = sadd.s32 %s511, %s509
      %s513 = smul.addr %s512, 8
      %s514 = scalar_lea.vmem %s4, %s513
      // Predicated region
      $region45: #{_lambda_.34} parent=35 // pred_check
        %p515 = pneg %p162
      $region46: #{_lambda_.34} parent=35 // pred_check_branch
        %517 = sbr.rel (%p515) target = $region48
      $region47: #{_lambda_.34} parent=35 // pred_region
        _
      $region48: #{_lambda_.34} parent=35 // pred_fallthru
        _
      // Predicated region
      $region49: #{_lambda_.34} parent=35 // pred_check
        %p518 = pneg %p162
      $region50: #{_lambda_.34} parent=35 // pred_check_branch
        %520 = sbr.rel (%p518) target = $region52
      $region51: #{_lambda_.34} parent=35 // pred_region
        %p521 = scmp.lt.s32.totalorder %s20, 0
        %s522 = scalar_select %p521, %s20, 0
        %p523 = scmp.lt.s32.totalorder %s21, 0
        %s524 = scalar_select %p523, %s21, 0
        %s525 = sadd.s32 %s524, %s522
        %s526 = smul.addr %s525, 8
        %s527 = scalar_lea.vmem %s4, %s526
      $region52: #{_lambda_.34} parent=35 // pred_fallthru
        _
    $region36: #{_lambda_.34} parent=5 // pred_fallthru
      _
    %p528 = scmp.le.s32.totalorder 2, %s10
    // Predicated region
    $region53: #{_lambda_.34} parent=5 // pred_check
      %p529 = pneg %p528
    $region54: #{_lambda_.34} parent=5 // pred_check_branch
      %531 = sbr.rel (%p529) target = $region56
    $region55: #{_lambda_.34} parent=5 // pred_region
      %s532 = ssub.s32 %s10, 2
    $region56: #{_lambda_.34} parent=5 // pred_fallthru
      _
  $region6: #{_lambda_.34} parent=0 // loop_footer
    %s14 = sadd.s32 1, %s10
  $region7: #{_lambda_.34} parent=0 // loop_footer_branch
    %9 = sbr.rel target = $region3
  $region8: #{_lambda_.34} parent=0 // loop_exit
    _

// kernel: _lambda_.35
$region0: #{_lambda_.35}
  #allocation0 [shape = 'u32[]', space=smem, size = 0x4, offset = 0x4, fixed_abs, tag = 'smem constant byte address 0x4 - core index']
  #allocation1 [shape = 'u32[144,128]{1,0:T(1,128)}', space=vmem, size = 0x12000, scoped, tag = 'internal scratch']
  #allocation2 [shape = 'f32[8,128]{1,0:T(8,128)}', space=vmem, size = 0x1000, scoped, tag = 'scratch operand']
  %s0 = inlined_call_operand.vmem [shape: bf16[8,128], index: 0, kind: input, shape index: {}]
  %s1 = inlined_call_operand.vmem [shape: bf16[128,128], index: 1, kind: input, shape index: {}]
  %s2 = inlined_call_operand.vmem [shape: f32[1,128], index: 2, kind: input, shape index: {}]
  %s3 = inlined_call_operand.vmem [shape: f32[1,128], index: 3, kind: input, shape index: {}]
  %s4 = inlined_call_operand.vmem [shape: f32[8,128], index: 4, kind: output, shape index: {}]
  %s5 = sld [smem:[#allocation0]]
  $region34: #{_lambda_.35} parent=0
    _
  %s7 = ssub.s32 1, %s5
  %s8 = scalar_select 0, %s7, %s5
  // Predicated region
  $region2: #{_lambda_.35} parent=0 // pred_check
    _
  $region3: #{_lambda_.35} parent=0 // pred_check_branch
    %10 = sbr.rel (0) target = $region5
  $region4: #{_lambda_.35} parent=0 // pred_region
    _
  $region5: #{_lambda_.35} parent=0 // pred_fallthru
    _
  // Predicated region
  $region6: #{_lambda_.35} parent=0 // pred_check
    _
  $region7: #{_lambda_.35} parent=0 // pred_check_branch
    %12 = sbr.rel (0) target = $region9
  $region8: #{_lambda_.35} parent=0 // pred_region
    _
  $region9: #{_lambda_.35} parent=0 // pred_fallthru
    _
  // Predicated region
  $region10: #{_lambda_.35} parent=0 // pred_check
    _
  $region11: #{_lambda_.35} parent=0 // pred_check_branch
    %14 = sbr.rel (0) target = $region13
  $region12: #{_lambda_.35} parent=0 // pred_region
    _
  $region13: #{_lambda_.35} parent=0 // pred_fallthru
    _
  // Predicated region
  $region14: #{_lambda_.35} parent=0 // pred_check
    _
  $region15: #{_lambda_.35} parent=0 // pred_check_branch
    %16 = sbr.rel (0) target = $region17
  $region16: #{_lambda_.35} parent=0 // pred_region
    _
  $region17: #{_lambda_.35} parent=0 // pred_fallthru
    _
  %p18 = scmp.eq.s32.totalorder 0, 0
  // Predicated region
  $region18: #{_lambda_.35} parent=0 // pred_check
    %p19 = pneg %p18
  $region19: #{_lambda_.35} parent=0 // pred_check_branch
    %21 = sbr.rel (%p19) target = $region21
  $region20: #{_lambda_.35} parent=0 // pred_region
    %22 = vst [vmem:[#allocation2] sm:$0xff] 0.0
  $region21: #{_lambda_.35} parent=0 // pred_fallthru
    _
  %v23 = vld [vmem:[#allocation2] sm:$0xff]
  %v24 = vld [vmem:[%s0] sm:$0xf]
  %v25 = vld [vmem:[%s1] sm:$0xf]
  %v26 = vld [vmem:[%s1 + $0x4] sm:$0xf]
  %v27 = vld [vmem:[%s1 + $0x8] sm:$0xf]
  %v28 = vld [vmem:[%s1 + $0xc] sm:$0xf]
  %v29 = vld [vmem:[%s1 + $0x10] sm:$0xf]
  %v30 = vld [vmem:[%s1 + $0x14] sm:$0xf]
  %v31 = vld [vmem:[%s1 + $0x18] sm:$0xf]
  %v32 = vld [vmem:[%s1 + $0x1c] sm:$0xf]
  %v33 = vld [vmem:[%s1 + $0x20] sm:$0xf]
  %v34 = vld [vmem:[%s1 + $0x24] sm:$0xf]
  %v35 = vld [vmem:[%s1 + $0x28] sm:$0xf]
  %v36 = vld [vmem:[%s1 + $0x2c] sm:$0xf]
  %v37 = vld [vmem:[%s1 + $0x30] sm:$0xf]
  %v38 = vld [vmem:[%s1 + $0x34] sm:$0xf]
  %v39 = vld [vmem:[%s1 + $0x38] sm:$0xf]
  %v40 = vld [vmem:[%s1 + $0x3c] sm:$0xf]
  %v57 = vunpack.c.l.b16 %v25
  %v58 = vunpack.c.l.b16 %v26
  %v59 = vunpack.c.l.b16 %v27
  %v60 = vunpack.c.l.b16 %v28
  %v61 = vunpack.c.l.b16 %v29
  %v62 = vunpack.c.l.b16 %v30
  %v63 = vunpack.c.l.b16 %v31
  %v64 = vunpack.c.l.b16 %v32
  %v65 = vunpack.c.l.b16 %v33
  %v66 = vunpack.c.l.b16 %v34
  %v67 = vunpack.c.l.b16 %v35
  %v68 = vunpack.c.l.b16 %v36
  %v69 = vunpack.c.l.b16 %v37
  %v70 = vunpack.c.l.b16 %v38
  %v71 = vunpack.c.l.b16 %v39
  %v72 = vunpack.c.l.b16 %v40
  %v73 = vpack.c.b16 %v58, %v57
  %v74 = vpack.c.b16 %v60, %v59
  %v75 = vpack.c.b16 %v62, %v61
  %v76 = vpack.c.b16 %v64, %v63
  %v77 = vpack.c.b16 %v66, %v65
  %v78 = vpack.c.b16 %v68, %v67
  %v79 = vpack.c.b16 %v70, %v69
  %v80 = vpack.c.b16 %v72, %v71
  %89 = vmatprep.subr.bf16.mxu0 0
  %90 = vmatpush1.bf16.msra.mxu0 %v73
  %91 = vmatprep.subr.bf16.mxu0 0
  %92 = vmatpush1.bf16.msra.mxu0 %v74
  %93 = vmatprep.subr.bf16.mxu0 0
  %94 = vmatpush1.bf16.msra.mxu0 %v75
  %95 = vmatprep.subr.bf16.mxu0 0
  %96 = vmatpush1.bf16.msra.mxu0 %v76
  %97 = vmatprep.subr.bf16.mxu0 0
  %98 = vmatpush1.bf16.msra.mxu0 %v77
  %99 = vmatprep.subr.bf16.mxu0 0
  %100 = vmatpush1.bf16.msra.mxu0 %v78
  %101 = vmatprep.subr.bf16.mxu0 0
  %102 = vmatpush1.bf16.msra.mxu0 %v79
  %103 = vmatprep.subr.bf16.mxu0 0
  %104 = vmatpush1.bf16.msra.mxu0 %v80
  %105 = vmatprep.subr.bf16.mxu0 0
  %106 = vmatpush1.bf16.msra.mxu0 0
  %107 = vmatprep.subr.bf16.mxu0 0
  %108 = vmatpush1.bf16.msra.mxu0 0
  %109 = vmatprep.subr.bf16.mxu0 0
  %110 = vmatpush1.bf16.msra.mxu0 0
  %111 = vmatprep.subr.bf16.mxu0 0
  %112 = vmatpush1.bf16.msra.mxu0 0
  %113 = vmatprep.subr.bf16.mxu0 0
  %114 = vmatpush1.bf16.msra.mxu0 0
  %115 = vmatprep.subr.bf16.mxu0 0
  %116 = vmatpush1.bf16.msra.mxu0 0
  %117 = vmatprep.subr.bf16.mxu0 0
  %118 = vmatpush1.bf16.msra.mxu0 0
  %119 = vmatprep.subr.bf16.mxu0 0
  %120 = vmatpush1.bf16.msra.mxu0 0
  %121 = vmatprep.mubr.bf16.mxu0 0
  %122 = vmatmul.mubr.bf16.gmra.mrb[0].mxu0 %v24
  %v123 = vpop.f32.mrb[0].mxu0
  %v124 = vadd.f32 0.0, %v123
  %v125 = vpop.f32.mrb[0].mxu0
  %v126 = vpop.f32.mrb[0].mxu0
  %v127 = vpop.f32.mrb[0].mxu0
  %128 = vdwg.mxu0
  %v129 = vadd.f32 %v23, %v124
  %130 = vst [vmem:[#allocation2] sm:$0xff] %v129
  // Predicated region
  $region22: #{_lambda_.35} parent=0 // pred_check
    %p131 = pneg %p18
  $region23: #{_lambda_.35} parent=0 // pred_check_branch
    %133 = sbr.rel (%p131) target = $region25
  $region24: #{_lambda_.35} parent=0 // pred_region
    %v134 = vld [vmem:[#allocation2] sm:$0xff]
    %v135 = vld [vmem:[%s2] sm:$0x1]
    %v137 = vlaneseq
    %v138 = vshrl.u32 %v137, 7
    %v139 = vsub.s32 0, %v138
    %v140 = vrot.slane %v135, %v139
    %v142 = vmul.f32 %v134, %v140
    %v143 = vld [vmem:[%s3] sm:$0x1]
    %v145 = vlaneseq
    %v146 = vshrl.u32 %v145, 7
    %v147 = vsub.s32 0, %v146
    %v148 = vrot.slane %v143, %v147
    %v150 = vadd.f32 %v142, %v148
    %151 = vst [vmem:[%s4] sm:$0xff] %v150
  $region25: #{_lambda_.35} parent=0 // pred_fallthru
    _
  // Predicated region
  $region26: #{_lambda_.35} parent=0 // pred_check
    _
  $region27: #{_lambda_.35} parent=0 // pred_check_branch
    %153 = sbr.rel (0) target = $region29
  $region28: #{_lambda_.35} parent=0 // pred_region
    _
  $region29: #{_lambda_.35} parent=0 // pred_fallthru
    _
  // Predicated region
  $region30: #{_lambda_.35} parent=0 // pred_check
    _
  $region31: #{_lambda_.35} parent=0 // pred_check_branch
    %155 = sbr.rel (0) target = $region33
  $region32: #{_lambda_.35} parent=0 // pred_region
    _
  $region33: #{_lambda_.35} parent=0 // pred_fallthru
    _

// kernel: _lambda_.36
$region0: #{_lambda_.36}
  #allocation0 [shape = 'u32[]', space=smem, size = 0x4, offset = 0x4, fixed_abs, tag = 'smem constant byte address 0x4 - core index']
  #allocation1 [shape = 'u32[144,128]{1,0:T(1,128)}', space=vmem, size = 0x12000, scoped, tag = 'internal scratch']
  #allocation2 [shape = 'f32[8,128]{1,0:T(8,128)}', space=vmem, size = 0x1000, scoped, tag = 'scratch operand']
  %s0 = inlined_call_operand.vmem [shape: bf16[8,768], index: 0, kind: input, shape index: {}]
  %s1 = inlined_call_operand.vmem [shape: bf16[768,128], index: 1, kind: input, shape index: {}]
  %s2 = inlined_call_operand.vmem [shape: f32[1,128], index: 2, kind: input, shape index: {}]
  %s3 = inlined_call_operand.vmem [shape: f32[1,128], index: 3, kind: input, shape index: {}]
  %s4 = inlined_call_operand.vmem [shape: f32[8,128], index: 4, kind: input, shape index: {}]
  %s5 = inlined_call_operand.vmem [shape: f32[8,128], index: 5, kind: output, shape index: {}]
  %s6 = sld [smem:[#allocation0]]
  $region61: #{_lambda_.36} parent=0
    _
  %s8 = ssub.s32 1, %s6
  %s9 = scalar_select 0, %s8, %s6
  loop: start=0, step=1, limit=5
  $region2: #{_lambda_.36} parent=0 // loop_pre_header
    _
  $region3: #{_lambda_.36} parent=0 // loop_header
    %s11 = sphi 0, %s15
    %p12 = scmp.ge.s32.totalorder %s11, 5
    %s18 = sphi 0, %s37
    %s19 = sphi 0, %s33
    %s20 = sphi 0, %s29
    %s21 = sphi 0, %s18
    %s22 = sphi 0, %s19
    %s23 = sphi 0, %s20
    %s24 = sphi 0, %s21
    %s25 = sphi 0, %s22
    %s26 = sphi 0, %s23
    %s42 = sphi 0, %s44
    %s45 = sphi 0, %s42
    %s46 = sphi 0, %s45
    %s62 = sphi 0, %s46
    %s70 = sphi 0, %s72
    %s73 = sphi 0, %s70
    %s74 = sphi 0, %s73
    %s90 = sphi 0, %s74
    %s96 = sphi 0, %s98
    %s99 = sphi 0, %s96
    %s100 = sphi 0, %s99
    %s116 = sphi 0, %s100
    %s122 = sphi 0, %s124
    %s125 = sphi 0, %s122
    %s126 = sphi 0, %s125
    %s142 = sphi 0, %s126
    %s150 = sphi 0, %s152
    %s153 = sphi 0, %s150
    %s154 = sphi 0, %s153
    %s170 = sphi 0, %s154
    %s178 = sphi 0, %s180
    %s181 = sphi 0, %s178
    %s182 = sphi 0, %s181
    %s198 = sphi 0, %s182
  $region4: #{_lambda_.36} parent=0 // loop_header_branch
    %14 = sbr.rel (%p12) target = $region8
  $region5: #{_lambda_.36} parent=0 // loop_body
    %s16 = ssub.s32 %s11, 1
    %s17 = ssub.s32 %s11, 2
    %s27 = sadd.s32 1, %s20
    %p28 = scmp.ge.s32.totalorder %s27, 3
    %s29 = scalar_select %p28, 0, %s27
    %s30 = sadd.s32 1, %s19
    %s31 = scalar_select %p28, %s30, %s19
    %p32 = scmp.ge.s32.totalorder %s31, 1
    %s33 = scalar_select %p32, 0, %s31
    %s34 = sadd.s32 1, %s18
    %s35 = scalar_select %p32, %s34, %s18
    %p36 = scmp.ge.s32.totalorder %s35, 1
    %s37 = scalar_select %p36, 0, %s35
    %s38 = ssub.s32 %s18, %s37
    %s39 = ssub.s32 %s20, %s29
    %s40 = sor.u32 %s38, %s39
    %p41 = scmp.eq.s32.totalorder %s40, 0
    %s43 = sadd.s32 %s42, 1
    %s44 = scalar_select %p41, %s42, %s43
    %p47 = pneg %p41
    %p48 = scmp.eq.s32.totalorder %s11, 2
    %p49 = por %p47, %p48
    %p50 = scmp.ne.s32.totalorder %s42, %s45
    %p51 = scmp.eq.s32.totalorder %s11, 0
    %p52 = por %p50, %p51
    %p53 = scmp.ne.s32.totalorder %s42, %s45
    %p54 = scmp.eq.s32.totalorder %s16, 2
    %p55 = por %p53, %p54
    %p56 = scmp.ne.s32.totalorder %s45, %s46
    %p57 = scmp.eq.s32.totalorder %s16, 0
    %p58 = por %p56, %p57
    %p59 = scmp.ne.s32.totalorder %s45, %s46
    %p60 = scmp.eq.s32.totalorder %s17, 2
    %p61 = por %p59, %p60
    %p63 = scmp.ne.s32.totalorder %s46, %s62
    %p64 = scmp.eq.s32.totalorder %s17, 0
    %p65 = por %p63, %p64
    %s66 = ssub.s32 %s20, %s29
    %s67 = ssub.s32 %s19, %s33
    %s68 = sor.u32 %s66, %s67
    %p69 = scmp.eq.s32.totalorder %s68, 0
    %s71 = sadd.s32 %s70, 1
    %s72 = scalar_select %p69, %s70, %s71
    %p75 = pneg %p69
    %p76 = scmp.eq.s32.totalorder %s11, 2
    %p77 = por %p75, %p76
    %p78 = scmp.ne.s32.totalorder %s70, %s73
    %p79 = scmp.eq.s32.totalorder %s11, 0
    %p80 = por %p78, %p79
    %p81 = scmp.ne.s32.totalorder %s70, %s73
    %p82 = scmp.eq.s32.totalorder %s16, 2
    %p83 = por %p81, %p82
    %p84 = scmp.ne.s32.totalorder %s73, %s74
    %p85 = scmp.eq.s32.totalorder %s16, 0
    %p86 = por %p84, %p85
    %p87 = scmp.ne.s32.totalorder %s73, %s74
    %p88 = scmp.eq.s32.totalorder %s17, 2
    %p89 = por %p87, %p88
    %p91 = scmp.ne.s32.totalorder %s74, %s90
    %p92 = scmp.eq.s32.totalorder %s17, 0
    %p93 = por %p91, %p92
    %s94 = ssub.s32 %s19, %s33
    %p95 = scmp.eq.s32.totalorder %s94, 0
    %s97 = sadd.s32 %s96, 1
    %s98 = scalar_select %p95, %s96, %s97
    %p101 = pneg %p95
    %p102 = scmp.eq.s32.totalorder %s11, 2
    %p103 = por %p101, %p102
    %p104 = scmp.ne.s32.totalorder %s96, %s99
    %p105 = scmp.eq.s32.totalorder %s11, 0
    %p106 = por %p104, %p105
    %p107 = scmp.ne.s32.totalorder %s96, %s99
    %p108 = scmp.eq.s32.totalorder %s16, 2
    %p109 = por %p107, %p108
    %p110 = scmp.ne.s32.totalorder %s99, %s100
    %p111 = scmp.eq.s32.totalorder %s16, 0
    %p112 = por %p110, %p111
    %p113 = scmp.ne.s32.totalorder %s99, %s100
    %p114 = scmp.eq.s32.totalorder %s17, 2
    %p115 = por %p113, %p114
    %p117 = scmp.ne.s32.totalorder %s100, %s116
    %p118 = scmp.eq.s32.totalorder %s17, 0
    %p119 = por %p117, %p118
    %s120 = ssub.s32 %s19, %s33
    %p121 = scmp.eq.s32.totalorder %s120, 0
    %s123 = sadd.s32 %s122, 1
    %s124 = scalar_select %p121, %s122, %s123
    %p127 = pneg %p121
    %p128 = scmp.eq.s32.totalorder %s11, 2
    %p129 = por %p127, %p128
    %p130 = scmp.ne.s32.totalorder %s122, %s125
    %p131 = scmp.eq.s32.totalorder %s11, 0
    %p132 = por %p130, %p131
    %p133 = scmp.ne.s32.totalorder %s122, %s125
    %p134 = scmp.eq.s32.totalorder %s16, 2
    %p135 = por %p133, %p134
    %p136 = scmp.ne.s32.totalorder %s125, %s126
    %p137 = scmp.eq.s32.totalorder %s16, 0
    %p138 = por %p136, %p137
    %p139 = scmp.ne.s32.totalorder %s125, %s126
    %p140 = scmp.eq.s32.totalorder %s17, 2
    %p141 = por %p139, %p140
    %p143 = scmp.ne.s32.totalorder %s126, %s142
    %p144 = scmp.eq.s32.totalorder %s17, 0
    %p145 = por %p143, %p144
    %s146 = ssub.s32 %s18, %s37
    %s147 = ssub.s32 %s19, %s33
    %s148 = sor.u32 %s146, %s147
    %p149 = scmp.eq.s32.totalorder %s148, 0
    %s151 = sadd.s32 %s150, 1
    %s152 = scalar_select %p149, %s150, %s151
    %p155 = pneg %p149
    %p156 = scmp.eq.s32.totalorder %s11, 2
    %p157 = por %p155, %p156
    %p158 = scmp.ne.s32.totalorder %s150, %s153
    %p159 = scmp.eq.s32.totalorder %s11, 0
    %p160 = por %p158, %p159
    %p161 = scmp.ne.s32.totalorder %s150, %s153
    %p162 = scmp.eq.s32.totalorder %s16, 2
    %p163 = por %p161, %p162
    %p164 = scmp.ne.s32.totalorder %s153, %s154
    %p165 = scmp.eq.s32.totalorder %s16, 0
    %p166 = por %p164, %p165
    %p167 = scmp.ne.s32.totalorder %s153, %s154
    %p168 = scmp.eq.s32.totalorder %s17, 2
    %p169 = por %p167, %p168
    %p171 = scmp.ne.s32.totalorder %s154, %s170
    %p172 = scmp.eq.s32.totalorder %s17, 0
    %p173 = por %p171, %p172
    %s174 = ssub.s32 %s18, %s37
    %s175 = ssub.s32 %s19, %s33
    %s176 = sor.u32 %s174, %s175
    %p177 = scmp.eq.s32.totalorder %s176, 0
    %s179 = sadd.s32 %s178, 1
    %s180 = scalar_select %p177, %s178, %s179
    %p183 = pneg %p177
    %p184 = scmp.eq.s32.totalorder %s11, 2
    %p185 = por %p183, %p184
    %p186 = scmp.ne.s32.totalorder %s178, %s181
    %p187 = scmp.eq.s32.totalorder %s11, 0
    %p188 = por %p186, %p187
    %p189 = scmp.ne.s32.totalorder %s178, %s181
    %p190 = scmp.eq.s32.totalorder %s16, 2
    %p191 = por %p189, %p190
    %p192 = scmp.ne.s32.totalorder %s181, %s182
    %p193 = scmp.eq.s32.totalorder %s16, 0
    %p194 = por %p192, %p193
    %p195 = scmp.ne.s32.totalorder %s181, %s182
    %p196 = scmp.eq.s32.totalorder %s17, 2
    %p197 = por %p195, %p196
    %p199 = scmp.ne.s32.totalorder %s182, %s198
    %p200 = scmp.eq.s32.totalorder %s17, 0
    %p201 = por %p199, %p200
    %p202 = scmp.le.s32.totalorder 1, %s11
    %p203 = scmp.lt.s32.totalorder %s11, 4
    %p204 = pnand %p202, %p203
    %p205 = pneg %p204
    // Predicated region
    $region9: #{_lambda_.36} parent=5 // pred_check
      _
    $region10: #{_lambda_.36} parent=5 // pred_check_branch
      %207 = sbr.rel (%p204) target = $region12
    $region11: #{_lambda_.36} parent=5 // pred_region
      %s208 = ssub.s32 %s11, 1
      // Predicated region
      $region13: #{_lambda_.36} parent=11 // pred_check
        %p209 = pneg %p112
      $region14: #{_lambda_.36} parent=11 // pred_check_branch
        %211 = sbr.rel (%p209) target = $region16
      $region15: #{_lambda_.36} parent=11 // pred_region
        %p212 = scmp.lt.s32.totalorder %s22, 0
        %s213 = scalar_select %p212, %s22, 0
        %s214 = scalar_lea.vmem %s2, %s213
      $region16: #{_lambda_.36} parent=11 // pred_fallthru
        _
      // Predicated region
      $region17: #{_lambda_.36} parent=11 // pred_check
        %p215 = pneg %p138
      $region18: #{_lambda_.36} parent=11 // pred_check_branch
        %217 = sbr.rel (%p215) target = $region20
      $region19: #{_lambda_.36} parent=11 // pred_region
        %p218 = scmp.lt.s32.totalorder %s22, 0
        %s219 = scalar_select %p218, %s22, 0
        %s220 = scalar_lea.vmem %s3, %s219
      $region20: #{_lambda_.36} parent=11 // pred_fallthru
        _
      // Predicated region
      $region21: #{_lambda_.36} parent=11 // pred_check
        %p221 = pneg %p166
      $region22: #{_lambda_.36} parent=11 // pred_check_branch
        %223 = sbr.rel (%p221) target = $region24
      $region23: #{_lambda_.36} parent=11 // pred_region
        %p224 = scmp.lt.s32.totalorder %s21, 0
        %s225 = scalar_select %p224, %s21, 0
        %p226 = scmp.lt.s32.totalorder %s22, 0
        %s227 = scalar_select %p226, %s22, 0
        %s228 = sadd.s32 %s227, %s225
        %s229 = smul.addr %s228, 8
        %s230 = scalar_lea.vmem %s4, %s229
      $region24: #{_lambda_.36} parent=11 // pred_fallthru
        _
    $region12: #{_lambda_.36} parent=5 // pred_fallthru
      _
    %p231 = scmp.lt.s32.totalorder %s11, 3
    // Predicated region
    $region25: #{_lambda_.36} parent=5 // pred_check
      %p232 = pneg %p231
    $region26: #{_lambda_.36} parent=5 // pred_check_branch
      %234 = sbr.rel (%p232) target = $region28
    $region27: #{_lambda_.36} parent=5 // pred_region
      // Predicated region
      $region29: #{_lambda_.36} parent=27 // pred_check
        %p235 = pneg %p52
      $region30: #{_lambda_.36} parent=27 // pred_check_branch
        %237 = sbr.rel (%p235) target = $region32
      $region31: #{_lambda_.36} parent=27 // pred_region
        %s238 = smul.u32 2, %s20
        %p239 = scmp.lt.s32.totalorder %s18, 0
        %s240 = scalar_select %p239, %s18, 0
        %p241 = scmp.lt.s32.totalorder %s238, 5
        %s242 = scalar_select %p241, %s238, 5
        %s243 = smul.addr %s240, 6
        %s244 = sadd.s32 %s242, %s243
        %s245 = smul.addr %s244, 4
        %s246 = scalar_lea.vmem %s0, %s245
        %s247 = smul.u32 2, %s20
      $region32: #{_lambda_.36} parent=27 // pred_fallthru
        _
      // Predicated region
      $region33: #{_lambda_.36} parent=27 // pred_check
        %p248 = pneg %p80
      $region34: #{_lambda_.36} parent=27 // pred_check_branch
        %250 = sbr.rel (%p248) target = $region36
      $region35: #{_lambda_.36} parent=27 // pred_region
        %s251 = smul.u32 32, %s20
        %p252 = scmp.lt.s32.totalorder %s251, 95
        %s253 = scalar_select %p252, %s251, 95
        %p254 = scmp.lt.s32.totalorder %s19, 0
        %s255 = scalar_select %p254, %s19, 0
        %s256 = sadd.s32 %s255, %s253
        %s257 = smul.addr %s256, 4
        %s258 = scalar_lea.vmem %s1, %s257
        %s259 = smul.u32 32, %s20
      $region36: #{_lambda_.36} parent=27 // pred_fallthru
        _
    $region28: #{_lambda_.36} parent=5 // pred_fallthru
      _
    %p260 = scmp.le.s32.totalorder 1, %s11
    %p261 = scmp.lt.s32.totalorder %s11, 4
    %p262 = pnand %p260, %p261
    %p263 = pneg %p262
    // Predicated region
    $region37: #{_lambda_.36} parent=5 // pred_check
      _
    $region38: #{_lambda_.36} parent=5 // pred_check_branch
      %265 = sbr.rel (%p262) target = $region40
    $region39: #{_lambda_.36} parent=5 // pred_region
      %s266 = ssub.s32 %s11, 1
      %s267 = smul.u32 2, %s23
      %p268 = scmp.lt.s32.totalorder %s21, 0
      %s269 = scalar_select %p268, %s21, 0
      %p270 = scmp.lt.s32.totalorder %s267, 5
      %s271 = scalar_select %p270, %s267, 5
      %s272 = smul.addr %s269, 6
      %s273 = sadd.s32 %s271, %s272
      %s274 = smul.addr %s273, 4
      %s275 = scalar_lea.vmem %s0, %s274
      %p276 = pneg %p58
      %p277 = pneg %p55
      %s278 = smul.u32 32, %s23
      %p279 = scmp.lt.s32.totalorder %s278, 95
      %s280 = scalar_select %p279, %s278, 95
      %p281 = scmp.lt.s32.totalorder %s22, 0
      %s282 = scalar_select %p281, %s22, 0
      %s283 = sadd.s32 %s282, %s280
      %s284 = smul.addr %s283, 4
      %s285 = scalar_lea.vmem %s1, %s284
      %p286 = pneg %p86
      %p287 = pneg %p83
      %p288 = scmp.lt.s32.totalorder %s22, 0
      %s289 = scalar_select %p288, %s22, 0
      %s290 = scalar_lea.vmem %s2, %s289
      %p291 = pneg %p112
      %p292 = pneg %p109
      %p293 = scmp.lt.s32.totalorder %s22, 0
      %s294 = scalar_select %p293, %s22, 0
      %s295 = scalar_lea.vmem %s3, %s294
      %p296 = pneg %p138
      %p297 = pneg %p135
      %p298 = scmp.lt.s32.totalorder %s21, 0
      %s299 = scalar_select %p298, %s21, 0
      %p300 = scmp.lt.s32.totalorder %s22, 0
      %s301 = scalar_select %p300, %s22, 0
      %s302 = sadd.s32 %s301, %s299
      %s303 = smul.addr %s302, 8
      %s304 = scalar_lea.vmem %s4, %s303
      %p305 = pneg %p166
      %p306 = pneg %p163
      %p307 = pneg %p194
      %p308 = pneg %p191
      %p309 = scmp.lt.s32.totalorder %s21, 0
      %s310 = scalar_select %p309, %s21, 0
      %p311 = scmp.lt.s32.totalorder %s22, 0
      %s312 = scalar_select %p311, %s22, 0
      %s313 = sadd.s32 %s312, %s310
      %s314 = smul.addr %s313, 8
      %s315 = scalar_lea.vmem %s5, %s314
      %s316 = smul.u32 2, %s23
      %p317 = scmp.lt.s32.totalorder %s21, 0
      %s318 = scalar_select %p317, %s21, 0
      %p319 = scmp.lt.s32.totalorder %s316, 5
      %s320 = scalar_select %p319, %s316, 5
      %s321 = smul.addr %s318, 6
      %s322 = sadd.s32 %s320, %s321
      %s323 = smul.addr %s322, 4
      %s324 = scalar_lea.vmem %s0, %s323
      %s325 = smul.u32 2, %s23
      %s326 = smul.u32 32, %s23
      %p327 = scmp.lt.s32.totalorder %s326, 95
      %s328 = scalar_select %p327, %s326, 95
      %p329 = scmp.lt.s32.totalorder %s22, 0
      %s330 = scalar_select %p329, %s22, 0
      %s331 = sadd.s32 %s330, %s328
      %s332 = smul.addr %s331, 4
      %s333 = scalar_lea.vmem %s1, %s332
      %s334 = smul.u32 32, %s23
      %p335 = scmp.lt.s32.totalorder %s22, 0
      %s336 = scalar_select %p335, %s22, 0
      %s337 = scalar_lea.vmem %s2, %s336
      %p338 = scmp.lt.s32.totalorder %s22, 0
      %s339 = scalar_select %p338, %s22, 0
      %s340 = scalar_lea.vmem %s3, %s339
      %p341 = scmp.lt.s32.totalorder %s21, 0
      %s342 = scalar_select %p341, %s21, 0
      %p343 = scmp.lt.s32.totalorder %s22, 0
      %s344 = scalar_select %p343, %s22, 0
      %s345 = sadd.s32 %s344, %s342
      %s346 = smul.addr %s345, 8
      %s347 = scalar_lea.vmem %s4, %s346
      %p348 = scmp.lt.s32.totalorder %s21, 0
      %s349 = scalar_select %p348, %s21, 0
      %p350 = scmp.lt.s32.totalorder %s22, 0
      %s351 = scalar_select %p350, %s22, 0
      %s352 = sadd.s32 %s351, %s349
      %s353 = smul.addr %s352, 8
      %s354 = scalar_lea.vmem %s5, %s353
      %p356 = scmp.eq.s32.totalorder %s23, 0
      // Predicated region
      $region41: #{_lambda_.36} parent=39 // pred_check
        %p357 = pneg %p356
      $region42: #{_lambda_.36} parent=39 // pred_check_branch
        %359 = sbr.rel (%p357) target = $region44
      $region43: #{_lambda_.36} parent=39 // pred_region
        %360 = vst [vmem:[#allocation2] sm:$0xff] 0.0
      $region44: #{_lambda_.36} parent=39 // pred_fallthru
        _
      %v361 = vld [vmem:[#allocation2] sm:$0xff]
      %v362 = vld [vmem:[%s324] sm:$0xff]
      %v363 = vld [vmem:[%s333] sm:$0xf]
      %v364 = vld [vmem:[%s333 + $0x4] sm:$0xf]
      %v365 = vld [vmem:[%s333 + $0x8] sm:$0xf]
      %v366 = vld [vmem:[%s333 + $0xc] sm:$0xf]
      %v367 = vld [vmem:[%s333 + $0x10] sm:$0xf]
      %v368 = vld [vmem:[%s333 + $0x14] sm:$0xf]
      %v369 = vld [vmem:[%s333 + $0x18] sm:$0xf]
      %v370 = vld [vmem:[%s333 + $0x1c] sm:$0xf]
      %v371 = vld [vmem:[%s333 + $0x20] sm:$0xf]
      %v372 = vld [vmem:[%s333 + $0x24] sm:$0xf]
      %v373 = vld [vmem:[%s333 + $0x28] sm:$0xf]
      %v374 = vld [vmem:[%s333 + $0x2c] sm:$0xf]
      %v375 = vld [vmem:[%s333 + $0x30] sm:$0xf]
      %v376 = vld [vmem:[%s333 + $0x34] sm:$0xf]
      %v377 = vld [vmem:[%s333 + $0x38] sm:$0xf]
      %v378 = vld [vmem:[%s333 + $0x3c] sm:$0xf]
      %v379 = vld [vmem:[%s333 + $0x40] sm:$0xf]
      %v380 = vld [vmem:[%s333 + $0x44] sm:$0xf]
      %v381 = vld [vmem:[%s333 + $0x48] sm:$0xf]
      %v382 = vld [vmem:[%s333 + $0x4c] sm:$0xf]
      %v383 = vld [vmem:[%s333 + $0x50] sm:$0xf]
      %v384 = vld [vmem:[%s333 + $0x54] sm:$0xf]
      %v385 = vld [vmem:[%s333 + $0x58] sm:$0xf]
      %v386 = vld [vmem:[%s333 + $0x5c] sm:$0xf]
      %v387 = vld [vmem:[%s333 + $0x60] sm:$0xf]
      %v388 = vld [vmem:[%s333 + $0x64] sm:$0xf]
      %v389 = vld [vmem:[%s333 + $0x68] sm:$0xf]
      %v390 = vld [vmem:[%s333 + $0x6c] sm:$0xf]
      %v391 = vld [vmem:[%s333 + $0x70] sm:$0xf]
      %v392 = vld [vmem:[%s333 + $0x74] sm:$0xf]
      %v393 = vld [vmem:[%s333 + $0x78] sm:$0xf]
      %v394 = vld [vmem:[%s333 + $0x7c] sm:$0xf]
      %v396 = vunpack.c.l.b16 %v362
      %v397 = vunpack.c.h.b16 %v362
      %v398 = vpack.c.b16 %v396, %v396
      %v399 = vpack.c.b16 %v397, %v397
      %v434 = vunpack.c.l.b16 %v363
      %v435 = vunpack.c.l.b16 %v364
      %v436 = vunpack.c.l.b16 %v365
      %v437 = vunpack.c.l.b16 %v366
      %v438 = vunpack.c.l.b16 %v367
      %v439 = vunpack.c.l.b16 %v368
      %v440 = vunpack.c.l.b16 %v369
      %v441 = vunpack.c.l.b16 %v370
      %v442 = vunpack.c.l.b16 %v371
      %v443 = vunpack.c.l.b16 %v372
      %v444 = vunpack.c.l.b16 %v373
      %v445 = vunpack.c.l.b16 %v374
      %v446 = vunpack.c.l.b16 %v375
      %v447 = vunpack.c.l.b16 %v376
      %v448 = vunpack.c.l.b16 %v377
      %v449 = vunpack.c.l.b16 %v378
      %v450 = vunpack.c.l.b16 %v379
      %v451 = vunpack.c.l.b16 %v380
      %v452 = vunpack.c.l.b16 %v381
      %v453 = vunpack.c.l.b16 %v382
      %v454 = vunpack.c.l.b16 %v383
      %v455 = vunpack.c.l.b16 %v384
      %v456 = vunpack.c.l.b16 %v385
      %v457 = vunpack.c.l.b16 %v386
      %v458 = vunpack.c.l.b16 %v387
      %v459 = vunpack.c.l.b16 %v388
      %v460 = vunpack.c.l.b16 %v389
      %v461 = vunpack.c.l.b16 %v390
      %v462 = vunpack.c.l.b16 %v391
      %v463 = vunpack.c.l.b16 %v392
      %v464 = vunpack.c.l.b16 %v393
      %v465 = vunpack.c.l.b16 %v394
      %v466 = vpack.c.b16 %v435, %v434
      %v467 = vpack.c.b16 %v437, %v436
      %v468 = vpack.c.b16 %v439, %v438
      %v469 = vpack.c.b16 %v441, %v440
      %v470 = vpack.c.b16 %v443, %v442
      %v471 = vpack.c.b16 %v445, %v444
      %v472 = vpack.c.b16 %v447, %v446
      %v473 = vpack.c.b16 %v449, %v448
      %v474 = vpack.c.b16 %v451, %v450
      %v475 = vpack.c.b16 %v453, %v452
      %v476 = vpack.c.b16 %v455, %v454
      %v477 = vpack.c.b16 %v457, %v456
      %v478 = vpack.c.b16 %v459, %v458
      %v479 = vpack.c.b16 %v461, %v460
      %v480 = vpack.c.b16 %v463, %v462
      %v481 = vpack.c.b16 %v465, %v464
      %498 = vmatprep.subr.bf16.mxu0 0
      %499 = vmatpush1.bf16.msra.mxu0 %v466
      %500 = vmatprep.subr.bf16.mxu0 0
      %501 = vmatpush1.bf16.msra.mxu0 %v467
      %502 = vmatprep.subr.bf16.mxu0 0
      %503 = vmatpush1.bf16.msra.mxu0 %v468
      %504 = vmatprep.subr.bf16.mxu0 0
      %505 = vmatpush1.bf16.msra.mxu0 %v469
      %506 = vmatprep.subr.bf16.mxu0 0
      %507 = vmatpush1.bf16.msra.mxu0 %v470
      %508 = vmatprep.subr.bf16.mxu0 0
      %509 = vmatpush1.bf16.msra.mxu0 %v471
      %510 = vmatprep.subr.bf16.mxu0 0
      %511 = vmatpush1.bf16.msra.mxu0 %v472
      %512 = vmatprep.subr.bf16.mxu0 0
      %513 = vmatpush1.bf16.msra.mxu0 %v473
      %514 = vmatprep.subr.bf16.mxu0 0
      %515 = vmatpush1.bf16.msra.mxu0 %v474
      %516 = vmatprep.subr.bf16.mxu0 0
      %517 = vmatpush1.bf16.msra.mxu0 %v475
      %518 = vmatprep.subr.bf16.mxu0 0
      %519 = vmatpush1.bf16.msra.mxu0 %v476
      %520 = vmatprep.subr.bf16.mxu0 0
      %521 = vmatpush1.bf16.msra.mxu0 %v477
      %522 = vmatprep.subr.bf16.mxu0 0
      %523 = vmatpush1.bf16.msra.mxu0 %v478
      %524 = vmatprep.subr.bf16.mxu0 0
      %525 = vmatpush1.bf16.msra.mxu0 %v479
      %526 = vmatprep.subr.bf16.mxu0 0
      %527 = vmatpush1.bf16.msra.mxu0 %v480
      %528 = vmatprep.subr.bf16.mxu0 0
      %529 = vmatpush1.bf16.msra.mxu0 %v481
      %530 = vmatprep.mubr.bf16.mxu0 %v399
      %531 = vmatmul.mubr.bf16.gmra.mrb[0].mxu0 %v398
      %v532 = vpop.f32.mrb[0].mxu0
      %v533 = vadd.f32 0.0, %v532
      %v534 = vpop.f32.mrb[0].mxu0
      %v535 = vpop.f32.mrb[0].mxu0
      %v536 = vpop.f32.mrb[0].mxu0
      %537 = vdwg.mxu0
      %v538 = vadd.f32 %v361, %v533
      %539 = vst [vmem:[#allocation2] sm:$0xff] %v538
      %p540 = scmp.eq.s32.totalorder %s23, 2
      // Predicated region
      $region45: #{_lambda_.36} parent=39 // pred_check
        %p541 = pneg %p540
      $region46: #{_lambda_.36} parent=39 // pred_check_branch
        %543 = sbr.rel (%p541) target = $region48
      $region47: #{_lambda_.36} parent=39 // pred_region
        %v544 = vld [vmem:[#allocation2] sm:$0xff]
        %v545 = vld [vmem:[%s337] sm:$0x1]
        %v547 = vlaneseq
        %v548 = vshrl.u32 %v547, 7
        %v549 = vsub.s32 0, %v548
        %v550 = vrot.slane %v545, %v549
        %v552 = vmul.f32 %v544, %v550
        %v553 = vld [vmem:[%s340] sm:$0x1]
        %v555 = vlaneseq
        %v556 = vshrl.u32 %v555, 7
        %v557 = vsub.s32 0, %v556
        %v558 = vrot.slane %v553, %v557
        %v560 = vadd.f32 %v552, %v558
        %v561 = vld [vmem:[%s347] sm:$0xff]
        %v562 = vadd.f32 %v560, %v561
        %v563 = vmax.f32 %v562, 0.0
        %564 = vst [vmem:[%s354] sm:$0xff] %v563
      $region48: #{_lambda_.36} parent=39 // pred_fallthru
        _
      %p565 = scmp.lt.s32.totalorder %s21, 0
      %s566 = scalar_select %p565, %s21, 0
      %p567 = scmp.lt.s32.totalorder %s22, 0
      %s568 = scalar_select %p567, %s22, 0
      %s569 = sadd.s32 %s568, %s566
      %s570 = smul.addr %s569, 8
      %s571 = scalar_lea.vmem %s5, %s570
      // Predicated region
      $region49: #{_lambda_.36} parent=39 // pred_check
        %p572 = pneg %p191
      $region50: #{_lambda_.36} parent=39 // pred_check_branch
        %574 = sbr.rel (%p572) target = $region52
      $region51: #{_lambda_.36} parent=39 // pred_region
        _
      $region52: #{_lambda_.36} parent=39 // pred_fallthru
        _
      // Predicated region
      $region53: #{_lambda_.36} parent=39 // pred_check
        %p575 = pneg %p191
      $region54: #{_lambda_.36} parent=39 // pred_check_branch
        %577 = sbr.rel (%p575) target = $region56
      $region55: #{_lambda_.36} parent=39 // pred_region
        %p578 = scmp.lt.s32.totalorder %s21, 0
        %s579 = scalar_select %p578, %s21, 0
        %p580 = scmp.lt.s32.totalorder %s22, 0
        %s581 = scalar_select %p580, %s22, 0
        %s582 = sadd.s32 %s581, %s579
        %s583 = smul.addr %s582, 8
        %s584 = scalar_lea.vmem %s5, %s583
      $region56: #{_lambda_.36} parent=39 // pred_fallthru
        _
    $region40: #{_lambda_.36} parent=5 // pred_fallthru
      _
    %p585 = scmp.le.s32.totalorder 2, %s11
    // Predicated region
    $region57: #{_lambda_.36} parent=5 // pred_check
      %p586 = pneg %p585
    $region58: #{_lambda_.36} parent=5 // pred_check_branch
      %588 = sbr.rel (%p586) target = $region60
    $region59: #{_lambda_.36} parent=5 // pred_region
      %s589 = ssub.s32 %s11, 2
    $region60: #{_lambda_.36} parent=5 // pred_fallthru
      _
  $region6: #{_lambda_.36} parent=0 // loop_footer
    %s15 = sadd.s32 1, %s11
  $region7: #{_lambda_.36} parent=0 // loop_footer_branch
    %10 = sbr.rel target = $region3
  $region8: #{_lambda_.36} parent=0 // loop_exit
    _

// kernel: _lambda_.37
$region0: #{_lambda_.37}
  #allocation0 [shape = 'u32[]', space=smem, size = 0x4, offset = 0x4, fixed_abs, tag = 'smem constant byte address 0x4 - core index']
  #allocation1 [shape = 'u32[144,128]{1,0:T(1,128)}', space=vmem, size = 0x12000, scoped, tag = 'internal scratch']
  %s0 = inlined_call_operand.vmem [shape: f32[2,4,64], index: 0, kind: input, shape index: {}]
  %s1 = inlined_call_operand.vmem [shape: f32[64,8], index: 1, kind: input, shape index: {}]
  %s2 = inlined_call_operand.vmem [shape: f32[1,8], index: 2, kind: input, shape index: {}]
  %s3 = inlined_call_operand.vmem [shape: f32[8,64], index: 3, kind: input, shape index: {}]
  %s4 = inlined_call_operand.vmem [shape: f32[1,64], index: 4, kind: input, shape index: {}]
  %s5 = inlined_call_operand.vmem [shape: f32[2,4,64], index: 5, kind: output, shape index: {}]
  %s6 = sld [smem:[#allocation0]]
  $region53: #{_lambda_.37} parent=0
    _
  %s8 = ssub.s32 1, %s6
  %s9 = scalar_select 0, %s8, %s6
  loop: start=0, step=1, limit=4
  $region2: #{_lambda_.37} parent=0 // loop_pre_header
    _
  $region3: #{_lambda_.37} parent=0 // loop_header
    %s11 = sphi 0, %s15
    %p12 = scmp.ge.s32.totalorder %s11, 4
    %s21 = sphi 0, %s23
    %s24 = sphi 0, %s21
    %s25 = sphi 0, %s24
    %s41 = sphi 0, %s25
    %s45 = sphi 0, %s45
    %s47 = sphi 0, %s45
    %s48 = sphi 0, %s47
    %s62 = sphi 0, %s48
    %s66 = sphi 0, %s66
    %s68 = sphi 0, %s66
    %s69 = sphi 0, %s68
    %s83 = sphi 0, %s69
    %s87 = sphi 0, %s87
    %s89 = sphi 0, %s87
    %s90 = sphi 0, %s89
    %s104 = sphi 0, %s90
    %s108 = sphi 0, %s108
    %s110 = sphi 0, %s108
    %s111 = sphi 0, %s110
    %s125 = sphi 0, %s111
    %s131 = sphi 0, %s133
    %s134 = sphi 0, %s131
    %s135 = sphi 0, %s134
    %s151 = sphi 0, %s135
  $region4: #{_lambda_.37} parent=0 // loop_header_branch
    %14 = sbr.rel (%p12) target = $region8
  $region5: #{_lambda_.37} parent=0 // loop_body
    %s16 = ssub.s32 %s11, 1
    %s17 = ssub.s32 %s11, 2
    %s18 = sadd.s32 %s11, 1
    %s19 = ssub.s32 %s11, %s18
    %p20 = scmp.eq.s32.totalorder %s19, 0
    %s22 = sadd.s32 %s21, 1
    %s23 = scalar_select %p20, %s21, %s22
    %p26 = pneg %p20
    %p27 = scmp.eq.s32.totalorder %s11, 1
    %p28 = por %p26, %p27
    %p29 = scmp.ne.s32.totalorder %s21, %s24
    %p30 = scmp.eq.s32.totalorder %s11, 0
    %p31 = por %p29, %p30
    %p32 = scmp.ne.s32.totalorder %s21, %s24
    %p33 = scmp.eq.s32.totalorder %s16, 1
    %p34 = por %p32, %p33
    %p35 = scmp.ne.s32.totalorder %s24, %s25
    %p36 = scmp.eq.s32.totalorder %s16, 0
    %p37 = por %p35, %p36
    %p38 = scmp.ne.s32.totalorder %s24, %s25
    %p39 = scmp.eq.s32.totalorder %s17, 1
    %p40 = por %p38, %p39
    %p42 = scmp.ne.s32.totalorder %s25, %s41
    %p43 = scmp.eq.s32.totalorder %s17, 0
    %p44 = por %p42, %p43
    %s46 = sadd.s32 %s45, 1
    %p49 = scmp.eq.s32.totalorder %s11, 1
    %p50 = scmp.ne.s32.totalorder %s45, %s47
    %p51 = scmp.eq.s32.totalorder %s11, 0
    %p52 = por %p50, %p51
    %p53 = scmp.ne.s32.totalorder %s45, %s47
    %p54 = scmp.eq.s32.totalorder %s16, 1
    %p55 = por %p53, %p54
    %p56 = scmp.ne.s32.totalorder %s47, %s48
    %p57 = scmp.eq.s32.totalorder %s16, 0
    %p58 = por %p56, %p57
    %p59 = scmp.ne.s32.totalorder %s47, %s48
    %p60 = scmp.eq.s32.totalorder %s17, 1
    %p61 = por %p59, %p60
    %p63 = scmp.ne.s32.totalorder %s48, %s62
    %p64 = scmp.eq.s32.totalorder %s17, 0
    %p65 = por %p63, %p64
    %s67 = sadd.s32 %s66, 1
    %p70 = scmp.eq.s32.totalorder %s11, 1
    %p71 = scmp.ne.s32.totalorder %s66, %s68
    %p72 = scmp.eq.s32.totalorder %s11, 0
    %p73 = por %p71, %p72
    %p74 = scmp.ne.s32.totalorder %s66, %s68
    %p75 = scmp.eq.s32.totalorder %s16, 1
    %p76 = por %p74, %p75
    %p77 = scmp.ne.s32.totalorder %s68, %s69
    %p78 = scmp.eq.s32.totalorder %s16, 0
    %p79 = por %p77, %p78
    %p80 = scmp.ne.s32.totalorder %s68, %s69
    %p81 = scmp.eq.s32.totalorder %s17, 1
    %p82 = por %p80, %p81
    %p84 = scmp.ne.s32.totalorder %s69, %s83
    %p85 = scmp.eq.s32.totalorder %s17, 0
    %p86 = por %p84, %p85
    %s88 = sadd.s32 %s87, 1
    %p91 = scmp.eq.s32.totalorder %s11, 1
    %p92 = scmp.ne.s32.totalorder %s87, %s89
    %p93 = scmp.eq.s32.totalorder %s11, 0
    %p94 = por %p92, %p93
    %p95 = scmp.ne.s32.totalorder %s87, %s89
    %p96 = scmp.eq.s32.totalorder %s16, 1
    %p97 = por %p95, %p96
    %p98 = scmp.ne.s32.totalorder %s89, %s90
    %p99 = scmp.eq.s32.totalorder %s16, 0
    %p100 = por %p98, %p99
    %p101 = scmp.ne.s32.totalorder %s89, %s90
    %p102 = scmp.eq.s32.totalorder %s17, 1
    %p103 = por %p101, %p102
    %p105 = scmp.ne.s32.totalorder %s90, %s104
    %p106 = scmp.eq.s32.totalorder %s17, 0
    %p107 = por %p105, %p106
    %s109 = sadd.s32 %s108, 1
    %p112 = scmp.eq.s32.totalorder %s11, 1
    %p113 = scmp.ne.s32.totalorder %s108, %s110
    %p114 = scmp.eq.s32.totalorder %s11, 0
    %p115 = por %p113, %p114
    %p116 = scmp.ne.s32.totalorder %s108, %s110
    %p117 = scmp.eq.s32.totalorder %s16, 1
    %p118 = por %p116, %p117
    %p119 = scmp.ne.s32.totalorder %s110, %s111
    %p120 = scmp.eq.s32.totalorder %s16, 0
    %p121 = por %p119, %p120
    %p122 = scmp.ne.s32.totalorder %s110, %s111
    %p123 = scmp.eq.s32.totalorder %s17, 1
    %p124 = por %p122, %p123
    %p126 = scmp.ne.s32.totalorder %s111, %s125
    %p127 = scmp.eq.s32.totalorder %s17, 0
    %p128 = por %p126, %p127
    %s129 = ssub.s32 %s11, %s18
    %p130 = scmp.eq.s32.totalorder %s129, 0
    %s132 = sadd.s32 %s131, 1
    %s133 = scalar_select %p130, %s131, %s132
    %p136 = pneg %p130
    %p137 = scmp.eq.s32.totalorder %s11, 1
    %p138 = por %p136, %p137
    %p139 = scmp.ne.s32.totalorder %s131, %s134
    %p140 = scmp.eq.s32.totalorder %s11, 0
    %p141 = por %p139, %p140
    %p142 = scmp.ne.s32.totalorder %s131, %s134
    %p143 = scmp.eq.s32.totalorder %s16, 1
    %p144 = por %p142, %p143
    %p145 = scmp.ne.s32.totalorder %s134, %s135
    %p146 = scmp.eq.s32.totalorder %s16, 0
    %p147 = por %p145, %p146
    %p148 = scmp.ne.s32.totalorder %s134, %s135
    %p149 = scmp.eq.s32.totalorder %s17, 1
    %p150 = por %p148, %p149
    %p152 = scmp.ne.s32.totalorder %s135, %s151
    %p153 = scmp.eq.s32.totalorder %s17, 0
    %p154 = por %p152, %p153
    %p155 = scmp.le.s32.totalorder 1, %s11
    %p156 = scmp.lt.s32.totalorder %s11, 3
    %p157 = pnand %p155, %p156
    %p158 = pneg %p157
    // Predicated region
    $region9: #{_lambda_.37} parent=5 // pred_check
      _
    $region10: #{_lambda_.37} parent=5 // pred_check_branch
      %160 = sbr.rel (%p157) target = $region12
    $region11: #{_lambda_.37} parent=5 // pred_region
      %s161 = ssub.s32 %s11, 1
      // Predicated region
      $region13: #{_lambda_.37} parent=11 // pred_check
        %p162 = pneg %p58
      $region14: #{_lambda_.37} parent=11 // pred_check_branch
        %164 = sbr.rel (%p162) target = $region16
      $region15: #{_lambda_.37} parent=11 // pred_region
        _
      $region16: #{_lambda_.37} parent=11 // pred_fallthru
        _
      // Predicated region
      $region17: #{_lambda_.37} parent=11 // pred_check
        %p165 = pneg %p79
      $region18: #{_lambda_.37} parent=11 // pred_check_branch
        %167 = sbr.rel (%p165) target = $region20
      $region19: #{_lambda_.37} parent=11 // pred_region
        _
      $region20: #{_lambda_.37} parent=11 // pred_fallthru
        _
      // Predicated region
      $region21: #{_lambda_.37} parent=11 // pred_check
        %p168 = pneg %p100
      $region22: #{_lambda_.37} parent=11 // pred_check_branch
        %170 = sbr.rel (%p168) target = $region24
      $region23: #{_lambda_.37} parent=11 // pred_region
        _
      $region24: #{_lambda_.37} parent=11 // pred_fallthru
        _
      // Predicated region
      $region25: #{_lambda_.37} parent=11 // pred_check
        %p171 = pneg %p121
      $region26: #{_lambda_.37} parent=11 // pred_check_branch
        %173 = sbr.rel (%p171) target = $region28
      $region27: #{_lambda_.37} parent=11 // pred_region
        _
      $region28: #{_lambda_.37} parent=11 // pred_fallthru
        _
    $region12: #{_lambda_.37} parent=5 // pred_fallthru
      _
    %p174 = scmp.lt.s32.totalorder %s11, 2
    // Predicated region
    $region29: #{_lambda_.37} parent=5 // pred_check
      %p175 = pneg %p174
    $region30: #{_lambda_.37} parent=5 // pred_check_branch
      %177 = sbr.rel (%p175) target = $region32
    $region31: #{_lambda_.37} parent=5 // pred_region
      // Predicated region
      $region33: #{_lambda_.37} parent=31 // pred_check
        %p178 = pneg %p31
      $region34: #{_lambda_.37} parent=31 // pred_check_branch
        %180 = sbr.rel (%p178) target = $region36
      $region35: #{_lambda_.37} parent=31 // pred_region
        %p181 = scmp.lt.s32.totalorder %s11, 1
        %s182 = scalar_select %p181, %s11, 1
        %s183 = smul.addr %s182, 4
        %s184 = scalar_lea.vmem %s0, %s183
      $region36: #{_lambda_.37} parent=31 // pred_fallthru
        _
    $region32: #{_lambda_.37} parent=5 // pred_fallthru
      _
    %p185 = scmp.le.s32.totalorder 1, %s11
    %p186 = scmp.lt.s32.totalorder %s11, 3
    %p187 = pnand %p185, %p186
    %p188 = pneg %p187
    // Predicated region
    $region37: #{_lambda_.37} parent=5 // pred_check
      _
    $region38: #{_lambda_.37} parent=5 // pred_check_branch
      %190 = sbr.rel (%p187) target = $region40
    $region39: #{_lambda_.37} parent=5 // pred_region
      %s191 = ssub.s32 %s11, 1
      %p192 = scmp.lt.s32.totalorder %s16, 1
      %s193 = scalar_select %p192, %s16, 1
      %s194 = smul.addr %s193, 4
      %s195 = scalar_lea.vmem %s0, %s194
      %p196 = pneg %p37
      %p197 = pneg %p34
      %p198 = pneg %p58
      %p199 = pneg %p55
      %p200 = pneg %p79
      %p201 = pneg %p76
      %p202 = pneg %p100
      %p203 = pneg %p97
      %p204 = pneg %p121
      %p205 = pneg %p118
      %p206 = pneg %p147
      %p207 = pneg %p144
      %p208 = scmp.lt.s32.totalorder %s16, 1
      %s209 = scalar_select %p208, %s16, 1
      %s210 = smul.addr %s209, 4
      %s211 = scalar_lea.vmem %s5, %s210
      %p212 = scmp.lt.s32.totalorder %s16, 1
      %s213 = scalar_select %p212, %s16, 1
      %s214 = smul.addr %s213, 4
      %s215 = scalar_lea.vmem %s0, %s214
      %p216 = scmp.lt.s32.totalorder %s16, 1
      %s217 = scalar_select %p216, %s16, 1
      %s218 = smul.addr %s217, 4
      %s219 = scalar_lea.vmem %s5, %s218
      %v220 = vld [vmem:[%s215] sm:$0xf]
      %vm221 = vcmask 519168
      %v222 = vsel %vm221, %v220, 0.0
      %v223 = vrot.slane %v222, 4
      %v224 = vadd.f32 %v222, %v223
      %v225 = vrot.slane %v224, 2
      %v226 = vadd.f32 %v224, %v225
      %v227 = vrot.slane %v226, 1
      %v228 = vadd.f32 %v226, %v227
      %v229 = vrcp.pop 4.0
      %v230 = vmul.f32 %v228, %v229
      %v231 = vld [vmem:[%s1] sm:$0xff]
      %v232 = vld [vmem:[%s1 + $0x8] sm:$0xff]
      %v233 = vld [vmem:[%s1 + $0x10] sm:$0xff]
      %v234 = vld [vmem:[%s1 + $0x18] sm:$0xff]
      %v235 = vld [vmem:[%s1 + $0x20] sm:$0xff]
      %v236 = vld [vmem:[%s1 + $0x28] sm:$0xff]
      %v237 = vld [vmem:[%s1 + $0x30] sm:$0xff]
      %v238 = vld [vmem:[%s1 + $0x38] sm:$0xff]
      %v239 = vld [vmem:[%s2] sm:$0x1]
      %vm240 = vcmask 523264
      %v242 = vsel %vm240, %v230, 0
      %244 = vmatprep.subr.mxu0 0.0
      %245 = vmatpush1.msra.mxu0 %v231
      %246 = vmatprep.subr.mxu0 0.0
      %247 = vmatpush1.msra.mxu0 %v232
      %248 = vmatprep.subr.mxu0 0.0
      %249 = vmatpush1.msra.mxu0 %v233
      %250 = vmatprep.subr.mxu0 0.0
      %251 = vmatpush1.msra.mxu0 %v234
      %252 = vmatprep.subr.mxu0 0.0
      %253 = vmatpush1.msra.mxu0 %v235
      %254 = vmatprep.subr.mxu0 0.0
      %255 = vmatpush1.msra.mxu0 %v236
      %256 = vmatprep.subr.mxu0 0.0
      %257 = vmatpush1.msra.mxu0 %v237
      %258 = vmatprep.subr.mxu0 0.0
      %259 = vmatpush1.msra.mxu0 %v238
      %260 = vmatprep.subr.mxu0 0.0
      %261 = vmatpush1.msra.mxu0 0.0
      %262 = vmatprep.subr.mxu0 0.0
      %263 = vmatpush1.msra.mxu0 0.0
      %264 = vmatprep.subr.mxu0 0.0
      %265 = vmatpush1.msra.mxu0 0.0
      %266 = vmatprep.subr.mxu0 0.0
      %267 = vmatpush1.msra.mxu0 0.0
      %268 = vmatprep.subr.mxu0 0.0
      %269 = vmatpush1.msra.mxu0 0.0
      %270 = vmatprep.subr.mxu0 0.0
      %271 = vmatpush1.msra.mxu0 0.0
      %272 = vmatprep.subr.mxu0 0.0
      %273 = vmatpush1.msra.mxu0 0.0
      %274 = vmatprep.subr.mxu0 0.0
      %275 = vmatpush1.msra.mxu0 0.0
      %276 = vmatprep.subr.mxu0 0.0
      %277 = vmatpush1.msra.mxu0 0.0
      %278 = vmatprep.subr.mxu0 0.0
      %279 = vmatpush1.msra.mxu0 0.0
      %280 = vmatprep.subr.mxu0 0.0
      %281 = vmatpush1.msra.mxu0 0.0
      %282 = vmatprep.subr.mxu0 0.0
      %283 = vmatpush1.msra.mxu0 0.0
      %284 = vmatprep.subr.mxu0 0.0
      %285 = vmatpush1.msra.mxu0 0.0
      %286 = vmatprep.subr.mxu0 0.0
      %287 = vmatpush1.msra.mxu0 0.0
      %288 = vmatprep.subr.mxu0 0.0
      %289 = vmatpush1.msra.mxu0 0.0
      %290 = vmatprep.subr.mxu0 0.0
      %291 = vmatpush1.msra.mxu0 0.0
      %292 = vmatprep.subr.mxu0 0.0
      %293 = vmatpush1.msra.mxu0 0.0
      %294 = vmatprep.subr.mxu0 0.0
      %295 = vmatpush1.msra.mxu0 0.0
      %296 = vmatprep.subr.mxu0 0.0
      %297 = vmatpush1.msra.mxu0 0.0
      %298 = vmatprep.subr.mxu0 0.0
      %299 = vmatpush1.msra.mxu0 0.0
      %300 = vmatprep.subr.mxu0 0.0
      %301 = vmatpush1.msra.mxu0 0.0
      %302 = vmatprep.subr.mxu0 0.0
      %303 = vmatpush1.msra.mxu0 0.0
      %304 = vmatprep.subr.mxu0 0.0
      %305 = vmatpush1.msra.mxu0 0.0
      %306 = vmatprep.subr.mxu0 0.0
      %307 = vmatpush1.msra.mxu0 0.0
      %308 = vmatprep.mubr.f32.mxu0 0.0
      %309 = vmatmul.mubr.f32.gmra.mrb[0].mxu0 %v242
      %v310 = vpop.f32.mrb[0].mxu0
      %v311 = vadd.f32 %v239, %v310
      %v312 = vpop.f32.mrb[0].mxu0
      %313 = vdwg.mxu0
      %v314 = vmax.f32 %v311, 0.0
      %v315 = vld [vmem:[%s3] sm:$0xff]
      %v316 = vld [vmem:[%s4] sm:$0x1]
      %vm317 = vcmask 64512
      %v319 = vsel %vm317, %v314, 0
      %321 = vmatprep.subr.mxu0 0.0
      %322 = vmatpush1.msra.mxu0 %v315
      %323 = vmatprep.subr.mxu0 0.0
      %324 = vmatpush1.msra.mxu0 0.0
      %325 = vmatprep.subr.mxu0 0.0
      %326 = vmatpush1.msra.mxu0 0.0
      %327 = vmatprep.subr.mxu0 0.0
      %328 = vmatpush1.msra.mxu0 0.0
      %329 = vmatprep.subr.mxu0 0.0
      %330 = vmatpush1.msra.mxu0 0.0
      %331 = vmatprep.subr.mxu0 0.0
      %332 = vmatpush1.msra.mxu0 0.0
      %333 = vmatprep.subr.mxu0 0.0
      %334 = vmatpush1.msra.mxu0 0.0
      %335 = vmatprep.subr.mxu0 0.0
      %336 = vmatpush1.msra.mxu0 0.0
      %337 = vmatprep.subr.mxu0 0.0
      %338 = vmatpush1.msra.mxu0 0.0
      %339 = vmatprep.subr.mxu0 0.0
      %340 = vmatpush1.msra.mxu0 0.0
      %341 = vmatprep.subr.mxu0 0.0
      %342 = vmatpush1.msra.mxu0 0.0
      %343 = vmatprep.subr.mxu0 0.0
      %344 = vmatpush1.msra.mxu0 0.0
      %345 = vmatprep.subr.mxu0 0.0
      %346 = vmatpush1.msra.mxu0 0.0
      %347 = vmatprep.subr.mxu0 0.0
      %348 = vmatpush1.msra.mxu0 0.0
      %349 = vmatprep.subr.mxu0 0.0
      %350 = vmatpush1.msra.mxu0 0.0
      %351 = vmatprep.subr.mxu0 0.0
      %352 = vmatpush1.msra.mxu0 0.0
      %353 = vmatprep.subr.mxu0 0.0
      %354 = vmatpush1.msra.mxu0 0.0
      %355 = vmatprep.subr.mxu0 0.0
      %356 = vmatpush1.msra.mxu0 0.0
      %357 = vmatprep.subr.mxu0 0.0
      %358 = vmatpush1.msra.mxu0 0.0
      %359 = vmatprep.subr.mxu0 0.0
      %360 = vmatpush1.msra.mxu0 0.0
      %361 = vmatprep.subr.mxu0 0.0
      %362 = vmatpush1.msra.mxu0 0.0
      %363 = vmatprep.subr.mxu0 0.0
      %364 = vmatpush1.msra.mxu0 0.0
      %365 = vmatprep.subr.mxu0 0.0
      %366 = vmatpush1.msra.mxu0 0.0
      %367 = vmatprep.subr.mxu0 0.0
      %368 = vmatpush1.msra.mxu0 0.0
      %369 = vmatprep.subr.mxu0 0.0
      %370 = vmatpush1.msra.mxu0 0.0
      %371 = vmatprep.subr.mxu0 0.0
      %372 = vmatpush1.msra.mxu0 0.0
      %373 = vmatprep.subr.mxu0 0.0
      %374 = vmatpush1.msra.mxu0 0.0
      %375 = vmatprep.subr.mxu0 0.0
      %376 = vmatpush1.msra.mxu0 0.0
      %377 = vmatprep.subr.mxu0 0.0
      %378 = vmatpush1.msra.mxu0 0.0
      %379 = vmatprep.subr.mxu0 0.0
      %380 = vmatpush1.msra.mxu0 0.0
      %381 = vmatprep.subr.mxu0 0.0
      %382 = vmatpush1.msra.mxu0 0.0
      %383 = vmatprep.subr.mxu0 0.0
      %384 = vmatpush1.msra.mxu0 0.0
      %385 = vmatprep.mubr.f32.mxu0 0.0
      %386 = vmatmul.mubr.f32.gmra.mrb[0].mxu0 %v319
      %v387 = vpop.f32.mrb[0].mxu0
      %v388 = vadd.f32 %v316, %v387
      %v389 = vpop.f32.mrb[0].mxu0
      %390 = vdwg.mxu0
      %v391 = vxor.u32 %v388, 2147483648
      %v392 = vmul.f32 %v391, 1.442695
      %v393 = vpow.pop %v392
      %v394 = vadd.f32 %v393, 1.0
      %v395 = vrcp.pop %v394
      %v396 = vmul.f32 1.0, %v395
      %v397 = vlaneseq
      %v398 = vshrl.u32 %v397, 7
      %v399 = vsub.s32 0, %v398
      %v400 = vrot.slane %v396, %v399
      %v401 = vmul.f32 %v220, %v400
      %402 = vst.msk [vmem:[%s219] sm:$0xf] %vm221, %v401
      %p403 = scmp.lt.s32.totalorder %s16, 1
      %s404 = scalar_select %p403, %s16, 1
      %s405 = smul.addr %s404, 4
      %s406 = scalar_lea.vmem %s5, %s405
      // Predicated region
      $region41: #{_lambda_.37} parent=39 // pred_check
        %p407 = pneg %p144
      $region42: #{_lambda_.37} parent=39 // pred_check_branch
        %409 = sbr.rel (%p407) target = $region44
      $region43: #{_lambda_.37} parent=39 // pred_region
        _
      $region44: #{_lambda_.37} parent=39 // pred_fallthru
        _
    $region40: #{_lambda_.37} parent=5 // pred_fallthru
      _
    %p410 = scmp.le.s32.totalorder 2, %s11
    // Predicated region
    $region45: #{_lambda_.37} parent=5 // pred_check
      %p411 = pneg %p410
    $region46: #{_lambda_.37} parent=5 // pred_check_branch
      %413 = sbr.rel (%p411) target = $region48
    $region47: #{_lambda_.37} parent=5 // pred_region
      %s414 = ssub.s32 %s11, 2
      // Predicated region
      $region49: #{_lambda_.37} parent=47 // pred_check
        %p415 = pneg %p150
      $region50: #{_lambda_.37} parent=47 // pred_check_branch
        %417 = sbr.rel (%p415) target = $region52
      $region51: #{_lambda_.37} parent=47 // pred_region
        %p418 = scmp.lt.s32.totalorder %s17, 1
        %s419 = scalar_select %p418, %s17, 1
        %s420 = smul.addr %s419, 4
        %s421 = scalar_lea.vmem %s5, %s420
      $region52: #{_lambda_.37} parent=47 // pred_fallthru
        _
    $region48: #{_lambda_.37} parent=5 // pred_fallthru
      _
  $region6: #{_lambda_.37} parent=0 // loop_footer
    %s15 = sadd.s32 1, %s11
  $region7: #{_lambda_.37} parent=0 // loop_footer_branch
    %10 = sbr.rel target = $region3
  $region8: #{_lambda_.37} parent=0 // loop_exit
    _

// kernel: _lambda_.38
$region0: #{_lambda_.38}
  #allocation0 [shape = 'u32[]', space=smem, size = 0x4, offset = 0x4, fixed_abs, tag = 'smem constant byte address 0x4 - core index']
  #allocation1 [shape = 'u32[144,128]{1,0:T(1,128)}', space=vmem, size = 0x12000, scoped, tag = 'internal scratch']
  #allocation2 [shape = 'f32[8,128]{1,0:T(8,128)}', space=vmem, size = 0x1000, scoped, tag = 'scratch operand']
  %s0 = inlined_call_operand.vmem [shape: bf16[8,128], index: 0, kind: input, shape index: {}]
  %s1 = inlined_call_operand.vmem [shape: bf16[128,128], index: 1, kind: input, shape index: {}]
  %s2 = inlined_call_operand.vmem [shape: f32[1,128], index: 2, kind: input, shape index: {}]
  %s3 = inlined_call_operand.vmem [shape: f32[1,128], index: 3, kind: input, shape index: {}]
  %s4 = inlined_call_operand.vmem [shape: f32[8,128], index: 4, kind: output, shape index: {}]
  %s5 = sld [smem:[#allocation0]]
  $region34: #{_lambda_.38} parent=0
    _
  %s7 = ssub.s32 1, %s5
  %s8 = scalar_select 0, %s7, %s5
  // Predicated region
  $region2: #{_lambda_.38} parent=0 // pred_check
    _
  $region3: #{_lambda_.38} parent=0 // pred_check_branch
    %10 = sbr.rel (0) target = $region5
  $region4: #{_lambda_.38} parent=0 // pred_region
    _
  $region5: #{_lambda_.38} parent=0 // pred_fallthru
    _
  // Predicated region
  $region6: #{_lambda_.38} parent=0 // pred_check
    _
  $region7: #{_lambda_.38} parent=0 // pred_check_branch
    %12 = sbr.rel (0) target = $region9
  $region8: #{_lambda_.38} parent=0 // pred_region
    _
  $region9: #{_lambda_.38} parent=0 // pred_fallthru
    _
  // Predicated region
  $region10: #{_lambda_.38} parent=0 // pred_check
    _
  $region11: #{_lambda_.38} parent=0 // pred_check_branch
    %14 = sbr.rel (0) target = $region13
  $region12: #{_lambda_.38} parent=0 // pred_region
    _
  $region13: #{_lambda_.38} parent=0 // pred_fallthru
    _
  // Predicated region
  $region14: #{_lambda_.38} parent=0 // pred_check
    _
  $region15: #{_lambda_.38} parent=0 // pred_check_branch
    %16 = sbr.rel (0) target = $region17
  $region16: #{_lambda_.38} parent=0 // pred_region
    _
  $region17: #{_lambda_.38} parent=0 // pred_fallthru
    _
  %p18 = scmp.eq.s32.totalorder 0, 0
  // Predicated region
  $region18: #{_lambda_.38} parent=0 // pred_check
    %p19 = pneg %p18
  $region19: #{_lambda_.38} parent=0 // pred_check_branch
    %21 = sbr.rel (%p19) target = $region21
  $region20: #{_lambda_.38} parent=0 // pred_region
    %22 = vst [vmem:[#allocation2] sm:$0xff] 0.0
  $region21: #{_lambda_.38} parent=0 // pred_fallthru
    _
  %v23 = vld [vmem:[#allocation2] sm:$0xff]
  %v24 = vld [vmem:[%s0] sm:$0xf]
  %v25 = vld [vmem:[%s1] sm:$0xf]
  %v26 = vld [vmem:[%s1 + $0x4] sm:$0xf]
  %v27 = vld [vmem:[%s1 + $0x8] sm:$0xf]
  %v28 = vld [vmem:[%s1 + $0xc] sm:$0xf]
  %v29 = vld [vmem:[%s1 + $0x10] sm:$0xf]
  %v30 = vld [vmem:[%s1 + $0x14] sm:$0xf]
  %v31 = vld [vmem:[%s1 + $0x18] sm:$0xf]
  %v32 = vld [vmem:[%s1 + $0x1c] sm:$0xf]
  %v33 = vld [vmem:[%s1 + $0x20] sm:$0xf]
  %v34 = vld [vmem:[%s1 + $0x24] sm:$0xf]
  %v35 = vld [vmem:[%s1 + $0x28] sm:$0xf]
  %v36 = vld [vmem:[%s1 + $0x2c] sm:$0xf]
  %v37 = vld [vmem:[%s1 + $0x30] sm:$0xf]
  %v38 = vld [vmem:[%s1 + $0x34] sm:$0xf]
  %v39 = vld [vmem:[%s1 + $0x38] sm:$0xf]
  %v40 = vld [vmem:[%s1 + $0x3c] sm:$0xf]
  %v57 = vunpack.c.l.b16 %v25
  %v58 = vunpack.c.l.b16 %v26
  %v59 = vunpack.c.l.b16 %v27
  %v60 = vunpack.c.l.b16 %v28
  %v61 = vunpack.c.l.b16 %v29
  %v62 = vunpack.c.l.b16 %v30
  %v63 = vunpack.c.l.b16 %v31
  %v64 = vunpack.c.l.b16 %v32
  %v65 = vunpack.c.l.b16 %v33
  %v66 = vunpack.c.l.b16 %v34
  %v67 = vunpack.c.l.b16 %v35
  %v68 = vunpack.c.l.b16 %v36
  %v69 = vunpack.c.l.b16 %v37
  %v70 = vunpack.c.l.b16 %v38
  %v71 = vunpack.c.l.b16 %v39
  %v72 = vunpack.c.l.b16 %v40
  %v73 = vpack.c.b16 %v58, %v57
  %v74 = vpack.c.b16 %v60, %v59
  %v75 = vpack.c.b16 %v62, %v61
  %v76 = vpack.c.b16 %v64, %v63
  %v77 = vpack.c.b16 %v66, %v65
  %v78 = vpack.c.b16 %v68, %v67
  %v79 = vpack.c.b16 %v70, %v69
  %v80 = vpack.c.b16 %v72, %v71
  %89 = vmatprep.subr.bf16.mxu0 0
  %90 = vmatpush1.bf16.msra.mxu0 %v73
  %91 = vmatprep.subr.bf16.mxu0 0
  %92 = vmatpush1.bf16.msra.mxu0 %v74
  %93 = vmatprep.subr.bf16.mxu0 0
  %94 = vmatpush1.bf16.msra.mxu0 %v75
  %95 = vmatprep.subr.bf16.mxu0 0
  %96 = vmatpush1.bf16.msra.mxu0 %v76
  %97 = vmatprep.subr.bf16.mxu0 0
  %98 = vmatpush1.bf16.msra.mxu0 %v77
  %99 = vmatprep.subr.bf16.mxu0 0
  %100 = vmatpush1.bf16.msra.mxu0 %v78
  %101 = vmatprep.subr.bf16.mxu0 0
  %102 = vmatpush1.bf16.msra.mxu0 %v79
  %103 = vmatprep.subr.bf16.mxu0 0
  %104 = vmatpush1.bf16.msra.mxu0 %v80
  %105 = vmatprep.subr.bf16.mxu0 0
  %106 = vmatpush1.bf16.msra.mxu0 0
  %107 = vmatprep.subr.bf16.mxu0 0
  %108 = vmatpush1.bf16.msra.mxu0 0
  %109 = vmatprep.subr.bf16.mxu0 0
  %110 = vmatpush1.bf16.msra.mxu0 0
  %111 = vmatprep.subr.bf16.mxu0 0
  %112 = vmatpush1.bf16.msra.mxu0 0
  %113 = vmatprep.subr.bf16.mxu0 0
  %114 = vmatpush1.bf16.msra.mxu0 0
  %115 = vmatprep.subr.bf16.mxu0 0
  %116 = vmatpush1.bf16.msra.mxu0 0
  %117 = vmatprep.subr.bf16.mxu0 0
  %118 = vmatpush1.bf16.msra.mxu0 0
  %119 = vmatprep.subr.bf16.mxu0 0
  %120 = vmatpush1.bf16.msra.mxu0 0
  %121 = vmatprep.mubr.bf16.mxu0 0
  %122 = vmatmul.mubr.bf16.gmra.mrb[0].mxu0 %v24
  %v123 = vpop.f32.mrb[0].mxu0
  %v124 = vadd.f32 0.0, %v123
  %v125 = vpop.f32.mrb[0].mxu0
  %v126 = vpop.f32.mrb[0].mxu0
  %v127 = vpop.f32.mrb[0].mxu0
  %128 = vdwg.mxu0
  %v129 = vadd.f32 %v23, %v124
  %130 = vst [vmem:[#allocation2] sm:$0xff] %v129
  // Predicated region
  $region22: #{_lambda_.38} parent=0 // pred_check
    %p131 = pneg %p18
  $region23: #{_lambda_.38} parent=0 // pred_check_branch
    %133 = sbr.rel (%p131) target = $region25
  $region24: #{_lambda_.38} parent=0 // pred_region
    %v134 = vld [vmem:[#allocation2] sm:$0xff]
    %v135 = vld [vmem:[%s2] sm:$0x1]
    %v137 = vlaneseq
    %v138 = vshrl.u32 %v137, 7
    %v139 = vsub.s32 0, %v138
    %v140 = vrot.slane %v135, %v139
    %v142 = vmul.f32 %v134, %v140
    %v143 = vld [vmem:[%s3] sm:$0x1]
    %v145 = vlaneseq
    %v146 = vshrl.u32 %v145, 7
    %v147 = vsub.s32 0, %v146
    %v148 = vrot.slane %v143, %v147
    %v150 = vadd.f32 %v142, %v148
    %v151 = vmax.f32 %v150, 0.0
    %152 = vst [vmem:[%s4] sm:$0xff] %v151
  $region25: #{_lambda_.38} parent=0 // pred_fallthru
    _
  // Predicated region
  $region26: #{_lambda_.38} parent=0 // pred_check
    _
  $region27: #{_lambda_.38} parent=0 // pred_check_branch
    %154 = sbr.rel (0) target = $region29
  $region28: #{_lambda_.38} parent=0 // pred_region
    _
  $region29: #{_lambda_.38} parent=0 // pred_fallthru
    _
  // Predicated region
  $region30: #{_lambda_.38} parent=0 // pred_check
    _
  $region31: #{_lambda_.38} parent=0 // pred_check_branch
    %156 = sbr.rel (0) target = $region33
  $region32: #{_lambda_.38} parent=0 // pred_region
    _
  $region33: #{_lambda_.38} parent=0 // pred_fallthru
    _

// kernel: _lambda_.40
$region0: #{_lambda_.40}
  #allocation0 [shape = 'u32[]', space=smem, size = 0x4, offset = 0x4, fixed_abs, tag = 'smem constant byte address 0x4 - core index']
  #allocation1 [shape = 'u32[144,128]{1,0:T(1,128)}', space=vmem, size = 0x12000, scoped, tag = 'internal scratch']
  %s0 = inlined_call_operand.vmem [shape: f32[2,2,128], index: 0, kind: input, shape index: {}]
  %s1 = inlined_call_operand.vmem [shape: f32[2,2,128], index: 1, kind: input, shape index: {}]
  %s2 = inlined_call_operand.vmem [shape: f32[2,1,128], index: 2, kind: output, shape index: {0}]
  %s3 = inlined_call_operand.vmem [shape: f32[2,1,128], index: 3, kind: output, shape index: {1}]
  %4 = xla_tuple %s2, %s3
  %s5 = sld [smem:[#allocation0]]
  $region49: #{_lambda_.40} parent=0
    _
  %s7 = ssub.s32 1, %s5
  %s8 = scalar_select 0, %s7, %s5
  loop: start=0, step=1, limit=4
  $region2: #{_lambda_.40} parent=0 // loop_pre_header
    _
  $region3: #{_lambda_.40} parent=0 // loop_header
    %s10 = sphi 0, %s14
    %p11 = scmp.ge.s32.totalorder %s10, 4
    %s20 = sphi 0, %s22
    %s23 = sphi 0, %s20
    %s24 = sphi 0, %s23
    %s40 = sphi 0, %s24
    %s46 = sphi 0, %s48
    %s49 = sphi 0, %s46
    %s50 = sphi 0, %s49
    %s66 = sphi 0, %s50
    %s72 = sphi 0, %s74
    %s75 = sphi 0, %s72
    %s76 = sphi 0, %s75
    %s92 = sphi 0, %s76
    %s98 = sphi 0, %s100
    %s101 = sphi 0, %s98
    %s102 = sphi 0, %s101
    %s118 = sphi 0, %s102
  $region4: #{_lambda_.40} parent=0 // loop_header_branch
    %13 = sbr.rel (%p11) target = $region8
  $region5: #{_lambda_.40} parent=0 // loop_body
    %s15 = ssub.s32 %s10, 1
    %s16 = ssub.s32 %s10, 2
    %s17 = sadd.s32 %s10, 1
    %s18 = ssub.s32 %s10, %s17
    %p19 = scmp.eq.s32.totalorder %s18, 0
    %s21 = sadd.s32 %s20, 1
    %s22 = scalar_select %p19, %s20, %s21
    %p25 = pneg %p19
    %p26 = scmp.eq.s32.totalorder %s10, 1
    %p27 = por %p25, %p26
    %p28 = scmp.ne.s32.totalorder %s20, %s23
    %p29 = scmp.eq.s32.totalorder %s10, 0
    %p30 = por %p28, %p29
    %p31 = scmp.ne.s32.totalorder %s20, %s23
    %p32 = scmp.eq.s32.totalorder %s15, 1
    %p33 = por %p31, %p32
    %p34 = scmp.ne.s32.totalorder %s23, %s24
    %p35 = scmp.eq.s32.totalorder %s15, 0
    %p36 = por %p34, %p35
    %p37 = scmp.ne.s32.totalorder %s23, %s24
    %p38 = scmp.eq.s32.totalorder %s16, 1
    %p39 = por %p37, %p38
    %p41 = scmp.ne.s32.totalorder %s24, %s40
    %p42 = scmp.eq.s32.totalorder %s16, 0
    %p43 = por %p41, %p42
    %s44 = ssub.s32 %s10, %s17
    %p45 = scmp.eq.s32.totalorder %s44, 0
    %s47 = sadd.s32 %s46, 1
    %s48 = scalar_select %p45, %s46, %s47
    %p51 = pneg %p45
    %p52 = scmp.eq.s32.totalorder %s10, 1
    %p53 = por %p51, %p52
    %p54 = scmp.ne.s32.totalorder %s46, %s49
    %p55 = scmp.eq.s32.totalorder %s10, 0
    %p56 = por %p54, %p55
    %p57 = scmp.ne.s32.totalorder %s46, %s49
    %p58 = scmp.eq.s32.totalorder %s15, 1
    %p59 = por %p57, %p58
    %p60 = scmp.ne.s32.totalorder %s49, %s50
    %p61 = scmp.eq.s32.totalorder %s15, 0
    %p62 = por %p60, %p61
    %p63 = scmp.ne.s32.totalorder %s49, %s50
    %p64 = scmp.eq.s32.totalorder %s16, 1
    %p65 = por %p63, %p64
    %p67 = scmp.ne.s32.totalorder %s50, %s66
    %p68 = scmp.eq.s32.totalorder %s16, 0
    %p69 = por %p67, %p68
    %s70 = ssub.s32 %s10, %s17
    %p71 = scmp.eq.s32.totalorder %s70, 0
    %s73 = sadd.s32 %s72, 1
    %s74 = scalar_select %p71, %s72, %s73
    %p77 = pneg %p71
    %p78 = scmp.eq.s32.totalorder %s10, 1
    %p79 = por %p77, %p78
    %p80 = scmp.ne.s32.totalorder %s72, %s75
    %p81 = scmp.eq.s32.totalorder %s10, 0
    %p82 = por %p80, %p81
    %p83 = scmp.ne.s32.totalorder %s72, %s75
    %p84 = scmp.eq.s32.totalorder %s15, 1
    %p85 = por %p83, %p84
    %p86 = scmp.ne.s32.totalorder %s75, %s76
    %p87 = scmp.eq.s32.totalorder %s15, 0
    %p88 = por %p86, %p87
    %p89 = scmp.ne.s32.totalorder %s75, %s76
    %p90 = scmp.eq.s32.totalorder %s16, 1
    %p91 = por %p89, %p90
    %p93 = scmp.ne.s32.totalorder %s76, %s92
    %p94 = scmp.eq.s32.totalorder %s16, 0
    %p95 = por %p93, %p94
    %s96 = ssub.s32 %s10, %s17
    %p97 = scmp.eq.s32.totalorder %s96, 0
    %s99 = sadd.s32 %s98, 1
    %s100 = scalar_select %p97, %s98, %s99
    %p103 = pneg %p97
    %p104 = scmp.eq.s32.totalorder %s10, 1
    %p105 = por %p103, %p104
    %p106 = scmp.ne.s32.totalorder %s98, %s101
    %p107 = scmp.eq.s32.totalorder %s10, 0
    %p108 = por %p106, %p107
    %p109 = scmp.ne.s32.totalorder %s98, %s101
    %p110 = scmp.eq.s32.totalorder %s15, 1
    %p111 = por %p109, %p110
    %p112 = scmp.ne.s32.totalorder %s101, %s102
    %p113 = scmp.eq.s32.totalorder %s15, 0
    %p114 = por %p112, %p113
    %p115 = scmp.ne.s32.totalorder %s101, %s102
    %p116 = scmp.eq.s32.totalorder %s16, 1
    %p117 = por %p115, %p116
    %p119 = scmp.ne.s32.totalorder %s102, %s118
    %p120 = scmp.eq.s32.totalorder %s16, 0
    %p121 = por %p119, %p120
    %p122 = scmp.le.s32.totalorder 1, %s10
    %p123 = scmp.lt.s32.totalorder %s10, 3
    %p124 = pnand %p122, %p123
    %p125 = pneg %p124
    // Predicated region
    $region9: #{_lambda_.40} parent=5 // pred_check
      _
    $region10: #{_lambda_.40} parent=5 // pred_check_branch
      %127 = sbr.rel (%p124) target = $region12
    $region11: #{_lambda_.40} parent=5 // pred_region
      %s128 = ssub.s32 %s10, 1
    $region12: #{_lambda_.40} parent=5 // pred_fallthru
      _
    %p129 = scmp.lt.s32.totalorder %s10, 2
    // Predicated region
    $region13: #{_lambda_.40} parent=5 // pred_check
      %p130 = pneg %p129
    $region14: #{_lambda_.40} parent=5 // pred_check_branch
      %132 = sbr.rel (%p130) target = $region16
    $region15: #{_lambda_.40} parent=5 // pred_region
      // Predicated region
      $region17: #{_lambda_.40} parent=15 // pred_check
        %p133 = pneg %p30
      $region18: #{_lambda_.40} parent=15 // pred_check_branch
        %135 = sbr.rel (%p133) target = $region20
      $region19: #{_lambda_.40} parent=15 // pred_region
        %p136 = scmp.lt.s32.totalorder %s10, 1
        %s137 = scalar_select %p136, %s10, 1
        %s138 = smul.addr %s137, 2
        %s139 = scalar_lea.vmem %s0, %s138
      $region20: #{_lambda_.40} parent=15 // pred_fallthru
        _
      // Predicated region
      $region21: #{_lambda_.40} parent=15 // pred_check
        %p140 = pneg %p56
      $region22: #{_lambda_.40} parent=15 // pred_check_branch
        %142 = sbr.rel (%p140) target = $region24
      $region23: #{_lambda_.40} parent=15 // pred_region
        %p143 = scmp.lt.s32.totalorder %s10, 1
        %s144 = scalar_select %p143, %s10, 1
        %s145 = smul.addr %s144, 2
        %s146 = scalar_lea.vmem %s1, %s145
      $region24: #{_lambda_.40} parent=15 // pred_fallthru
        _
    $region16: #{_lambda_.40} parent=5 // pred_fallthru
      _
    %p147 = scmp.le.s32.totalorder 1, %s10
    %p148 = scmp.lt.s32.totalorder %s10, 3
    %p149 = pnand %p147, %p148
    %p150 = pneg %p149
    // Predicated region
    $region25: #{_lambda_.40} parent=5 // pred_check
      _
    $region26: #{_lambda_.40} parent=5 // pred_check_branch
      %152 = sbr.rel (%p149) target = $region28
    $region27: #{_lambda_.40} parent=5 // pred_region
      %s153 = ssub.s32 %s10, 1
      %p154 = scmp.lt.s32.totalorder %s15, 1
      %s155 = scalar_select %p154, %s15, 1
      %s156 = smul.addr %s155, 2
      %s157 = scalar_lea.vmem %s0, %s156
      %p158 = pneg %p36
      %p159 = pneg %p33
      %p160 = scmp.lt.s32.totalorder %s15, 1
      %s161 = scalar_select %p160, %s15, 1
      %s162 = smul.addr %s161, 2
      %s163 = scalar_lea.vmem %s1, %s162
      %p164 = pneg %p62
      %p165 = pneg %p59
      %p166 = pneg %p88
      %p167 = pneg %p85
      %p168 = scmp.lt.s32.totalorder %s15, 1
      %s169 = scalar_select %p168, %s15, 1
      %s170 = scalar_lea.vmem %s2, %s169
      %p171 = pneg %p114
      %p172 = pneg %p111
      %p173 = scmp.lt.s32.totalorder %s15, 1
      %s174 = scalar_select %p173, %s15, 1
      %s175 = scalar_lea.vmem %s3, %s174
      %p176 = scmp.lt.s32.totalorder %s15, 1
      %s177 = scalar_select %p176, %s15, 1
      %s178 = smul.addr %s177, 2
      %s179 = scalar_lea.vmem %s0, %s178
      %p180 = scmp.lt.s32.totalorder %s15, 1
      %s181 = scalar_select %p180, %s15, 1
      %s182 = smul.addr %s181, 2
      %s183 = scalar_lea.vmem %s1, %s182
      %p184 = scmp.lt.s32.totalorder %s15, 1
      %s185 = scalar_select %p184, %s15, 1
      %s186 = scalar_lea.vmem %s2, %s185
      %p187 = scmp.lt.s32.totalorder %s15, 1
      %s188 = scalar_select %p187, %s15, 1
      %s189 = scalar_lea.vmem %s3, %s188
      %v190 = vld [vmem:[%s179] sm:$0x3]
      %v191 = vld [vmem:[%s183] sm:$0x3]
      %vm192 = vcmask 1041408
      %v193 = vsel %vm192, %v190, -inf
      %v194 = vrot.slane %v193, 4
      %v195 = vmax.f32 %v193, %v194
      %v196 = vrot.slane %v195, 2
      %v197 = vmax.f32 %v195, %v196
      %v198 = vrot.slane %v197, 1
      %v199 = vmax.f32 %v197, %v198
      %v200 = vsub.f32 %v190, %v199
      %v201 = vmul.f32 %v200, 1.442695
      %v202 = vpow.pop %v201
      %v203 = vsel %vm192, %v202, 0.0
      %v204 = vrot.slane %v203, 4
      %v205 = vadd.f32 %v203, %v204
      %v206 = vrot.slane %v205, 2
      %v207 = vadd.f32 %v205, %v206
      %v208 = vrot.slane %v207, 1
      %v209 = vadd.f32 %v207, %v208
      %v210 = vrcp.pop %v209
      %v211 = vmul.f32 %v202, %v210
      %v212 = vmul.f32 %v191, %v211
      %v213 = vsel %vm192, %v212, 0.0
      %v214 = vrot.slane %v213, 4
      %v215 = vadd.f32 %v213, %v214
      %v216 = vrot.slane %v215, 2
      %v217 = vadd.f32 %v215, %v216
      %v218 = vrot.slane %v217, 1
      %v219 = vadd.f32 %v217, %v218
      %v220 = vmul.f32 %v191, %v191
      %v221 = vmul.f32 %v220, %v211
      %v222 = vsel %vm192, %v221, 0.0
      %v223 = vrot.slane %v222, 4
      %v224 = vadd.f32 %v222, %v223
      %v225 = vrot.slane %v224, 2
      %v226 = vadd.f32 %v224, %v225
      %v227 = vrot.slane %v226, 1
      %v228 = vadd.f32 %v226, %v227
      %v229 = vmul.f32 %v219, %v219
      %v230 = vsub.f32 %v228, %v229
      %v231 = vmax.f32 %v230, 1e-05
      %v232 = vrsqrt.pop %v231
      %v233 = vmul.f32 %v231, %v232
      %vm234 = vcmp.eq.f32.partialorder %v231, inf
      %v235 = vsel %vm234, %v231, %v233
      %vm236 = vcmp.eq.f32.partialorder %v231, 0.0
      %v237 = vand.u32 %v231, 2147483648
      %v238 = vsel %vm236, %v237, %v235
      %239 = vst [vmem:[%s186] sm:$0x1] %v219
      %240 = vst [vmem:[%s189] sm:$0x1] %v238
      %p241 = scmp.lt.s32.totalorder %s15, 1
      %s242 = scalar_select %p241, %s15, 1
      %s243 = scalar_lea.vmem %s2, %s242
      %p244 = scmp.lt.s32.totalorder %s15, 1
      %s245 = scalar_select %p244, %s15, 1
      %s246 = scalar_lea.vmem %s3, %s245
      // Predicated region
      $region29: #{_lambda_.40} parent=27 // pred_check
        %p247 = pneg %p85
      $region30: #{_lambda_.40} parent=27 // pred_check_branch
        %249 = sbr.rel (%p247) target = $region32
      $region31: #{_lambda_.40} parent=27 // pred_region
        _
      $region32: #{_lambda_.40} parent=27 // pred_fallthru
        _
      // Predicated region
      $region33: #{_lambda_.40} parent=27 // pred_check
        %p250 = pneg %p111
      $region34: #{_lambda_.40} parent=27 // pred_check_branch
        %252 = sbr.rel (%p250) target = $region36
      $region35: #{_lambda_.40} parent=27 // pred_region
        _
      $region36: #{_lambda_.40} parent=27 // pred_fallthru
        _
    $region28: #{_lambda_.40} parent=5 // pred_fallthru
      _
    %p253 = scmp.le.s32.totalorder 2, %s10
    // Predicated region
    $region37: #{_lambda_.40} parent=5 // pred_check
      %p254 = pneg %p253
    $region38: #{_lambda_.40} parent=5 // pred_check_branch
      %256 = sbr.rel (%p254) target = $region40
    $region39: #{_lambda_.40} parent=5 // pred_region
      %s257 = ssub.s32 %s10, 2
      // Predicated region
      $region41: #{_lambda_.40} parent=39 // pred_check
        %p258 = pneg %p91
      $region42: #{_lambda_.40} parent=39 // pred_check_branch
        %260 = sbr.rel (%p258) target = $region44
      $region43: #{_lambda_.40} parent=39 // pred_region
        %p261 = scmp.lt.s32.totalorder %s16, 1
        %s262 = scalar_select %p261, %s16, 1
        %s263 = scalar_lea.vmem %s2, %s262
      $region44: #{_lambda_.40} parent=39 // pred_fallthru
        _
      // Predicated region
      $region45: #{_lambda_.40} parent=39 // pred_check
        %p264 = pneg %p117
      $region46: #{_lambda_.40} parent=39 // pred_check_branch
        %266 = sbr.rel (%p264) target = $region48
      $region47: #{_lambda_.40} parent=39 // pred_region
        %p267 = scmp.lt.s32.totalorder %s16, 1
        %s268 = scalar_select %p267, %s16, 1
        %s269 = scalar_lea.vmem %s3, %s268
      $region48: #{_lambda_.40} parent=39 // pred_fallthru
        _
    $region40: #{_lambda_.40} parent=5 // pred_fallthru
      _
  $region6: #{_lambda_.40} parent=0 // loop_footer
    %s14 = sadd.s32 1, %s10
  $region7: #{_lambda_.40} parent=0 // loop_footer_branch
    %9 = sbr.rel target = $region3
  $region8: #{_lambda_.40} parent=0 // loop_exit
    _

// kernel: _lambda_.41
$region0: #{_lambda_.41}
  #allocation0 [shape = 'u32[]', space=smem, size = 0x4, offset = 0x4, fixed_abs, tag = 'smem constant byte address 0x4 - core index']
  #allocation1 [shape = 'u32[144,128]{1,0:T(1,128)}', space=vmem, size = 0x12000, scoped, tag = 'internal scratch']
  #allocation2 [shape = 'f32[8,128]{1,0:T(8,128)}', space=vmem, size = 0x1000, scoped, tag = 'scratch operand']
  %s0 = inlined_call_operand.vmem [shape: bf16[8,256], index: 0, kind: input, shape index: {}]
  %s1 = inlined_call_operand.vmem [shape: bf16[256,128], index: 1, kind: input, shape index: {}]
  %s2 = inlined_call_operand.vmem [shape: f32[1,128], index: 2, kind: input, shape index: {}]
  %s3 = inlined_call_operand.vmem [shape: f32[1,128], index: 3, kind: input, shape index: {}]
  %s4 = inlined_call_operand.vmem [shape: f32[8,128], index: 4, kind: output, shape index: {}]
  %s5 = sld [smem:[#allocation0]]
  $region34: #{_lambda_.41} parent=0
    _
  %s7 = ssub.s32 1, %s5
  %s8 = scalar_select 0, %s7, %s5
  // Predicated region
  $region2: #{_lambda_.41} parent=0 // pred_check
    _
  $region3: #{_lambda_.41} parent=0 // pred_check_branch
    %10 = sbr.rel (0) target = $region5
  $region4: #{_lambda_.41} parent=0 // pred_region
    _
  $region5: #{_lambda_.41} parent=0 // pred_fallthru
    _
  // Predicated region
  $region6: #{_lambda_.41} parent=0 // pred_check
    _
  $region7: #{_lambda_.41} parent=0 // pred_check_branch
    %12 = sbr.rel (0) target = $region9
  $region8: #{_lambda_.41} parent=0 // pred_region
    _
  $region9: #{_lambda_.41} parent=0 // pred_fallthru
    _
  // Predicated region
  $region10: #{_lambda_.41} parent=0 // pred_check
    _
  $region11: #{_lambda_.41} parent=0 // pred_check_branch
    %14 = sbr.rel (0) target = $region13
  $region12: #{_lambda_.41} parent=0 // pred_region
    _
  $region13: #{_lambda_.41} parent=0 // pred_fallthru
    _
  // Predicated region
  $region14: #{_lambda_.41} parent=0 // pred_check
    _
  $region15: #{_lambda_.41} parent=0 // pred_check_branch
    %16 = sbr.rel (0) target = $region17
  $region16: #{_lambda_.41} parent=0 // pred_region
    _
  $region17: #{_lambda_.41} parent=0 // pred_fallthru
    _
  %p18 = scmp.eq.s32.totalorder 0, 0
  // Predicated region
  $region18: #{_lambda_.41} parent=0 // pred_check
    %p19 = pneg %p18
  $region19: #{_lambda_.41} parent=0 // pred_check_branch
    %21 = sbr.rel (%p19) target = $region21
  $region20: #{_lambda_.41} parent=0 // pred_region
    %22 = vst [vmem:[#allocation2] sm:$0xff] 0.0
  $region21: #{_lambda_.41} parent=0 // pred_fallthru
    _
  %v23 = vld [vmem:[#allocation2] sm:$0xff]
  %v24 = vld [vmem:[%s0] sm:$0xff]
  %v25 = vld [vmem:[%s1] sm:$0xf]
  %v26 = vld [vmem:[%s1 + $0x4] sm:$0xf]
  %v27 = vld [vmem:[%s1 + $0x8] sm:$0xf]
  %v28 = vld [vmem:[%s1 + $0xc] sm:$0xf]
  %v29 = vld [vmem:[%s1 + $0x10] sm:$0xf]
  %v30 = vld [vmem:[%s1 + $0x14] sm:$0xf]
  %v31 = vld [vmem:[%s1 + $0x18] sm:$0xf]
  %v32 = vld [vmem:[%s1 + $0x1c] sm:$0xf]
  %v33 = vld [vmem:[%s1 + $0x20] sm:$0xf]
  %v34 = vld [vmem:[%s1 + $0x24] sm:$0xf]
  %v35 = vld [vmem:[%s1 + $0x28] sm:$0xf]
  %v36 = vld [vmem:[%s1 + $0x2c] sm:$0xf]
  %v37 = vld [vmem:[%s1 + $0x30] sm:$0xf]
  %v38 = vld [vmem:[%s1 + $0x34] sm:$0xf]
  %v39 = vld [vmem:[%s1 + $0x38] sm:$0xf]
  %v40 = vld [vmem:[%s1 + $0x3c] sm:$0xf]
  %v41 = vld [vmem:[%s1 + $0x40] sm:$0xf]
  %v42 = vld [vmem:[%s1 + $0x44] sm:$0xf]
  %v43 = vld [vmem:[%s1 + $0x48] sm:$0xf]
  %v44 = vld [vmem:[%s1 + $0x4c] sm:$0xf]
  %v45 = vld [vmem:[%s1 + $0x50] sm:$0xf]
  %v46 = vld [vmem:[%s1 + $0x54] sm:$0xf]
  %v47 = vld [vmem:[%s1 + $0x58] sm:$0xf]
  %v48 = vld [vmem:[%s1 + $0x5c] sm:$0xf]
  %v49 = vld [vmem:[%s1 + $0x60] sm:$0xf]
  %v50 = vld [vmem:[%s1 + $0x64] sm:$0xf]
  %v51 = vld [vmem:[%s1 + $0x68] sm:$0xf]
  %v52 = vld [vmem:[%s1 + $0x6c] sm:$0xf]
  %v53 = vld [vmem:[%s1 + $0x70] sm:$0xf]
  %v54 = vld [vmem:[%s1 + $0x74] sm:$0xf]
  %v55 = vld [vmem:[%s1 + $0x78] sm:$0xf]
  %v56 = vld [vmem:[%s1 + $0x7c] sm:$0xf]
  %v58 = vunpack.c.l.b16 %v24
  %v59 = vunpack.c.h.b16 %v24
  %v60 = vpack.c.b16 %v58, %v58
  %v61 = vpack.c.b16 %v59, %v59
  %v96 = vunpack.c.l.b16 %v25
  %v97 = vunpack.c.l.b16 %v26
  %v98 = vunpack.c.l.b16 %v27
  %v99 = vunpack.c.l.b16 %v28
  %v100 = vunpack.c.l.b16 %v29
  %v101 = vunpack.c.l.b16 %v30
  %v102 = vunpack.c.l.b16 %v31
  %v103 = vunpack.c.l.b16 %v32
  %v104 = vunpack.c.l.b16 %v33
  %v105 = vunpack.c.l.b16 %v34
  %v106 = vunpack.c.l.b16 %v35
  %v107 = vunpack.c.l.b16 %v36
  %v108 = vunpack.c.l.b16 %v37
  %v109 = vunpack.c.l.b16 %v38
  %v110 = vunpack.c.l.b16 %v39
  %v111 = vunpack.c.l.b16 %v40
  %v112 = vunpack.c.l.b16 %v41
  %v113 = vunpack.c.l.b16 %v42
  %v114 = vunpack.c.l.b16 %v43
  %v115 = vunpack.c.l.b16 %v44
  %v116 = vunpack.c.l.b16 %v45
  %v117 = vunpack.c.l.b16 %v46
  %v118 = vunpack.c.l.b16 %v47
  %v119 = vunpack.c.l.b16 %v48
  %v120 = vunpack.c.l.b16 %v49
  %v121 = vunpack.c.l.b16 %v50
  %v122 = vunpack.c.l.b16 %v51
  %v123 = vunpack.c.l.b16 %v52
  %v124 = vunpack.c.l.b16 %v53
  %v125 = vunpack.c.l.b16 %v54
  %v126 = vunpack.c.l.b16 %v55
  %v127 = vunpack.c.l.b16 %v56
  %v128 = vpack.c.b16 %v97, %v96
  %v129 = vpack.c.b16 %v99, %v98
  %v130 = vpack.c.b16 %v101, %v100
  %v131 = vpack.c.b16 %v103, %v102
  %v132 = vpack.c.b16 %v105, %v104
  %v133 = vpack.c.b16 %v107, %v106
  %v134 = vpack.c.b16 %v109, %v108
  %v135 = vpack.c.b16 %v111, %v110
  %v136 = vpack.c.b16 %v113, %v112
  %v137 = vpack.c.b16 %v115, %v114
  %v138 = vpack.c.b16 %v117, %v116
  %v139 = vpack.c.b16 %v119, %v118
  %v140 = vpack.c.b16 %v121, %v120
  %v141 = vpack.c.b16 %v123, %v122
  %v142 = vpack.c.b16 %v125, %v124
  %v143 = vpack.c.b16 %v127, %v126
  %160 = vmatprep.subr.bf16.mxu0 0
  %161 = vmatpush1.bf16.msra.mxu0 %v128
  %162 = vmatprep.subr.bf16.mxu0 0
  %163 = vmatpush1.bf16.msra.mxu0 %v129
  %164 = vmatprep.subr.bf16.mxu0 0
  %165 = vmatpush1.bf16.msra.mxu0 %v130
  %166 = vmatprep.subr.bf16.mxu0 0
  %167 = vmatpush1.bf16.msra.mxu0 %v131
  %168 = vmatprep.subr.bf16.mxu0 0
  %169 = vmatpush1.bf16.msra.mxu0 %v132
  %170 = vmatprep.subr.bf16.mxu0 0
  %171 = vmatpush1.bf16.msra.mxu0 %v133
  %172 = vmatprep.subr.bf16.mxu0 0
  %173 = vmatpush1.bf16.msra.mxu0 %v134
  %174 = vmatprep.subr.bf16.mxu0 0
  %175 = vmatpush1.bf16.msra.mxu0 %v135
  %176 = vmatprep.subr.bf16.mxu0 0
  %177 = vmatpush1.bf16.msra.mxu0 %v136
  %178 = vmatprep.subr.bf16.mxu0 0
  %179 = vmatpush1.bf16.msra.mxu0 %v137
  %180 = vmatprep.subr.bf16.mxu0 0
  %181 = vmatpush1.bf16.msra.mxu0 %v138
  %182 = vmatprep.subr.bf16.mxu0 0
  %183 = vmatpush1.bf16.msra.mxu0 %v139
  %184 = vmatprep.subr.bf16.mxu0 0
  %185 = vmatpush1.bf16.msra.mxu0 %v140
  %186 = vmatprep.subr.bf16.mxu0 0
  %187 = vmatpush1.bf16.msra.mxu0 %v141
  %188 = vmatprep.subr.bf16.mxu0 0
  %189 = vmatpush1.bf16.msra.mxu0 %v142
  %190 = vmatprep.subr.bf16.mxu0 0
  %191 = vmatpush1.bf16.msra.mxu0 %v143
  %192 = vmatprep.mubr.bf16.mxu0 %v61
  %193 = vmatmul.mubr.bf16.gmra.mrb[0].mxu0 %v60
  %v194 = vpop.f32.mrb[0].mxu0
  %v195 = vadd.f32 0.0, %v194
  %v196 = vpop.f32.mrb[0].mxu0
  %v197 = vpop.f32.mrb[0].mxu0
  %v198 = vpop.f32.mrb[0].mxu0
  %199 = vdwg.mxu0
  %v200 = vadd.f32 %v23, %v195
  %201 = vst [vmem:[#allocation2] sm:$0xff] %v200
  // Predicated region
  $region22: #{_lambda_.41} parent=0 // pred_check
    %p202 = pneg %p18
  $region23: #{_lambda_.41} parent=0 // pred_check_branch
    %204 = sbr.rel (%p202) target = $region25
  $region24: #{_lambda_.41} parent=0 // pred_region
    %v205 = vld [vmem:[#allocation2] sm:$0xff]
    %v206 = vld [vmem:[%s2] sm:$0x1]
    %v208 = vlaneseq
    %v209 = vshrl.u32 %v208, 7
    %v210 = vsub.s32 0, %v209
    %v211 = vrot.slane %v206, %v210
    %v213 = vmul.f32 %v205, %v211
    %v214 = vld [vmem:[%s3] sm:$0x1]
    %v216 = vlaneseq
    %v217 = vshrl.u32 %v216, 7
    %v218 = vsub.s32 0, %v217
    %v219 = vrot.slane %v214, %v218
    %v221 = vadd.f32 %v213, %v219
    %222 = vst [vmem:[%s4] sm:$0xff] %v221
  $region25: #{_lambda_.41} parent=0 // pred_fallthru
    _
  // Predicated region
  $region26: #{_lambda_.41} parent=0 // pred_check
    _
  $region27: #{_lambda_.41} parent=0 // pred_check_branch
    %224 = sbr.rel (0) target = $region29
  $region28: #{_lambda_.41} parent=0 // pred_region
    _
  $region29: #{_lambda_.41} parent=0 // pred_fallthru
    _
  // Predicated region
  $region30: #{_lambda_.41} parent=0 // pred_check
    _
  $region31: #{_lambda_.41} parent=0 // pred_check_branch
    %226 = sbr.rel (0) target = $region33
  $region32: #{_lambda_.41} parent=0 // pred_region
    _
  $region33: #{_lambda_.41} parent=0 // pred_fallthru
    _

</llo_original>
